<compile_context>
chip_gen: v7x
topology: tpu7x:2x2x1
jax: 0.10.0
libtpu: 0.0.40
codegen_flags: <defaults>
</compile_context>

<pallas_src>
import jax
import jax.numpy as jnp
import numpy as np
from jax.experimental import pallas as pl
from jax.experimental.pallas import tpu as pltpu

C1 = 32   # conv1 out-channels, padded 20 -> 32 (lane aligned)
C2 = 64   # conv2 out-channels, padded 50 -> 64 (lane aligned)


def source_cnn_kernel(x_ref, t1_ref, b1_ref, t2_ref, b2_ref, wl_ref, bl_ref, o_ref):
    """Fused conv1 -> pool/relu -> conv2 -> pool/relu -> flatten -> linear.

    x_ref : (nb, 28, 28) f32 input block (Cin == 1 squeezed in the wrapper)
    t1_ref: (5, 28, 24*C1)   conv1 block-Toeplitz weights, one slab per kh;
                             output lanes ordered (w-parity, w//2, c)
    b1_ref: (1, 24*C1)
    t2_ref: (5, 12*C1, 8*C2) conv2 block-Toeplitz weights (input lanes (w, cin))
    b2_ref: (1, 8*C2)
    wl_ref: (16*C2, 512)     linear weight, rows in kernel flatten order,
                             cols padded 500 -> 512
    bl_ref: (1, 512)
    o_ref : (nb, 512)        lane-dense output tile (sliced to 500 outside)
    """
    nb = x_ref.shape[0]
    x = x_ref[...]                                              # (nb, 28, 28)

    # ---- conv1: 5 accumulated block-Toeplitz matmuls (one per kernel row) ----
    h1 = jnp.dot(x[:, 0:24, :].reshape(nb * 24, 28), t1_ref[0],
                 preferred_element_type=jnp.float32)
    for kh in range(1, 5):
        h1 += jnp.dot(x[:, kh:kh + 24, :].reshape(nb * 24, 28), t1_ref[kh],
                      preferred_element_type=jnp.float32)
    h1 += b1_ref[...]                          # (nb*24, 768), lanes (parity, w', c)

    # ---- 2x2 maxpool + ReLU (layout-friendly) --------------------------------
    h1 = h1.reshape(nb * 12, 2, 768)
    h1 = jnp.maximum(h1[:, 0, :], h1[:, 1, :])                  # pool H: adjacent rows
    a1 = jnp.maximum(jnp.maximum(h1[:, :384], h1[:, 384:]), 0.0)  # pool W: lane halves + relu
    a1 = a1.reshape(nb, 12, 384)               # rows (n, h), lanes (w in [0,12), cin in [0,C1))

    # TODO(synk): nn.Dropout2d(0.5) is identity in eval mode; training-mode
    # per-channel dropout (mask + 2x rescale) is not implemented.

    # ---- conv2: 5 accumulated block-Toeplitz matmuls --------------------------
    h2 = jnp.dot(a1[:, 0:8, :].reshape(nb * 8, 384), t2_ref[0],
                 preferred_element_type=jnp.float32)
    for kh in range(1, 5):
        h2 += jnp.dot(a1[:, kh:kh + 8, :].reshape(nb * 8, 384), t2_ref[kh],
                      preferred_element_type=jnp.float32)
    h2 += b2_ref[...]                          # (nb*8, 512), lanes (parity, w', c)

    h2 = h2.reshape(nb * 4, 2, 512)
    h2 = jnp.maximum(h2[:, 0, :], h2[:, 1, :])                  # pool H
    a2 = jnp.maximum(jnp.maximum(h2[:, :256], h2[:, 256:]), 0.0)  # pool W + relu
    a2 = a2.reshape(nb, 4, 256)                # rows n, (h', lanes (w', c))

    # ---- flatten (4-way aligned lane concat) + linear (lane-dense 512 out) ----
    flat = jnp.concatenate([a2[:, r, :] for r in range(4)], axis=-1)   # (nb, 1024)
    o_ref[...] = (jnp.dot(flat, wl_ref[...], preferred_element_type=jnp.float32)
                  + bl_ref[...])


def source_cnn_forward(x_nchw, params, *, batch_block=16):
    """x_nchw: (N, 1, 28, 28) f32. `params` in kernel layout (see convert_params)."""
    n = x_nchw.shape[0]
    x = x_nchw.reshape(n, 28, 28)              # squeeze Cin == 1 (free, outside kernel)

    nb = min(batch_block, n)
    num_blocks = -(-n // nb)                   # ceil
    n_pad = num_blocks * nb
    if n_pad != n:                             # pad ragged batch instead of nb = N
        x = jnp.concatenate([x, jnp.zeros((n_pad - n, 28, 28), x.dtype)], axis=0)

    t1, b1 = params["t1"], params["b1"]
    t2, b2 = params["t2"], params["b2"]
    wl, bl = params["wl"], params["bl"]

    def whole(a):
        nd = a.ndim
        return pl.BlockSpec(a.shape, lambda i, _nd=nd: (0,) * _nd)   # weights resident

    out = pl.pallas_call(
        source_cnn_kernel,
        out_shape=jax.ShapeDtypeStruct((n_pad, 512), jnp.float32),
        grid=(num_blocks,),
        in_specs=[
            pl.BlockSpec((nb, 28, 28), lambda i: (i, 0, 0)),
            whole(t1), whole(b1), whole(t2), whole(b2), whole(wl), whole(bl),
        ],
        out_specs=pl.BlockSpec((nb, 512), lambda i: (i, 0)),
        compiler_params=pltpu.CompilerParams(
            dimension_semantics=("parallel",),
            vmem_limit_bytes=48 << 20),
    )(x, t1, b1, t2, b2, wl, bl)

    return out[:n, :500]                       # drop batch pad + output lane pad


def convert_params(torch_params):
    """One-time offline conversion: PyTorch layouts -> kernel (Toeplitz) layouts."""
    w1 = np.asarray(torch_params["conv1.weight"], np.float32)   # (20, 1, 5, 5)
    b1 = np.asarray(torch_params["conv1.bias"], np.float32)     # (20,)
    w2 = np.asarray(torch_params["conv2.weight"], np.float32)   # (50, 20, 5, 5)
    b2 = np.asarray(torch_params["conv2.bias"], np.float32)     # (50,)
    wl = np.asarray(torch_params["linear.weight"], np.float32)  # (500, 800)
    bl = np.asarray(torch_params["linear.bias"], np.float32)    # (500,)

    # conv1 block-Toeplitz: one (28, 24*C1) slab per kh; output column for spatial
    # position j and channel c is (j%2)*(12*C1) + (j//2)*C1 + c, so the 2x2 W-pool
    # is a max of two contiguous 384-lane halves.
    t1 = np.zeros((5, 28, 24 * C1), np.float32)
    b1k = np.zeros((1, 24 * C1), np.float32)
    for j in range(24):
        col = (j % 2) * (12 * C1) + (j // 2) * C1
        b1k[0, col:col + 20] = b1
        for kh in range(5):
            for kw in range(5):
                t1[kh, j + kw, col:col + 20] = w1[:, 0, kh, kw]

    # conv2 block-Toeplitz: input lanes (w in [0,12), cin in [0,C1)); one
    # (12*C1, 8*C2) slab per kh; output columns ordered (parity, j//2, c).
    t2 = np.zeros((5, 12 * C1, 8 * C2), np.float32)
    b2k = np.zeros((1, 8 * C2), np.float32)
    for j in range(8):
        col = (j % 2) * (4 * C2) + (j // 2) * C2
        b2k[0, col:col + 50] = b2
        for kh in range(5):
            for kw in range(5):
                w = j + kw
                for cin in range(20):
                    t2[kh, w * C1 + cin, col:col + 50] = w2[:, cin, kh, kw]

    # linear: rows in kernel flatten order g = h*4*C2 + w*C2 + c (c < 50 valid),
    # columns padded 500 -> 512 for a lane-dense output tile.
    wlk = np.zeros((16 * C2, 512), np.float32)
    for h in range(4):
        for w in range(4):
            for c in range(50):
                g = h * 4 * C2 + w * C2 + c
                f = c * 16 + h * 4 + w          # PyTorch x.view(N, -1) order (NCHW)
                wlk[g, :500] = wl[:, f]
    blk = np.zeros((1, 512), np.float32)
    blk[0, :500] = bl

    arrs = {"t1": t1, "b1": b1k, "t2": t2, "b2": b2k, "wl": wlk, "bl": blk}
    return {k: jnp.asarray(v) for k, v in arrs.items()}


def reference_forward(x_nchw, torch_params):
    """Plain-XLA NCHW reference of the PyTorch module (eval mode)."""
    dn = ("NCHW", "OIHW", "NCHW")

    def conv(h, w, b):
        h = jax.lax.conv_general_dilated(h, w, (1, 1), "VALID", dimension_numbers=dn)
        return h + b[None, :, None, None]

    def pool_relu(h):
        h = jax.lax.reduce_window(h, -jnp.inf, jax.lax.max,
                                  (1, 1, 2, 2), (1, 1, 2, 2), "VALID")
        return jnp.maximum(h, 0.0)

    h = pool_relu(conv(x_nchw, torch_params["conv1.weight"], torch_params["conv1.bias"]))
    h = pool_relu(conv(h, torch_params["conv2.weight"], torch_params["conv2.bias"]))
    flat = h.reshape(h.shape[0], -1)
    return flat @ torch_params["linear.weight"].T + torch_params["linear.bias"]


if __name__ == "__main__":
    key = jax.random.PRNGKey(0)
    kx, kx2, k1, k2, k3, k4, k5, k6 = jax.random.split(key, 8)

    # MNIST-style input: 1 channel, 28x28 (so Linear(800, 500) is consistent).
    x = jax.random.normal(kx, (2, 1, 28, 28), jnp.float32)

    torch_params = {  # PyTorch-native layouts (OIHW conv weights, (out, in) linear)
        "conv1.weight": jax.random.normal(k1, (20, 1, 5, 5), jnp.float32) * 0.1,
        "conv1.bias": jax.random.normal(k2, (20,), jnp.float32) * 0.1,
        "conv2.weight": jax.random.normal(k3, (50, 20, 5, 5), jnp.float32) * 0.05,
        "conv2.bias": jax.random.normal(k4, (50,), jnp.float32) * 0.05,
        "linear.weight": jax.random.normal(k5, (500, 800), jnp.float32) * 0.02,
        "linear.bias": jax.random.normal(k6, (500,), jnp.float32) * 0.02,
    }
    params = convert_params(torch_params)
    fwd = jax.jit(source_cnn_forward)

    # --- small batch (single grid step) -------------------------------------
    out = jax.block_until_ready(fwd(x, params))
    assert out.shape == (2, 500) and out.dtype == jnp.float32
    ref = reference_forward(x, torch_params)
    err = float(jnp.max(jnp.abs(out - ref)))
    assert err < 2e-3, f"mismatch vs reference: max abs err = {err}"

    # --- ragged batch (pad to block multiple, grid > 1) ----------------------
    x2 = jax.random.normal(kx2, (34, 1, 28, 28), jnp.float32)
    out2 = jax.block_until_ready(fwd(x2, params))
    ref2 = reference_forward(x2, torch_params)
    err2 = float(jnp.max(jnp.abs(out2 - ref2)))
    assert out2.shape == (34, 500), out2.shape
    assert err2 < 2e-3, f"mismatch (grid>1 path): max abs err = {err2}"

    print("KERNEL_OK")
</pallas_src>

<mosaic_0001>
module attributes {stable_mosaic.version = 11 : i64} {
  func.func @source_cnn_kernel(%arg0: i32, %arg1: memref<2x28x28xf32, #tpu.memory_space<vmem>>, %arg2: memref<5x28x768xf32, #tpu.memory_space<vmem>>, %arg3: memref<1x768xf32, #tpu.memory_space<vmem>>, %arg4: memref<5x384x512xf32, #tpu.memory_space<vmem>>, %arg5: memref<1x512xf32, #tpu.memory_space<vmem>>, %arg6: memref<1024x512xf32, #tpu.memory_space<vmem>>, %arg7: memref<1x512xf32, #tpu.memory_space<vmem>>, %arg8: memref<2x512xf32, #tpu.memory_space<vmem>>) attributes {dimension_semantics = [#tpu.dimension_semantics<parallel>], iteration_bounds = array<i64: 1>, scalar_prefetch = 0 : i64, scratch_operands = 0 : i64, tpu.core_type = #tpu.core_type<tc>, window_params = [{transform_indices = @transform_0, window_bounds = array<i64: 2, 28, 28>}, {pipeline_mode = #tpu.pipeline_mode<synchronous>, transform_indices = @transform_1, window_bounds = array<i64: 5, 28, 768>}, {pipeline_mode = #tpu.pipeline_mode<synchronous>, transform_indices = @transform_2, window_bounds = array<i64: 1, 768>}, {pipeline_mode = #tpu.pipeline_mode<synchronous>, transform_indices = @transform_3, window_bounds = array<i64: 5, 384, 512>}, {pipeline_mode = #tpu.pipeline_mode<synchronous>, transform_indices = @transform_4, window_bounds = array<i64: 1, 512>}, {pipeline_mode = #tpu.pipeline_mode<synchronous>, transform_indices = @transform_5, window_bounds = array<i64: 1024, 512>}, {pipeline_mode = #tpu.pipeline_mode<synchronous>, transform_indices = @transform_6, window_bounds = array<i64: 1, 512>}, {transform_indices = @transform_7, window_bounds = array<i64: 2, 512>}]} {
    %c0 = arith.constant 0 : index
    %c0_0 = arith.constant 0 : index
    %c0_1 = arith.constant 0 : index
    %0 = vector.load %arg1[%c0, %c0_0, %c0_1] : memref<2x28x28xf32, #tpu.memory_space<vmem>>, vector<2x28x28xf32>
    %1 = vector.extract_strided_slice %0 {offsets = [0, 0, 0], sizes = [2, 24, 28], strides = [1, 1, 1]} : vector<2x28x28xf32> to vector<2x24x28xf32>
    %2 = vector.shape_cast %1 : vector<2x24x28xf32> to vector<48x28xf32>
    %c0_2 = arith.constant 0 : index
    %c0_3 = arith.constant 0 : index
    %c0_4 = arith.constant 0 : index
    %3 = vector.load %arg2[%c0_2, %c0_3, %c0_4] : memref<5x28x768xf32, #tpu.memory_space<vmem>>, vector<1x28x768xf32>
    %4 = vector.shape_cast %3 : vector<1x28x768xf32> to vector<28x768xf32>
    %cst = arith.constant dense<0.000000e+00> : vector<48x768xf32>
    %5 = tpu.matmul %2, %4, %cst {dimension_numbers = #tpu.dot_dimension_numbers<[1], [0], [0], [1], [0, 0, 1, 1], [], []>} : vector<48x28xf32>, vector<28x768xf32>, vector<48x768xf32> -> vector<48x768xf32>
    %6 = vector.extract_strided_slice %0 {offsets = [0, 1, 0], sizes = [2, 24, 28], strides = [1, 1, 1]} : vector<2x28x28xf32> to vector<2x24x28xf32>
    %7 = vector.shape_cast %6 : vector<2x24x28xf32> to vector<48x28xf32>
    %c1 = arith.constant 1 : index
    %c0_5 = arith.constant 0 : index
    %c0_6 = arith.constant 0 : index
    %8 = vector.load %arg2[%c1, %c0_5, %c0_6] : memref<5x28x768xf32, #tpu.memory_space<vmem>>, vector<1x28x768xf32>
    %9 = vector.shape_cast %8 : vector<1x28x768xf32> to vector<28x768xf32>
    %cst_7 = arith.constant dense<0.000000e+00> : vector<48x768xf32>
    %10 = tpu.matmul %7, %9, %cst_7 {dimension_numbers = #tpu.dot_dimension_numbers<[1], [0], [0], [1], [0, 0, 1, 1], [], []>} : vector<48x28xf32>, vector<28x768xf32>, vector<48x768xf32> -> vector<48x768xf32>
    %11 = arith.addf %5, %10 : vector<48x768xf32>
    %12 = vector.extract_strided_slice %0 {offsets = [0, 2, 0], sizes = [2, 24, 28], strides = [1, 1, 1]} : vector<2x28x28xf32> to vector<2x24x28xf32>
    %13 = vector.shape_cast %12 : vector<2x24x28xf32> to vector<48x28xf32>
    %c2 = arith.constant 2 : index
    %c0_8 = arith.constant 0 : index
    %c0_9 = arith.constant 0 : index
    %14 = vector.load %arg2[%c2, %c0_8, %c0_9] : memref<5x28x768xf32, #tpu.memory_space<vmem>>, vector<1x28x768xf32>
    %15 = vector.shape_cast %14 : vector<1x28x768xf32> to vector<28x768xf32>
    %cst_10 = arith.constant dense<0.000000e+00> : vector<48x768xf32>
    %16 = tpu.matmul %13, %15, %cst_10 {dimension_numbers = #tpu.dot_dimension_numbers<[1], [0], [0], [1], [0, 0, 1, 1], [], []>} : vector<48x28xf32>, vector<28x768xf32>, vector<48x768xf32> -> vector<48x768xf32>
    %17 = arith.addf %11, %16 : vector<48x768xf32>
    %18 = vector.extract_strided_slice %0 {offsets = [0, 3, 0], sizes = [2, 24, 28], strides = [1, 1, 1]} : vector<2x28x28xf32> to vector<2x24x28xf32>
    %19 = vector.shape_cast %18 : vector<2x24x28xf32> to vector<48x28xf32>
    %c3 = arith.constant 3 : index
    %c0_11 = arith.constant 0 : index
    %c0_12 = arith.constant 0 : index
    %20 = vector.load %arg2[%c3, %c0_11, %c0_12] : memref<5x28x768xf32, #tpu.memory_space<vmem>>, vector<1x28x768xf32>
    %21 = vector.shape_cast %20 : vector<1x28x768xf32> to vector<28x768xf32>
    %cst_13 = arith.constant dense<0.000000e+00> : vector<48x768xf32>
    %22 = tpu.matmul %19, %21, %cst_13 {dimension_numbers = #tpu.dot_dimension_numbers<[1], [0], [0], [1], [0, 0, 1, 1], [], []>} : vector<48x28xf32>, vector<28x768xf32>, vector<48x768xf32> -> vector<48x768xf32>
    %23 = arith.addf %17, %22 : vector<48x768xf32>
    %24 = vector.extract_strided_slice %0 {offsets = [0, 4, 0], sizes = [2, 24, 28], strides = [1, 1, 1]} : vector<2x28x28xf32> to vector<2x24x28xf32>
    %25 = vector.shape_cast %24 : vector<2x24x28xf32> to vector<48x28xf32>
    %c4 = arith.constant 4 : index
    %c0_14 = arith.constant 0 : index
    %c0_15 = arith.constant 0 : index
    %26 = vector.load %arg2[%c4, %c0_14, %c0_15] : memref<5x28x768xf32, #tpu.memory_space<vmem>>, vector<1x28x768xf32>
    %27 = vector.shape_cast %26 : vector<1x28x768xf32> to vector<28x768xf32>
    %cst_16 = arith.constant dense<0.000000e+00> : vector<48x768xf32>
    %28 = tpu.matmul %25, %27, %cst_16 {dimension_numbers = #tpu.dot_dimension_numbers<[1], [0], [0], [1], [0, 0, 1, 1], [], []>} : vector<48x28xf32>, vector<28x768xf32>, vector<48x768xf32> -> vector<48x768xf32>
    %29 = arith.addf %23, %28 : vector<48x768xf32>
    %c0_17 = arith.constant 0 : index
    %c0_18 = arith.constant 0 : index
    %30 = vector.load %arg3[%c0_17, %c0_18] : memref<1x768xf32, #tpu.memory_space<vmem>>, vector<1x768xf32>
    %31 = vector.broadcast %30 : vector<1x768xf32> to vector<48x768xf32>
    %32 = arith.addf %29, %31 : vector<48x768xf32>
    %33 = vector.shape_cast %32 : vector<48x768xf32> to vector<24x2x768xf32>
    %34 = vector.extract_strided_slice %33 {offsets = [0, 0, 0], sizes = [24, 1, 768], strides = [1, 1, 1]} : vector<24x2x768xf32> to vector<24x1x768xf32>
    %35 = vector.shape_cast %34 : vector<24x1x768xf32> to vector<24x768xf32>
    %36 = vector.extract_strided_slice %33 {offsets = [0, 1, 0], sizes = [24, 1, 768], strides = [1, 1, 1]} : vector<24x2x768xf32> to vector<24x1x768xf32>
    %37 = vector.shape_cast %36 : vector<24x1x768xf32> to vector<24x768xf32>
    %38 = arith.maximumf %35, %37 : vector<24x768xf32>
    %39 = vector.extract_strided_slice %38 {offsets = [0, 0], sizes = [24, 384], strides = [1, 1]} : vector<24x768xf32> to vector<24x384xf32>
    %40 = vector.extract_strided_slice %38 {offsets = [0, 384], sizes = [24, 384], strides = [1, 1]} : vector<24x768xf32> to vector<24x384xf32>
    %41 = arith.maximumf %39, %40 : vector<24x384xf32>
    %cst_19 = arith.constant 0.000000e+00 : f32
    %42 = vector.broadcast %cst_19 : f32 to vector<24x384xf32>
    %43 = arith.maximumf %41, %42 : vector<24x384xf32>
    %44 = vector.shape_cast %43 : vector<24x384xf32> to vector<2x12x384xf32>
    %45 = vector.extract_strided_slice %44 {offsets = [0, 0, 0], sizes = [2, 8, 384], strides = [1, 1, 1]} : vector<2x12x384xf32> to vector<2x8x384xf32>
    %46 = vector.shape_cast %45 : vector<2x8x384xf32> to vector<16x384xf32>
    %c0_20 = arith.constant 0 : index
    %c0_21 = arith.constant 0 : index
    %c0_22 = arith.constant 0 : index
    %47 = vector.load %arg4[%c0_20, %c0_21, %c0_22] : memref<5x384x512xf32, #tpu.memory_space<vmem>>, vector<1x384x512xf32>
    %48 = vector.shape_cast %47 : vector<1x384x512xf32> to vector<384x512xf32>
    %cst_23 = arith.constant dense<0.000000e+00> : vector<16x512xf32>
    %49 = tpu.matmul %46, %48, %cst_23 {dimension_numbers = #tpu.dot_dimension_numbers<[1], [0], [0], [1], [0, 0, 1, 1], [], []>} : vector<16x384xf32>, vector<384x512xf32>, vector<16x512xf32> -> vector<16x512xf32>
    %50 = vector.extract_strided_slice %44 {offsets = [0, 1, 0], sizes = [2, 8, 384], strides = [1, 1, 1]} : vector<2x12x384xf32> to vector<2x8x384xf32>
    %51 = vector.shape_cast %50 : vector<2x8x384xf32> to vector<16x384xf32>
    %c1_24 = arith.constant 1 : index
    %c0_25 = arith.constant 0 : index
    %c0_26 = arith.constant 0 : index
    %52 = vector.load %arg4[%c1_24, %c0_25, %c0_26] : memref<5x384x512xf32, #tpu.memory_space<vmem>>, vector<1x384x512xf32>
    %53 = vector.shape_cast %52 : vector<1x384x512xf32> to vector<384x512xf32>
    %cst_27 = arith.constant dense<0.000000e+00> : vector<16x512xf32>
    %54 = tpu.matmul %51, %53, %cst_27 {dimension_numbers = #tpu.dot_dimension_numbers<[1], [0], [0], [1], [0, 0, 1, 1], [], []>} : vector<16x384xf32>, vector<384x512xf32>, vector<16x512xf32> -> vector<16x512xf32>
    %55 = arith.addf %49, %54 : vector<16x512xf32>
    %56 = vector.extract_strided_slice %44 {offsets = [0, 2, 0], sizes = [2, 8, 384], strides = [1, 1, 1]} : vector<2x12x384xf32> to vector<2x8x384xf32>
    %57 = vector.shape_cast %56 : vector<2x8x384xf32> to vector<16x384xf32>
    %c2_28 = arith.constant 2 : index
    %c0_29 = arith.constant 0 : index
    %c0_30 = arith.constant 0 : index
    %58 = vector.load %arg4[%c2_28, %c0_29, %c0_30] : memref<5x384x512xf32, #tpu.memory_space<vmem>>, vector<1x384x512xf32>
    %59 = vector.shape_cast %58 : vector<1x384x512xf32> to vector<384x512xf32>
    %cst_31 = arith.constant dense<0.000000e+00> : vector<16x512xf32>
    %60 = tpu.matmul %57, %59, %cst_31 {dimension_numbers = #tpu.dot_dimension_numbers<[1], [0], [0], [1], [0, 0, 1, 1], [], []>} : vector<16x384xf32>, vector<384x512xf32>, vector<16x512xf32> -> vector<16x512xf32>
    %61 = arith.addf %55, %60 : vector<16x512xf32>
    %62 = vector.extract_strided_slice %44 {offsets = [0, 3, 0], sizes = [2, 8, 384], strides = [1, 1, 1]} : vector<2x12x384xf32> to vector<2x8x384xf32>
    %63 = vector.shape_cast %62 : vector<2x8x384xf32> to vector<16x384xf32>
    %c3_32 = arith.constant 3 : index
    %c0_33 = arith.constant 0 : index
    %c0_34 = arith.constant 0 : index
    %64 = vector.load %arg4[%c3_32, %c0_33, %c0_34] : memref<5x384x512xf32, #tpu.memory_space<vmem>>, vector<1x384x512xf32>
    %65 = vector.shape_cast %64 : vector<1x384x512xf32> to vector<384x512xf32>
    %cst_35 = arith.constant dense<0.000000e+00> : vector<16x512xf32>
    %66 = tpu.matmul %63, %65, %cst_35 {dimension_numbers = #tpu.dot_dimension_numbers<[1], [0], [0], [1], [0, 0, 1, 1], [], []>} : vector<16x384xf32>, vector<384x512xf32>, vector<16x512xf32> -> vector<16x512xf32>
    %67 = arith.addf %61, %66 : vector<16x512xf32>
    %68 = vector.extract_strided_slice %44 {offsets = [0, 4, 0], sizes = [2, 8, 384], strides = [1, 1, 1]} : vector<2x12x384xf32> to vector<2x8x384xf32>
    %69 = vector.shape_cast %68 : vector<2x8x384xf32> to vector<16x384xf32>
    %c4_36 = arith.constant 4 : index
    %c0_37 = arith.constant 0 : index
    %c0_38 = arith.constant 0 : index
    %70 = vector.load %arg4[%c4_36, %c0_37, %c0_38] : memref<5x384x512xf32, #tpu.memory_space<vmem>>, vector<1x384x512xf32>
    %71 = vector.shape_cast %70 : vector<1x384x512xf32> to vector<384x512xf32>
    %cst_39 = arith.constant dense<0.000000e+00> : vector<16x512xf32>
    %72 = tpu.matmul %69, %71, %cst_39 {dimension_numbers = #tpu.dot_dimension_numbers<[1], [0], [0], [1], [0, 0, 1, 1], [], []>} : vector<16x384xf32>, vector<384x512xf32>, vector<16x512xf32> -> vector<16x512xf32>
    %73 = arith.addf %67, %72 : vector<16x512xf32>
    %c0_40 = arith.constant 0 : index
    %c0_41 = arith.constant 0 : index
    %74 = vector.load %arg5[%c0_40, %c0_41] : memref<1x512xf32, #tpu.memory_space<vmem>>, vector<1x512xf32>
    %75 = vector.broadcast %74 : vector<1x512xf32> to vector<16x512xf32>
    %76 = arith.addf %73, %75 : vector<16x512xf32>
    %77 = vector.shape_cast %76 : vector<16x512xf32> to vector<8x2x512xf32>
    %78 = vector.extract_strided_slice %77 {offsets = [0, 0, 0], sizes = [8, 1, 512], strides = [1, 1, 1]} : vector<8x2x512xf32> to vector<8x1x512xf32>
    %79 = vector.shape_cast %78 : vector<8x1x512xf32> to vector<8x512xf32>
    %80 = vector.extract_strided_slice %77 {offsets = [0, 1, 0], sizes = [8, 1, 512], strides = [1, 1, 1]} : vector<8x2x512xf32> to vector<8x1x512xf32>
    %81 = vector.shape_cast %80 : vector<8x1x512xf32> to vector<8x512xf32>
    %82 = arith.maximumf %79, %81 : vector<8x512xf32>
    %83 = vector.extract_strided_slice %82 {offsets = [0, 0], sizes = [8, 256], strides = [1, 1]} : vector<8x512xf32> to vector<8x256xf32>
    %84 = vector.extract_strided_slice %82 {offsets = [0, 256], sizes = [8, 256], strides = [1, 1]} : vector<8x512xf32> to vector<8x256xf32>
    %85 = arith.maximumf %83, %84 : vector<8x256xf32>
    %cst_42 = arith.constant 0.000000e+00 : f32
    %86 = vector.broadcast %cst_42 : f32 to vector<8x256xf32>
    %87 = arith.maximumf %85, %86 : vector<8x256xf32>
    %88 = vector.shape_cast %87 : vector<8x256xf32> to vector<2x4x256xf32>
    %89 = vector.extract_strided_slice %88 {offsets = [0, 0, 0], sizes = [2, 1, 256], strides = [1, 1, 1]} : vector<2x4x256xf32> to vector<2x1x256xf32>
    %90 = vector.shape_cast %89 : vector<2x1x256xf32> to vector<2x256xf32>
    %91 = vector.extract_strided_slice %88 {offsets = [0, 1, 0], sizes = [2, 1, 256], strides = [1, 1, 1]} : vector<2x4x256xf32> to vector<2x1x256xf32>
    %92 = vector.shape_cast %91 : vector<2x1x256xf32> to vector<2x256xf32>
    %93 = vector.extract_strided_slice %88 {offsets = [0, 2, 0], sizes = [2, 1, 256], strides = [1, 1, 1]} : vector<2x4x256xf32> to vector<2x1x256xf32>
    %94 = vector.shape_cast %93 : vector<2x1x256xf32> to vector<2x256xf32>
    %95 = vector.extract_strided_slice %88 {offsets = [0, 3, 0], sizes = [2, 1, 256], strides = [1, 1, 1]} : vector<2x4x256xf32> to vector<2x1x256xf32>
    %96 = vector.shape_cast %95 : vector<2x1x256xf32> to vector<2x256xf32>
    %97 = tpu.concatenate %90, %92, %94, %96 in 1 : vector<2x256xf32>, vector<2x256xf32>, vector<2x256xf32>, vector<2x256xf32> -> vector<2x1024xf32>
    %c0_43 = arith.constant 0 : index
    %c0_44 = arith.constant 0 : index
    %98 = vector.load %arg6[%c0_43, %c0_44] : memref<1024x512xf32, #tpu.memory_space<vmem>>, vector<1024x512xf32>
    %cst_45 = arith.constant dense<0.000000e+00> : vector<2x512xf32>
    %99 = tpu.matmul %97, %98, %cst_45 {dimension_numbers = #tpu.dot_dimension_numbers<[1], [0], [0], [1], [0, 0, 1, 1], [], []>} : vector<2x1024xf32>, vector<1024x512xf32>, vector<2x512xf32> -> vector<2x512xf32>
    %c0_46 = arith.constant 0 : index
    %c0_47 = arith.constant 0 : index
    %100 = vector.load %arg7[%c0_46, %c0_47] : memref<1x512xf32, #tpu.memory_space<vmem>>, vector<1x512xf32>
    %101 = vector.broadcast %100 : vector<1x512xf32> to vector<2x512xf32>
    %102 = arith.addf %99, %101 : vector<2x512xf32>
    %c0_48 = arith.constant 0 : index
    %c0_49 = arith.constant 0 : index
    %103 = vector.load %arg8[%c0_48, %c0_49] : memref<2x512xf32, #tpu.memory_space<vmem>>, vector<2x512xf32>
    tpu.vector_store %arg8[%c0_48, %c0_49], %102 {strides = array<i32>} : memref<2x512xf32, #tpu.memory_space<vmem>>, vector<2x512xf32>,
    return
  }
  func.func @transform_0(%arg0: i32) -> (i32, i32, i32) {
    %c0_i32 = arith.constant 0 : i32
    %c0_i32_0 = arith.constant 0 : i32
    %c0_i32_1 = arith.constant 0 : i32
    return %arg0, %c0_i32, %c0_i32_0 : i32, i32, i32
  }
  func.func @transform_1(%arg0: i32) -> (i32, i32, i32) {
    %c0_i32 = arith.constant 0 : i32
    %c0_i32_0 = arith.constant 0 : i32
    %c0_i32_1 = arith.constant 0 : i32
    %c0_i32_2 = arith.constant 0 : i32
    return %c0_i32, %c0_i32_0, %c0_i32_1 : i32, i32, i32
  }
  func.func @transform_2(%arg0: i32) -> (i32, i32) {
    %c0_i32 = arith.constant 0 : i32
    %c0_i32_0 = arith.constant 0 : i32
    %c0_i32_1 = arith.constant 0 : i32
    return %c0_i32, %c0_i32_0 : i32, i32
  }
  func.func @transform_3(%arg0: i32) -> (i32, i32, i32) {
    %c0_i32 = arith.constant 0 : i32
    %c0_i32_0 = arith.constant 0 : i32
    %c0_i32_1 = arith.constant 0 : i32
    %c0_i32_2 = arith.constant 0 : i32
    return %c0_i32, %c0_i32_0, %c0_i32_1 : i32, i32, i32
  }
  func.func @transform_4(%arg0: i32) -> (i32, i32) {
    %c0_i32 = arith.constant 0 : i32
    %c0_i32_0 = arith.constant 0 : i32
    %c0_i32_1 = arith.constant 0 : i32
    return %c0_i32, %c0_i32_0 : i32, i32
  }
  func.func @transform_5(%arg0: i32) -> (i32, i32) {
    %c0_i32 = arith.constant 0 : i32
    %c0_i32_0 = arith.constant 0 : i32
    %c0_i32_1 = arith.constant 0 : i32
    return %c0_i32, %c0_i32_0 : i32, i32
  }
  func.func @transform_6(%arg0: i32) -> (i32, i32) {
    %c0_i32 = arith.constant 0 : i32
    %c0_i32_0 = arith.constant 0 : i32
    %c0_i32_1 = arith.constant 0 : i32
    return %c0_i32, %c0_i32_0 : i32, i32
  }
  func.func @transform_7(%arg0: i32) -> (i32, i32) {
    %c0_i32 = arith.constant 0 : i32
    %c0_i32_0 = arith.constant 0 : i32
    return %arg0, %c0_i32 : i32, i32
  }
}

</mosaic_0001>

<llo_original>
// kernel: source_cnn_forward.1
$region0: #{source_cnn_forward.1}
  #allocation0 [shape = 'u32[]', space=smem, size = 0x4, offset = 0x4, fixed_abs, tag = 'smem constant byte address 0x4 - core index']
  #allocation1 [shape = 'u32[144,128]{1,0:T(1,128)}', space=vmem, size = 0x12000, scoped, tag = 'internal scratch']
  %s0 = inlined_call_operand.vmem [shape: f32[2,28,28], index: 0, kind: input, shape index: {}]
  %s1 = inlined_call_operand.hbm [shape: f32[5,28,768], index: 1, kind: input, shape index: {}]
  %s2 = inlined_call_operand.hbm [shape: f32[1,768], index: 2, kind: input, shape index: {}]
  %s3 = inlined_call_operand.hbm [shape: f32[5,384,512], index: 3, kind: input, shape index: {}]
  %s4 = inlined_call_operand.hbm [shape: f32[1,512], index: 4, kind: input, shape index: {}]
  %s5 = inlined_call_operand.hbm [shape: f32[1024,512], index: 5, kind: input, shape index: {}]
  %s6 = inlined_call_operand.hbm [shape: f32[1,512], index: 6, kind: input, shape index: {}]
  %s7 = inlined_call_operand.hbm [shape: f32[2,512], index: 7, kind: output, shape index: {}]
  %s8 = sld [smem:[#allocation0]]
  $region62: #{source_cnn_forward.1} parent=0
    _
  %s10 = ssub.s32 1, %s8
  %s11 = scalar_select 0, %s10, %s8
  $region1: #{source_cnn_forward.1} parent=0
    #allocation2 [shape = 'u8[491520]{0}', space=vmem, size = 0x78000, scoped, tag = 'input window, operand 1, single buffered']
    #allocation3 [shape = 's32[1]{0}', space=sflag, size = 0x4, scoped, tag = 'scoped memory for source_cnn_forward.1']
    #allocation4 [shape = 's32[1]{0}', space=sflag, size = 0x4, scoped, tag = 'scoped memory for source_cnn_forward.1']
    #allocation5 [shape = 'u8[3072]{0}', space=vmem, size = 0xc00, scoped, tag = 'input window, operand 2, single buffered']
    #allocation6 [shape = 's32[1]{0}', space=sflag, size = 0x4, scoped, tag = 'scoped memory for source_cnn_forward.1']
    #allocation7 [shape = 'u8[3932160]{0}', space=vmem, size = 0x3c0000, scoped, tag = 'input window, operand 3, single buffered']
    #allocation8 [shape = 'u8[2048]{0}', space=vmem, size = 0x800, scoped, tag = 'input window, operand 4, single buffered']
    #allocation9 [shape = 's32[1]{0}', space=sflag, size = 0x4, scoped, tag = 'scoped memory for source_cnn_forward.1']
    #allocation10 [shape = 'u8[2097152]{0}', space=vmem, size = 0x200000, scoped, tag = 'input window, operand 5, single buffered']
    #allocation11 [shape = 'u8[2048]{0}', space=vmem, size = 0x800, scoped, tag = 'input window, operand 6, single buffered']
    #allocation12 [shape = 's32[1]{0}', space=sflag, size = 0x4, scoped, tag = 'scoped memory for source_cnn_forward.1']
    #allocation13 [shape = 'u8[4096]{0}', space=vmem, size = 0x1000, scoped, tag = 'output window, operand 0, single buffered']
    %12 = vsyncpa [#allocation3], 0
    %13 = vsyncpa [#allocation6], 0
    %14 = vsyncpa [#allocation9], 0
    %15 = vsyncpa [#allocation12], 0
    %16 = vsyncpa [#allocation4], 0
    // Predicated region
    $region2: #{source_cnn_forward.1} parent=1 // pred_check
      _
    $region3: #{source_cnn_forward.1} parent=1 // pred_check_branch
      %18 = sbr.rel (0) target = $region5
    $region4: #{source_cnn_forward.1} parent=1 // pred_region
      _
    $region5: #{source_cnn_forward.1} parent=1 // pred_fallthru
      _
    // Predicated region
    $region6: #{source_cnn_forward.1} parent=1 // pred_check
      _
    $region7: #{source_cnn_forward.1} parent=1 // pred_check_branch
      %20 = sbr.rel (0) target = $region9
    $region8: #{source_cnn_forward.1} parent=1 // pred_region
      %s22 = ssub.s32 15360, 15360
      %23 = vsyncadd [#allocation3], %s22
      %s24 = sshll.u32 [#allocation2], 4
      %s25 = int_to_ptr.vmem [resolvable:$true] %s24
      %30 = dma.hbm_to_vmem [thread:$0]  %s1, 15360, %s25, [#allocation3], 768, 768, 48
    $region9: #{source_cnn_forward.1} parent=1 // pred_fallthru
      _
    // Predicated region
    $region10: #{source_cnn_forward.1} parent=1 // pred_check
      _
    $region11: #{source_cnn_forward.1} parent=1 // pred_check_branch
      %32 = sbr.rel (0) target = $region13
    $region12: #{source_cnn_forward.1} parent=1 // pred_region
      %s34 = ssub.s32 96, 96
      %35 = vsyncadd [#allocation6], %s34
      %s37 = sshll.u32 [#allocation5], 4
      %s38 = int_to_ptr.vmem [resolvable:$true] %s37
      %40 = dma.hbm_to_vmem [thread:$0]  %s2, 96, %s38, [#allocation6]
    $region13: #{source_cnn_forward.1} parent=1 // pred_fallthru
      _
    // Predicated region
    $region14: #{source_cnn_forward.1} parent=1 // pred_check
      _
    $region15: #{source_cnn_forward.1} parent=1 // pred_check_branch
      %42 = sbr.rel (0) target = $region17
    $region16: #{source_cnn_forward.1} parent=1 // pred_region
      %s44 = ssub.s32 122880, 122880
      %45 = vsyncadd [#allocation6], %s44
      %s46 = sshll.u32 [#allocation7], 4
      %s47 = int_to_ptr.vmem [resolvable:$true] %s46
      %52 = dma.hbm_to_vmem [thread:$0]  %s3, 122880, %s47, [#allocation6], 512, 512, 32
    $region17: #{source_cnn_forward.1} parent=1 // pred_fallthru
      _
    // Predicated region
    $region18: #{source_cnn_forward.1} parent=1 // pred_check
      _
    $region19: #{source_cnn_forward.1} parent=1 // pred_check_branch
      %54 = sbr.rel (0) target = $region21
    $region20: #{source_cnn_forward.1} parent=1 // pred_region
      %s56 = ssub.s32 64, 64
      %57 = vsyncadd [#allocation9], %s56
      %s59 = sshll.u32 [#allocation8], 4
      %s60 = int_to_ptr.vmem [resolvable:$true] %s59
      %62 = dma.hbm_to_vmem [thread:$0]  %s4, 64, %s60, [#allocation9]
    $region21: #{source_cnn_forward.1} parent=1 // pred_fallthru
      _
    // Predicated region
    $region22: #{source_cnn_forward.1} parent=1 // pred_check
      _
    $region23: #{source_cnn_forward.1} parent=1 // pred_check_branch
      %64 = sbr.rel (0) target = $region25
    $region24: #{source_cnn_forward.1} parent=1 // pred_region
      %s66 = ssub.s32 65536, 65536
      %67 = vsyncadd [#allocation9], %s66
      %s68 = sshll.u32 [#allocation10], 4
      %s69 = int_to_ptr.vmem [resolvable:$true] %s68
      %74 = dma.hbm_to_vmem [thread:$0]  %s5, 65536, %s69, [#allocation9], 512, 512, 32
    $region25: #{source_cnn_forward.1} parent=1 // pred_fallthru
      _
    // Predicated region
    $region26: #{source_cnn_forward.1} parent=1 // pred_check
      _
    $region27: #{source_cnn_forward.1} parent=1 // pred_check_branch
      %76 = sbr.rel (0) target = $region29
    $region28: #{source_cnn_forward.1} parent=1 // pred_region
      %s78 = ssub.s32 64, 64
      %79 = vsyncadd [#allocation12], %s78
      %s81 = sshll.u32 [#allocation11], 4
      %s82 = int_to_ptr.vmem [resolvable:$true] %s81
      %84 = dma.hbm_to_vmem [thread:$0]  %s6, 64, %s82, [#allocation12]
    $region29: #{source_cnn_forward.1} parent=1 // pred_fallthru
      _
    // Predicated region
    $region30: #{source_cnn_forward.1} parent=1 // pred_check
      _
    $region31: #{source_cnn_forward.1} parent=1 // pred_check_branch
      %86 = sbr.rel (0) target = $region33
    $region32: #{source_cnn_forward.1} parent=1 // pred_region
      %87 = dma.done [#allocation3], 15360
    $region33: #{source_cnn_forward.1} parent=1 // pred_fallthru
      _
    // Predicated region
    $region34: #{source_cnn_forward.1} parent=1 // pred_check
      _
    $region35: #{source_cnn_forward.1} parent=1 // pred_check_branch
      %89 = sbr.rel (0) target = $region37
    $region36: #{source_cnn_forward.1} parent=1 // pred_region
      %90 = dma.done [#allocation6], 96
    $region37: #{source_cnn_forward.1} parent=1 // pred_fallthru
      _
    // Predicated region
    $region38: #{source_cnn_forward.1} parent=1 // pred_check
      _
    $region39: #{source_cnn_forward.1} parent=1 // pred_check_branch
      %92 = sbr.rel (0) target = $region41
    $region40: #{source_cnn_forward.1} parent=1 // pred_region
      %93 = dma.done [#allocation6], 122880
    $region41: #{source_cnn_forward.1} parent=1 // pred_fallthru
      _
    // Predicated region
    $region42: #{source_cnn_forward.1} parent=1 // pred_check
      _
    $region43: #{source_cnn_forward.1} parent=1 // pred_check_branch
      %95 = sbr.rel (0) target = $region45
    $region44: #{source_cnn_forward.1} parent=1 // pred_region
      %96 = dma.done [#allocation9], 64
    $region45: #{source_cnn_forward.1} parent=1 // pred_fallthru
      _
    // Predicated region
    $region46: #{source_cnn_forward.1} parent=1 // pred_check
      _
    $region47: #{source_cnn_forward.1} parent=1 // pred_check_branch
      %98 = sbr.rel (0) target = $region49
    $region48: #{source_cnn_forward.1} parent=1 // pred_region
      %99 = dma.done [#allocation9], 65536
    $region49: #{source_cnn_forward.1} parent=1 // pred_fallthru
      _
    // Predicated region
    $region50: #{source_cnn_forward.1} parent=1 // pred_check
      _
    $region51: #{source_cnn_forward.1} parent=1 // pred_check_branch
      %101 = sbr.rel (0) target = $region53
    $region52: #{source_cnn_forward.1} parent=1 // pred_region
      %102 = dma.done [#allocation12], 64
    $region53: #{source_cnn_forward.1} parent=1 // pred_fallthru
      _
    %v103 = vld [vmem:[%s0] sm:$0xff]
    %v104 = vld [vmem:[%s0 + $0x8] sm:$0xff]
    %v105 = vld [vmem:[%s0 + $0x10] sm:$0xff]
    %v106 = vld [vmem:[%s0 + $0x18] sm:$0xf]
    %v107 = vld [vmem:[%s0 + $0x20] sm:$0xff]
    %v108 = vld [vmem:[%s0 + $0x28] sm:$0xff]
    %v109 = vld [vmem:[%s0 + $0x30] sm:$0xff]
    %v110 = vld [vmem:[%s0 + $0x38] sm:$0xf]
    %v111 = vld [vmem:[#allocation2] sm:$0xff]
    %v112 = vld [vmem:[#allocation2 + $0x8] sm:$0xff]
    %v113 = vld [vmem:[#allocation2 + $0x10] sm:$0xff]
    %v114 = vld [vmem:[#allocation2 + $0x18] sm:$0xff]
    %v115 = vld [vmem:[#allocation2 + $0x20] sm:$0xff]
    %v116 = vld [vmem:[#allocation2 + $0x28] sm:$0xff]
    %v117 = vld [vmem:[#allocation2 + $0x30] sm:$0xff]
    %v118 = vld [vmem:[#allocation2 + $0x38] sm:$0xff]
    %v119 = vld [vmem:[#allocation2 + $0x40] sm:$0xff]
    %v120 = vld [vmem:[#allocation2 + $0x48] sm:$0xff]
    %v121 = vld [vmem:[#allocation2 + $0x50] sm:$0xff]
    %v122 = vld [vmem:[#allocation2 + $0x58] sm:$0xff]
    %v123 = vld [vmem:[#allocation2 + $0x60] sm:$0xff]
    %v124 = vld [vmem:[#allocation2 + $0x68] sm:$0xff]
    %v125 = vld [vmem:[#allocation2 + $0x70] sm:$0xff]
    %v126 = vld [vmem:[#allocation2 + $0x78] sm:$0xff]
    %v127 = vld [vmem:[#allocation2 + $0x80] sm:$0xff]
    %v128 = vld [vmem:[#allocation2 + $0x88] sm:$0xff]
    %v129 = vld [vmem:[#allocation2 + $0x90] sm:$0xf]
    %v130 = vld [vmem:[#allocation2 + $0x98] sm:$0xf]
    %v131 = vld [vmem:[#allocation2 + $0xa0] sm:$0xf]
    %v132 = vld [vmem:[#allocation2 + $0xa8] sm:$0xf]
    %v133 = vld [vmem:[#allocation2 + $0xb0] sm:$0xf]
    %v134 = vld [vmem:[#allocation2 + $0xb8] sm:$0xf]
    %vm143 = vcmask 1046528
    %v144 = vrot.slane %v103, 1
    %v145 = vrot.slane %v104, 1
    %v146 = vsel %vm143, %v144, %v145
    %v147 = vrot.slane %v105, 1
    %v148 = vsel %vm143, %v145, %v147
    %v149 = vrot.slane %v106, 1
    %v150 = vsel %vm143, %v147, %v149
    %v151 = vrot.slane %v107, 1
    %v152 = vrot.slane %v108, 1
    %v153 = vsel %vm143, %v151, %v152
    %v154 = vrot.slane %v109, 1
    %v155 = vsel %vm143, %v152, %v154
    %v156 = vrot.slane %v110, 1
    %v157 = vsel %vm143, %v154, %v156
    %s158 = scalar_lea.vmem [#allocation2], 192
    %v159 = vld [vmem:[%s158] sm:$0xff]
    %v160 = vld [vmem:[%s158 + $0x8] sm:$0xff]
    %v161 = vld [vmem:[%s158 + $0x10] sm:$0xff]
    %v162 = vld [vmem:[%s158 + $0x18] sm:$0xff]
    %v163 = vld [vmem:[%s158 + $0x20] sm:$0xff]
    %v164 = vld [vmem:[%s158 + $0x28] sm:$0xff]
    %v165 = vld [vmem:[%s158 + $0x30] sm:$0xff]
    %v166 = vld [vmem:[%s158 + $0x38] sm:$0xff]
    %v167 = vld [vmem:[%s158 + $0x40] sm:$0xff]
    %v168 = vld [vmem:[%s158 + $0x48] sm:$0xff]
    %v169 = vld [vmem:[%s158 + $0x50] sm:$0xff]
    %v170 = vld [vmem:[%s158 + $0x58] sm:$0xff]
    %v171 = vld [vmem:[%s158 + $0x60] sm:$0xff]
    %v172 = vld [vmem:[%s158 + $0x68] sm:$0xff]
    %v173 = vld [vmem:[%s158 + $0x70] sm:$0xff]
    %v174 = vld [vmem:[%s158 + $0x78] sm:$0xff]
    %v175 = vld [vmem:[%s158 + $0x80] sm:$0xff]
    %v176 = vld [vmem:[%s158 + $0x88] sm:$0xff]
    %v177 = vld [vmem:[%s158 + $0x90] sm:$0xf]
    %v178 = vld [vmem:[%s158 + $0x98] sm:$0xf]
    %v179 = vld [vmem:[%s158 + $0xa0] sm:$0xf]
    %v180 = vld [vmem:[%s158 + $0xa8] sm:$0xf]
    %v181 = vld [vmem:[%s158 + $0xb0] sm:$0xf]
    %v182 = vld [vmem:[%s158 + $0xb8] sm:$0xf]
    %vm183 = vcmask 228352
    %v184 = vsel %vm183, %v146, 0
    %v186 = vsel %vm183, %v148, 0
    %v188 = vsel %vm183, %v150, 0
    %v190 = vsel %vm183, %v153, 0
    %v192 = vsel %vm183, %v155, 0
    %v194 = vsel %vm183, %v157, 0
    %vm196 = vcmask 1043456
    %v198 = vsel %vm196, %v177, 0
    %v201 = vsel %vm196, %v178, 0
    %v204 = vsel %vm196, %v179, 0
    %v207 = vsel %vm196, %v180, 0
    %v210 = vsel %vm196, %v181, 0
    %v213 = vsel %vm196, %v182, 0
    %215 = vmatprep.subr.mxu0 %v160
    %216 = vmatpush1.msra.mxu0 %v159
    %217 = vmatprep.subr.mxu0 %v166
    %218 = vmatpush1.msra.mxu0 %v165
    %219 = vmatprep.subr.mxu0 %v172
    %220 = vmatpush1.msra.mxu0 %v171
    %221 = vmatprep.subr.mxu0 %v201
    %222 = vmatpush1.msra.mxu0 %v198
    %223 = vmatprep.subr.mxu0 0.0
    %224 = vmatpush1.msra.mxu0 0.0
    %225 = vmatprep.subr.mxu0 0.0
    %226 = vmatpush1.msra.mxu0 0.0
    %227 = vmatprep.subr.mxu0 0.0
    %228 = vmatpush1.msra.mxu0 0.0
    %229 = vmatprep.subr.mxu0 0.0
    %230 = vmatpush1.msra.mxu0 0.0
    %231 = vmatprep.subr.mxu0 0.0
    %232 = vmatpush1.msra.mxu0 0.0
    %233 = vmatprep.subr.mxu0 0.0
    %234 = vmatpush1.msra.mxu0 0.0
    %235 = vmatprep.subr.mxu0 0.0
    %236 = vmatpush1.msra.mxu0 0.0
    %237 = vmatprep.subr.mxu0 0.0
    %238 = vmatpush1.msra.mxu0 0.0
    %239 = vmatprep.subr.mxu0 0.0
    %240 = vmatpush1.msra.mxu0 0.0
    %241 = vmatprep.subr.mxu0 0.0
    %242 = vmatpush1.msra.mxu0 0.0
    %243 = vmatprep.subr.mxu0 0.0
    %244 = vmatpush1.msra.mxu0 0.0
    %245 = vmatprep.subr.mxu0 0.0
    %246 = vmatpush1.msra.mxu0 0.0
    %247 = vmatprep.subr.mxu0 0.0
    %248 = vmatpush1.msra.mxu0 0.0
    %249 = vmatprep.subr.mxu0 0.0
    %250 = vmatpush1.msra.mxu0 0.0
    %251 = vmatprep.subr.mxu0 0.0
    %252 = vmatpush1.msra.mxu0 0.0
    %253 = vmatprep.subr.mxu0 0.0
    %254 = vmatpush1.msra.mxu0 0.0
    %255 = vmatprep.subr.mxu0 0.0
    %256 = vmatpush1.msra.mxu0 0.0
    %257 = vmatprep.subr.mxu0 0.0
    %258 = vmatpush1.msra.mxu0 0.0
    %259 = vmatprep.subr.mxu0 0.0
    %260 = vmatpush1.msra.mxu0 0.0
    %261 = vmatprep.subr.mxu0 0.0
    %262 = vmatpush1.msra.mxu0 0.0
    %263 = vmatprep.subr.mxu0 0.0
    %264 = vmatpush1.msra.mxu0 0.0
    %265 = vmatprep.subr.mxu0 0.0
    %266 = vmatpush1.msra.mxu0 0.0
    %267 = vmatprep.subr.mxu0 0.0
    %268 = vmatpush1.msra.mxu0 0.0
    %269 = vmatprep.subr.mxu0 0.0
    %270 = vmatpush1.msra.mxu0 0.0
    %271 = vmatprep.subr.mxu0 0.0
    %272 = vmatpush1.msra.mxu0 0.0
    %273 = vmatprep.subr.mxu0 0.0
    %274 = vmatpush1.msra.mxu0 0.0
    %275 = vmatprep.subr.mxu0 0.0
    %276 = vmatpush1.msra.mxu0 0.0
    %277 = vmatprep.subr.mxu0 0.0
    %278 = vmatpush1.msra.mxu0 0.0
    %279 = vmatprep.mubr.f32.mxu0 0.0
    %280 = vmatmul.mubr.f32.gmra.mrb[0].mxu0 %v184
    %v281 = vpop.f32.mrb[0].mxu0
    %v282 = vadd.f32 0.0, %v281
    %v283 = vpop.f32.mrb[0].mxu0
    %v284 = vadd.f32 0.0, %v283
    %285 = vmatprep.mubr.f32.mxu0 0.0
    %286 = vmatmul.mubr.f32.gmra.mrb[0].mxu0 %v186
    %v287 = vpop.f32.mrb[0].mxu0
    %v288 = vadd.f32 0.0, %v287
    %v289 = vpop.f32.mrb[0].mxu0
    %v290 = vadd.f32 0.0, %v289
    %291 = vmatprep.mubr.f32.mxu0 0.0
    %292 = vmatmul.mubr.f32.gmra.mrb[0].mxu0 %v188
    %v293 = vpop.f32.mrb[0].mxu0
    %v294 = vadd.f32 0.0, %v293
    %v295 = vpop.f32.mrb[0].mxu0
    %v296 = vadd.f32 0.0, %v295
    %297 = vmatprep.mubr.f32.mxu0 0.0
    %298 = vmatmul.mubr.f32.gmra.mrb[0].mxu0 %v190
    %v299 = vpop.f32.mrb[0].mxu0
    %v300 = vadd.f32 0.0, %v299
    %v301 = vpop.f32.mrb[0].mxu0
    %v302 = vadd.f32 0.0, %v301
    %303 = vmatprep.mubr.f32.mxu0 0.0
    %304 = vmatmul.mubr.f32.gmra.mrb[0].mxu0 %v192
    %v305 = vpop.f32.mrb[0].mxu0
    %v306 = vadd.f32 0.0, %v305
    %v307 = vpop.f32.mrb[0].mxu0
    %v308 = vadd.f32 0.0, %v307
    %309 = vmatprep.mubr.f32.mxu0 0.0
    %310 = vmatmul.mubr.f32.gmra.mrb[0].mxu0 %v194
    %v311 = vpop.f32.mrb[0].mxu0
    %v312 = vadd.f32 0.0, %v311
    %v313 = vpop.f32.mrb[0].mxu0
    %v314 = vadd.f32 0.0, %v313
    %315 = vdwg.mxu0
    %316 = vmatprep.subr.mxu0 %v162
    %317 = vmatpush1.msra.mxu0 %v161
    %318 = vmatprep.subr.mxu0 %v168
    %319 = vmatpush1.msra.mxu0 %v167
    %320 = vmatprep.subr.mxu0 %v174
    %321 = vmatpush1.msra.mxu0 %v173
    %322 = vmatprep.subr.mxu0 %v207
    %323 = vmatpush1.msra.mxu0 %v204
    %324 = vmatprep.subr.mxu0 0.0
    %325 = vmatpush1.msra.mxu0 0.0
    %326 = vmatprep.subr.mxu0 0.0
    %327 = vmatpush1.msra.mxu0 0.0
    %328 = vmatprep.subr.mxu0 0.0
    %329 = vmatpush1.msra.mxu0 0.0
    %330 = vmatprep.subr.mxu0 0.0
    %331 = vmatpush1.msra.mxu0 0.0
    %332 = vmatprep.subr.mxu0 0.0
    %333 = vmatpush1.msra.mxu0 0.0
    %334 = vmatprep.subr.mxu0 0.0
    %335 = vmatpush1.msra.mxu0 0.0
    %336 = vmatprep.subr.mxu0 0.0
    %337 = vmatpush1.msra.mxu0 0.0
    %338 = vmatprep.subr.mxu0 0.0
    %339 = vmatpush1.msra.mxu0 0.0
    %340 = vmatprep.subr.mxu0 0.0
    %341 = vmatpush1.msra.mxu0 0.0
    %342 = vmatprep.subr.mxu0 0.0
    %343 = vmatpush1.msra.mxu0 0.0
    %344 = vmatprep.subr.mxu0 0.0
    %345 = vmatpush1.msra.mxu0 0.0
    %346 = vmatprep.subr.mxu0 0.0
    %347 = vmatpush1.msra.mxu0 0.0
    %348 = vmatprep.subr.mxu0 0.0
    %349 = vmatpush1.msra.mxu0 0.0
    %350 = vmatprep.subr.mxu0 0.0
    %351 = vmatpush1.msra.mxu0 0.0
    %352 = vmatprep.subr.mxu0 0.0
    %353 = vmatpush1.msra.mxu0 0.0
    %354 = vmatprep.subr.mxu0 0.0
    %355 = vmatpush1.msra.mxu0 0.0
    %356 = vmatprep.subr.mxu0 0.0
    %357 = vmatpush1.msra.mxu0 0.0
    %358 = vmatprep.subr.mxu0 0.0
    %359 = vmatpush1.msra.mxu0 0.0
    %360 = vmatprep.subr.mxu0 0.0
    %361 = vmatpush1.msra.mxu0 0.0
    %362 = vmatprep.subr.mxu0 0.0
    %363 = vmatpush1.msra.mxu0 0.0
    %364 = vmatprep.subr.mxu0 0.0
    %365 = vmatpush1.msra.mxu0 0.0
    %366 = vmatprep.subr.mxu0 0.0
    %367 = vmatpush1.msra.mxu0 0.0
    %368 = vmatprep.subr.mxu0 0.0
    %369 = vmatpush1.msra.mxu0 0.0
    %370 = vmatprep.subr.mxu0 0.0
    %371 = vmatpush1.msra.mxu0 0.0
    %372 = vmatprep.subr.mxu0 0.0
    %373 = vmatpush1.msra.mxu0 0.0
    %374 = vmatprep.subr.mxu0 0.0
    %375 = vmatpush1.msra.mxu0 0.0
    %376 = vmatprep.subr.mxu0 0.0
    %377 = vmatpush1.msra.mxu0 0.0
    %378 = vmatprep.subr.mxu0 0.0
    %379 = vmatpush1.msra.mxu0 0.0
    %380 = vmatprep.mubr.f32.mxu0 0.0
    %381 = vmatmul.mubr.f32.gmra.mrb[0].mxu0 %v184
    %v382 = vpop.f32.mrb[0].mxu0
    %v383 = vadd.f32 0.0, %v382
    %v384 = vpop.f32.mrb[0].mxu0
    %v385 = vadd.f32 0.0, %v384
    %386 = vmatprep.mubr.f32.mxu0 0.0
    %387 = vmatmul.mubr.f32.gmra.mrb[0].mxu0 %v186
    %v388 = vpop.f32.mrb[0].mxu0
    %v389 = vadd.f32 0.0, %v388
    %v390 = vpop.f32.mrb[0].mxu0
    %v391 = vadd.f32 0.0, %v390
    %392 = vmatprep.mubr.f32.mxu0 0.0
    %393 = vmatmul.mubr.f32.gmra.mrb[0].mxu0 %v188
    %v394 = vpop.f32.mrb[0].mxu0
    %v395 = vadd.f32 0.0, %v394
    %v396 = vpop.f32.mrb[0].mxu0
    %v397 = vadd.f32 0.0, %v396
    %398 = vmatprep.mubr.f32.mxu0 0.0
    %399 = vmatmul.mubr.f32.gmra.mrb[0].mxu0 %v190
    %v400 = vpop.f32.mrb[0].mxu0
    %v401 = vadd.f32 0.0, %v400
    %v402 = vpop.f32.mrb[0].mxu0
    %v403 = vadd.f32 0.0, %v402
    %404 = vmatprep.mubr.f32.mxu0 0.0
    %405 = vmatmul.mubr.f32.gmra.mrb[0].mxu0 %v192
    %v406 = vpop.f32.mrb[0].mxu0
    %v407 = vadd.f32 0.0, %v406
    %v408 = vpop.f32.mrb[0].mxu0
    %v409 = vadd.f32 0.0, %v408
    %410 = vmatprep.mubr.f32.mxu0 0.0
    %411 = vmatmul.mubr.f32.gmra.mrb[0].mxu0 %v194
    %v412 = vpop.f32.mrb[0].mxu0
    %v413 = vadd.f32 0.0, %v412
    %v414 = vpop.f32.mrb[0].mxu0
    %v415 = vadd.f32 0.0, %v414
    %416 = vdwg.mxu0
    %417 = vmatprep.subr.mxu0 %v164
    %418 = vmatpush1.msra.mxu0 %v163
    %419 = vmatprep.subr.mxu0 %v170
    %420 = vmatpush1.msra.mxu0 %v169
    %421 = vmatprep.subr.mxu0 %v176
    %422 = vmatpush1.msra.mxu0 %v175
    %423 = vmatprep.subr.mxu0 %v213
    %424 = vmatpush1.msra.mxu0 %v210
    %425 = vmatprep.subr.mxu0 0.0
    %426 = vmatpush1.msra.mxu0 0.0
    %427 = vmatprep.subr.mxu0 0.0
    %428 = vmatpush1.msra.mxu0 0.0
    %429 = vmatprep.subr.mxu0 0.0
    %430 = vmatpush1.msra.mxu0 0.0
    %431 = vmatprep.subr.mxu0 0.0
    %432 = vmatpush1.msra.mxu0 0.0
    %433 = vmatprep.subr.mxu0 0.0
    %434 = vmatpush1.msra.mxu0 0.0
    %435 = vmatprep.subr.mxu0 0.0
    %436 = vmatpush1.msra.mxu0 0.0
    %437 = vmatprep.subr.mxu0 0.0
    %438 = vmatpush1.msra.mxu0 0.0
    %439 = vmatprep.subr.mxu0 0.0
    %440 = vmatpush1.msra.mxu0 0.0
    %441 = vmatprep.subr.mxu0 0.0
    %442 = vmatpush1.msra.mxu0 0.0
    %443 = vmatprep.subr.mxu0 0.0
    %444 = vmatpush1.msra.mxu0 0.0
    %445 = vmatprep.subr.mxu0 0.0
    %446 = vmatpush1.msra.mxu0 0.0
    %447 = vmatprep.subr.mxu0 0.0
    %448 = vmatpush1.msra.mxu0 0.0
    %449 = vmatprep.subr.mxu0 0.0
    %450 = vmatpush1.msra.mxu0 0.0
    %451 = vmatprep.subr.mxu0 0.0
    %452 = vmatpush1.msra.mxu0 0.0
    %453 = vmatprep.subr.mxu0 0.0
    %454 = vmatpush1.msra.mxu0 0.0
    %455 = vmatprep.subr.mxu0 0.0
    %456 = vmatpush1.msra.mxu0 0.0
    %457 = vmatprep.subr.mxu0 0.0
    %458 = vmatpush1.msra.mxu0 0.0
    %459 = vmatprep.subr.mxu0 0.0
    %460 = vmatpush1.msra.mxu0 0.0
    %461 = vmatprep.subr.mxu0 0.0
    %462 = vmatpush1.msra.mxu0 0.0
    %463 = vmatprep.subr.mxu0 0.0
    %464 = vmatpush1.msra.mxu0 0.0
    %465 = vmatprep.subr.mxu0 0.0
    %466 = vmatpush1.msra.mxu0 0.0
    %467 = vmatprep.subr.mxu0 0.0
    %468 = vmatpush1.msra.mxu0 0.0
    %469 = vmatprep.subr.mxu0 0.0
    %470 = vmatpush1.msra.mxu0 0.0
    %471 = vmatprep.subr.mxu0 0.0
    %472 = vmatpush1.msra.mxu0 0.0
    %473 = vmatprep.subr.mxu0 0.0
    %474 = vmatpush1.msra.mxu0 0.0
    %475 = vmatprep.subr.mxu0 0.0
    %476 = vmatpush1.msra.mxu0 0.0
    %477 = vmatprep.subr.mxu0 0.0
    %478 = vmatpush1.msra.mxu0 0.0
    %479 = vmatprep.subr.mxu0 0.0
    %480 = vmatpush1.msra.mxu0 0.0
    %481 = vmatprep.mubr.f32.mxu0 0.0
    %482 = vmatmul.mubr.f32.gmra.mrb[0].mxu0 %v184
    %v483 = vpop.f32.mrb[0].mxu0
    %v484 = vadd.f32 0.0, %v483
    %v485 = vpop.f32.mrb[0].mxu0
    %v486 = vadd.f32 0.0, %v485
    %487 = vmatprep.mubr.f32.mxu0 0.0
    %488 = vmatmul.mubr.f32.gmra.mrb[0].mxu0 %v186
    %v489 = vpop.f32.mrb[0].mxu0
    %v490 = vadd.f32 0.0, %v489
    %v491 = vpop.f32.mrb[0].mxu0
    %v492 = vadd.f32 0.0, %v491
    %493 = vmatprep.mubr.f32.mxu0 0.0
    %494 = vmatmul.mubr.f32.gmra.mrb[0].mxu0 %v188
    %v495 = vpop.f32.mrb[0].mxu0
    %v496 = vadd.f32 0.0, %v495
    %v497 = vpop.f32.mrb[0].mxu0
    %v498 = vadd.f32 0.0, %v497
    %499 = vmatprep.mubr.f32.mxu0 0.0
    %500 = vmatmul.mubr.f32.gmra.mrb[0].mxu0 %v190
    %v501 = vpop.f32.mrb[0].mxu0
    %v502 = vadd.f32 0.0, %v501
    %v503 = vpop.f32.mrb[0].mxu0
    %v504 = vadd.f32 0.0, %v503
    %505 = vmatprep.mubr.f32.mxu0 0.0
    %506 = vmatmul.mubr.f32.gmra.mrb[0].mxu0 %v192
    %v507 = vpop.f32.mrb[0].mxu0
    %v508 = vadd.f32 0.0, %v507
    %v509 = vpop.f32.mrb[0].mxu0
    %v510 = vadd.f32 0.0, %v509
    %511 = vmatprep.mubr.f32.mxu0 0.0
    %512 = vmatmul.mubr.f32.gmra.mrb[0].mxu0 %v194
    %v513 = vpop.f32.mrb[0].mxu0
    %v514 = vadd.f32 0.0, %v513
    %v515 = vpop.f32.mrb[0].mxu0
    %v516 = vadd.f32 0.0, %v515
    %517 = vdwg.mxu0
    %v518 = vsel %vm183, %v103, 0
    %v520 = vsel %vm183, %v104, 0
    %v522 = vsel %vm183, %v105, 0
    %v524 = vsel %vm183, %v107, 0
    %v526 = vsel %vm183, %v108, 0
    %v528 = vsel %vm183, %v109, 0
    %v531 = vsel %vm196, %v129, 0
    %v534 = vsel %vm196, %v130, 0
    %v537 = vsel %vm196, %v131, 0
    %v540 = vsel %vm196, %v132, 0
    %v543 = vsel %vm196, %v133, 0
    %v546 = vsel %vm196, %v134, 0
    %548 = vmatprep.subr.mxu0 %v112
    %549 = vmatpush1.msra.mxu0 %v111
    %550 = vmatprep.subr.mxu0 %v118
    %551 = vmatpush1.msra.mxu0 %v117
    %552 = vmatprep.subr.mxu0 %v124
    %553 = vmatpush1.msra.mxu0 %v123
    %554 = vmatprep.subr.mxu0 %v534
    %555 = vmatpush1.msra.mxu0 %v531
    %556 = vmatprep.subr.mxu0 0.0
    %557 = vmatpush1.msra.mxu0 0.0
    %558 = vmatprep.subr.mxu0 0.0
    %559 = vmatpush1.msra.mxu0 0.0
    %560 = vmatprep.subr.mxu0 0.0
    %561 = vmatpush1.msra.mxu0 0.0
    %562 = vmatprep.subr.mxu0 0.0
    %563 = vmatpush1.msra.mxu0 0.0
    %564 = vmatprep.subr.mxu0 0.0
    %565 = vmatpush1.msra.mxu0 0.0
    %566 = vmatprep.subr.mxu0 0.0
    %567 = vmatpush1.msra.mxu0 0.0
    %568 = vmatprep.subr.mxu0 0.0
    %569 = vmatpush1.msra.mxu0 0.0
    %570 = vmatprep.subr.mxu0 0.0
    %571 = vmatpush1.msra.mxu0 0.0
    %572 = vmatprep.subr.mxu0 0.0
    %573 = vmatpush1.msra.mxu0 0.0
    %574 = vmatprep.subr.mxu0 0.0
    %575 = vmatpush1.msra.mxu0 0.0
    %576 = vmatprep.subr.mxu0 0.0
    %577 = vmatpush1.msra.mxu0 0.0
    %578 = vmatprep.subr.mxu0 0.0
    %579 = vmatpush1.msra.mxu0 0.0
    %580 = vmatprep.subr.mxu0 0.0
    %581 = vmatpush1.msra.mxu0 0.0
    %582 = vmatprep.subr.mxu0 0.0
    %583 = vmatpush1.msra.mxu0 0.0
    %584 = vmatprep.subr.mxu0 0.0
    %585 = vmatpush1.msra.mxu0 0.0
    %586 = vmatprep.subr.mxu0 0.0
    %587 = vmatpush1.msra.mxu0 0.0
    %588 = vmatprep.subr.mxu0 0.0
    %589 = vmatpush1.msra.mxu0 0.0
    %590 = vmatprep.subr.mxu0 0.0
    %591 = vmatpush1.msra.mxu0 0.0
    %592 = vmatprep.subr.mxu0 0.0
    %593 = vmatpush1.msra.mxu0 0.0
    %594 = vmatprep.subr.mxu0 0.0
    %595 = vmatpush1.msra.mxu0 0.0
    %596 = vmatprep.subr.mxu0 0.0
    %597 = vmatpush1.msra.mxu0 0.0
    %598 = vmatprep.subr.mxu0 0.0
    %599 = vmatpush1.msra.mxu0 0.0
    %600 = vmatprep.subr.mxu0 0.0
    %601 = vmatpush1.msra.mxu0 0.0
    %602 = vmatprep.subr.mxu0 0.0
    %603 = vmatpush1.msra.mxu0 0.0
    %604 = vmatprep.subr.mxu0 0.0
    %605 = vmatpush1.msra.mxu0 0.0
    %606 = vmatprep.subr.mxu0 0.0
    %607 = vmatpush1.msra.mxu0 0.0
    %608 = vmatprep.subr.mxu0 0.0
    %609 = vmatpush1.msra.mxu0 0.0
    %610 = vmatprep.subr.mxu0 0.0
    %611 = vmatpush1.msra.mxu0 0.0
    %612 = vmatprep.mubr.f32.mxu0 0.0
    %613 = vmatmul.mubr.f32.gmra.mrb[0].mxu0 %v518
    %v614 = vpop.f32.mrb[0].mxu0
    %v615 = vadd.f32 %v282, %v614
    %v616 = vpop.f32.mrb[0].mxu0
    %v617 = vadd.f32 %v284, %v616
    %618 = vmatprep.mubr.f32.mxu0 0.0
    %619 = vmatmul.mubr.f32.gmra.mrb[0].mxu0 %v520
    %v620 = vpop.f32.mrb[0].mxu0
    %v621 = vadd.f32 %v288, %v620
    %v622 = vpop.f32.mrb[0].mxu0
    %v623 = vadd.f32 %v290, %v622
    %624 = vmatprep.mubr.f32.mxu0 0.0
    %625 = vmatmul.mubr.f32.gmra.mrb[0].mxu0 %v522
    %v626 = vpop.f32.mrb[0].mxu0
    %v627 = vadd.f32 %v294, %v626
    %v628 = vpop.f32.mrb[0].mxu0
    %v629 = vadd.f32 %v296, %v628
    %630 = vmatprep.mubr.f32.mxu0 0.0
    %631 = vmatmul.mubr.f32.gmra.mrb[0].mxu0 %v524
    %v632 = vpop.f32.mrb[0].mxu0
    %v633 = vadd.f32 %v300, %v632
    %v634 = vpop.f32.mrb[0].mxu0
    %v635 = vadd.f32 %v302, %v634
    %636 = vmatprep.mubr.f32.mxu0 0.0
    %637 = vmatmul.mubr.f32.gmra.mrb[0].mxu0 %v526
    %v638 = vpop.f32.mrb[0].mxu0
    %v639 = vadd.f32 %v306, %v638
    %v640 = vpop.f32.mrb[0].mxu0
    %v641 = vadd.f32 %v308, %v640
    %642 = vmatprep.mubr.f32.mxu0 0.0
    %643 = vmatmul.mubr.f32.gmra.mrb[0].mxu0 %v528
    %v644 = vpop.f32.mrb[0].mxu0
    %v645 = vadd.f32 %v312, %v644
    %v646 = vpop.f32.mrb[0].mxu0
    %v647 = vadd.f32 %v314, %v646
    %648 = vdwg.mxu0
    %649 = vmatprep.subr.mxu0 %v114
    %650 = vmatpush1.msra.mxu0 %v113
    %651 = vmatprep.subr.mxu0 %v120
    %652 = vmatpush1.msra.mxu0 %v119
    %653 = vmatprep.subr.mxu0 %v126
    %654 = vmatpush1.msra.mxu0 %v125
    %655 = vmatprep.subr.mxu0 %v540
    %656 = vmatpush1.msra.mxu0 %v537
    %657 = vmatprep.subr.mxu0 0.0
    %658 = vmatpush1.msra.mxu0 0.0
    %659 = vmatprep.subr.mxu0 0.0
    %660 = vmatpush1.msra.mxu0 0.0
    %661 = vmatprep.subr.mxu0 0.0
    %662 = vmatpush1.msra.mxu0 0.0
    %663 = vmatprep.subr.mxu0 0.0
    %664 = vmatpush1.msra.mxu0 0.0
    %665 = vmatprep.subr.mxu0 0.0
    %666 = vmatpush1.msra.mxu0 0.0
    %667 = vmatprep.subr.mxu0 0.0
    %668 = vmatpush1.msra.mxu0 0.0
    %669 = vmatprep.subr.mxu0 0.0
    %670 = vmatpush1.msra.mxu0 0.0
    %671 = vmatprep.subr.mxu0 0.0
    %672 = vmatpush1.msra.mxu0 0.0
    %673 = vmatprep.subr.mxu0 0.0
    %674 = vmatpush1.msra.mxu0 0.0
    %675 = vmatprep.subr.mxu0 0.0
    %676 = vmatpush1.msra.mxu0 0.0
    %677 = vmatprep.subr.mxu0 0.0
    %678 = vmatpush1.msra.mxu0 0.0
    %679 = vmatprep.subr.mxu0 0.0
    %680 = vmatpush1.msra.mxu0 0.0
    %681 = vmatprep.subr.mxu0 0.0
    %682 = vmatpush1.msra.mxu0 0.0
    %683 = vmatprep.subr.mxu0 0.0
    %684 = vmatpush1.msra.mxu0 0.0
    %685 = vmatprep.subr.mxu0 0.0
    %686 = vmatpush1.msra.mxu0 0.0
    %687 = vmatprep.subr.mxu0 0.0
    %688 = vmatpush1.msra.mxu0 0.0
    %689 = vmatprep.subr.mxu0 0.0
    %690 = vmatpush1.msra.mxu0 0.0
    %691 = vmatprep.subr.mxu0 0.0
    %692 = vmatpush1.msra.mxu0 0.0
    %693 = vmatprep.subr.mxu0 0.0
    %694 = vmatpush1.msra.mxu0 0.0
    %695 = vmatprep.subr.mxu0 0.0
    %696 = vmatpush1.msra.mxu0 0.0
    %697 = vmatprep.subr.mxu0 0.0
    %698 = vmatpush1.msra.mxu0 0.0
    %699 = vmatprep.subr.mxu0 0.0
    %700 = vmatpush1.msra.mxu0 0.0
    %701 = vmatprep.subr.mxu0 0.0
    %702 = vmatpush1.msra.mxu0 0.0
    %703 = vmatprep.subr.mxu0 0.0
    %704 = vmatpush1.msra.mxu0 0.0
    %705 = vmatprep.subr.mxu0 0.0
    %706 = vmatpush1.msra.mxu0 0.0
    %707 = vmatprep.subr.mxu0 0.0
    %708 = vmatpush1.msra.mxu0 0.0
    %709 = vmatprep.subr.mxu0 0.0
    %710 = vmatpush1.msra.mxu0 0.0
    %711 = vmatprep.subr.mxu0 0.0
    %712 = vmatpush1.msra.mxu0 0.0
    %713 = vmatprep.mubr.f32.mxu0 0.0
    %714 = vmatmul.mubr.f32.gmra.mrb[0].mxu0 %v518
    %v715 = vpop.f32.mrb[0].mxu0
    %v716 = vadd.f32 %v383, %v715
    %v717 = vpop.f32.mrb[0].mxu0
    %v718 = vadd.f32 %v385, %v717
    %719 = vmatprep.mubr.f32.mxu0 0.0
    %720 = vmatmul.mubr.f32.gmra.mrb[0].mxu0 %v520
    %v721 = vpop.f32.mrb[0].mxu0
    %v722 = vadd.f32 %v389, %v721
    %v723 = vpop.f32.mrb[0].mxu0
    %v724 = vadd.f32 %v391, %v723
    %725 = vmatprep.mubr.f32.mxu0 0.0
    %726 = vmatmul.mubr.f32.gmra.mrb[0].mxu0 %v522
    %v727 = vpop.f32.mrb[0].mxu0
    %v728 = vadd.f32 %v395, %v727
    %v729 = vpop.f32.mrb[0].mxu0
    %v730 = vadd.f32 %v397, %v729
    %731 = vmatprep.mubr.f32.mxu0 0.0
    %732 = vmatmul.mubr.f32.gmra.mrb[0].mxu0 %v524
    %v733 = vpop.f32.mrb[0].mxu0
    %v734 = vadd.f32 %v401, %v733
    %v735 = vpop.f32.mrb[0].mxu0
    %v736 = vadd.f32 %v403, %v735
    %737 = vmatprep.mubr.f32.mxu0 0.0
    %738 = vmatmul.mubr.f32.gmra.mrb[0].mxu0 %v526
    %v739 = vpop.f32.mrb[0].mxu0
    %v740 = vadd.f32 %v407, %v739
    %v741 = vpop.f32.mrb[0].mxu0
    %v742 = vadd.f32 %v409, %v741
    %743 = vmatprep.mubr.f32.mxu0 0.0
    %744 = vmatmul.mubr.f32.gmra.mrb[0].mxu0 %v528
    %v745 = vpop.f32.mrb[0].mxu0
    %v746 = vadd.f32 %v413, %v745
    %v747 = vpop.f32.mrb[0].mxu0
    %v748 = vadd.f32 %v415, %v747
    %749 = vdwg.mxu0
    %750 = vmatprep.subr.mxu0 %v116
    %751 = vmatpush1.msra.mxu0 %v115
    %752 = vmatprep.subr.mxu0 %v122
    %753 = vmatpush1.msra.mxu0 %v121
    %754 = vmatprep.subr.mxu0 %v128
    %755 = vmatpush1.msra.mxu0 %v127
    %756 = vmatprep.subr.mxu0 %v546
    %757 = vmatpush1.msra.mxu0 %v543
    %758 = vmatprep.subr.mxu0 0.0
    %759 = vmatpush1.msra.mxu0 0.0
    %760 = vmatprep.subr.mxu0 0.0
    %761 = vmatpush1.msra.mxu0 0.0
    %762 = vmatprep.subr.mxu0 0.0
    %763 = vmatpush1.msra.mxu0 0.0
    %764 = vmatprep.subr.mxu0 0.0
    %765 = vmatpush1.msra.mxu0 0.0
    %766 = vmatprep.subr.mxu0 0.0
    %767 = vmatpush1.msra.mxu0 0.0
    %768 = vmatprep.subr.mxu0 0.0
    %769 = vmatpush1.msra.mxu0 0.0
    %770 = vmatprep.subr.mxu0 0.0
    %771 = vmatpush1.msra.mxu0 0.0
    %772 = vmatprep.subr.mxu0 0.0
    %773 = vmatpush1.msra.mxu0 0.0
    %774 = vmatprep.subr.mxu0 0.0
    %775 = vmatpush1.msra.mxu0 0.0
    %776 = vmatprep.subr.mxu0 0.0
    %777 = vmatpush1.msra.mxu0 0.0
    %778 = vmatprep.subr.mxu0 0.0
    %779 = vmatpush1.msra.mxu0 0.0
    %780 = vmatprep.subr.mxu0 0.0
    %781 = vmatpush1.msra.mxu0 0.0
    %782 = vmatprep.subr.mxu0 0.0
    %783 = vmatpush1.msra.mxu0 0.0
    %784 = vmatprep.subr.mxu0 0.0
    %785 = vmatpush1.msra.mxu0 0.0
    %786 = vmatprep.subr.mxu0 0.0
    %787 = vmatpush1.msra.mxu0 0.0
    %788 = vmatprep.subr.mxu0 0.0
    %789 = vmatpush1.msra.mxu0 0.0
    %790 = vmatprep.subr.mxu0 0.0
    %791 = vmatpush1.msra.mxu0 0.0
    %792 = vmatprep.subr.mxu0 0.0
    %793 = vmatpush1.msra.mxu0 0.0
    %794 = vmatprep.subr.mxu0 0.0
    %795 = vmatpush1.msra.mxu0 0.0
    %796 = vmatprep.subr.mxu0 0.0
    %797 = vmatpush1.msra.mxu0 0.0
    %798 = vmatprep.subr.mxu0 0.0
    %799 = vmatpush1.msra.mxu0 0.0
    %800 = vmatprep.subr.mxu0 0.0
    %801 = vmatpush1.msra.mxu0 0.0
    %802 = vmatprep.subr.mxu0 0.0
    %803 = vmatpush1.msra.mxu0 0.0
    %804 = vmatprep.subr.mxu0 0.0
    %805 = vmatpush1.msra.mxu0 0.0
    %806 = vmatprep.subr.mxu0 0.0
    %807 = vmatpush1.msra.mxu0 0.0
    %808 = vmatprep.subr.mxu0 0.0
    %809 = vmatpush1.msra.mxu0 0.0
    %810 = vmatprep.subr.mxu0 0.0
    %811 = vmatpush1.msra.mxu0 0.0
    %812 = vmatprep.subr.mxu0 0.0
    %813 = vmatpush1.msra.mxu0 0.0
    %814 = vmatprep.mubr.f32.mxu0 0.0
    %815 = vmatmul.mubr.f32.gmra.mrb[0].mxu0 %v518
    %v816 = vpop.f32.mrb[0].mxu0
    %v817 = vadd.f32 %v484, %v816
    %v818 = vpop.f32.mrb[0].mxu0
    %v819 = vadd.f32 %v486, %v818
    %820 = vmatprep.mubr.f32.mxu0 0.0
    %821 = vmatmul.mubr.f32.gmra.mrb[0].mxu0 %v520
    %v822 = vpop.f32.mrb[0].mxu0
    %v823 = vadd.f32 %v490, %v822
    %v824 = vpop.f32.mrb[0].mxu0
    %v825 = vadd.f32 %v492, %v824
    %826 = vmatprep.mubr.f32.mxu0 0.0
    %827 = vmatmul.mubr.f32.gmra.mrb[0].mxu0 %v522
    %v828 = vpop.f32.mrb[0].mxu0
    %v829 = vadd.f32 %v496, %v828
    %v830 = vpop.f32.mrb[0].mxu0
    %v831 = vadd.f32 %v498, %v830
    %832 = vmatprep.mubr.f32.mxu0 0.0
    %833 = vmatmul.mubr.f32.gmra.mrb[0].mxu0 %v524
    %v834 = vpop.f32.mrb[0].mxu0
    %v835 = vadd.f32 %v502, %v834
    %v836 = vpop.f32.mrb[0].mxu0
    %v837 = vadd.f32 %v504, %v836
    %838 = vmatprep.mubr.f32.mxu0 0.0
    %839 = vmatmul.mubr.f32.gmra.mrb[0].mxu0 %v526
    %v840 = vpop.f32.mrb[0].mxu0
    %v841 = vadd.f32 %v508, %v840
    %v842 = vpop.f32.mrb[0].mxu0
    %v843 = vadd.f32 %v510, %v842
    %844 = vmatprep.mubr.f32.mxu0 0.0
    %845 = vmatmul.mubr.f32.gmra.mrb[0].mxu0 %v528
    %v846 = vpop.f32.mrb[0].mxu0
    %v847 = vadd.f32 %v514, %v846
    %v848 = vpop.f32.mrb[0].mxu0
    %v849 = vadd.f32 %v516, %v848
    %850 = vdwg.mxu0
    %vm851 = vcmask 1045504
    %v852 = vrot.slane %v103, 2
    %v853 = vrot.slane %v104, 2
    %v854 = vsel %vm851, %v852, %v853
    %v855 = vrot.slane %v105, 2
    %v856 = vsel %vm851, %v853, %v855
    %v857 = vrot.slane %v106, 2
    %v858 = vsel %vm851, %v855, %v857
    %v859 = vrot.slane %v107, 2
    %v860 = vrot.slane %v108, 2
    %v861 = vsel %vm851, %v859, %v860
    %v862 = vrot.slane %v109, 2
    %v863 = vsel %vm851, %v860, %v862
    %v864 = vrot.slane %v110, 2
    %v865 = vsel %vm851, %v862, %v864
    %s866 = scalar_lea.vmem [#allocation2], 384
    %v867 = vld [vmem:[%s866] sm:$0xff]
    %v868 = vld [vmem:[%s866 + $0x8] sm:$0xff]
    %v869 = vld [vmem:[%s866 + $0x10] sm:$0xff]
    %v870 = vld [vmem:[%s866 + $0x18] sm:$0xff]
    %v871 = vld [vmem:[%s866 + $0x20] sm:$0xff]
    %v872 = vld [vmem:[%s866 + $0x28] sm:$0xff]
    %v873 = vld [vmem:[%s866 + $0x30] sm:$0xff]
    %v874 = vld [vmem:[%s866 + $0x38] sm:$0xff]
    %v875 = vld [vmem:[%s866 + $0x40] sm:$0xff]
    %v876 = vld [vmem:[%s866 + $0x48] sm:$0xff]
    %v877 = vld [vmem:[%s866 + $0x50] sm:$0xff]
    %v878 = vld [vmem:[%s866 + $0x58] sm:$0xff]
    %v879 = vld [vmem:[%s866 + $0x60] sm:$0xff]
    %v880 = vld [vmem:[%s866 + $0x68] sm:$0xff]
    %v881 = vld [vmem:[%s866 + $0x70] sm:$0xff]
    %v882 = vld [vmem:[%s866 + $0x78] sm:$0xff]
    %v883 = vld [vmem:[%s866 + $0x80] sm:$0xff]
    %v884 = vld [vmem:[%s866 + $0x88] sm:$0xff]
    %v885 = vld [vmem:[%s866 + $0x90] sm:$0xf]
    %v886 = vld [vmem:[%s866 + $0x98] sm:$0xf]
    %v887 = vld [vmem:[%s866 + $0xa0] sm:$0xf]
    %v888 = vld [vmem:[%s866 + $0xa8] sm:$0xf]
    %v889 = vld [vmem:[%s866 + $0xb0] sm:$0xf]
    %v890 = vld [vmem:[%s866 + $0xb8] sm:$0xf]
    %v891 = vsel %vm183, %v854, 0
    %v893 = vsel %vm183, %v856, 0
    %v895 = vsel %vm183, %v858, 0
    %v897 = vsel %vm183, %v861, 0
    %v899 = vsel %vm183, %v863, 0
    %v901 = vsel %vm183, %v865, 0
    %v904 = vsel %vm196, %v885, 0
    %v907 = vsel %vm196, %v886, 0
    %v910 = vsel %vm196, %v887, 0
    %v913 = vsel %vm196, %v888, 0
    %v916 = vsel %vm196, %v889, 0
    %v919 = vsel %vm196, %v890, 0
    %921 = vmatprep.subr.mxu0 %v868
    %922 = vmatpush1.msra.mxu0 %v867
    %923 = vmatprep.subr.mxu0 %v874
    %924 = vmatpush1.msra.mxu0 %v873
    %925 = vmatprep.subr.mxu0 %v880
    %926 = vmatpush1.msra.mxu0 %v879
    %927 = vmatprep.subr.mxu0 %v907
    %928 = vmatpush1.msra.mxu0 %v904
    %929 = vmatprep.subr.mxu0 0.0
    %930 = vmatpush1.msra.mxu0 0.0
    %931 = vmatprep.subr.mxu0 0.0
    %932 = vmatpush1.msra.mxu0 0.0
    %933 = vmatprep.subr.mxu0 0.0
    %934 = vmatpush1.msra.mxu0 0.0
    %935 = vmatprep.subr.mxu0 0.0
    %936 = vmatpush1.msra.mxu0 0.0
    %937 = vmatprep.subr.mxu0 0.0
    %938 = vmatpush1.msra.mxu0 0.0
    %939 = vmatprep.subr.mxu0 0.0
    %940 = vmatpush1.msra.mxu0 0.0
    %941 = vmatprep.subr.mxu0 0.0
    %942 = vmatpush1.msra.mxu0 0.0
    %943 = vmatprep.subr.mxu0 0.0
    %944 = vmatpush1.msra.mxu0 0.0
    %945 = vmatprep.subr.mxu0 0.0
    %946 = vmatpush1.msra.mxu0 0.0
    %947 = vmatprep.subr.mxu0 0.0
    %948 = vmatpush1.msra.mxu0 0.0
    %949 = vmatprep.subr.mxu0 0.0
    %950 = vmatpush1.msra.mxu0 0.0
    %951 = vmatprep.subr.mxu0 0.0
    %952 = vmatpush1.msra.mxu0 0.0
    %953 = vmatprep.subr.mxu0 0.0
    %954 = vmatpush1.msra.mxu0 0.0
    %955 = vmatprep.subr.mxu0 0.0
    %956 = vmatpush1.msra.mxu0 0.0
    %957 = vmatprep.subr.mxu0 0.0
    %958 = vmatpush1.msra.mxu0 0.0
    %959 = vmatprep.subr.mxu0 0.0
    %960 = vmatpush1.msra.mxu0 0.0
    %961 = vmatprep.subr.mxu0 0.0
    %962 = vmatpush1.msra.mxu0 0.0
    %963 = vmatprep.subr.mxu0 0.0
    %964 = vmatpush1.msra.mxu0 0.0
    %965 = vmatprep.subr.mxu0 0.0
    %966 = vmatpush1.msra.mxu0 0.0
    %967 = vmatprep.subr.mxu0 0.0
    %968 = vmatpush1.msra.mxu0 0.0
    %969 = vmatprep.subr.mxu0 0.0
    %970 = vmatpush1.msra.mxu0 0.0
    %971 = vmatprep.subr.mxu0 0.0
    %972 = vmatpush1.msra.mxu0 0.0
    %973 = vmatprep.subr.mxu0 0.0
    %974 = vmatpush1.msra.mxu0 0.0
    %975 = vmatprep.subr.mxu0 0.0
    %976 = vmatpush1.msra.mxu0 0.0
    %977 = vmatprep.subr.mxu0 0.0
    %978 = vmatpush1.msra.mxu0 0.0
    %979 = vmatprep.subr.mxu0 0.0
    %980 = vmatpush1.msra.mxu0 0.0
    %981 = vmatprep.subr.mxu0 0.0
    %982 = vmatpush1.msra.mxu0 0.0
    %983 = vmatprep.subr.mxu0 0.0
    %984 = vmatpush1.msra.mxu0 0.0
    %985 = vmatprep.mubr.f32.mxu0 0.0
    %986 = vmatmul.mubr.f32.gmra.mrb[0].mxu0 %v891
    %v987 = vpop.f32.mrb[0].mxu0
    %v988 = vadd.f32 0.0, %v987
    %v989 = vpop.f32.mrb[0].mxu0
    %v990 = vadd.f32 0.0, %v989
    %991 = vmatprep.mubr.f32.mxu0 0.0
    %992 = vmatmul.mubr.f32.gmra.mrb[0].mxu0 %v893
    %v993 = vpop.f32.mrb[0].mxu0
    %v994 = vadd.f32 0.0, %v993
    %v995 = vpop.f32.mrb[0].mxu0
    %v996 = vadd.f32 0.0, %v995
    %997 = vmatprep.mubr.f32.mxu0 0.0
    %998 = vmatmul.mubr.f32.gmra.mrb[0].mxu0 %v895
    %v999 = vpop.f32.mrb[0].mxu0
    %v1000 = vadd.f32 0.0, %v999
    %v1001 = vpop.f32.mrb[0].mxu0
    %v1002 = vadd.f32 0.0, %v1001
    %1003 = vmatprep.mubr.f32.mxu0 0.0
    %1004 = vmatmul.mubr.f32.gmra.mrb[0].mxu0 %v897
    %v1005 = vpop.f32.mrb[0].mxu0
    %v1006 = vadd.f32 0.0, %v1005
    %v1007 = vpop.f32.mrb[0].mxu0
    %v1008 = vadd.f32 0.0, %v1007
    %1009 = vmatprep.mubr.f32.mxu0 0.0
    %1010 = vmatmul.mubr.f32.gmra.mrb[0].mxu0 %v899
    %v1011 = vpop.f32.mrb[0].mxu0
    %v1012 = vadd.f32 0.0, %v1011
    %v1013 = vpop.f32.mrb[0].mxu0
    %v1014 = vadd.f32 0.0, %v1013
    %1015 = vmatprep.mubr.f32.mxu0 0.0
    %1016 = vmatmul.mubr.f32.gmra.mrb[0].mxu0 %v901
    %v1017 = vpop.f32.mrb[0].mxu0
    %v1018 = vadd.f32 0.0, %v1017
    %v1019 = vpop.f32.mrb[0].mxu0
    %v1020 = vadd.f32 0.0, %v1019
    %1021 = vdwg.mxu0
    %1022 = vmatprep.subr.mxu0 %v870
    %1023 = vmatpush1.msra.mxu0 %v869
    %1024 = vmatprep.subr.mxu0 %v876
    %1025 = vmatpush1.msra.mxu0 %v875
    %1026 = vmatprep.subr.mxu0 %v882
    %1027 = vmatpush1.msra.mxu0 %v881
    %1028 = vmatprep.subr.mxu0 %v913
    %1029 = vmatpush1.msra.mxu0 %v910
    %1030 = vmatprep.subr.mxu0 0.0
    %1031 = vmatpush1.msra.mxu0 0.0
    %1032 = vmatprep.subr.mxu0 0.0
    %1033 = vmatpush1.msra.mxu0 0.0
    %1034 = vmatprep.subr.mxu0 0.0
    %1035 = vmatpush1.msra.mxu0 0.0
    %1036 = vmatprep.subr.mxu0 0.0
    %1037 = vmatpush1.msra.mxu0 0.0
    %1038 = vmatprep.subr.mxu0 0.0
    %1039 = vmatpush1.msra.mxu0 0.0
    %1040 = vmatprep.subr.mxu0 0.0
    %1041 = vmatpush1.msra.mxu0 0.0
    %1042 = vmatprep.subr.mxu0 0.0
    %1043 = vmatpush1.msra.mxu0 0.0
    %1044 = vmatprep.subr.mxu0 0.0
    %1045 = vmatpush1.msra.mxu0 0.0
    %1046 = vmatprep.subr.mxu0 0.0
    %1047 = vmatpush1.msra.mxu0 0.0
    %1048 = vmatprep.subr.mxu0 0.0
    %1049 = vmatpush1.msra.mxu0 0.0
    %1050 = vmatprep.subr.mxu0 0.0
    %1051 = vmatpush1.msra.mxu0 0.0
    %1052 = vmatprep.subr.mxu0 0.0
    %1053 = vmatpush1.msra.mxu0 0.0
    %1054 = vmatprep.subr.mxu0 0.0
    %1055 = vmatpush1.msra.mxu0 0.0
    %1056 = vmatprep.subr.mxu0 0.0
    %1057 = vmatpush1.msra.mxu0 0.0
    %1058 = vmatprep.subr.mxu0 0.0
    %1059 = vmatpush1.msra.mxu0 0.0
    %1060 = vmatprep.subr.mxu0 0.0
    %1061 = vmatpush1.msra.mxu0 0.0
    %1062 = vmatprep.subr.mxu0 0.0
    %1063 = vmatpush1.msra.mxu0 0.0
    %1064 = vmatprep.subr.mxu0 0.0
    %1065 = vmatpush1.msra.mxu0 0.0
    %1066 = vmatprep.subr.mxu0 0.0
    %1067 = vmatpush1.msra.mxu0 0.0
    %1068 = vmatprep.subr.mxu0 0.0
    %1069 = vmatpush1.msra.mxu0 0.0
    %1070 = vmatprep.subr.mxu0 0.0
    %1071 = vmatpush1.msra.mxu0 0.0
    %1072 = vmatprep.subr.mxu0 0.0
    %1073 = vmatpush1.msra.mxu0 0.0
    %1074 = vmatprep.subr.mxu0 0.0
    %1075 = vmatpush1.msra.mxu0 0.0
    %1076 = vmatprep.subr.mxu0 0.0
    %1077 = vmatpush1.msra.mxu0 0.0
    %1078 = vmatprep.subr.mxu0 0.0
    %1079 = vmatpush1.msra.mxu0 0.0
    %1080 = vmatprep.subr.mxu0 0.0
    %1081 = vmatpush1.msra.mxu0 0.0
    %1082 = vmatprep.subr.mxu0 0.0
    %1083 = vmatpush1.msra.mxu0 0.0
    %1084 = vmatprep.subr.mxu0 0.0
    %1085 = vmatpush1.msra.mxu0 0.0
    %1086 = vmatprep.mubr.f32.mxu0 0.0
    %1087 = vmatmul.mubr.f32.gmra.mrb[0].mxu0 %v891
    %v1088 = vpop.f32.mrb[0].mxu0
    %v1089 = vadd.f32 0.0, %v1088
    %v1090 = vpop.f32.mrb[0].mxu0
    %v1091 = vadd.f32 0.0, %v1090
    %1092 = vmatprep.mubr.f32.mxu0 0.0
    %1093 = vmatmul.mubr.f32.gmra.mrb[0].mxu0 %v893
    %v1094 = vpop.f32.mrb[0].mxu0
    %v1095 = vadd.f32 0.0, %v1094
    %v1096 = vpop.f32.mrb[0].mxu0
    %v1097 = vadd.f32 0.0, %v1096
    %1098 = vmatprep.mubr.f32.mxu0 0.0
    %1099 = vmatmul.mubr.f32.gmra.mrb[0].mxu0 %v895
    %v1100 = vpop.f32.mrb[0].mxu0
    %v1101 = vadd.f32 0.0, %v1100
    %v1102 = vpop.f32.mrb[0].mxu0
    %v1103 = vadd.f32 0.0, %v1102
    %1104 = vmatprep.mubr.f32.mxu0 0.0
    %1105 = vmatmul.mubr.f32.gmra.mrb[0].mxu0 %v897
    %v1106 = vpop.f32.mrb[0].mxu0
    %v1107 = vadd.f32 0.0, %v1106
    %v1108 = vpop.f32.mrb[0].mxu0
    %v1109 = vadd.f32 0.0, %v1108
    %1110 = vmatprep.mubr.f32.mxu0 0.0
    %1111 = vmatmul.mubr.f32.gmra.mrb[0].mxu0 %v899
    %v1112 = vpop.f32.mrb[0].mxu0
    %v1113 = vadd.f32 0.0, %v1112
    %v1114 = vpop.f32.mrb[0].mxu0
    %v1115 = vadd.f32 0.0, %v1114
    %1116 = vmatprep.mubr.f32.mxu0 0.0
    %1117 = vmatmul.mubr.f32.gmra.mrb[0].mxu0 %v901
    %v1118 = vpop.f32.mrb[0].mxu0
    %v1119 = vadd.f32 0.0, %v1118
    %v1120 = vpop.f32.mrb[0].mxu0
    %v1121 = vadd.f32 0.0, %v1120
    %1122 = vdwg.mxu0
    %1123 = vmatprep.subr.mxu0 %v872
    %1124 = vmatpush1.msra.mxu0 %v871
    %1125 = vmatprep.subr.mxu0 %v878
    %1126 = vmatpush1.msra.mxu0 %v877
    %1127 = vmatprep.subr.mxu0 %v884
    %1128 = vmatpush1.msra.mxu0 %v883
    %1129 = vmatprep.subr.mxu0 %v919
    %1130 = vmatpush1.msra.mxu0 %v916
    %1131 = vmatprep.subr.mxu0 0.0
    %1132 = vmatpush1.msra.mxu0 0.0
    %1133 = vmatprep.subr.mxu0 0.0
    %1134 = vmatpush1.msra.mxu0 0.0
    %1135 = vmatprep.subr.mxu0 0.0
    %1136 = vmatpush1.msra.mxu0 0.0
    %1137 = vmatprep.subr.mxu0 0.0
    %1138 = vmatpush1.msra.mxu0 0.0
    %1139 = vmatprep.subr.mxu0 0.0
    %1140 = vmatpush1.msra.mxu0 0.0
    %1141 = vmatprep.subr.mxu0 0.0
    %1142 = vmatpush1.msra.mxu0 0.0
    %1143 = vmatprep.subr.mxu0 0.0
    %1144 = vmatpush1.msra.mxu0 0.0
    %1145 = vmatprep.subr.mxu0 0.0
    %1146 = vmatpush1.msra.mxu0 0.0
    %1147 = vmatprep.subr.mxu0 0.0
    %1148 = vmatpush1.msra.mxu0 0.0
    %1149 = vmatprep.subr.mxu0 0.0
    %1150 = vmatpush1.msra.mxu0 0.0
    %1151 = vmatprep.subr.mxu0 0.0
    %1152 = vmatpush1.msra.mxu0 0.0
    %1153 = vmatprep.subr.mxu0 0.0
    %1154 = vmatpush1.msra.mxu0 0.0
    %1155 = vmatprep.subr.mxu0 0.0
    %1156 = vmatpush1.msra.mxu0 0.0
    %1157 = vmatprep.subr.mxu0 0.0
    %1158 = vmatpush1.msra.mxu0 0.0
    %1159 = vmatprep.subr.mxu0 0.0
    %1160 = vmatpush1.msra.mxu0 0.0
    %1161 = vmatprep.subr.mxu0 0.0
    %1162 = vmatpush1.msra.mxu0 0.0
    %1163 = vmatprep.subr.mxu0 0.0
    %1164 = vmatpush1.msra.mxu0 0.0
    %1165 = vmatprep.subr.mxu0 0.0
    %1166 = vmatpush1.msra.mxu0 0.0
    %1167 = vmatprep.subr.mxu0 0.0
    %1168 = vmatpush1.msra.mxu0 0.0
    %1169 = vmatprep.subr.mxu0 0.0
    %1170 = vmatpush1.msra.mxu0 0.0
    %1171 = vmatprep.subr.mxu0 0.0
    %1172 = vmatpush1.msra.mxu0 0.0
    %1173 = vmatprep.subr.mxu0 0.0
    %1174 = vmatpush1.msra.mxu0 0.0
    %1175 = vmatprep.subr.mxu0 0.0
    %1176 = vmatpush1.msra.mxu0 0.0
    %1177 = vmatprep.subr.mxu0 0.0
    %1178 = vmatpush1.msra.mxu0 0.0
    %1179 = vmatprep.subr.mxu0 0.0
    %1180 = vmatpush1.msra.mxu0 0.0
    %1181 = vmatprep.subr.mxu0 0.0
    %1182 = vmatpush1.msra.mxu0 0.0
    %1183 = vmatprep.subr.mxu0 0.0
    %1184 = vmatpush1.msra.mxu0 0.0
    %1185 = vmatprep.subr.mxu0 0.0
    %1186 = vmatpush1.msra.mxu0 0.0
    %1187 = vmatprep.mubr.f32.mxu0 0.0
    %1188 = vmatmul.mubr.f32.gmra.mrb[0].mxu0 %v891
    %v1189 = vpop.f32.mrb[0].mxu0
    %v1190 = vadd.f32 0.0, %v1189
    %v1191 = vpop.f32.mrb[0].mxu0
    %v1192 = vadd.f32 0.0, %v1191
    %1193 = vmatprep.mubr.f32.mxu0 0.0
    %1194 = vmatmul.mubr.f32.gmra.mrb[0].mxu0 %v893
    %v1195 = vpop.f32.mrb[0].mxu0
    %v1196 = vadd.f32 0.0, %v1195
    %v1197 = vpop.f32.mrb[0].mxu0
    %v1198 = vadd.f32 0.0, %v1197
    %1199 = vmatprep.mubr.f32.mxu0 0.0
    %1200 = vmatmul.mubr.f32.gmra.mrb[0].mxu0 %v895
    %v1201 = vpop.f32.mrb[0].mxu0
    %v1202 = vadd.f32 0.0, %v1201
    %v1203 = vpop.f32.mrb[0].mxu0
    %v1204 = vadd.f32 0.0, %v1203
    %1205 = vmatprep.mubr.f32.mxu0 0.0
    %1206 = vmatmul.mubr.f32.gmra.mrb[0].mxu0 %v897
    %v1207 = vpop.f32.mrb[0].mxu0
    %v1208 = vadd.f32 0.0, %v1207
    %v1209 = vpop.f32.mrb[0].mxu0
    %v1210 = vadd.f32 0.0, %v1209
    %1211 = vmatprep.mubr.f32.mxu0 0.0
    %1212 = vmatmul.mubr.f32.gmra.mrb[0].mxu0 %v899
    %v1213 = vpop.f32.mrb[0].mxu0
    %v1214 = vadd.f32 0.0, %v1213
    %v1215 = vpop.f32.mrb[0].mxu0
    %v1216 = vadd.f32 0.0, %v1215
    %1217 = vmatprep.mubr.f32.mxu0 0.0
    %1218 = vmatmul.mubr.f32.gmra.mrb[0].mxu0 %v901
    %v1219 = vpop.f32.mrb[0].mxu0
    %v1220 = vadd.f32 0.0, %v1219
    %v1221 = vpop.f32.mrb[0].mxu0
    %v1222 = vadd.f32 0.0, %v1221
    %1223 = vdwg.mxu0
    %v1224 = vadd.f32 %v615, %v988
    %v1225 = vadd.f32 %v617, %v990
    %v1226 = vadd.f32 %v716, %v1089
    %v1227 = vadd.f32 %v718, %v1091
    %v1228 = vadd.f32 %v817, %v1190
    %v1229 = vadd.f32 %v819, %v1192
    %v1230 = vadd.f32 %v621, %v994
    %v1231 = vadd.f32 %v623, %v996
    %v1232 = vadd.f32 %v722, %v1095
    %v1233 = vadd.f32 %v724, %v1097
    %v1234 = vadd.f32 %v823, %v1196
    %v1235 = vadd.f32 %v825, %v1198
    %v1236 = vadd.f32 %v627, %v1000
    %v1237 = vadd.f32 %v629, %v1002
    %v1238 = vadd.f32 %v728, %v1101
    %v1239 = vadd.f32 %v730, %v1103
    %v1240 = vadd.f32 %v829, %v1202
    %v1241 = vadd.f32 %v831, %v1204
    %v1242 = vadd.f32 %v633, %v1006
    %v1243 = vadd.f32 %v635, %v1008
    %v1244 = vadd.f32 %v734, %v1107
    %v1245 = vadd.f32 %v736, %v1109
    %v1246 = vadd.f32 %v835, %v1208
    %v1247 = vadd.f32 %v837, %v1210
    %v1248 = vadd.f32 %v639, %v1012
    %v1249 = vadd.f32 %v641, %v1014
    %v1250 = vadd.f32 %v740, %v1113
    %v1251 = vadd.f32 %v742, %v1115
    %v1252 = vadd.f32 %v841, %v1214
    %v1253 = vadd.f32 %v843, %v1216
    %v1254 = vadd.f32 %v645, %v1018
    %v1255 = vadd.f32 %v647, %v1020
    %v1256 = vadd.f32 %v746, %v1119
    %v1257 = vadd.f32 %v748, %v1121
    %v1258 = vadd.f32 %v847, %v1220
    %v1259 = vadd.f32 %v849, %v1222
    %vm1260 = vcmask 1044480
    %v1261 = vrot.slane %v103, 3
    %v1262 = vrot.slane %v104, 3
    %v1263 = vsel %vm1260, %v1261, %v1262
    %v1264 = vrot.slane %v105, 3
    %v1265 = vsel %vm1260, %v1262, %v1264
    %v1266 = vrot.slane %v106, 3
    %v1267 = vsel %vm1260, %v1264, %v1266
    %v1268 = vrot.slane %v107, 3
    %v1269 = vrot.slane %v108, 3
    %v1270 = vsel %vm1260, %v1268, %v1269
    %v1271 = vrot.slane %v109, 3
    %v1272 = vsel %vm1260, %v1269, %v1271
    %v1273 = vrot.slane %v110, 3
    %v1274 = vsel %vm1260, %v1271, %v1273
    %s1275 = scalar_lea.vmem [#allocation2], 576
    %v1276 = vld [vmem:[%s1275] sm:$0xff]
    %v1277 = vld [vmem:[%s1275 + $0x8] sm:$0xff]
    %v1278 = vld [vmem:[%s1275 + $0x10] sm:$0xff]
    %v1279 = vld [vmem:[%s1275 + $0x18] sm:$0xff]
    %v1280 = vld [vmem:[%s1275 + $0x20] sm:$0xff]
    %v1281 = vld [vmem:[%s1275 + $0x28] sm:$0xff]
    %v1282 = vld [vmem:[%s1275 + $0x30] sm:$0xff]
    %v1283 = vld [vmem:[%s1275 + $0x38] sm:$0xff]
    %v1284 = vld [vmem:[%s1275 + $0x40] sm:$0xff]
    %v1285 = vld [vmem:[%s1275 + $0x48] sm:$0xff]
    %v1286 = vld [vmem:[%s1275 + $0x50] sm:$0xff]
    %v1287 = vld [vmem:[%s1275 + $0x58] sm:$0xff]
    %v1288 = vld [vmem:[%s1275 + $0x60] sm:$0xff]
    %v1289 = vld [vmem:[%s1275 + $0x68] sm:$0xff]
    %v1290 = vld [vmem:[%s1275 + $0x70] sm:$0xff]
    %v1291 = vld [vmem:[%s1275 + $0x78] sm:$0xff]
    %v1292 = vld [vmem:[%s1275 + $0x80] sm:$0xff]
    %v1293 = vld [vmem:[%s1275 + $0x88] sm:$0xff]
    %v1294 = vld [vmem:[%s1275 + $0x90] sm:$0xf]
    %v1295 = vld [vmem:[%s1275 + $0x98] sm:$0xf]
    %v1296 = vld [vmem:[%s1275 + $0xa0] sm:$0xf]
    %v1297 = vld [vmem:[%s1275 + $0xa8] sm:$0xf]
    %v1298 = vld [vmem:[%s1275 + $0xb0] sm:$0xf]
    %v1299 = vld [vmem:[%s1275 + $0xb8] sm:$0xf]
    %v1300 = vsel %vm183, %v1263, 0
    %v1302 = vsel %vm183, %v1265, 0
    %v1304 = vsel %vm183, %v1267, 0
    %v1306 = vsel %vm183, %v1270, 0
    %v1308 = vsel %vm183, %v1272, 0
    %v1310 = vsel %vm183, %v1274, 0
    %v1313 = vsel %vm196, %v1294, 0
    %v1316 = vsel %vm196, %v1295, 0
    %v1319 = vsel %vm196, %v1296, 0
    %v1322 = vsel %vm196, %v1297, 0
    %v1325 = vsel %vm196, %v1298, 0
    %v1328 = vsel %vm196, %v1299, 0
    %1330 = vmatprep.subr.mxu0 %v1277
    %1331 = vmatpush1.msra.mxu0 %v1276
    %1332 = vmatprep.subr.mxu0 %v1283
    %1333 = vmatpush1.msra.mxu0 %v1282
    %1334 = vmatprep.subr.mxu0 %v1289
    %1335 = vmatpush1.msra.mxu0 %v1288
    %1336 = vmatprep.subr.mxu0 %v1316
    %1337 = vmatpush1.msra.mxu0 %v1313
    %1338 = vmatprep.subr.mxu0 0.0
    %1339 = vmatpush1.msra.mxu0 0.0
    %1340 = vmatprep.subr.mxu0 0.0
    %1341 = vmatpush1.msra.mxu0 0.0
    %1342 = vmatprep.subr.mxu0 0.0
    %1343 = vmatpush1.msra.mxu0 0.0
    %1344 = vmatprep.subr.mxu0 0.0
    %1345 = vmatpush1.msra.mxu0 0.0
    %1346 = vmatprep.subr.mxu0 0.0
    %1347 = vmatpush1.msra.mxu0 0.0
    %1348 = vmatprep.subr.mxu0 0.0
    %1349 = vmatpush1.msra.mxu0 0.0
    %1350 = vmatprep.subr.mxu0 0.0
    %1351 = vmatpush1.msra.mxu0 0.0
    %1352 = vmatprep.subr.mxu0 0.0
    %1353 = vmatpush1.msra.mxu0 0.0
    %1354 = vmatprep.subr.mxu0 0.0
    %1355 = vmatpush1.msra.mxu0 0.0
    %1356 = vmatprep.subr.mxu0 0.0
    %1357 = vmatpush1.msra.mxu0 0.0
    %1358 = vmatprep.subr.mxu0 0.0
    %1359 = vmatpush1.msra.mxu0 0.0
    %1360 = vmatprep.subr.mxu0 0.0
    %1361 = vmatpush1.msra.mxu0 0.0
    %1362 = vmatprep.subr.mxu0 0.0
    %1363 = vmatpush1.msra.mxu0 0.0
    %1364 = vmatprep.subr.mxu0 0.0
    %1365 = vmatpush1.msra.mxu0 0.0
    %1366 = vmatprep.subr.mxu0 0.0
    %1367 = vmatpush1.msra.mxu0 0.0
    %1368 = vmatprep.subr.mxu0 0.0
    %1369 = vmatpush1.msra.mxu0 0.0
    %1370 = vmatprep.subr.mxu0 0.0
    %1371 = vmatpush1.msra.mxu0 0.0
    %1372 = vmatprep.subr.mxu0 0.0
    %1373 = vmatpush1.msra.mxu0 0.0
    %1374 = vmatprep.subr.mxu0 0.0
    %1375 = vmatpush1.msra.mxu0 0.0
    %1376 = vmatprep.subr.mxu0 0.0
    %1377 = vmatpush1.msra.mxu0 0.0
    %1378 = vmatprep.subr.mxu0 0.0
    %1379 = vmatpush1.msra.mxu0 0.0
    %1380 = vmatprep.subr.mxu0 0.0
    %1381 = vmatpush1.msra.mxu0 0.0
    %1382 = vmatprep.subr.mxu0 0.0
    %1383 = vmatpush1.msra.mxu0 0.0
    %1384 = vmatprep.subr.mxu0 0.0
    %1385 = vmatpush1.msra.mxu0 0.0
    %1386 = vmatprep.subr.mxu0 0.0
    %1387 = vmatpush1.msra.mxu0 0.0
    %1388 = vmatprep.subr.mxu0 0.0
    %1389 = vmatpush1.msra.mxu0 0.0
    %1390 = vmatprep.subr.mxu0 0.0
    %1391 = vmatpush1.msra.mxu0 0.0
    %1392 = vmatprep.subr.mxu0 0.0
    %1393 = vmatpush1.msra.mxu0 0.0
    %1394 = vmatprep.mubr.f32.mxu0 0.0
    %1395 = vmatmul.mubr.f32.gmra.mrb[0].mxu0 %v1300
    %v1396 = vpop.f32.mrb[0].mxu0
    %v1397 = vadd.f32 0.0, %v1396
    %v1398 = vpop.f32.mrb[0].mxu0
    %v1399 = vadd.f32 0.0, %v1398
    %1400 = vmatprep.mubr.f32.mxu0 0.0
    %1401 = vmatmul.mubr.f32.gmra.mrb[0].mxu0 %v1302
    %v1402 = vpop.f32.mrb[0].mxu0
    %v1403 = vadd.f32 0.0, %v1402
    %v1404 = vpop.f32.mrb[0].mxu0
    %v1405 = vadd.f32 0.0, %v1404
    %1406 = vmatprep.mubr.f32.mxu0 0.0
    %1407 = vmatmul.mubr.f32.gmra.mrb[0].mxu0 %v1304
    %v1408 = vpop.f32.mrb[0].mxu0
    %v1409 = vadd.f32 0.0, %v1408
    %v1410 = vpop.f32.mrb[0].mxu0
    %v1411 = vadd.f32 0.0, %v1410
    %1412 = vmatprep.mubr.f32.mxu0 0.0
    %1413 = vmatmul.mubr.f32.gmra.mrb[0].mxu0 %v1306
    %v1414 = vpop.f32.mrb[0].mxu0
    %v1415 = vadd.f32 0.0, %v1414
    %v1416 = vpop.f32.mrb[0].mxu0
    %v1417 = vadd.f32 0.0, %v1416
    %1418 = vmatprep.mubr.f32.mxu0 0.0
    %1419 = vmatmul.mubr.f32.gmra.mrb[0].mxu0 %v1308
    %v1420 = vpop.f32.mrb[0].mxu0
    %v1421 = vadd.f32 0.0, %v1420
    %v1422 = vpop.f32.mrb[0].mxu0
    %v1423 = vadd.f32 0.0, %v1422
    %1424 = vmatprep.mubr.f32.mxu0 0.0
    %1425 = vmatmul.mubr.f32.gmra.mrb[0].mxu0 %v1310
    %v1426 = vpop.f32.mrb[0].mxu0
    %v1427 = vadd.f32 0.0, %v1426
    %v1428 = vpop.f32.mrb[0].mxu0
    %v1429 = vadd.f32 0.0, %v1428
    %1430 = vdwg.mxu0
    %1431 = vmatprep.subr.mxu0 %v1279
    %1432 = vmatpush1.msra.mxu0 %v1278
    %1433 = vmatprep.subr.mxu0 %v1285
    %1434 = vmatpush1.msra.mxu0 %v1284
    %1435 = vmatprep.subr.mxu0 %v1291
    %1436 = vmatpush1.msra.mxu0 %v1290
    %1437 = vmatprep.subr.mxu0 %v1322
    %1438 = vmatpush1.msra.mxu0 %v1319
    %1439 = vmatprep.subr.mxu0 0.0
    %1440 = vmatpush1.msra.mxu0 0.0
    %1441 = vmatprep.subr.mxu0 0.0
    %1442 = vmatpush1.msra.mxu0 0.0
    %1443 = vmatprep.subr.mxu0 0.0
    %1444 = vmatpush1.msra.mxu0 0.0
    %1445 = vmatprep.subr.mxu0 0.0
    %1446 = vmatpush1.msra.mxu0 0.0
    %1447 = vmatprep.subr.mxu0 0.0
    %1448 = vmatpush1.msra.mxu0 0.0
    %1449 = vmatprep.subr.mxu0 0.0
    %1450 = vmatpush1.msra.mxu0 0.0
    %1451 = vmatprep.subr.mxu0 0.0
    %1452 = vmatpush1.msra.mxu0 0.0
    %1453 = vmatprep.subr.mxu0 0.0
    %1454 = vmatpush1.msra.mxu0 0.0
    %1455 = vmatprep.subr.mxu0 0.0
    %1456 = vmatpush1.msra.mxu0 0.0
    %1457 = vmatprep.subr.mxu0 0.0
    %1458 = vmatpush1.msra.mxu0 0.0
    %1459 = vmatprep.subr.mxu0 0.0
    %1460 = vmatpush1.msra.mxu0 0.0
    %1461 = vmatprep.subr.mxu0 0.0
    %1462 = vmatpush1.msra.mxu0 0.0
    %1463 = vmatprep.subr.mxu0 0.0
    %1464 = vmatpush1.msra.mxu0 0.0
    %1465 = vmatprep.subr.mxu0 0.0
    %1466 = vmatpush1.msra.mxu0 0.0
    %1467 = vmatprep.subr.mxu0 0.0
    %1468 = vmatpush1.msra.mxu0 0.0
    %1469 = vmatprep.subr.mxu0 0.0
    %1470 = vmatpush1.msra.mxu0 0.0
    %1471 = vmatprep.subr.mxu0 0.0
    %1472 = vmatpush1.msra.mxu0 0.0
    %1473 = vmatprep.subr.mxu0 0.0
    %1474 = vmatpush1.msra.mxu0 0.0
    %1475 = vmatprep.subr.mxu0 0.0
    %1476 = vmatpush1.msra.mxu0 0.0
    %1477 = vmatprep.subr.mxu0 0.0
    %1478 = vmatpush1.msra.mxu0 0.0
    %1479 = vmatprep.subr.mxu0 0.0
    %1480 = vmatpush1.msra.mxu0 0.0
    %1481 = vmatprep.subr.mxu0 0.0
    %1482 = vmatpush1.msra.mxu0 0.0
    %1483 = vmatprep.subr.mxu0 0.0
    %1484 = vmatpush1.msra.mxu0 0.0
    %1485 = vmatprep.subr.mxu0 0.0
    %1486 = vmatpush1.msra.mxu0 0.0
    %1487 = vmatprep.subr.mxu0 0.0
    %1488 = vmatpush1.msra.mxu0 0.0
    %1489 = vmatprep.subr.mxu0 0.0
    %1490 = vmatpush1.msra.mxu0 0.0
    %1491 = vmatprep.subr.mxu0 0.0
    %1492 = vmatpush1.msra.mxu0 0.0
    %1493 = vmatprep.subr.mxu0 0.0
    %1494 = vmatpush1.msra.mxu0 0.0
    %1495 = vmatprep.mubr.f32.mxu0 0.0
    %1496 = vmatmul.mubr.f32.gmra.mrb[0].mxu0 %v1300
    %v1497 = vpop.f32.mrb[0].mxu0
    %v1498 = vadd.f32 0.0, %v1497
    %v1499 = vpop.f32.mrb[0].mxu0
    %v1500 = vadd.f32 0.0, %v1499
    %1501 = vmatprep.mubr.f32.mxu0 0.0
    %1502 = vmatmul.mubr.f32.gmra.mrb[0].mxu0 %v1302
    %v1503 = vpop.f32.mrb[0].mxu0
    %v1504 = vadd.f32 0.0, %v1503
    %v1505 = vpop.f32.mrb[0].mxu0
    %v1506 = vadd.f32 0.0, %v1505
    %1507 = vmatprep.mubr.f32.mxu0 0.0
    %1508 = vmatmul.mubr.f32.gmra.mrb[0].mxu0 %v1304
    %v1509 = vpop.f32.mrb[0].mxu0
    %v1510 = vadd.f32 0.0, %v1509
    %v1511 = vpop.f32.mrb[0].mxu0
    %v1512 = vadd.f32 0.0, %v1511
    %1513 = vmatprep.mubr.f32.mxu0 0.0
    %1514 = vmatmul.mubr.f32.gmra.mrb[0].mxu0 %v1306
    %v1515 = vpop.f32.mrb[0].mxu0
    %v1516 = vadd.f32 0.0, %v1515
    %v1517 = vpop.f32.mrb[0].mxu0
    %v1518 = vadd.f32 0.0, %v1517
    %1519 = vmatprep.mubr.f32.mxu0 0.0
    %1520 = vmatmul.mubr.f32.gmra.mrb[0].mxu0 %v1308
    %v1521 = vpop.f32.mrb[0].mxu0
    %v1522 = vadd.f32 0.0, %v1521
    %v1523 = vpop.f32.mrb[0].mxu0
    %v1524 = vadd.f32 0.0, %v1523
    %1525 = vmatprep.mubr.f32.mxu0 0.0
    %1526 = vmatmul.mubr.f32.gmra.mrb[0].mxu0 %v1310
    %v1527 = vpop.f32.mrb[0].mxu0
    %v1528 = vadd.f32 0.0, %v1527
    %v1529 = vpop.f32.mrb[0].mxu0
    %v1530 = vadd.f32 0.0, %v1529
    %1531 = vdwg.mxu0
    %1532 = vmatprep.subr.mxu0 %v1281
    %1533 = vmatpush1.msra.mxu0 %v1280
    %1534 = vmatprep.subr.mxu0 %v1287
    %1535 = vmatpush1.msra.mxu0 %v1286
    %1536 = vmatprep.subr.mxu0 %v1293
    %1537 = vmatpush1.msra.mxu0 %v1292
    %1538 = vmatprep.subr.mxu0 %v1328
    %1539 = vmatpush1.msra.mxu0 %v1325
    %1540 = vmatprep.subr.mxu0 0.0
    %1541 = vmatpush1.msra.mxu0 0.0
    %1542 = vmatprep.subr.mxu0 0.0
    %1543 = vmatpush1.msra.mxu0 0.0
    %1544 = vmatprep.subr.mxu0 0.0
    %1545 = vmatpush1.msra.mxu0 0.0
    %1546 = vmatprep.subr.mxu0 0.0
    %1547 = vmatpush1.msra.mxu0 0.0
    %1548 = vmatprep.subr.mxu0 0.0
    %1549 = vmatpush1.msra.mxu0 0.0
    %1550 = vmatprep.subr.mxu0 0.0
    %1551 = vmatpush1.msra.mxu0 0.0
    %1552 = vmatprep.subr.mxu0 0.0
    %1553 = vmatpush1.msra.mxu0 0.0
    %1554 = vmatprep.subr.mxu0 0.0
    %1555 = vmatpush1.msra.mxu0 0.0
    %1556 = vmatprep.subr.mxu0 0.0
    %1557 = vmatpush1.msra.mxu0 0.0
    %1558 = vmatprep.subr.mxu0 0.0
    %1559 = vmatpush1.msra.mxu0 0.0
    %1560 = vmatprep.subr.mxu0 0.0
    %1561 = vmatpush1.msra.mxu0 0.0
    %1562 = vmatprep.subr.mxu0 0.0
    %1563 = vmatpush1.msra.mxu0 0.0
    %1564 = vmatprep.subr.mxu0 0.0
    %1565 = vmatpush1.msra.mxu0 0.0
    %1566 = vmatprep.subr.mxu0 0.0
    %1567 = vmatpush1.msra.mxu0 0.0
    %1568 = vmatprep.subr.mxu0 0.0
    %1569 = vmatpush1.msra.mxu0 0.0
    %1570 = vmatprep.subr.mxu0 0.0
    %1571 = vmatpush1.msra.mxu0 0.0
    %1572 = vmatprep.subr.mxu0 0.0
    %1573 = vmatpush1.msra.mxu0 0.0
    %1574 = vmatprep.subr.mxu0 0.0
    %1575 = vmatpush1.msra.mxu0 0.0
    %1576 = vmatprep.subr.mxu0 0.0
    %1577 = vmatpush1.msra.mxu0 0.0
    %1578 = vmatprep.subr.mxu0 0.0
    %1579 = vmatpush1.msra.mxu0 0.0
    %1580 = vmatprep.subr.mxu0 0.0
    %1581 = vmatpush1.msra.mxu0 0.0
    %1582 = vmatprep.subr.mxu0 0.0
    %1583 = vmatpush1.msra.mxu0 0.0
    %1584 = vmatprep.subr.mxu0 0.0
    %1585 = vmatpush1.msra.mxu0 0.0
    %1586 = vmatprep.subr.mxu0 0.0
    %1587 = vmatpush1.msra.mxu0 0.0
    %1588 = vmatprep.subr.mxu0 0.0
    %1589 = vmatpush1.msra.mxu0 0.0
    %1590 = vmatprep.subr.mxu0 0.0
    %1591 = vmatpush1.msra.mxu0 0.0
    %1592 = vmatprep.subr.mxu0 0.0
    %1593 = vmatpush1.msra.mxu0 0.0
    %1594 = vmatprep.subr.mxu0 0.0
    %1595 = vmatpush1.msra.mxu0 0.0
    %1596 = vmatprep.mubr.f32.mxu0 0.0
    %1597 = vmatmul.mubr.f32.gmra.mrb[0].mxu0 %v1300
    %v1598 = vpop.f32.mrb[0].mxu0
    %v1599 = vadd.f32 0.0, %v1598
    %v1600 = vpop.f32.mrb[0].mxu0
    %v1601 = vadd.f32 0.0, %v1600
    %1602 = vmatprep.mubr.f32.mxu0 0.0
    %1603 = vmatmul.mubr.f32.gmra.mrb[0].mxu0 %v1302
    %v1604 = vpop.f32.mrb[0].mxu0
    %v1605 = vadd.f32 0.0, %v1604
    %v1606 = vpop.f32.mrb[0].mxu0
    %v1607 = vadd.f32 0.0, %v1606
    %1608 = vmatprep.mubr.f32.mxu0 0.0
    %1609 = vmatmul.mubr.f32.gmra.mrb[0].mxu0 %v1304
    %v1610 = vpop.f32.mrb[0].mxu0
    %v1611 = vadd.f32 0.0, %v1610
    %v1612 = vpop.f32.mrb[0].mxu0
    %v1613 = vadd.f32 0.0, %v1612
    %1614 = vmatprep.mubr.f32.mxu0 0.0
    %1615 = vmatmul.mubr.f32.gmra.mrb[0].mxu0 %v1306
    %v1616 = vpop.f32.mrb[0].mxu0
    %v1617 = vadd.f32 0.0, %v1616
    %v1618 = vpop.f32.mrb[0].mxu0
    %v1619 = vadd.f32 0.0, %v1618
    %1620 = vmatprep.mubr.f32.mxu0 0.0
    %1621 = vmatmul.mubr.f32.gmra.mrb[0].mxu0 %v1308
    %v1622 = vpop.f32.mrb[0].mxu0
    %v1623 = vadd.f32 0.0, %v1622
    %v1624 = vpop.f32.mrb[0].mxu0
    %v1625 = vadd.f32 0.0, %v1624
    %1626 = vmatprep.mubr.f32.mxu0 0.0
    %1627 = vmatmul.mubr.f32.gmra.mrb[0].mxu0 %v1310
    %v1628 = vpop.f32.mrb[0].mxu0
    %v1629 = vadd.f32 0.0, %v1628
    %v1630 = vpop.f32.mrb[0].mxu0
    %v1631 = vadd.f32 0.0, %v1630
    %1632 = vdwg.mxu0
    %v1633 = vadd.f32 %v1224, %v1397
    %v1634 = vadd.f32 %v1225, %v1399
    %v1635 = vadd.f32 %v1226, %v1498
    %v1636 = vadd.f32 %v1227, %v1500
    %v1637 = vadd.f32 %v1228, %v1599
    %v1638 = vadd.f32 %v1229, %v1601
    %v1639 = vadd.f32 %v1230, %v1403
    %v1640 = vadd.f32 %v1231, %v1405
    %v1641 = vadd.f32 %v1232, %v1504
    %v1642 = vadd.f32 %v1233, %v1506
    %v1643 = vadd.f32 %v1234, %v1605
    %v1644 = vadd.f32 %v1235, %v1607
    %v1645 = vadd.f32 %v1236, %v1409
    %v1646 = vadd.f32 %v1237, %v1411
    %v1647 = vadd.f32 %v1238, %v1510
    %v1648 = vadd.f32 %v1239, %v1512
    %v1649 = vadd.f32 %v1240, %v1611
    %v1650 = vadd.f32 %v1241, %v1613
    %v1651 = vadd.f32 %v1242, %v1415
    %v1652 = vadd.f32 %v1243, %v1417
    %v1653 = vadd.f32 %v1244, %v1516
    %v1654 = vadd.f32 %v1245, %v1518
    %v1655 = vadd.f32 %v1246, %v1617
    %v1656 = vadd.f32 %v1247, %v1619
    %v1657 = vadd.f32 %v1248, %v1421
    %v1658 = vadd.f32 %v1249, %v1423
    %v1659 = vadd.f32 %v1250, %v1522
    %v1660 = vadd.f32 %v1251, %v1524
    %v1661 = vadd.f32 %v1252, %v1623
    %v1662 = vadd.f32 %v1253, %v1625
    %v1663 = vadd.f32 %v1254, %v1427
    %v1664 = vadd.f32 %v1255, %v1429
    %v1665 = vadd.f32 %v1256, %v1528
    %v1666 = vadd.f32 %v1257, %v1530
    %v1667 = vadd.f32 %v1258, %v1629
    %v1668 = vadd.f32 %v1259, %v1631
    %v1669 = vrot.slane %v103, 4
    %v1670 = vrot.slane %v104, 4
    %v1671 = vsel %vm196, %v1669, %v1670
    %v1672 = vrot.slane %v105, 4
    %v1673 = vsel %vm196, %v1670, %v1672
    %v1674 = vrot.slane %v106, 4
    %v1675 = vsel %vm196, %v1672, %v1674
    %v1676 = vrot.slane %v107, 4
    %v1677 = vrot.slane %v108, 4
    %v1678 = vsel %vm196, %v1676, %v1677
    %v1679 = vrot.slane %v109, 4
    %v1680 = vsel %vm196, %v1677, %v1679
    %v1681 = vrot.slane %v110, 4
    %v1682 = vsel %vm196, %v1679, %v1681
    %s1683 = scalar_lea.vmem [#allocation2], 768
    %v1684 = vld [vmem:[%s1683] sm:$0xff]
    %v1685 = vld [vmem:[%s1683 + $0x8] sm:$0xff]
    %v1686 = vld [vmem:[%s1683 + $0x10] sm:$0xff]
    %v1687 = vld [vmem:[%s1683 + $0x18] sm:$0xff]
    %v1688 = vld [vmem:[%s1683 + $0x20] sm:$0xff]
    %v1689 = vld [vmem:[%s1683 + $0x28] sm:$0xff]
    %v1690 = vld [vmem:[%s1683 + $0x30] sm:$0xff]
    %v1691 = vld [vmem:[%s1683 + $0x38] sm:$0xff]
    %v1692 = vld [vmem:[%s1683 + $0x40] sm:$0xff]
    %v1693 = vld [vmem:[%s1683 + $0x48] sm:$0xff]
    %v1694 = vld [vmem:[%s1683 + $0x50] sm:$0xff]
    %v1695 = vld [vmem:[%s1683 + $0x58] sm:$0xff]
    %v1696 = vld [vmem:[%s1683 + $0x60] sm:$0xff]
    %v1697 = vld [vmem:[%s1683 + $0x68] sm:$0xff]
    %v1698 = vld [vmem:[%s1683 + $0x70] sm:$0xff]
    %v1699 = vld [vmem:[%s1683 + $0x78] sm:$0xff]
    %v1700 = vld [vmem:[%s1683 + $0x80] sm:$0xff]
    %v1701 = vld [vmem:[%s1683 + $0x88] sm:$0xff]
    %v1702 = vld [vmem:[%s1683 + $0x90] sm:$0xf]
    %v1703 = vld [vmem:[%s1683 + $0x98] sm:$0xf]
    %v1704 = vld [vmem:[%s1683 + $0xa0] sm:$0xf]
    %v1705 = vld [vmem:[%s1683 + $0xa8] sm:$0xf]
    %v1706 = vld [vmem:[%s1683 + $0xb0] sm:$0xf]
    %v1707 = vld [vmem:[%s1683 + $0xb8] sm:$0xf]
    %v1708 = vsel %vm183, %v1671, 0
    %v1710 = vsel %vm183, %v1673, 0
    %v1712 = vsel %vm183, %v1675, 0
    %v1714 = vsel %vm183, %v1678, 0
    %v1716 = vsel %vm183, %v1680, 0
    %v1718 = vsel %vm183, %v1682, 0
    %v1721 = vsel %vm196, %v1702, 0
    %v1724 = vsel %vm196, %v1703, 0
    %v1727 = vsel %vm196, %v1704, 0
    %v1730 = vsel %vm196, %v1705, 0
    %v1733 = vsel %vm196, %v1706, 0
    %v1736 = vsel %vm196, %v1707, 0
    %1738 = vmatprep.subr.mxu0 %v1685
    %1739 = vmatpush1.msra.mxu0 %v1684
    %1740 = vmatprep.subr.mxu0 %v1691
    %1741 = vmatpush1.msra.mxu0 %v1690
    %1742 = vmatprep.subr.mxu0 %v1697
    %1743 = vmatpush1.msra.mxu0 %v1696
    %1744 = vmatprep.subr.mxu0 %v1724
    %1745 = vmatpush1.msra.mxu0 %v1721
    %1746 = vmatprep.subr.mxu0 0.0
    %1747 = vmatpush1.msra.mxu0 0.0
    %1748 = vmatprep.subr.mxu0 0.0
    %1749 = vmatpush1.msra.mxu0 0.0
    %1750 = vmatprep.subr.mxu0 0.0
    %1751 = vmatpush1.msra.mxu0 0.0
    %1752 = vmatprep.subr.mxu0 0.0
    %1753 = vmatpush1.msra.mxu0 0.0
    %1754 = vmatprep.subr.mxu0 0.0
    %1755 = vmatpush1.msra.mxu0 0.0
    %1756 = vmatprep.subr.mxu0 0.0
    %1757 = vmatpush1.msra.mxu0 0.0
    %1758 = vmatprep.subr.mxu0 0.0
    %1759 = vmatpush1.msra.mxu0 0.0
    %1760 = vmatprep.subr.mxu0 0.0
    %1761 = vmatpush1.msra.mxu0 0.0
    %1762 = vmatprep.subr.mxu0 0.0
    %1763 = vmatpush1.msra.mxu0 0.0
    %1764 = vmatprep.subr.mxu0 0.0
    %1765 = vmatpush1.msra.mxu0 0.0
    %1766 = vmatprep.subr.mxu0 0.0
    %1767 = vmatpush1.msra.mxu0 0.0
    %1768 = vmatprep.subr.mxu0 0.0
    %1769 = vmatpush1.msra.mxu0 0.0
    %1770 = vmatprep.subr.mxu0 0.0
    %1771 = vmatpush1.msra.mxu0 0.0
    %1772 = vmatprep.subr.mxu0 0.0
    %1773 = vmatpush1.msra.mxu0 0.0
    %1774 = vmatprep.subr.mxu0 0.0
    %1775 = vmatpush1.msra.mxu0 0.0
    %1776 = vmatprep.subr.mxu0 0.0
    %1777 = vmatpush1.msra.mxu0 0.0
    %1778 = vmatprep.subr.mxu0 0.0
    %1779 = vmatpush1.msra.mxu0 0.0
    %1780 = vmatprep.subr.mxu0 0.0
    %1781 = vmatpush1.msra.mxu0 0.0
    %1782 = vmatprep.subr.mxu0 0.0
    %1783 = vmatpush1.msra.mxu0 0.0
    %1784 = vmatprep.subr.mxu0 0.0
    %1785 = vmatpush1.msra.mxu0 0.0
    %1786 = vmatprep.subr.mxu0 0.0
    %1787 = vmatpush1.msra.mxu0 0.0
    %1788 = vmatprep.subr.mxu0 0.0
    %1789 = vmatpush1.msra.mxu0 0.0
    %1790 = vmatprep.subr.mxu0 0.0
    %1791 = vmatpush1.msra.mxu0 0.0
    %1792 = vmatprep.subr.mxu0 0.0
    %1793 = vmatpush1.msra.mxu0 0.0
    %1794 = vmatprep.subr.mxu0 0.0
    %1795 = vmatpush1.msra.mxu0 0.0
    %1796 = vmatprep.subr.mxu0 0.0
    %1797 = vmatpush1.msra.mxu0 0.0
    %1798 = vmatprep.subr.mxu0 0.0
    %1799 = vmatpush1.msra.mxu0 0.0
    %1800 = vmatprep.subr.mxu0 0.0
    %1801 = vmatpush1.msra.mxu0 0.0
    %1802 = vmatprep.mubr.f32.mxu0 0.0
    %1803 = vmatmul.mubr.f32.gmra.mrb[0].mxu0 %v1708
    %v1804 = vpop.f32.mrb[0].mxu0
    %v1805 = vadd.f32 0.0, %v1804
    %v1806 = vpop.f32.mrb[0].mxu0
    %v1807 = vadd.f32 0.0, %v1806
    %1808 = vmatprep.mubr.f32.mxu0 0.0
    %1809 = vmatmul.mubr.f32.gmra.mrb[0].mxu0 %v1710
    %v1810 = vpop.f32.mrb[0].mxu0
    %v1811 = vadd.f32 0.0, %v1810
    %v1812 = vpop.f32.mrb[0].mxu0
    %v1813 = vadd.f32 0.0, %v1812
    %1814 = vmatprep.mubr.f32.mxu0 0.0
    %1815 = vmatmul.mubr.f32.gmra.mrb[0].mxu0 %v1712
    %v1816 = vpop.f32.mrb[0].mxu0
    %v1817 = vadd.f32 0.0, %v1816
    %v1818 = vpop.f32.mrb[0].mxu0
    %v1819 = vadd.f32 0.0, %v1818
    %1820 = vmatprep.mubr.f32.mxu0 0.0
    %1821 = vmatmul.mubr.f32.gmra.mrb[0].mxu0 %v1714
    %v1822 = vpop.f32.mrb[0].mxu0
    %v1823 = vadd.f32 0.0, %v1822
    %v1824 = vpop.f32.mrb[0].mxu0
    %v1825 = vadd.f32 0.0, %v1824
    %1826 = vmatprep.mubr.f32.mxu0 0.0
    %1827 = vmatmul.mubr.f32.gmra.mrb[0].mxu0 %v1716
    %v1828 = vpop.f32.mrb[0].mxu0
    %v1829 = vadd.f32 0.0, %v1828
    %v1830 = vpop.f32.mrb[0].mxu0
    %v1831 = vadd.f32 0.0, %v1830
    %1832 = vmatprep.mubr.f32.mxu0 0.0
    %1833 = vmatmul.mubr.f32.gmra.mrb[0].mxu0 %v1718
    %v1834 = vpop.f32.mrb[0].mxu0
    %v1835 = vadd.f32 0.0, %v1834
    %v1836 = vpop.f32.mrb[0].mxu0
    %v1837 = vadd.f32 0.0, %v1836
    %1838 = vdwg.mxu0
    %1839 = vmatprep.subr.mxu0 %v1687
    %1840 = vmatpush1.msra.mxu0 %v1686
    %1841 = vmatprep.subr.mxu0 %v1693
    %1842 = vmatpush1.msra.mxu0 %v1692
    %1843 = vmatprep.subr.mxu0 %v1699
    %1844 = vmatpush1.msra.mxu0 %v1698
    %1845 = vmatprep.subr.mxu0 %v1730
    %1846 = vmatpush1.msra.mxu0 %v1727
    %1847 = vmatprep.subr.mxu0 0.0
    %1848 = vmatpush1.msra.mxu0 0.0
    %1849 = vmatprep.subr.mxu0 0.0
    %1850 = vmatpush1.msra.mxu0 0.0
    %1851 = vmatprep.subr.mxu0 0.0
    %1852 = vmatpush1.msra.mxu0 0.0
    %1853 = vmatprep.subr.mxu0 0.0
    %1854 = vmatpush1.msra.mxu0 0.0
    %1855 = vmatprep.subr.mxu0 0.0
    %1856 = vmatpush1.msra.mxu0 0.0
    %1857 = vmatprep.subr.mxu0 0.0
    %1858 = vmatpush1.msra.mxu0 0.0
    %1859 = vmatprep.subr.mxu0 0.0
    %1860 = vmatpush1.msra.mxu0 0.0
    %1861 = vmatprep.subr.mxu0 0.0
    %1862 = vmatpush1.msra.mxu0 0.0
    %1863 = vmatprep.subr.mxu0 0.0
    %1864 = vmatpush1.msra.mxu0 0.0
    %1865 = vmatprep.subr.mxu0 0.0
    %1866 = vmatpush1.msra.mxu0 0.0
    %1867 = vmatprep.subr.mxu0 0.0
    %1868 = vmatpush1.msra.mxu0 0.0
    %1869 = vmatprep.subr.mxu0 0.0
    %1870 = vmatpush1.msra.mxu0 0.0
    %1871 = vmatprep.subr.mxu0 0.0
    %1872 = vmatpush1.msra.mxu0 0.0
    %1873 = vmatprep.subr.mxu0 0.0
    %1874 = vmatpush1.msra.mxu0 0.0
    %1875 = vmatprep.subr.mxu0 0.0
    %1876 = vmatpush1.msra.mxu0 0.0
    %1877 = vmatprep.subr.mxu0 0.0
    %1878 = vmatpush1.msra.mxu0 0.0
    %1879 = vmatprep.subr.mxu0 0.0
    %1880 = vmatpush1.msra.mxu0 0.0
    %1881 = vmatprep.subr.mxu0 0.0
    %1882 = vmatpush1.msra.mxu0 0.0
    %1883 = vmatprep.subr.mxu0 0.0
    %1884 = vmatpush1.msra.mxu0 0.0
    %1885 = vmatprep.subr.mxu0 0.0
    %1886 = vmatpush1.msra.mxu0 0.0
    %1887 = vmatprep.subr.mxu0 0.0
    %1888 = vmatpush1.msra.mxu0 0.0
    %1889 = vmatprep.subr.mxu0 0.0
    %1890 = vmatpush1.msra.mxu0 0.0
    %1891 = vmatprep.subr.mxu0 0.0
    %1892 = vmatpush1.msra.mxu0 0.0
    %1893 = vmatprep.subr.mxu0 0.0
    %1894 = vmatpush1.msra.mxu0 0.0
    %1895 = vmatprep.subr.mxu0 0.0
    %1896 = vmatpush1.msra.mxu0 0.0
    %1897 = vmatprep.subr.mxu0 0.0
    %1898 = vmatpush1.msra.mxu0 0.0
    %1899 = vmatprep.subr.mxu0 0.0
    %1900 = vmatpush1.msra.mxu0 0.0
    %1901 = vmatprep.subr.mxu0 0.0
    %1902 = vmatpush1.msra.mxu0 0.0
    %1903 = vmatprep.mubr.f32.mxu0 0.0
    %1904 = vmatmul.mubr.f32.gmra.mrb[0].mxu0 %v1708
    %v1905 = vpop.f32.mrb[0].mxu0
    %v1906 = vadd.f32 0.0, %v1905
    %v1907 = vpop.f32.mrb[0].mxu0
    %v1908 = vadd.f32 0.0, %v1907
    %1909 = vmatprep.mubr.f32.mxu0 0.0
    %1910 = vmatmul.mubr.f32.gmra.mrb[0].mxu0 %v1710
    %v1911 = vpop.f32.mrb[0].mxu0
    %v1912 = vadd.f32 0.0, %v1911
    %v1913 = vpop.f32.mrb[0].mxu0
    %v1914 = vadd.f32 0.0, %v1913
    %1915 = vmatprep.mubr.f32.mxu0 0.0
    %1916 = vmatmul.mubr.f32.gmra.mrb[0].mxu0 %v1712
    %v1917 = vpop.f32.mrb[0].mxu0
    %v1918 = vadd.f32 0.0, %v1917
    %v1919 = vpop.f32.mrb[0].mxu0
    %v1920 = vadd.f32 0.0, %v1919
    %1921 = vmatprep.mubr.f32.mxu0 0.0
    %1922 = vmatmul.mubr.f32.gmra.mrb[0].mxu0 %v1714
    %v1923 = vpop.f32.mrb[0].mxu0
    %v1924 = vadd.f32 0.0, %v1923
    %v1925 = vpop.f32.mrb[0].mxu0
    %v1926 = vadd.f32 0.0, %v1925
    %1927 = vmatprep.mubr.f32.mxu0 0.0
    %1928 = vmatmul.mubr.f32.gmra.mrb[0].mxu0 %v1716
    %v1929 = vpop.f32.mrb[0].mxu0
    %v1930 = vadd.f32 0.0, %v1929
    %v1931 = vpop.f32.mrb[0].mxu0
    %v1932 = vadd.f32 0.0, %v1931
    %1933 = vmatprep.mubr.f32.mxu0 0.0
    %1934 = vmatmul.mubr.f32.gmra.mrb[0].mxu0 %v1718
    %v1935 = vpop.f32.mrb[0].mxu0
    %v1936 = vadd.f32 0.0, %v1935
    %v1937 = vpop.f32.mrb[0].mxu0
    %v1938 = vadd.f32 0.0, %v1937
    %1939 = vdwg.mxu0
    %1940 = vmatprep.subr.mxu0 %v1689
    %1941 = vmatpush1.msra.mxu0 %v1688
    %1942 = vmatprep.subr.mxu0 %v1695
    %1943 = vmatpush1.msra.mxu0 %v1694
    %1944 = vmatprep.subr.mxu0 %v1701
    %1945 = vmatpush1.msra.mxu0 %v1700
    %1946 = vmatprep.subr.mxu0 %v1736
    %1947 = vmatpush1.msra.mxu0 %v1733
    %1948 = vmatprep.subr.mxu0 0.0
    %1949 = vmatpush1.msra.mxu0 0.0
    %1950 = vmatprep.subr.mxu0 0.0
    %1951 = vmatpush1.msra.mxu0 0.0
    %1952 = vmatprep.subr.mxu0 0.0
    %1953 = vmatpush1.msra.mxu0 0.0
    %1954 = vmatprep.subr.mxu0 0.0
    %1955 = vmatpush1.msra.mxu0 0.0
    %1956 = vmatprep.subr.mxu0 0.0
    %1957 = vmatpush1.msra.mxu0 0.0
    %1958 = vmatprep.subr.mxu0 0.0
    %1959 = vmatpush1.msra.mxu0 0.0
    %1960 = vmatprep.subr.mxu0 0.0
    %1961 = vmatpush1.msra.mxu0 0.0
    %1962 = vmatprep.subr.mxu0 0.0
    %1963 = vmatpush1.msra.mxu0 0.0
    %1964 = vmatprep.subr.mxu0 0.0
    %1965 = vmatpush1.msra.mxu0 0.0
    %1966 = vmatprep.subr.mxu0 0.0
    %1967 = vmatpush1.msra.mxu0 0.0
    %1968 = vmatprep.subr.mxu0 0.0
    %1969 = vmatpush1.msra.mxu0 0.0
    %1970 = vmatprep.subr.mxu0 0.0
    %1971 = vmatpush1.msra.mxu0 0.0
    %1972 = vmatprep.subr.mxu0 0.0
    %1973 = vmatpush1.msra.mxu0 0.0
    %1974 = vmatprep.subr.mxu0 0.0
    %1975 = vmatpush1.msra.mxu0 0.0
    %1976 = vmatprep.subr.mxu0 0.0
    %1977 = vmatpush1.msra.mxu0 0.0
    %1978 = vmatprep.subr.mxu0 0.0
    %1979 = vmatpush1.msra.mxu0 0.0
    %1980 = vmatprep.subr.mxu0 0.0
    %1981 = vmatpush1.msra.mxu0 0.0
    %1982 = vmatprep.subr.mxu0 0.0
    %1983 = vmatpush1.msra.mxu0 0.0
    %1984 = vmatprep.subr.mxu0 0.0
    %1985 = vmatpush1.msra.mxu0 0.0
    %1986 = vmatprep.subr.mxu0 0.0
    %1987 = vmatpush1.msra.mxu0 0.0
    %1988 = vmatprep.subr.mxu0 0.0
    %1989 = vmatpush1.msra.mxu0 0.0
    %1990 = vmatprep.subr.mxu0 0.0
    %1991 = vmatpush1.msra.mxu0 0.0
    %1992 = vmatprep.subr.mxu0 0.0
    %1993 = vmatpush1.msra.mxu0 0.0
    %1994 = vmatprep.subr.mxu0 0.0
    %1995 = vmatpush1.msra.mxu0 0.0
    %1996 = vmatprep.subr.mxu0 0.0
    %1997 = vmatpush1.msra.mxu0 0.0
    %1998 = vmatprep.subr.mxu0 0.0
    %1999 = vmatpush1.msra.mxu0 0.0
    %2000 = vmatprep.subr.mxu0 0.0
    %2001 = vmatpush1.msra.mxu0 0.0
    %2002 = vmatprep.subr.mxu0 0.0
    %2003 = vmatpush1.msra.mxu0 0.0
    %2004 = vmatprep.mubr.f32.mxu0 0.0
    %2005 = vmatmul.mubr.f32.gmra.mrb[0].mxu0 %v1708
    %v2006 = vpop.f32.mrb[0].mxu0
    %v2007 = vadd.f32 0.0, %v2006
    %v2008 = vpop.f32.mrb[0].mxu0
    %v2009 = vadd.f32 0.0, %v2008
    %2010 = vmatprep.mubr.f32.mxu0 0.0
    %2011 = vmatmul.mubr.f32.gmra.mrb[0].mxu0 %v1710
    %v2012 = vpop.f32.mrb[0].mxu0
    %v2013 = vadd.f32 0.0, %v2012
    %v2014 = vpop.f32.mrb[0].mxu0
    %v2015 = vadd.f32 0.0, %v2014
    %2016 = vmatprep.mubr.f32.mxu0 0.0
    %2017 = vmatmul.mubr.f32.gmra.mrb[0].mxu0 %v1712
    %v2018 = vpop.f32.mrb[0].mxu0
    %v2019 = vadd.f32 0.0, %v2018
    %v2020 = vpop.f32.mrb[0].mxu0
    %v2021 = vadd.f32 0.0, %v2020
    %2022 = vmatprep.mubr.f32.mxu0 0.0
    %2023 = vmatmul.mubr.f32.gmra.mrb[0].mxu0 %v1714
    %v2024 = vpop.f32.mrb[0].mxu0
    %v2025 = vadd.f32 0.0, %v2024
    %v2026 = vpop.f32.mrb[0].mxu0
    %v2027 = vadd.f32 0.0, %v2026
    %2028 = vmatprep.mubr.f32.mxu0 0.0
    %2029 = vmatmul.mubr.f32.gmra.mrb[0].mxu0 %v1716
    %v2030 = vpop.f32.mrb[0].mxu0
    %v2031 = vadd.f32 0.0, %v2030
    %v2032 = vpop.f32.mrb[0].mxu0
    %v2033 = vadd.f32 0.0, %v2032
    %2034 = vmatprep.mubr.f32.mxu0 0.0
    %2035 = vmatmul.mubr.f32.gmra.mrb[0].mxu0 %v1718
    %v2036 = vpop.f32.mrb[0].mxu0
    %v2037 = vadd.f32 0.0, %v2036
    %v2038 = vpop.f32.mrb[0].mxu0
    %v2039 = vadd.f32 0.0, %v2038
    %2040 = vdwg.mxu0
    %v2041 = vadd.f32 %v1633, %v1805
    %v2042 = vadd.f32 %v1634, %v1807
    %v2043 = vadd.f32 %v1635, %v1906
    %v2044 = vadd.f32 %v1636, %v1908
    %v2045 = vadd.f32 %v1637, %v2007
    %v2046 = vadd.f32 %v1638, %v2009
    %v2047 = vadd.f32 %v1639, %v1811
    %v2048 = vadd.f32 %v1640, %v1813
    %v2049 = vadd.f32 %v1641, %v1912
    %v2050 = vadd.f32 %v1642, %v1914
    %v2051 = vadd.f32 %v1643, %v2013
    %v2052 = vadd.f32 %v1644, %v2015
    %v2053 = vadd.f32 %v1645, %v1817
    %v2054 = vadd.f32 %v1646, %v1819
    %v2055 = vadd.f32 %v1647, %v1918
    %v2056 = vadd.f32 %v1648, %v1920
    %v2057 = vadd.f32 %v1649, %v2019
    %v2058 = vadd.f32 %v1650, %v2021
    %v2059 = vadd.f32 %v1651, %v1823
    %v2060 = vadd.f32 %v1652, %v1825
    %v2061 = vadd.f32 %v1653, %v1924
    %v2062 = vadd.f32 %v1654, %v1926
    %v2063 = vadd.f32 %v1655, %v2025
    %v2064 = vadd.f32 %v1656, %v2027
    %v2065 = vadd.f32 %v1657, %v1829
    %v2066 = vadd.f32 %v1658, %v1831
    %v2067 = vadd.f32 %v1659, %v1930
    %v2068 = vadd.f32 %v1660, %v1932
    %v2069 = vadd.f32 %v1661, %v2031
    %v2070 = vadd.f32 %v1662, %v2033
    %v2071 = vadd.f32 %v1663, %v1835
    %v2072 = vadd.f32 %v1664, %v1837
    %v2073 = vadd.f32 %v1665, %v1936
    %v2074 = vadd.f32 %v1666, %v1938
    %v2075 = vadd.f32 %v1667, %v2037
    %v2076 = vadd.f32 %v1668, %v2039
    %v2077 = vld [vmem:[#allocation5] sm:$0x3f]
    %v2079 = vlaneseq
    %v2080 = vshrl.u32 %v2079, 7
    %v2081 = vsub.s32 0, %v2080
    %v2082 = vrot.slane %v2077, %v2081
    %v2083 = vlaneseq
    %v2084 = vshrl.u32 %v2083, 7
    %v2085 = vsub.s32 1, %v2084
    %v2086 = vrot.slane %v2077, %v2085
    %v2087 = vlaneseq
    %v2088 = vshrl.u32 %v2087, 7
    %v2089 = vsub.s32 2, %v2088
    %v2090 = vrot.slane %v2077, %v2089
    %v2091 = vlaneseq
    %v2092 = vshrl.u32 %v2091, 7
    %v2093 = vsub.s32 3, %v2092
    %v2094 = vrot.slane %v2077, %v2093
    %v2095 = vlaneseq
    %v2096 = vshrl.u32 %v2095, 7
    %v2097 = vsub.s32 4, %v2096
    %v2098 = vrot.slane %v2077, %v2097
    %v2099 = vlaneseq
    %v2100 = vshrl.u32 %v2099, 7
    %v2101 = vsub.s32 5, %v2100
    %v2102 = vrot.slane %v2077, %v2101
    %v2109 = vadd.f32 %v2041, %v2082
    %v2110 = vadd.f32 %v2042, %v2086
    %v2111 = vadd.f32 %v2043, %v2090
    %v2112 = vadd.f32 %v2044, %v2094
    %v2113 = vadd.f32 %v2045, %v2098
    %v2114 = vadd.f32 %v2046, %v2102
    %v2115 = vadd.f32 %v2047, %v2082
    %v2116 = vadd.f32 %v2048, %v2086
    %v2117 = vadd.f32 %v2049, %v2090
    %v2118 = vadd.f32 %v2050, %v2094
    %v2119 = vadd.f32 %v2051, %v2098
    %v2120 = vadd.f32 %v2052, %v2102
    %v2121 = vadd.f32 %v2053, %v2082
    %v2122 = vadd.f32 %v2054, %v2086
    %v2123 = vadd.f32 %v2055, %v2090
    %v2124 = vadd.f32 %v2056, %v2094
    %v2125 = vadd.f32 %v2057, %v2098
    %v2126 = vadd.f32 %v2058, %v2102
    %v2127 = vadd.f32 %v2059, %v2082
    %v2128 = vadd.f32 %v2060, %v2086
    %v2129 = vadd.f32 %v2061, %v2090
    %v2130 = vadd.f32 %v2062, %v2094
    %v2131 = vadd.f32 %v2063, %v2098
    %v2132 = vadd.f32 %v2064, %v2102
    %v2133 = vadd.f32 %v2065, %v2082
    %v2134 = vadd.f32 %v2066, %v2086
    %v2135 = vadd.f32 %v2067, %v2090
    %v2136 = vadd.f32 %v2068, %v2094
    %v2137 = vadd.f32 %v2069, %v2098
    %v2138 = vadd.f32 %v2070, %v2102
    %v2139 = vadd.f32 %v2071, %v2082
    %v2140 = vadd.f32 %v2072, %v2086
    %v2141 = vadd.f32 %v2073, %v2090
    %v2142 = vadd.f32 %v2074, %v2094
    %v2143 = vadd.f32 %v2075, %v2098
    %v2144 = vadd.f32 %v2076, %v2102
    %v2181 = vcombine.low %v2109, %v2110
    %v2182 = vcombine.high %v2109, %v2110
    %v2183 = vcombine.low %v2111, %v2112
    %v2184 = vcombine.high %v2111, %v2112
    %v2186 = vunpack.c.l.s4 1983009808
    %v2187 = vunpack.c.0.s8 %v2186
    %v2188 = vlaneseq
    %v2189 = vshrl.u32 %v2188, 7
    %v2190 = vsub.s32 %v2187, %v2189
    %v2191 = vrot.slane %v2181, %v2190
    %v2193 = vunpack.c.l.s4 1983009808
    %v2194 = vunpack.c.0.s8 %v2193
    %v2195 = vlaneseq
    %v2196 = vshrl.u32 %v2195, 7
    %v2197 = vsub.s32 %v2194, %v2196
    %v2198 = vrot.slane %v2182, %v2197
    %v2200 = vunpack.c.l.s4 1983009808
    %v2201 = vunpack.c.0.s8 %v2200
    %v2202 = vlaneseq
    %v2203 = vshrl.u32 %v2202, 7
    %v2204 = vsub.s32 %v2201, %v2203
    %v2205 = vrot.slane %v2183, %v2204
    %v2207 = vunpack.c.l.s4 1983009808
    %v2208 = vunpack.c.0.s8 %v2207
    %v2209 = vlaneseq
    %v2210 = vshrl.u32 %v2209, 7
    %v2211 = vsub.s32 %v2208, %v2210
    %v2212 = vrot.slane %v2184, %v2211
    %v2213 = vcombine.low %v2191, %v2205
    %v2214 = vcombine.high %v2191, %v2205
    %v2215 = vcombine.low %v2198, %v2212
    %v2216 = vcombine.high %v2198, %v2212
    %v2217 = vcombine.low %v2113, %v2114
    %v2218 = vcombine.high %v2113, %v2114
    %v2220 = vunpack.c.l.s4 1983009808
    %v2221 = vunpack.c.0.s8 %v2220
    %v2222 = vlaneseq
    %v2223 = vshrl.u32 %v2222, 7
    %v2224 = vsub.s32 %v2221, %v2223
    %v2225 = vrot.slane %v2217, %v2224
    %v2227 = vunpack.c.l.s4 1983009808
    %v2228 = vunpack.c.0.s8 %v2227
    %v2229 = vlaneseq
    %v2230 = vshrl.u32 %v2229, 7
    %v2231 = vsub.s32 %v2228, %v2230
    %v2232 = vrot.slane %v2218, %v2231
    %v2233 = vcombine.high %v2225, %v2225
    %v2234 = vcombine.high %v2232, %v2232
    %v2235 = vcombine.low %v2115, %v2116
    %v2236 = vcombine.high %v2115, %v2116
    %v2237 = vcombine.low %v2117, %v2118
    %v2238 = vcombine.high %v2117, %v2118
    %v2240 = vunpack.c.l.s4 1983009808
    %v2241 = vunpack.c.0.s8 %v2240
    %v2242 = vlaneseq
    %v2243 = vshrl.u32 %v2242, 7
    %v2244 = vsub.s32 %v2241, %v2243
    %v2245 = vrot.slane %v2235, %v2244
    %v2247 = vunpack.c.l.s4 1983009808
    %v2248 = vunpack.c.0.s8 %v2247
    %v2249 = vlaneseq
    %v2250 = vshrl.u32 %v2249, 7
    %v2251 = vsub.s32 %v2248, %v2250
    %v2252 = vrot.slane %v2236, %v2251
    %v2254 = vunpack.c.l.s4 1983009808
    %v2255 = vunpack.c.0.s8 %v2254
    %v2256 = vlaneseq
    %v2257 = vshrl.u32 %v2256, 7
    %v2258 = vsub.s32 %v2255, %v2257
    %v2259 = vrot.slane %v2237, %v2258
    %v2261 = vunpack.c.l.s4 1983009808
    %v2262 = vunpack.c.0.s8 %v2261
    %v2263 = vlaneseq
    %v2264 = vshrl.u32 %v2263, 7
    %v2265 = vsub.s32 %v2262, %v2264
    %v2266 = vrot.slane %v2238, %v2265
    %v2267 = vcombine.low %v2245, %v2259
    %v2268 = vcombine.high %v2245, %v2259
    %v2269 = vcombine.low %v2252, %v2266
    %v2270 = vcombine.high %v2252, %v2266
    %v2271 = vcombine.low %v2119, %v2120
    %v2272 = vcombine.high %v2119, %v2120
    %v2274 = vunpack.c.l.s4 1983009808
    %v2275 = vunpack.c.0.s8 %v2274
    %v2276 = vlaneseq
    %v2277 = vshrl.u32 %v2276, 7
    %v2278 = vsub.s32 %v2275, %v2277
    %v2279 = vrot.slane %v2271, %v2278
    %v2281 = vunpack.c.l.s4 1983009808
    %v2282 = vunpack.c.0.s8 %v2281
    %v2283 = vlaneseq
    %v2284 = vshrl.u32 %v2283, 7
    %v2285 = vsub.s32 %v2282, %v2284
    %v2286 = vrot.slane %v2272, %v2285
    %v2287 = vcombine.high %v2279, %v2279
    %v2288 = vcombine.high %v2286, %v2286
    %v2289 = vcombine.low %v2121, %v2122
    %v2290 = vcombine.high %v2121, %v2122
    %v2291 = vcombine.low %v2123, %v2124
    %v2292 = vcombine.high %v2123, %v2124
    %v2294 = vunpack.c.l.s4 1983009808
    %v2295 = vunpack.c.0.s8 %v2294
    %v2296 = vlaneseq
    %v2297 = vshrl.u32 %v2296, 7
    %v2298 = vsub.s32 %v2295, %v2297
    %v2299 = vrot.slane %v2289, %v2298
    %v2301 = vunpack.c.l.s4 1983009808
    %v2302 = vunpack.c.0.s8 %v2301
    %v2303 = vlaneseq
    %v2304 = vshrl.u32 %v2303, 7
    %v2305 = vsub.s32 %v2302, %v2304
    %v2306 = vrot.slane %v2290, %v2305
    %v2308 = vunpack.c.l.s4 1983009808
    %v2309 = vunpack.c.0.s8 %v2308
    %v2310 = vlaneseq
    %v2311 = vshrl.u32 %v2310, 7
    %v2312 = vsub.s32 %v2309, %v2311
    %v2313 = vrot.slane %v2291, %v2312
    %v2315 = vunpack.c.l.s4 1983009808
    %v2316 = vunpack.c.0.s8 %v2315
    %v2317 = vlaneseq
    %v2318 = vshrl.u32 %v2317, 7
    %v2319 = vsub.s32 %v2316, %v2318
    %v2320 = vrot.slane %v2292, %v2319
    %v2321 = vcombine.low %v2299, %v2313
    %v2322 = vcombine.high %v2299, %v2313
    %v2323 = vcombine.low %v2306, %v2320
    %v2324 = vcombine.high %v2306, %v2320
    %v2325 = vcombine.low %v2125, %v2126
    %v2326 = vcombine.high %v2125, %v2126
    %v2328 = vunpack.c.l.s4 1983009808
    %v2329 = vunpack.c.0.s8 %v2328
    %v2330 = vlaneseq
    %v2331 = vshrl.u32 %v2330, 7
    %v2332 = vsub.s32 %v2329, %v2331
    %v2333 = vrot.slane %v2325, %v2332
    %v2335 = vunpack.c.l.s4 1983009808
    %v2336 = vunpack.c.0.s8 %v2335
    %v2337 = vlaneseq
    %v2338 = vshrl.u32 %v2337, 7
    %v2339 = vsub.s32 %v2336, %v2338
    %v2340 = vrot.slane %v2326, %v2339
    %v2341 = vcombine.high %v2333, %v2333
    %v2342 = vcombine.high %v2340, %v2340
    %v2343 = vcombine.low %v2127, %v2128
    %v2344 = vcombine.high %v2127, %v2128
    %v2345 = vcombine.low %v2129, %v2130
    %v2346 = vcombine.high %v2129, %v2130
    %v2348 = vunpack.c.l.s4 1983009808
    %v2349 = vunpack.c.0.s8 %v2348
    %v2350 = vlaneseq
    %v2351 = vshrl.u32 %v2350, 7
    %v2352 = vsub.s32 %v2349, %v2351
    %v2353 = vrot.slane %v2343, %v2352
    %v2355 = vunpack.c.l.s4 1983009808
    %v2356 = vunpack.c.0.s8 %v2355
    %v2357 = vlaneseq
    %v2358 = vshrl.u32 %v2357, 7
    %v2359 = vsub.s32 %v2356, %v2358
    %v2360 = vrot.slane %v2344, %v2359
    %v2362 = vunpack.c.l.s4 1983009808
    %v2363 = vunpack.c.0.s8 %v2362
    %v2364 = vlaneseq
    %v2365 = vshrl.u32 %v2364, 7
    %v2366 = vsub.s32 %v2363, %v2365
    %v2367 = vrot.slane %v2345, %v2366
    %v2369 = vunpack.c.l.s4 1983009808
    %v2370 = vunpack.c.0.s8 %v2369
    %v2371 = vlaneseq
    %v2372 = vshrl.u32 %v2371, 7
    %v2373 = vsub.s32 %v2370, %v2372
    %v2374 = vrot.slane %v2346, %v2373
    %v2375 = vcombine.low %v2353, %v2367
    %v2376 = vcombine.high %v2353, %v2367
    %v2377 = vcombine.low %v2360, %v2374
    %v2378 = vcombine.high %v2360, %v2374
    %v2379 = vcombine.low %v2131, %v2132
    %v2380 = vcombine.high %v2131, %v2132
    %v2382 = vunpack.c.l.s4 1983009808
    %v2383 = vunpack.c.0.s8 %v2382
    %v2384 = vlaneseq
    %v2385 = vshrl.u32 %v2384, 7
    %v2386 = vsub.s32 %v2383, %v2385
    %v2387 = vrot.slane %v2379, %v2386
    %v2389 = vunpack.c.l.s4 1983009808
    %v2390 = vunpack.c.0.s8 %v2389
    %v2391 = vlaneseq
    %v2392 = vshrl.u32 %v2391, 7
    %v2393 = vsub.s32 %v2390, %v2392
    %v2394 = vrot.slane %v2380, %v2393
    %v2395 = vcombine.high %v2387, %v2387
    %v2396 = vcombine.high %v2394, %v2394
    %v2397 = vcombine.low %v2133, %v2134
    %v2398 = vcombine.high %v2133, %v2134
    %v2399 = vcombine.low %v2135, %v2136
    %v2400 = vcombine.high %v2135, %v2136
    %v2402 = vunpack.c.l.s4 1983009808
    %v2403 = vunpack.c.0.s8 %v2402
    %v2404 = vlaneseq
    %v2405 = vshrl.u32 %v2404, 7
    %v2406 = vsub.s32 %v2403, %v2405
    %v2407 = vrot.slane %v2397, %v2406
    %v2409 = vunpack.c.l.s4 1983009808
    %v2410 = vunpack.c.0.s8 %v2409
    %v2411 = vlaneseq
    %v2412 = vshrl.u32 %v2411, 7
    %v2413 = vsub.s32 %v2410, %v2412
    %v2414 = vrot.slane %v2398, %v2413
    %v2416 = vunpack.c.l.s4 1983009808
    %v2417 = vunpack.c.0.s8 %v2416
    %v2418 = vlaneseq
    %v2419 = vshrl.u32 %v2418, 7
    %v2420 = vsub.s32 %v2417, %v2419
    %v2421 = vrot.slane %v2399, %v2420
    %v2423 = vunpack.c.l.s4 1983009808
    %v2424 = vunpack.c.0.s8 %v2423
    %v2425 = vlaneseq
    %v2426 = vshrl.u32 %v2425, 7
    %v2427 = vsub.s32 %v2424, %v2426
    %v2428 = vrot.slane %v2400, %v2427
    %v2429 = vcombine.low %v2407, %v2421
    %v2430 = vcombine.high %v2407, %v2421
    %v2431 = vcombine.low %v2414, %v2428
    %v2432 = vcombine.high %v2414, %v2428
    %v2433 = vcombine.low %v2137, %v2138
    %v2434 = vcombine.high %v2137, %v2138
    %v2436 = vunpack.c.l.s4 1983009808
    %v2437 = vunpack.c.0.s8 %v2436
    %v2438 = vlaneseq
    %v2439 = vshrl.u32 %v2438, 7
    %v2440 = vsub.s32 %v2437, %v2439
    %v2441 = vrot.slane %v2433, %v2440
    %v2443 = vunpack.c.l.s4 1983009808
    %v2444 = vunpack.c.0.s8 %v2443
    %v2445 = vlaneseq
    %v2446 = vshrl.u32 %v2445, 7
    %v2447 = vsub.s32 %v2444, %v2446
    %v2448 = vrot.slane %v2434, %v2447
    %v2449 = vcombine.high %v2441, %v2441
    %v2450 = vcombine.high %v2448, %v2448
    %v2451 = vcombine.low %v2139, %v2140
    %v2452 = vcombine.high %v2139, %v2140
    %v2453 = vcombine.low %v2141, %v2142
    %v2454 = vcombine.high %v2141, %v2142
    %v2456 = vunpack.c.l.s4 1983009808
    %v2457 = vunpack.c.0.s8 %v2456
    %v2458 = vlaneseq
    %v2459 = vshrl.u32 %v2458, 7
    %v2460 = vsub.s32 %v2457, %v2459
    %v2461 = vrot.slane %v2451, %v2460
    %v2463 = vunpack.c.l.s4 1983009808
    %v2464 = vunpack.c.0.s8 %v2463
    %v2465 = vlaneseq
    %v2466 = vshrl.u32 %v2465, 7
    %v2467 = vsub.s32 %v2464, %v2466
    %v2468 = vrot.slane %v2452, %v2467
    %v2470 = vunpack.c.l.s4 1983009808
    %v2471 = vunpack.c.0.s8 %v2470
    %v2472 = vlaneseq
    %v2473 = vshrl.u32 %v2472, 7
    %v2474 = vsub.s32 %v2471, %v2473
    %v2475 = vrot.slane %v2453, %v2474
    %v2477 = vunpack.c.l.s4 1983009808
    %v2478 = vunpack.c.0.s8 %v2477
    %v2479 = vlaneseq
    %v2480 = vshrl.u32 %v2479, 7
    %v2481 = vsub.s32 %v2478, %v2480
    %v2482 = vrot.slane %v2454, %v2481
    %v2483 = vcombine.low %v2461, %v2475
    %v2484 = vcombine.high %v2461, %v2475
    %v2485 = vcombine.low %v2468, %v2482
    %v2486 = vcombine.high %v2468, %v2482
    %v2487 = vcombine.low %v2143, %v2144
    %v2488 = vcombine.high %v2143, %v2144
    %v2490 = vunpack.c.l.s4 1983009808
    %v2491 = vunpack.c.0.s8 %v2490
    %v2492 = vlaneseq
    %v2493 = vshrl.u32 %v2492, 7
    %v2494 = vsub.s32 %v2491, %v2493
    %v2495 = vrot.slane %v2487, %v2494
    %v2497 = vunpack.c.l.s4 1983009808
    %v2498 = vunpack.c.0.s8 %v2497
    %v2499 = vlaneseq
    %v2500 = vshrl.u32 %v2499, 7
    %v2501 = vsub.s32 %v2498, %v2500
    %v2502 = vrot.slane %v2488, %v2501
    %v2503 = vcombine.high %v2495, %v2495
    %v2504 = vcombine.high %v2502, %v2502
    %v2553 = vrot.slane %v2213, 7
    %v2554 = vrot.slane %v2553, 2
    %v2555 = vrot.slane %v2225, 7
    %v2556 = vrot.slane %v2555, 2
    %v2557 = vrot.slane %v2214, 7
    %v2558 = vrot.slane %v2557, 2
    %v2559 = vrot.slane %v2233, 7
    %v2560 = vrot.slane %v2559, 2
    %v2561 = vrot.slane %v2215, 7
    %v2562 = vrot.slane %v2561, 2
    %v2563 = vrot.slane %v2232, 7
    %v2564 = vrot.slane %v2563, 2
    %v2565 = vrot.slane %v2216, 7
    %v2566 = vrot.slane %v2565, 2
    %v2567 = vrot.slane %v2234, 7
    %v2568 = vrot.slane %v2567, 2
    %v2569 = vrot.slane %v2267, 7
    %v2570 = vrot.slane %v2569, 2
    %v2571 = vrot.slane %v2279, 7
    %v2572 = vrot.slane %v2571, 2
    %v2573 = vrot.slane %v2268, 7
    %v2574 = vrot.slane %v2573, 2
    %v2575 = vrot.slane %v2287, 7
    %v2576 = vrot.slane %v2575, 2
    %v2577 = vrot.slane %v2269, 7
    %v2578 = vrot.slane %v2577, 2
    %v2579 = vrot.slane %v2286, 7
    %v2580 = vrot.slane %v2579, 2
    %v2581 = vrot.slane %v2270, 7
    %v2582 = vrot.slane %v2581, 2
    %v2583 = vrot.slane %v2288, 7
    %v2584 = vrot.slane %v2583, 2
    %v2585 = vrot.slane %v2321, 7
    %v2586 = vrot.slane %v2585, 2
    %v2587 = vrot.slane %v2333, 7
    %v2588 = vrot.slane %v2587, 2
    %v2589 = vrot.slane %v2322, 7
    %v2590 = vrot.slane %v2589, 2
    %v2591 = vrot.slane %v2341, 7
    %v2592 = vrot.slane %v2591, 2
    %v2593 = vrot.slane %v2323, 7
    %v2594 = vrot.slane %v2593, 2
    %v2595 = vrot.slane %v2340, 7
    %v2596 = vrot.slane %v2595, 2
    %v2597 = vrot.slane %v2324, 7
    %v2598 = vrot.slane %v2597, 2
    %v2599 = vrot.slane %v2342, 7
    %v2600 = vrot.slane %v2599, 2
    %v2601 = vrot.slane %v2375, 7
    %v2602 = vrot.slane %v2601, 2
    %v2603 = vrot.slane %v2387, 7
    %v2604 = vrot.slane %v2603, 2
    %v2605 = vrot.slane %v2376, 7
    %v2606 = vrot.slane %v2605, 2
    %v2607 = vrot.slane %v2395, 7
    %v2608 = vrot.slane %v2607, 2
    %v2609 = vrot.slane %v2377, 7
    %v2610 = vrot.slane %v2609, 2
    %v2611 = vrot.slane %v2394, 7
    %v2612 = vrot.slane %v2611, 2
    %v2613 = vrot.slane %v2378, 7
    %v2614 = vrot.slane %v2613, 2
    %v2615 = vrot.slane %v2396, 7
    %v2616 = vrot.slane %v2615, 2
    %v2617 = vrot.slane %v2429, 7
    %v2618 = vrot.slane %v2617, 2
    %v2619 = vrot.slane %v2441, 7
    %v2620 = vrot.slane %v2619, 2
    %v2621 = vrot.slane %v2430, 7
    %v2622 = vrot.slane %v2621, 2
    %v2623 = vrot.slane %v2449, 7
    %v2624 = vrot.slane %v2623, 2
    %v2625 = vrot.slane %v2431, 7
    %v2626 = vrot.slane %v2625, 2
    %v2627 = vrot.slane %v2448, 7
    %v2628 = vrot.slane %v2627, 2
    %v2629 = vrot.slane %v2432, 7
    %v2630 = vrot.slane %v2629, 2
    %v2631 = vrot.slane %v2450, 7
    %v2632 = vrot.slane %v2631, 2
    %v2633 = vrot.slane %v2483, 7
    %v2634 = vrot.slane %v2633, 2
    %v2635 = vrot.slane %v2495, 7
    %v2636 = vrot.slane %v2635, 2
    %v2637 = vrot.slane %v2484, 7
    %v2638 = vrot.slane %v2637, 2
    %v2639 = vrot.slane %v2503, 7
    %v2640 = vrot.slane %v2639, 2
    %v2641 = vrot.slane %v2485, 7
    %v2642 = vrot.slane %v2641, 2
    %v2643 = vrot.slane %v2502, 7
    %v2644 = vrot.slane %v2643, 2
    %v2645 = vrot.slane %v2486, 7
    %v2646 = vrot.slane %v2645, 2
    %v2647 = vrot.slane %v2504, 7
    %v2648 = vrot.slane %v2647, 2
    %v2697 = vmax.f32 %v2213, %v2554
    %v2698 = vmax.f32 %v2225, %v2556
    %v2699 = vmax.f32 %v2214, %v2558
    %v2700 = vmax.f32 %v2233, %v2560
    %v2701 = vmax.f32 %v2215, %v2562
    %v2702 = vmax.f32 %v2232, %v2564
    %v2703 = vmax.f32 %v2216, %v2566
    %v2704 = vmax.f32 %v2234, %v2568
    %v2705 = vmax.f32 %v2267, %v2570
    %v2706 = vmax.f32 %v2279, %v2572
    %v2707 = vmax.f32 %v2268, %v2574
    %v2708 = vmax.f32 %v2287, %v2576
    %v2709 = vmax.f32 %v2269, %v2578
    %v2710 = vmax.f32 %v2286, %v2580
    %v2711 = vmax.f32 %v2270, %v2582
    %v2712 = vmax.f32 %v2288, %v2584
    %v2713 = vmax.f32 %v2321, %v2586
    %v2714 = vmax.f32 %v2333, %v2588
    %v2715 = vmax.f32 %v2322, %v2590
    %v2716 = vmax.f32 %v2341, %v2592
    %v2717 = vmax.f32 %v2323, %v2594
    %v2718 = vmax.f32 %v2340, %v2596
    %v2719 = vmax.f32 %v2324, %v2598
    %v2720 = vmax.f32 %v2342, %v2600
    %v2721 = vmax.f32 %v2375, %v2602
    %v2722 = vmax.f32 %v2387, %v2604
    %v2723 = vmax.f32 %v2376, %v2606
    %v2724 = vmax.f32 %v2395, %v2608
    %v2725 = vmax.f32 %v2377, %v2610
    %v2726 = vmax.f32 %v2394, %v2612
    %v2727 = vmax.f32 %v2378, %v2614
    %v2728 = vmax.f32 %v2396, %v2616
    %v2729 = vmax.f32 %v2429, %v2618
    %v2730 = vmax.f32 %v2441, %v2620
    %v2731 = vmax.f32 %v2430, %v2622
    %v2732 = vmax.f32 %v2449, %v2624
    %v2733 = vmax.f32 %v2431, %v2626
    %v2734 = vmax.f32 %v2448, %v2628
    %v2735 = vmax.f32 %v2432, %v2630
    %v2736 = vmax.f32 %v2450, %v2632
    %v2737 = vmax.f32 %v2483, %v2634
    %v2738 = vmax.f32 %v2495, %v2636
    %v2739 = vmax.f32 %v2484, %v2638
    %v2740 = vmax.f32 %v2503, %v2640
    %v2741 = vmax.f32 %v2485, %v2642
    %v2742 = vmax.f32 %v2502, %v2644
    %v2743 = vmax.f32 %v2486, %v2646
    %v2744 = vmax.f32 %v2504, %v2648
    %v2793 = vrot.slane %v2697, 6
    %v2794 = vrot.slane %v2698, 6
    %v2795 = vrot.slane %v2699, 6
    %v2796 = vrot.slane %v2700, 6
    %v2797 = vrot.slane %v2701, 6
    %v2798 = vrot.slane %v2702, 6
    %v2799 = vrot.slane %v2703, 6
    %v2800 = vrot.slane %v2704, 6
    %v2801 = vrot.slane %v2705, 6
    %v2802 = vrot.slane %v2706, 6
    %v2803 = vrot.slane %v2707, 6
    %v2804 = vrot.slane %v2708, 6
    %v2805 = vrot.slane %v2709, 6
    %v2806 = vrot.slane %v2710, 6
    %v2807 = vrot.slane %v2711, 6
    %v2808 = vrot.slane %v2712, 6
    %v2809 = vrot.slane %v2713, 6
    %v2810 = vrot.slane %v2714, 6
    %v2811 = vrot.slane %v2715, 6
    %v2812 = vrot.slane %v2716, 6
    %v2813 = vrot.slane %v2717, 6
    %v2814 = vrot.slane %v2718, 6
    %v2815 = vrot.slane %v2719, 6
    %v2816 = vrot.slane %v2720, 6
    %v2817 = vrot.slane %v2721, 6
    %v2818 = vrot.slane %v2722, 6
    %v2819 = vrot.slane %v2723, 6
    %v2820 = vrot.slane %v2724, 6
    %v2821 = vrot.slane %v2725, 6
    %v2822 = vrot.slane %v2726, 6
    %v2823 = vrot.slane %v2727, 6
    %v2824 = vrot.slane %v2728, 6
    %v2825 = vrot.slane %v2729, 6
    %v2826 = vrot.slane %v2730, 6
    %v2827 = vrot.slane %v2731, 6
    %v2828 = vrot.slane %v2732, 6
    %v2829 = vrot.slane %v2733, 6
    %v2830 = vrot.slane %v2734, 6
    %v2831 = vrot.slane %v2735, 6
    %v2832 = vrot.slane %v2736, 6
    %v2833 = vrot.slane %v2737, 6
    %v2834 = vrot.slane %v2738, 6
    %v2835 = vrot.slane %v2739, 6
    %v2836 = vrot.slane %v2740, 6
    %v2837 = vrot.slane %v2741, 6
    %v2838 = vrot.slane %v2742, 6
    %v2839 = vrot.slane %v2743, 6
    %v2840 = vrot.slane %v2744, 6
    %vm2841 = vcmask 1041408
    %v2842 = vsel %vm2841, %v2793, %v2794
    %v2843 = vsel %vm2841, %v2795, %v2796
    %v2844 = vsel %vm2841, %v2797, %v2798
    %v2845 = vsel %vm2841, %v2799, %v2800
    %v2846 = vsel %vm2841, %v2801, %v2802
    %v2847 = vsel %vm2841, %v2803, %v2804
    %v2848 = vsel %vm2841, %v2805, %v2806
    %v2849 = vsel %vm2841, %v2807, %v2808
    %v2850 = vsel %vm2841, %v2809, %v2810
    %v2851 = vsel %vm2841, %v2811, %v2812
    %v2852 = vsel %vm2841, %v2813, %v2814
    %v2853 = vsel %vm2841, %v2815, %v2816
    %v2854 = vsel %vm2841, %v2817, %v2818
    %v2855 = vsel %vm2841, %v2819, %v2820
    %v2856 = vsel %vm2841, %v2821, %v2822
    %v2857 = vsel %vm2841, %v2823, %v2824
    %v2858 = vsel %vm2841, %v2825, %v2826
    %v2859 = vsel %vm2841, %v2827, %v2828
    %v2860 = vsel %vm2841, %v2829, %v2830
    %v2861 = vsel %vm2841, %v2831, %v2832
    %v2862 = vsel %vm2841, %v2833, %v2834
    %v2863 = vsel %vm2841, %v2835, %v2836
    %v2864 = vsel %vm2841, %v2837, %v2838
    %v2865 = vsel %vm2841, %v2839, %v2840
    %v2890 = vmax.f32 %v2697, %v2842
    %v2891 = vmax.f32 %v2699, %v2843
    %v2892 = vmax.f32 %v2701, %v2844
    %v2893 = vmax.f32 %v2703, %v2845
    %v2894 = vmax.f32 %v2705, %v2846
    %v2895 = vmax.f32 %v2707, %v2847
    %v2896 = vmax.f32 %v2709, %v2848
    %v2897 = vmax.f32 %v2711, %v2849
    %v2898 = vmax.f32 %v2713, %v2850
    %v2899 = vmax.f32 %v2715, %v2851
    %v2900 = vmax.f32 %v2717, %v2852
    %v2901 = vmax.f32 %v2719, %v2853
    %v2902 = vmax.f32 %v2721, %v2854
    %v2903 = vmax.f32 %v2723, %v2855
    %v2904 = vmax.f32 %v2725, %v2856
    %v2905 = vmax.f32 %v2727, %v2857
    %v2906 = vmax.f32 %v2729, %v2858
    %v2907 = vmax.f32 %v2731, %v2859
    %v2908 = vmax.f32 %v2733, %v2860
    %v2909 = vmax.f32 %v2735, %v2861
    %v2910 = vmax.f32 %v2737, %v2862
    %v2911 = vmax.f32 %v2739, %v2863
    %v2912 = vmax.f32 %v2741, %v2864
    %v2913 = vmax.f32 %v2743, %v2865
    %v2914 = vmax.f32 %v2890, 0.0
    %v2915 = vmax.f32 %v2891, 0.0
    %v2916 = vmax.f32 %v2892, 0.0
    %v2917 = vmax.f32 %v2893, 0.0
    %v2918 = vmax.f32 %v2894, 0.0
    %v2919 = vmax.f32 %v2895, 0.0
    %v2920 = vmax.f32 %v2896, 0.0
    %v2921 = vmax.f32 %v2897, 0.0
    %v2922 = vmax.f32 %v2898, 0.0
    %v2923 = vmax.f32 %v2899, 0.0
    %v2924 = vmax.f32 %v2900, 0.0
    %v2925 = vmax.f32 %v2901, 0.0
    %v2926 = vmax.f32 %v2902, 0.0
    %v2927 = vmax.f32 %v2903, 0.0
    %v2928 = vmax.f32 %v2904, 0.0
    %v2929 = vmax.f32 %v2905, 0.0
    %v2930 = vmax.f32 %v2906, 0.0
    %v2931 = vmax.f32 %v2907, 0.0
    %v2932 = vmax.f32 %v2908, 0.0
    %v2933 = vmax.f32 %v2909, 0.0
    %v2934 = vmax.f32 %v2910, 0.0
    %v2935 = vmax.f32 %v2911, 0.0
    %v2936 = vmax.f32 %v2912, 0.0
    %v2937 = vmax.f32 %v2913, 0.0
    %v2938 = vld [vmem:[#allocation7] sm:$0xff]
    %v2939 = vld [vmem:[#allocation7 + $0x8] sm:$0xff]
    %v2940 = vld [vmem:[#allocation7 + $0x10] sm:$0xff]
    %v2941 = vld [vmem:[#allocation7 + $0x18] sm:$0xff]
    %v2942 = vld [vmem:[#allocation7 + $0x20] sm:$0xff]
    %v2943 = vld [vmem:[#allocation7 + $0x28] sm:$0xff]
    %v2944 = vld [vmem:[#allocation7 + $0x30] sm:$0xff]
    %v2945 = vld [vmem:[#allocation7 + $0x38] sm:$0xff]
    %v2946 = vld [vmem:[#allocation7 + $0x40] sm:$0xff]
    %v2947 = vld [vmem:[#allocation7 + $0x48] sm:$0xff]
    %v2948 = vld [vmem:[#allocation7 + $0x50] sm:$0xff]
    %v2949 = vld [vmem:[#allocation7 + $0x58] sm:$0xff]
    %v2950 = vld [vmem:[#allocation7 + $0x60] sm:$0xff]
    %v2951 = vld [vmem:[#allocation7 + $0x68] sm:$0xff]
    %v2952 = vld [vmem:[#allocation7 + $0x70] sm:$0xff]
    %v2953 = vld [vmem:[#allocation7 + $0x78] sm:$0xff]
    %v2954 = vld [vmem:[#allocation7 + $0x80] sm:$0xff]
    %v2955 = vld [vmem:[#allocation7 + $0x88] sm:$0xff]
    %v2956 = vld [vmem:[#allocation7 + $0x90] sm:$0xff]
    %v2957 = vld [vmem:[#allocation7 + $0x98] sm:$0xff]
    %v2958 = vld [vmem:[#allocation7 + $0xa0] sm:$0xff]
    %v2959 = vld [vmem:[#allocation7 + $0xa8] sm:$0xff]
    %v2960 = vld [vmem:[#allocation7 + $0xb0] sm:$0xff]
    %v2961 = vld [vmem:[#allocation7 + $0xb8] sm:$0xff]
    %v2962 = vld [vmem:[#allocation7 + $0xc0] sm:$0xff]
    %v2963 = vld [vmem:[#allocation7 + $0xc8] sm:$0xff]
    %v2964 = vld [vmem:[#allocation7 + $0xd0] sm:$0xff]
    %v2965 = vld [vmem:[#allocation7 + $0xd8] sm:$0xff]
    %v2966 = vld [vmem:[#allocation7 + $0xe0] sm:$0xff]
    %v2967 = vld [vmem:[#allocation7 + $0xe8] sm:$0xff]
    %v2968 = vld [vmem:[#allocation7 + $0xf0] sm:$0xff]
    %v2969 = vld [vmem:[#allocation7 + $0xf8] sm:$0xff]
    %v2970 = vld [vmem:[#allocation7 + $0x100] sm:$0xff]
    %v2971 = vld [vmem:[#allocation7 + $0x108] sm:$0xff]
    %v2972 = vld [vmem:[#allocation7 + $0x110] sm:$0xff]
    %v2973 = vld [vmem:[#allocation7 + $0x118] sm:$0xff]
    %v2974 = vld [vmem:[#allocation7 + $0x120] sm:$0xff]
    %v2975 = vld [vmem:[#allocation7 + $0x128] sm:$0xff]
    %v2976 = vld [vmem:[#allocation7 + $0x130] sm:$0xff]
    %v2977 = vld [vmem:[#allocation7 + $0x138] sm:$0xff]
    %v2978 = vld [vmem:[#allocation7 + $0x140] sm:$0xff]
    %v2979 = vld [vmem:[#allocation7 + $0x148] sm:$0xff]
    %v2980 = vld [vmem:[#allocation7 + $0x150] sm:$0xff]
    %v2981 = vld [vmem:[#allocation7 + $0x158] sm:$0xff]
    %v2982 = vld [vmem:[#allocation7 + $0x160] sm:$0xff]
    %v2983 = vld [vmem:[#allocation7 + $0x168] sm:$0xff]
    %v2984 = vld [vmem:[#allocation7 + $0x170] sm:$0xff]
    %v2985 = vld [vmem:[#allocation7 + $0x178] sm:$0xff]
    %v2986 = vld [vmem:[#allocation7 + $0x180] sm:$0xff]
    %v2987 = vld [vmem:[#allocation7 + $0x188] sm:$0xff]
    %v2988 = vld [vmem:[#allocation7 + $0x190] sm:$0xff]
    %v2989 = vld [vmem:[#allocation7 + $0x198] sm:$0xff]
    %v2990 = vld [vmem:[#allocation7 + $0x1a0] sm:$0xff]
    %v2991 = vld [vmem:[#allocation7 + $0x1a8] sm:$0xff]
    %v2992 = vld [vmem:[#allocation7 + $0x1b0] sm:$0xff]
    %v2993 = vld [vmem:[#allocation7 + $0x1b8] sm:$0xff]
    %v2994 = vld [vmem:[#allocation7 + $0x1c0] sm:$0xff]
    %v2995 = vld [vmem:[#allocation7 + $0x1c8] sm:$0xff]
    %v2996 = vld [vmem:[#allocation7 + $0x1d0] sm:$0xff]
    %v2997 = vld [vmem:[#allocation7 + $0x1d8] sm:$0xff]
    %v2998 = vld [vmem:[#allocation7 + $0x1e0] sm:$0xff]
    %v2999 = vld [vmem:[#allocation7 + $0x1e8] sm:$0xff]
    %v3000 = vld [vmem:[#allocation7 + $0x1f0] sm:$0xff]
    %v3001 = vld [vmem:[#allocation7 + $0x1f8] sm:$0xff]
    %v3002 = vld [vmem:[#allocation7 + $0x200] sm:$0xff]
    %v3003 = vld [vmem:[#allocation7 + $0x208] sm:$0xff]
    %v3004 = vld [vmem:[#allocation7 + $0x210] sm:$0xff]
    %v3005 = vld [vmem:[#allocation7 + $0x218] sm:$0xff]
    %v3006 = vld [vmem:[#allocation7 + $0x220] sm:$0xff]
    %v3007 = vld [vmem:[#allocation7 + $0x228] sm:$0xff]
    %v3008 = vld [vmem:[#allocation7 + $0x230] sm:$0xff]
    %v3009 = vld [vmem:[#allocation7 + $0x238] sm:$0xff]
    %v3010 = vld [vmem:[#allocation7 + $0x240] sm:$0xff]
    %v3011 = vld [vmem:[#allocation7 + $0x248] sm:$0xff]
    %v3012 = vld [vmem:[#allocation7 + $0x250] sm:$0xff]
    %v3013 = vld [vmem:[#allocation7 + $0x258] sm:$0xff]
    %v3014 = vld [vmem:[#allocation7 + $0x260] sm:$0xff]
    %v3015 = vld [vmem:[#allocation7 + $0x268] sm:$0xff]
    %v3016 = vld [vmem:[#allocation7 + $0x270] sm:$0xff]
    %v3017 = vld [vmem:[#allocation7 + $0x278] sm:$0xff]
    %v3018 = vld [vmem:[#allocation7 + $0x280] sm:$0xff]
    %v3019 = vld [vmem:[#allocation7 + $0x288] sm:$0xff]
    %v3020 = vld [vmem:[#allocation7 + $0x290] sm:$0xff]
    %v3021 = vld [vmem:[#allocation7 + $0x298] sm:$0xff]
    %v3022 = vld [vmem:[#allocation7 + $0x2a0] sm:$0xff]
    %v3023 = vld [vmem:[#allocation7 + $0x2a8] sm:$0xff]
    %v3024 = vld [vmem:[#allocation7 + $0x2b0] sm:$0xff]
    %v3025 = vld [vmem:[#allocation7 + $0x2b8] sm:$0xff]
    %v3026 = vld [vmem:[#allocation7 + $0x2c0] sm:$0xff]
    %v3027 = vld [vmem:[#allocation7 + $0x2c8] sm:$0xff]
    %v3028 = vld [vmem:[#allocation7 + $0x2d0] sm:$0xff]
    %v3029 = vld [vmem:[#allocation7 + $0x2d8] sm:$0xff]
    %v3030 = vld [vmem:[#allocation7 + $0x2e0] sm:$0xff]
    %v3031 = vld [vmem:[#allocation7 + $0x2e8] sm:$0xff]
    %v3032 = vld [vmem:[#allocation7 + $0x2f0] sm:$0xff]
    %v3033 = vld [vmem:[#allocation7 + $0x2f8] sm:$0xff]
    %v3034 = vld [vmem:[#allocation7 + $0x300] sm:$0xff]
    %v3035 = vld [vmem:[#allocation7 + $0x308] sm:$0xff]
    %v3036 = vld [vmem:[#allocation7 + $0x310] sm:$0xff]
    %v3037 = vld [vmem:[#allocation7 + $0x318] sm:$0xff]
    %v3038 = vld [vmem:[#allocation7 + $0x320] sm:$0xff]
    %v3039 = vld [vmem:[#allocation7 + $0x328] sm:$0xff]
    %v3040 = vld [vmem:[#allocation7 + $0x330] sm:$0xff]
    %v3041 = vld [vmem:[#allocation7 + $0x338] sm:$0xff]
    %v3042 = vld [vmem:[#allocation7 + $0x340] sm:$0xff]
    %v3043 = vld [vmem:[#allocation7 + $0x348] sm:$0xff]
    %v3044 = vld [vmem:[#allocation7 + $0x350] sm:$0xff]
    %v3045 = vld [vmem:[#allocation7 + $0x358] sm:$0xff]
    %v3046 = vld [vmem:[#allocation7 + $0x360] sm:$0xff]
    %v3047 = vld [vmem:[#allocation7 + $0x368] sm:$0xff]
    %v3048 = vld [vmem:[#allocation7 + $0x370] sm:$0xff]
    %v3049 = vld [vmem:[#allocation7 + $0x378] sm:$0xff]
    %v3050 = vld [vmem:[#allocation7 + $0x380] sm:$0xff]
    %v3051 = vld [vmem:[#allocation7 + $0x388] sm:$0xff]
    %v3052 = vld [vmem:[#allocation7 + $0x390] sm:$0xff]
    %v3053 = vld [vmem:[#allocation7 + $0x398] sm:$0xff]
    %v3054 = vld [vmem:[#allocation7 + $0x3a0] sm:$0xff]
    %v3055 = vld [vmem:[#allocation7 + $0x3a8] sm:$0xff]
    %v3056 = vld [vmem:[#allocation7 + $0x3b0] sm:$0xff]
    %v3057 = vld [vmem:[#allocation7 + $0x3b8] sm:$0xff]
    %v3058 = vld [vmem:[#allocation7 + $0x3c0] sm:$0xff]
    %v3059 = vld [vmem:[#allocation7 + $0x3c8] sm:$0xff]
    %v3060 = vld [vmem:[#allocation7 + $0x3d0] sm:$0xff]
    %v3061 = vld [vmem:[#allocation7 + $0x3d8] sm:$0xff]
    %v3062 = vld [vmem:[#allocation7 + $0x3e0] sm:$0xff]
    %v3063 = vld [vmem:[#allocation7 + $0x3e8] sm:$0xff]
    %v3064 = vld [vmem:[#allocation7 + $0x3f0] sm:$0xff]
    %v3065 = vld [vmem:[#allocation7 + $0x3f8] sm:$0xff]
    %v3066 = vld [vmem:[#allocation7 + $0x400] sm:$0xff]
    %v3067 = vld [vmem:[#allocation7 + $0x408] sm:$0xff]
    %v3068 = vld [vmem:[#allocation7 + $0x410] sm:$0xff]
    %v3069 = vld [vmem:[#allocation7 + $0x418] sm:$0xff]
    %v3070 = vld [vmem:[#allocation7 + $0x420] sm:$0xff]
    %v3071 = vld [vmem:[#allocation7 + $0x428] sm:$0xff]
    %v3072 = vld [vmem:[#allocation7 + $0x430] sm:$0xff]
    %v3073 = vld [vmem:[#allocation7 + $0x438] sm:$0xff]
    %v3074 = vld [vmem:[#allocation7 + $0x440] sm:$0xff]
    %v3075 = vld [vmem:[#allocation7 + $0x448] sm:$0xff]
    %v3076 = vld [vmem:[#allocation7 + $0x450] sm:$0xff]
    %v3077 = vld [vmem:[#allocation7 + $0x458] sm:$0xff]
    %v3078 = vld [vmem:[#allocation7 + $0x460] sm:$0xff]
    %v3079 = vld [vmem:[#allocation7 + $0x468] sm:$0xff]
    %v3080 = vld [vmem:[#allocation7 + $0x470] sm:$0xff]
    %v3081 = vld [vmem:[#allocation7 + $0x478] sm:$0xff]
    %v3082 = vld [vmem:[#allocation7 + $0x480] sm:$0xff]
    %v3083 = vld [vmem:[#allocation7 + $0x488] sm:$0xff]
    %v3084 = vld [vmem:[#allocation7 + $0x490] sm:$0xff]
    %v3085 = vld [vmem:[#allocation7 + $0x498] sm:$0xff]
    %v3086 = vld [vmem:[#allocation7 + $0x4a0] sm:$0xff]
    %v3087 = vld [vmem:[#allocation7 + $0x4a8] sm:$0xff]
    %v3088 = vld [vmem:[#allocation7 + $0x4b0] sm:$0xff]
    %v3089 = vld [vmem:[#allocation7 + $0x4b8] sm:$0xff]
    %v3090 = vld [vmem:[#allocation7 + $0x4c0] sm:$0xff]
    %v3091 = vld [vmem:[#allocation7 + $0x4c8] sm:$0xff]
    %v3092 = vld [vmem:[#allocation7 + $0x4d0] sm:$0xff]
    %v3093 = vld [vmem:[#allocation7 + $0x4d8] sm:$0xff]
    %v3094 = vld [vmem:[#allocation7 + $0x4e0] sm:$0xff]
    %v3095 = vld [vmem:[#allocation7 + $0x4e8] sm:$0xff]
    %v3096 = vld [vmem:[#allocation7 + $0x4f0] sm:$0xff]
    %v3097 = vld [vmem:[#allocation7 + $0x4f8] sm:$0xff]
    %v3098 = vld [vmem:[#allocation7 + $0x500] sm:$0xff]
    %v3099 = vld [vmem:[#allocation7 + $0x508] sm:$0xff]
    %v3100 = vld [vmem:[#allocation7 + $0x510] sm:$0xff]
    %v3101 = vld [vmem:[#allocation7 + $0x518] sm:$0xff]
    %v3102 = vld [vmem:[#allocation7 + $0x520] sm:$0xff]
    %v3103 = vld [vmem:[#allocation7 + $0x528] sm:$0xff]
    %v3104 = vld [vmem:[#allocation7 + $0x530] sm:$0xff]
    %v3105 = vld [vmem:[#allocation7 + $0x538] sm:$0xff]
    %v3106 = vld [vmem:[#allocation7 + $0x540] sm:$0xff]
    %v3107 = vld [vmem:[#allocation7 + $0x548] sm:$0xff]
    %v3108 = vld [vmem:[#allocation7 + $0x550] sm:$0xff]
    %v3109 = vld [vmem:[#allocation7 + $0x558] sm:$0xff]
    %v3110 = vld [vmem:[#allocation7 + $0x560] sm:$0xff]
    %v3111 = vld [vmem:[#allocation7 + $0x568] sm:$0xff]
    %v3112 = vld [vmem:[#allocation7 + $0x570] sm:$0xff]
    %v3113 = vld [vmem:[#allocation7 + $0x578] sm:$0xff]
    %v3114 = vld [vmem:[#allocation7 + $0x580] sm:$0xff]
    %v3115 = vld [vmem:[#allocation7 + $0x588] sm:$0xff]
    %v3116 = vld [vmem:[#allocation7 + $0x590] sm:$0xff]
    %v3117 = vld [vmem:[#allocation7 + $0x598] sm:$0xff]
    %v3118 = vld [vmem:[#allocation7 + $0x5a0] sm:$0xff]
    %v3119 = vld [vmem:[#allocation7 + $0x5a8] sm:$0xff]
    %v3120 = vld [vmem:[#allocation7 + $0x5b0] sm:$0xff]
    %v3121 = vld [vmem:[#allocation7 + $0x5b8] sm:$0xff]
    %v3122 = vld [vmem:[#allocation7 + $0x5c0] sm:$0xff]
    %v3123 = vld [vmem:[#allocation7 + $0x5c8] sm:$0xff]
    %v3124 = vld [vmem:[#allocation7 + $0x5d0] sm:$0xff]
    %v3125 = vld [vmem:[#allocation7 + $0x5d8] sm:$0xff]
    %v3126 = vld [vmem:[#allocation7 + $0x5e0] sm:$0xff]
    %v3127 = vld [vmem:[#allocation7 + $0x5e8] sm:$0xff]
    %v3128 = vld [vmem:[#allocation7 + $0x5f0] sm:$0xff]
    %v3129 = vld [vmem:[#allocation7 + $0x5f8] sm:$0xff]
    %s3130 = scalar_lea.vmem [#allocation7], 1536
    %v3131 = vld [vmem:[%s3130] sm:$0xff]
    %v3132 = vld [vmem:[%s3130 + $0x8] sm:$0xff]
    %v3133 = vld [vmem:[%s3130 + $0x10] sm:$0xff]
    %v3134 = vld [vmem:[%s3130 + $0x18] sm:$0xff]
    %v3135 = vld [vmem:[%s3130 + $0x20] sm:$0xff]
    %v3136 = vld [vmem:[%s3130 + $0x28] sm:$0xff]
    %v3137 = vld [vmem:[%s3130 + $0x30] sm:$0xff]
    %v3138 = vld [vmem:[%s3130 + $0x38] sm:$0xff]
    %v3139 = vld [vmem:[%s3130 + $0x40] sm:$0xff]
    %v3140 = vld [vmem:[%s3130 + $0x48] sm:$0xff]
    %v3141 = vld [vmem:[%s3130 + $0x50] sm:$0xff]
    %v3142 = vld [vmem:[%s3130 + $0x58] sm:$0xff]
    %v3143 = vld [vmem:[%s3130 + $0x60] sm:$0xff]
    %v3144 = vld [vmem:[%s3130 + $0x68] sm:$0xff]
    %v3145 = vld [vmem:[%s3130 + $0x70] sm:$0xff]
    %v3146 = vld [vmem:[%s3130 + $0x78] sm:$0xff]
    %v3147 = vld [vmem:[%s3130 + $0x80] sm:$0xff]
    %v3148 = vld [vmem:[%s3130 + $0x88] sm:$0xff]
    %v3149 = vld [vmem:[%s3130 + $0x90] sm:$0xff]
    %v3150 = vld [vmem:[%s3130 + $0x98] sm:$0xff]
    %v3151 = vld [vmem:[%s3130 + $0xa0] sm:$0xff]
    %v3152 = vld [vmem:[%s3130 + $0xa8] sm:$0xff]
    %v3153 = vld [vmem:[%s3130 + $0xb0] sm:$0xff]
    %v3154 = vld [vmem:[%s3130 + $0xb8] sm:$0xff]
    %v3155 = vld [vmem:[%s3130 + $0xc0] sm:$0xff]
    %v3156 = vld [vmem:[%s3130 + $0xc8] sm:$0xff]
    %v3157 = vld [vmem:[%s3130 + $0xd0] sm:$0xff]
    %v3158 = vld [vmem:[%s3130 + $0xd8] sm:$0xff]
    %v3159 = vld [vmem:[%s3130 + $0xe0] sm:$0xff]
    %v3160 = vld [vmem:[%s3130 + $0xe8] sm:$0xff]
    %v3161 = vld [vmem:[%s3130 + $0xf0] sm:$0xff]
    %v3162 = vld [vmem:[%s3130 + $0xf8] sm:$0xff]
    %v3163 = vld [vmem:[%s3130 + $0x100] sm:$0xff]
    %v3164 = vld [vmem:[%s3130 + $0x108] sm:$0xff]
    %v3165 = vld [vmem:[%s3130 + $0x110] sm:$0xff]
    %v3166 = vld [vmem:[%s3130 + $0x118] sm:$0xff]
    %v3167 = vld [vmem:[%s3130 + $0x120] sm:$0xff]
    %v3168 = vld [vmem:[%s3130 + $0x128] sm:$0xff]
    %v3169 = vld [vmem:[%s3130 + $0x130] sm:$0xff]
    %v3170 = vld [vmem:[%s3130 + $0x138] sm:$0xff]
    %v3171 = vld [vmem:[%s3130 + $0x140] sm:$0xff]
    %v3172 = vld [vmem:[%s3130 + $0x148] sm:$0xff]
    %v3173 = vld [vmem:[%s3130 + $0x150] sm:$0xff]
    %v3174 = vld [vmem:[%s3130 + $0x158] sm:$0xff]
    %v3175 = vld [vmem:[%s3130 + $0x160] sm:$0xff]
    %v3176 = vld [vmem:[%s3130 + $0x168] sm:$0xff]
    %v3177 = vld [vmem:[%s3130 + $0x170] sm:$0xff]
    %v3178 = vld [vmem:[%s3130 + $0x178] sm:$0xff]
    %v3179 = vld [vmem:[%s3130 + $0x180] sm:$0xff]
    %v3180 = vld [vmem:[%s3130 + $0x188] sm:$0xff]
    %v3181 = vld [vmem:[%s3130 + $0x190] sm:$0xff]
    %v3182 = vld [vmem:[%s3130 + $0x198] sm:$0xff]
    %v3183 = vld [vmem:[%s3130 + $0x1a0] sm:$0xff]
    %v3184 = vld [vmem:[%s3130 + $0x1a8] sm:$0xff]
    %v3185 = vld [vmem:[%s3130 + $0x1b0] sm:$0xff]
    %v3186 = vld [vmem:[%s3130 + $0x1b8] sm:$0xff]
    %v3187 = vld [vmem:[%s3130 + $0x1c0] sm:$0xff]
    %v3188 = vld [vmem:[%s3130 + $0x1c8] sm:$0xff]
    %v3189 = vld [vmem:[%s3130 + $0x1d0] sm:$0xff]
    %v3190 = vld [vmem:[%s3130 + $0x1d8] sm:$0xff]
    %v3191 = vld [vmem:[%s3130 + $0x1e0] sm:$0xff]
    %v3192 = vld [vmem:[%s3130 + $0x1e8] sm:$0xff]
    %v3193 = vld [vmem:[%s3130 + $0x1f0] sm:$0xff]
    %v3194 = vld [vmem:[%s3130 + $0x1f8] sm:$0xff]
    %v3195 = vld [vmem:[%s3130 + $0x200] sm:$0xff]
    %v3196 = vld [vmem:[%s3130 + $0x208] sm:$0xff]
    %v3197 = vld [vmem:[%s3130 + $0x210] sm:$0xff]
    %v3198 = vld [vmem:[%s3130 + $0x218] sm:$0xff]
    %v3199 = vld [vmem:[%s3130 + $0x220] sm:$0xff]
    %v3200 = vld [vmem:[%s3130 + $0x228] sm:$0xff]
    %v3201 = vld [vmem:[%s3130 + $0x230] sm:$0xff]
    %v3202 = vld [vmem:[%s3130 + $0x238] sm:$0xff]
    %v3203 = vld [vmem:[%s3130 + $0x240] sm:$0xff]
    %v3204 = vld [vmem:[%s3130 + $0x248] sm:$0xff]
    %v3205 = vld [vmem:[%s3130 + $0x250] sm:$0xff]
    %v3206 = vld [vmem:[%s3130 + $0x258] sm:$0xff]
    %v3207 = vld [vmem:[%s3130 + $0x260] sm:$0xff]
    %v3208 = vld [vmem:[%s3130 + $0x268] sm:$0xff]
    %v3209 = vld [vmem:[%s3130 + $0x270] sm:$0xff]
    %v3210 = vld [vmem:[%s3130 + $0x278] sm:$0xff]
    %v3211 = vld [vmem:[%s3130 + $0x280] sm:$0xff]
    %v3212 = vld [vmem:[%s3130 + $0x288] sm:$0xff]
    %v3213 = vld [vmem:[%s3130 + $0x290] sm:$0xff]
    %v3214 = vld [vmem:[%s3130 + $0x298] sm:$0xff]
    %v3215 = vld [vmem:[%s3130 + $0x2a0] sm:$0xff]
    %v3216 = vld [vmem:[%s3130 + $0x2a8] sm:$0xff]
    %v3217 = vld [vmem:[%s3130 + $0x2b0] sm:$0xff]
    %v3218 = vld [vmem:[%s3130 + $0x2b8] sm:$0xff]
    %v3219 = vld [vmem:[%s3130 + $0x2c0] sm:$0xff]
    %v3220 = vld [vmem:[%s3130 + $0x2c8] sm:$0xff]
    %v3221 = vld [vmem:[%s3130 + $0x2d0] sm:$0xff]
    %v3222 = vld [vmem:[%s3130 + $0x2d8] sm:$0xff]
    %v3223 = vld [vmem:[%s3130 + $0x2e0] sm:$0xff]
    %v3224 = vld [vmem:[%s3130 + $0x2e8] sm:$0xff]
    %v3225 = vld [vmem:[%s3130 + $0x2f0] sm:$0xff]
    %v3226 = vld [vmem:[%s3130 + $0x2f8] sm:$0xff]
    %v3227 = vld [vmem:[%s3130 + $0x300] sm:$0xff]
    %v3228 = vld [vmem:[%s3130 + $0x308] sm:$0xff]
    %v3229 = vld [vmem:[%s3130 + $0x310] sm:$0xff]
    %v3230 = vld [vmem:[%s3130 + $0x318] sm:$0xff]
    %v3231 = vld [vmem:[%s3130 + $0x320] sm:$0xff]
    %v3232 = vld [vmem:[%s3130 + $0x328] sm:$0xff]
    %v3233 = vld [vmem:[%s3130 + $0x330] sm:$0xff]
    %v3234 = vld [vmem:[%s3130 + $0x338] sm:$0xff]
    %v3235 = vld [vmem:[%s3130 + $0x340] sm:$0xff]
    %v3236 = vld [vmem:[%s3130 + $0x348] sm:$0xff]
    %v3237 = vld [vmem:[%s3130 + $0x350] sm:$0xff]
    %v3238 = vld [vmem:[%s3130 + $0x358] sm:$0xff]
    %v3239 = vld [vmem:[%s3130 + $0x360] sm:$0xff]
    %v3240 = vld [vmem:[%s3130 + $0x368] sm:$0xff]
    %v3241 = vld [vmem:[%s3130 + $0x370] sm:$0xff]
    %v3242 = vld [vmem:[%s3130 + $0x378] sm:$0xff]
    %v3243 = vld [vmem:[%s3130 + $0x380] sm:$0xff]
    %v3244 = vld [vmem:[%s3130 + $0x388] sm:$0xff]
    %v3245 = vld [vmem:[%s3130 + $0x390] sm:$0xff]
    %v3246 = vld [vmem:[%s3130 + $0x398] sm:$0xff]
    %v3247 = vld [vmem:[%s3130 + $0x3a0] sm:$0xff]
    %v3248 = vld [vmem:[%s3130 + $0x3a8] sm:$0xff]
    %v3249 = vld [vmem:[%s3130 + $0x3b0] sm:$0xff]
    %v3250 = vld [vmem:[%s3130 + $0x3b8] sm:$0xff]
    %v3251 = vld [vmem:[%s3130 + $0x3c0] sm:$0xff]
    %v3252 = vld [vmem:[%s3130 + $0x3c8] sm:$0xff]
    %v3253 = vld [vmem:[%s3130 + $0x3d0] sm:$0xff]
    %v3254 = vld [vmem:[%s3130 + $0x3d8] sm:$0xff]
    %v3255 = vld [vmem:[%s3130 + $0x3e0] sm:$0xff]
    %v3256 = vld [vmem:[%s3130 + $0x3e8] sm:$0xff]
    %v3257 = vld [vmem:[%s3130 + $0x3f0] sm:$0xff]
    %v3258 = vld [vmem:[%s3130 + $0x3f8] sm:$0xff]
    %v3259 = vld [vmem:[%s3130 + $0x400] sm:$0xff]
    %v3260 = vld [vmem:[%s3130 + $0x408] sm:$0xff]
    %v3261 = vld [vmem:[%s3130 + $0x410] sm:$0xff]
    %v3262 = vld [vmem:[%s3130 + $0x418] sm:$0xff]
    %v3263 = vld [vmem:[%s3130 + $0x420] sm:$0xff]
    %v3264 = vld [vmem:[%s3130 + $0x428] sm:$0xff]
    %v3265 = vld [vmem:[%s3130 + $0x430] sm:$0xff]
    %v3266 = vld [vmem:[%s3130 + $0x438] sm:$0xff]
    %v3267 = vld [vmem:[%s3130 + $0x440] sm:$0xff]
    %v3268 = vld [vmem:[%s3130 + $0x448] sm:$0xff]
    %v3269 = vld [vmem:[%s3130 + $0x450] sm:$0xff]
    %v3270 = vld [vmem:[%s3130 + $0x458] sm:$0xff]
    %v3271 = vld [vmem:[%s3130 + $0x460] sm:$0xff]
    %v3272 = vld [vmem:[%s3130 + $0x468] sm:$0xff]
    %v3273 = vld [vmem:[%s3130 + $0x470] sm:$0xff]
    %v3274 = vld [vmem:[%s3130 + $0x478] sm:$0xff]
    %v3275 = vld [vmem:[%s3130 + $0x480] sm:$0xff]
    %v3276 = vld [vmem:[%s3130 + $0x488] sm:$0xff]
    %v3277 = vld [vmem:[%s3130 + $0x490] sm:$0xff]
    %v3278 = vld [vmem:[%s3130 + $0x498] sm:$0xff]
    %v3279 = vld [vmem:[%s3130 + $0x4a0] sm:$0xff]
    %v3280 = vld [vmem:[%s3130 + $0x4a8] sm:$0xff]
    %v3281 = vld [vmem:[%s3130 + $0x4b0] sm:$0xff]
    %v3282 = vld [vmem:[%s3130 + $0x4b8] sm:$0xff]
    %v3283 = vld [vmem:[%s3130 + $0x4c0] sm:$0xff]
    %v3284 = vld [vmem:[%s3130 + $0x4c8] sm:$0xff]
    %v3285 = vld [vmem:[%s3130 + $0x4d0] sm:$0xff]
    %v3286 = vld [vmem:[%s3130 + $0x4d8] sm:$0xff]
    %v3287 = vld [vmem:[%s3130 + $0x4e0] sm:$0xff]
    %v3288 = vld [vmem:[%s3130 + $0x4e8] sm:$0xff]
    %v3289 = vld [vmem:[%s3130 + $0x4f0] sm:$0xff]
    %v3290 = vld [vmem:[%s3130 + $0x4f8] sm:$0xff]
    %v3291 = vld [vmem:[%s3130 + $0x500] sm:$0xff]
    %v3292 = vld [vmem:[%s3130 + $0x508] sm:$0xff]
    %v3293 = vld [vmem:[%s3130 + $0x510] sm:$0xff]
    %v3294 = vld [vmem:[%s3130 + $0x518] sm:$0xff]
    %v3295 = vld [vmem:[%s3130 + $0x520] sm:$0xff]
    %v3296 = vld [vmem:[%s3130 + $0x528] sm:$0xff]
    %v3297 = vld [vmem:[%s3130 + $0x530] sm:$0xff]
    %v3298 = vld [vmem:[%s3130 + $0x538] sm:$0xff]
    %v3299 = vld [vmem:[%s3130 + $0x540] sm:$0xff]
    %v3300 = vld [vmem:[%s3130 + $0x548] sm:$0xff]
    %v3301 = vld [vmem:[%s3130 + $0x550] sm:$0xff]
    %v3302 = vld [vmem:[%s3130 + $0x558] sm:$0xff]
    %v3303 = vld [vmem:[%s3130 + $0x560] sm:$0xff]
    %v3304 = vld [vmem:[%s3130 + $0x568] sm:$0xff]
    %v3305 = vld [vmem:[%s3130 + $0x570] sm:$0xff]
    %v3306 = vld [vmem:[%s3130 + $0x578] sm:$0xff]
    %v3307 = vld [vmem:[%s3130 + $0x580] sm:$0xff]
    %v3308 = vld [vmem:[%s3130 + $0x588] sm:$0xff]
    %v3309 = vld [vmem:[%s3130 + $0x590] sm:$0xff]
    %v3310 = vld [vmem:[%s3130 + $0x598] sm:$0xff]
    %v3311 = vld [vmem:[%s3130 + $0x5a0] sm:$0xff]
    %v3312 = vld [vmem:[%s3130 + $0x5a8] sm:$0xff]
    %v3313 = vld [vmem:[%s3130 + $0x5b0] sm:$0xff]
    %v3314 = vld [vmem:[%s3130 + $0x5b8] sm:$0xff]
    %v3315 = vld [vmem:[%s3130 + $0x5c0] sm:$0xff]
    %v3316 = vld [vmem:[%s3130 + $0x5c8] sm:$0xff]
    %v3317 = vld [vmem:[%s3130 + $0x5d0] sm:$0xff]
    %v3318 = vld [vmem:[%s3130 + $0x5d8] sm:$0xff]
    %v3319 = vld [vmem:[%s3130 + $0x5e0] sm:$0xff]
    %v3320 = vld [vmem:[%s3130 + $0x5e8] sm:$0xff]
    %v3321 = vld [vmem:[%s3130 + $0x5f0] sm:$0xff]
    %v3322 = vld [vmem:[%s3130 + $0x5f8] sm:$0xff]
    %v3339 = vlaneseq
    %v3340 = vshrl.u32 %v3339, 7
    %v3341 = vsub.s32 0, %v3340
    %v3342 = vrot.slane %v2915, %v3341
    %v3343 = vlaneseq
    %v3344 = vshrl.u32 %v3343, 7
    %v3345 = vsub.s32 2, %v3344
    %v3346 = vrot.slane %v2915, %v3345
    %v3347 = vlaneseq
    %v3348 = vshrl.u32 %v3347, 7
    %v3349 = vsub.s32 4, %v3348
    %v3350 = vrot.slane %v2915, %v3349
    %v3351 = vlaneseq
    %v3352 = vshrl.u32 %v3351, 7
    %v3353 = vsub.s32 0, %v3352
    %v3354 = vrot.slane %v2916, %v3353
    %v3355 = vlaneseq
    %v3356 = vshrl.u32 %v3355, 7
    %v3357 = vsub.s32 2, %v3356
    %v3358 = vrot.slane %v2916, %v3357
    %v3359 = vlaneseq
    %v3360 = vshrl.u32 %v3359, 7
    %v3361 = vsub.s32 4, %v3360
    %v3362 = vrot.slane %v2916, %v3361
    %v3363 = vlaneseq
    %v3364 = vshrl.u32 %v3363, 7
    %v3365 = vsub.s32 0, %v3364
    %v3366 = vrot.slane %v2917, %v3365
    %v3367 = vlaneseq
    %v3368 = vshrl.u32 %v3367, 7
    %v3369 = vsub.s32 2, %v3368
    %v3370 = vrot.slane %v2917, %v3369
    %v3371 = vlaneseq
    %v3372 = vshrl.u32 %v3371, 7
    %v3373 = vsub.s32 4, %v3372
    %v3374 = vrot.slane %v2917, %v3373
    %v3375 = vlaneseq
    %v3376 = vshrl.u32 %v3375, 7
    %v3377 = vsub.s32 0, %v3376
    %v3378 = vrot.slane %v2918, %v3377
    %v3379 = vlaneseq
    %v3380 = vshrl.u32 %v3379, 7
    %v3381 = vsub.s32 2, %v3380
    %v3382 = vrot.slane %v2918, %v3381
    %v3383 = vlaneseq
    %v3384 = vshrl.u32 %v3383, 7
    %v3385 = vsub.s32 4, %v3384
    %v3386 = vrot.slane %v2918, %v3385
    %v3387 = vlaneseq
    %v3388 = vshrl.u32 %v3387, 7
    %v3389 = vsub.s32 0, %v3388
    %v3390 = vrot.slane %v2919, %v3389
    %v3391 = vlaneseq
    %v3392 = vshrl.u32 %v3391, 7
    %v3393 = vsub.s32 2, %v3392
    %v3394 = vrot.slane %v2919, %v3393
    %v3395 = vlaneseq
    %v3396 = vshrl.u32 %v3395, 7
    %v3397 = vsub.s32 4, %v3396
    %v3398 = vrot.slane %v2919, %v3397
    %v3399 = vlaneseq
    %v3400 = vshrl.u32 %v3399, 7
    %v3401 = vsub.s32 0, %v3400
    %v3402 = vrot.slane %v2920, %v3401
    %v3403 = vlaneseq
    %v3404 = vshrl.u32 %v3403, 7
    %v3405 = vsub.s32 2, %v3404
    %v3406 = vrot.slane %v2920, %v3405
    %v3407 = vlaneseq
    %v3408 = vshrl.u32 %v3407, 7
    %v3409 = vsub.s32 4, %v3408
    %v3410 = vrot.slane %v2920, %v3409
    %v3411 = vlaneseq
    %v3412 = vshrl.u32 %v3411, 7
    %v3413 = vsub.s32 0, %v3412
    %v3414 = vrot.slane %v2921, %v3413
    %v3415 = vlaneseq
    %v3416 = vshrl.u32 %v3415, 7
    %v3417 = vsub.s32 2, %v3416
    %v3418 = vrot.slane %v2921, %v3417
    %v3419 = vlaneseq
    %v3420 = vshrl.u32 %v3419, 7
    %v3421 = vsub.s32 4, %v3420
    %v3422 = vrot.slane %v2921, %v3421
    %v3423 = vlaneseq
    %v3424 = vshrl.u32 %v3423, 7
    %v3425 = vsub.s32 0, %v3424
    %v3426 = vrot.slane %v2922, %v3425
    %v3427 = vlaneseq
    %v3428 = vshrl.u32 %v3427, 7
    %v3429 = vsub.s32 2, %v3428
    %v3430 = vrot.slane %v2922, %v3429
    %v3431 = vlaneseq
    %v3432 = vshrl.u32 %v3431, 7
    %v3433 = vsub.s32 4, %v3432
    %v3434 = vrot.slane %v2922, %v3433
    %v3435 = vlaneseq
    %v3436 = vshrl.u32 %v3435, 7
    %v3437 = vsub.s32 0, %v3436
    %v3438 = vrot.slane %v2927, %v3437
    %v3439 = vlaneseq
    %v3440 = vshrl.u32 %v3439, 7
    %v3441 = vsub.s32 2, %v3440
    %v3442 = vrot.slane %v2927, %v3441
    %v3443 = vlaneseq
    %v3444 = vshrl.u32 %v3443, 7
    %v3445 = vsub.s32 4, %v3444
    %v3446 = vrot.slane %v2927, %v3445
    %v3447 = vlaneseq
    %v3448 = vshrl.u32 %v3447, 7
    %v3449 = vsub.s32 0, %v3448
    %v3450 = vrot.slane %v2928, %v3449
    %v3451 = vlaneseq
    %v3452 = vshrl.u32 %v3451, 7
    %v3453 = vsub.s32 2, %v3452
    %v3454 = vrot.slane %v2928, %v3453
    %v3455 = vlaneseq
    %v3456 = vshrl.u32 %v3455, 7
    %v3457 = vsub.s32 4, %v3456
    %v3458 = vrot.slane %v2928, %v3457
    %v3459 = vlaneseq
    %v3460 = vshrl.u32 %v3459, 7
    %v3461 = vsub.s32 0, %v3460
    %v3462 = vrot.slane %v2929, %v3461
    %v3463 = vlaneseq
    %v3464 = vshrl.u32 %v3463, 7
    %v3465 = vsub.s32 2, %v3464
    %v3466 = vrot.slane %v2929, %v3465
    %v3467 = vlaneseq
    %v3468 = vshrl.u32 %v3467, 7
    %v3469 = vsub.s32 4, %v3468
    %v3470 = vrot.slane %v2929, %v3469
    %v3471 = vlaneseq
    %v3472 = vshrl.u32 %v3471, 7
    %v3473 = vsub.s32 0, %v3472
    %v3474 = vrot.slane %v2930, %v3473
    %v3475 = vlaneseq
    %v3476 = vshrl.u32 %v3475, 7
    %v3477 = vsub.s32 2, %v3476
    %v3478 = vrot.slane %v2930, %v3477
    %v3479 = vlaneseq
    %v3480 = vshrl.u32 %v3479, 7
    %v3481 = vsub.s32 4, %v3480
    %v3482 = vrot.slane %v2930, %v3481
    %v3483 = vlaneseq
    %v3484 = vshrl.u32 %v3483, 7
    %v3485 = vsub.s32 0, %v3484
    %v3486 = vrot.slane %v2931, %v3485
    %v3487 = vlaneseq
    %v3488 = vshrl.u32 %v3487, 7
    %v3489 = vsub.s32 2, %v3488
    %v3490 = vrot.slane %v2931, %v3489
    %v3491 = vlaneseq
    %v3492 = vshrl.u32 %v3491, 7
    %v3493 = vsub.s32 4, %v3492
    %v3494 = vrot.slane %v2931, %v3493
    %v3495 = vlaneseq
    %v3496 = vshrl.u32 %v3495, 7
    %v3497 = vsub.s32 0, %v3496
    %v3498 = vrot.slane %v2932, %v3497
    %v3499 = vlaneseq
    %v3500 = vshrl.u32 %v3499, 7
    %v3501 = vsub.s32 2, %v3500
    %v3502 = vrot.slane %v2932, %v3501
    %v3503 = vlaneseq
    %v3504 = vshrl.u32 %v3503, 7
    %v3505 = vsub.s32 4, %v3504
    %v3506 = vrot.slane %v2932, %v3505
    %v3507 = vlaneseq
    %v3508 = vshrl.u32 %v3507, 7
    %v3509 = vsub.s32 0, %v3508
    %v3510 = vrot.slane %v2933, %v3509
    %v3511 = vlaneseq
    %v3512 = vshrl.u32 %v3511, 7
    %v3513 = vsub.s32 2, %v3512
    %v3514 = vrot.slane %v2933, %v3513
    %v3515 = vlaneseq
    %v3516 = vshrl.u32 %v3515, 7
    %v3517 = vsub.s32 4, %v3516
    %v3518 = vrot.slane %v2933, %v3517
    %v3519 = vlaneseq
    %v3520 = vshrl.u32 %v3519, 7
    %v3521 = vsub.s32 0, %v3520
    %v3522 = vrot.slane %v2934, %v3521
    %v3523 = vlaneseq
    %v3524 = vshrl.u32 %v3523, 7
    %v3525 = vsub.s32 2, %v3524
    %v3526 = vrot.slane %v2934, %v3525
    %v3527 = vlaneseq
    %v3528 = vshrl.u32 %v3527, 7
    %v3529 = vsub.s32 4, %v3528
    %v3530 = vrot.slane %v2934, %v3529
    %vm3531 = vcmask 1041409
    %v3532 = vsel %vm3531, %v3354, %v3342
    %vm3533 = vcmask 1042434
    %v3534 = vsel %vm3533, %v3366, %v3532
    %vm3535 = vcmask 1043459
    %v3536 = vsel %vm3535, %v3378, %v3534
    %vm3537 = vcmask 1044484
    %v3538 = vsel %vm3537, %v3390, %v3536
    %vm3539 = vcmask 1045509
    %v3540 = vsel %vm3539, %v3402, %v3538
    %vm3541 = vcmask 1046534
    %v3542 = vsel %vm3541, %v3414, %v3540
    %vm3543 = vcmask 1047559
    %v3544 = vsel %vm3543, %v3426, %v3542
    %v3545 = vsel %vm3531, %v3358, %v3346
    %v3546 = vsel %vm3533, %v3370, %v3545
    %v3547 = vsel %vm3535, %v3382, %v3546
    %v3548 = vsel %vm3537, %v3394, %v3547
    %v3549 = vsel %vm3539, %v3406, %v3548
    %v3550 = vsel %vm3541, %v3418, %v3549
    %v3551 = vsel %vm3543, %v3430, %v3550
    %v3552 = vsel %vm3531, %v3362, %v3350
    %v3553 = vsel %vm3533, %v3374, %v3552
    %v3554 = vsel %vm3535, %v3386, %v3553
    %v3555 = vsel %vm3537, %v3398, %v3554
    %v3556 = vsel %vm3539, %v3410, %v3555
    %v3557 = vsel %vm3541, %v3422, %v3556
    %v3558 = vsel %vm3543, %v3434, %v3557
    %v3559 = vsel %vm3531, %v3450, %v3438
    %v3560 = vsel %vm3533, %v3462, %v3559
    %v3561 = vsel %vm3535, %v3474, %v3560
    %v3562 = vsel %vm3537, %v3486, %v3561
    %v3563 = vsel %vm3539, %v3498, %v3562
    %v3564 = vsel %vm3541, %v3510, %v3563
    %v3565 = vsel %vm3543, %v3522, %v3564
    %v3566 = vsel %vm3531, %v3454, %v3442
    %v3567 = vsel %vm3533, %v3466, %v3566
    %v3568 = vsel %vm3535, %v3478, %v3567
    %v3569 = vsel %vm3537, %v3490, %v3568
    %v3570 = vsel %vm3539, %v3502, %v3569
    %v3571 = vsel %vm3541, %v3514, %v3570
    %v3572 = vsel %vm3543, %v3526, %v3571
    %v3573 = vsel %vm3531, %v3458, %v3446
    %v3574 = vsel %vm3533, %v3470, %v3573
    %v3575 = vsel %vm3535, %v3482, %v3574
    %v3576 = vsel %vm3537, %v3494, %v3575
    %v3577 = vsel %vm3539, %v3506, %v3576
    %v3578 = vsel %vm3541, %v3518, %v3577
    %v3579 = vsel %vm3543, %v3530, %v3578
    %3586 = vmatprep.subr.mxu0 %v3132
    %3587 = vmatpush1.msra.mxu0 %v3131
    %3588 = vmatprep.subr.mxu0 %v3136
    %3589 = vmatpush1.msra.mxu0 %v3135
    %3590 = vmatprep.subr.mxu0 %v3140
    %3591 = vmatpush1.msra.mxu0 %v3139
    %3592 = vmatprep.subr.mxu0 %v3144
    %3593 = vmatpush1.msra.mxu0 %v3143
    %3594 = vmatprep.subr.mxu0 %v3148
    %3595 = vmatpush1.msra.mxu0 %v3147
    %3596 = vmatprep.subr.mxu0 %v3152
    %3597 = vmatpush1.msra.mxu0 %v3151
    %3598 = vmatprep.subr.mxu0 %v3156
    %3599 = vmatpush1.msra.mxu0 %v3155
    %3600 = vmatprep.subr.mxu0 %v3160
    %3601 = vmatpush1.msra.mxu0 %v3159
    %3602 = vmatprep.subr.mxu0 %v3164
    %3603 = vmatpush1.msra.mxu0 %v3163
    %3604 = vmatprep.subr.mxu0 %v3168
    %3605 = vmatpush1.msra.mxu0 %v3167
    %3606 = vmatprep.subr.mxu0 %v3172
    %3607 = vmatpush1.msra.mxu0 %v3171
    %3608 = vmatprep.subr.mxu0 %v3176
    %3609 = vmatpush1.msra.mxu0 %v3175
    %3610 = vmatprep.subr.mxu0 %v3180
    %3611 = vmatpush1.msra.mxu0 %v3179
    %3612 = vmatprep.subr.mxu0 %v3184
    %3613 = vmatpush1.msra.mxu0 %v3183
    %3614 = vmatprep.subr.mxu0 %v3188
    %3615 = vmatpush1.msra.mxu0 %v3187
    %3616 = vmatprep.subr.mxu0 %v3192
    %3617 = vmatpush1.msra.mxu0 %v3191
    %3618 = vmatprep.subr.mxu0 %v3196
    %3619 = vmatpush1.msra.mxu0 %v3195
    %3620 = vmatprep.subr.mxu0 %v3200
    %3621 = vmatpush1.msra.mxu0 %v3199
    %3622 = vmatprep.subr.mxu0 %v3204
    %3623 = vmatpush1.msra.mxu0 %v3203
    %3624 = vmatprep.subr.mxu0 %v3208
    %3625 = vmatpush1.msra.mxu0 %v3207
    %3626 = vmatprep.subr.mxu0 %v3212
    %3627 = vmatpush1.msra.mxu0 %v3211
    %3628 = vmatprep.subr.mxu0 %v3216
    %3629 = vmatpush1.msra.mxu0 %v3215
    %3630 = vmatprep.subr.mxu0 %v3220
    %3631 = vmatpush1.msra.mxu0 %v3219
    %3632 = vmatprep.subr.mxu0 %v3224
    %3633 = vmatpush1.msra.mxu0 %v3223
    %3634 = vmatprep.subr.mxu0 %v3228
    %3635 = vmatpush1.msra.mxu0 %v3227
    %3636 = vmatprep.subr.mxu0 %v3232
    %3637 = vmatpush1.msra.mxu0 %v3231
    %3638 = vmatprep.subr.mxu0 %v3236
    %3639 = vmatpush1.msra.mxu0 %v3235
    %3640 = vmatprep.subr.mxu0 %v3240
    %3641 = vmatpush1.msra.mxu0 %v3239
    %3642 = vmatprep.subr.mxu0 %v3244
    %3643 = vmatpush1.msra.mxu0 %v3243
    %3644 = vmatprep.subr.mxu0 %v3248
    %3645 = vmatpush1.msra.mxu0 %v3247
    %3646 = vmatprep.subr.mxu0 %v3252
    %3647 = vmatpush1.msra.mxu0 %v3251
    %3648 = vmatprep.subr.mxu0 %v3256
    %3649 = vmatpush1.msra.mxu0 %v3255
    %3650 = vmatprep.mubr.f32.mxu0 %v3551
    %3651 = vmatmul.mubr.f32.gmra.mrb[0].mxu0 %v3544
    %v3652 = vpop.f32.mrb[0].mxu0
    %v3653 = vadd.f32 0.0, %v3652
    %v3654 = vpop.f32.mrb[0].mxu0
    %v3655 = vadd.f32 0.0, %v3654
    %3656 = vmatprep.mubr.f32.mxu0 %v3572
    %3657 = vmatmul.mubr.f32.gmra.mrb[0].mxu0 %v3565
    %v3658 = vpop.f32.mrb[0].mxu0
    %v3659 = vadd.f32 0.0, %v3658
    %v3660 = vpop.f32.mrb[0].mxu0
    %v3661 = vadd.f32 0.0, %v3660
    %3662 = vdwg.mxu0
    %3663 = vmatprep.subr.mxu0 %v3260
    %3664 = vmatpush1.msra.mxu0 %v3259
    %3665 = vmatprep.subr.mxu0 %v3264
    %3666 = vmatpush1.msra.mxu0 %v3263
    %3667 = vmatprep.subr.mxu0 %v3268
    %3668 = vmatpush1.msra.mxu0 %v3267
    %3669 = vmatprep.subr.mxu0 %v3272
    %3670 = vmatpush1.msra.mxu0 %v3271
    %3671 = vmatprep.subr.mxu0 %v3276
    %3672 = vmatpush1.msra.mxu0 %v3275
    %3673 = vmatprep.subr.mxu0 %v3280
    %3674 = vmatpush1.msra.mxu0 %v3279
    %3675 = vmatprep.subr.mxu0 %v3284
    %3676 = vmatpush1.msra.mxu0 %v3283
    %3677 = vmatprep.subr.mxu0 %v3288
    %3678 = vmatpush1.msra.mxu0 %v3287
    %3679 = vmatprep.subr.mxu0 %v3292
    %3680 = vmatpush1.msra.mxu0 %v3291
    %3681 = vmatprep.subr.mxu0 %v3296
    %3682 = vmatpush1.msra.mxu0 %v3295
    %3683 = vmatprep.subr.mxu0 %v3300
    %3684 = vmatpush1.msra.mxu0 %v3299
    %3685 = vmatprep.subr.mxu0 %v3304
    %3686 = vmatpush1.msra.mxu0 %v3303
    %3687 = vmatprep.subr.mxu0 %v3308
    %3688 = vmatpush1.msra.mxu0 %v3307
    %3689 = vmatprep.subr.mxu0 %v3312
    %3690 = vmatpush1.msra.mxu0 %v3311
    %3691 = vmatprep.subr.mxu0 %v3316
    %3692 = vmatpush1.msra.mxu0 %v3315
    %3693 = vmatprep.subr.mxu0 %v3320
    %3694 = vmatpush1.msra.mxu0 %v3319
    %3695 = vmatprep.subr.mxu0 0.0
    %3696 = vmatpush1.msra.mxu0 0.0
    %3697 = vmatprep.subr.mxu0 0.0
    %3698 = vmatpush1.msra.mxu0 0.0
    %3699 = vmatprep.subr.mxu0 0.0
    %3700 = vmatpush1.msra.mxu0 0.0
    %3701 = vmatprep.subr.mxu0 0.0
    %3702 = vmatpush1.msra.mxu0 0.0
    %3703 = vmatprep.subr.mxu0 0.0
    %3704 = vmatpush1.msra.mxu0 0.0
    %3705 = vmatprep.subr.mxu0 0.0
    %3706 = vmatpush1.msra.mxu0 0.0
    %3707 = vmatprep.subr.mxu0 0.0
    %3708 = vmatpush1.msra.mxu0 0.0
    %3709 = vmatprep.subr.mxu0 0.0
    %3710 = vmatpush1.msra.mxu0 0.0
    %3711 = vmatprep.subr.mxu0 0.0
    %3712 = vmatpush1.msra.mxu0 0.0
    %3713 = vmatprep.subr.mxu0 0.0
    %3714 = vmatpush1.msra.mxu0 0.0
    %3715 = vmatprep.subr.mxu0 0.0
    %3716 = vmatpush1.msra.mxu0 0.0
    %3717 = vmatprep.subr.mxu0 0.0
    %3718 = vmatpush1.msra.mxu0 0.0
    %3719 = vmatprep.subr.mxu0 0.0
    %3720 = vmatpush1.msra.mxu0 0.0
    %3721 = vmatprep.subr.mxu0 0.0
    %3722 = vmatpush1.msra.mxu0 0.0
    %3723 = vmatprep.subr.mxu0 0.0
    %3724 = vmatpush1.msra.mxu0 0.0
    %3725 = vmatprep.subr.mxu0 0.0
    %3726 = vmatpush1.msra.mxu0 0.0
    %3727 = vmatprep.mubr.f32.mxu0 0.0
    %3728 = vmatmul.mubr.f32.gmra.mrb[0].mxu0 %v3558
    %v3729 = vpop.f32.mrb[0].mxu0
    %v3730 = vadd.f32 %v3653, %v3729
    %v3731 = vpop.f32.mrb[0].mxu0
    %v3732 = vadd.f32 %v3655, %v3731
    %3733 = vmatprep.mubr.f32.mxu0 0.0
    %3734 = vmatmul.mubr.f32.gmra.mrb[0].mxu0 %v3579
    %v3735 = vpop.f32.mrb[0].mxu0
    %v3736 = vadd.f32 %v3659, %v3735
    %v3737 = vpop.f32.mrb[0].mxu0
    %v3738 = vadd.f32 %v3661, %v3737
    %3739 = vdwg.mxu0
    %3740 = vmatprep.subr.mxu0 %v3134
    %3741 = vmatpush1.msra.mxu0 %v3133
    %3742 = vmatprep.subr.mxu0 %v3138
    %3743 = vmatpush1.msra.mxu0 %v3137
    %3744 = vmatprep.subr.mxu0 %v3142
    %3745 = vmatpush1.msra.mxu0 %v3141
    %3746 = vmatprep.subr.mxu0 %v3146
    %3747 = vmatpush1.msra.mxu0 %v3145
    %3748 = vmatprep.subr.mxu0 %v3150
    %3749 = vmatpush1.msra.mxu0 %v3149
    %3750 = vmatprep.subr.mxu0 %v3154
    %3751 = vmatpush1.msra.mxu0 %v3153
    %3752 = vmatprep.subr.mxu0 %v3158
    %3753 = vmatpush1.msra.mxu0 %v3157
    %3754 = vmatprep.subr.mxu0 %v3162
    %3755 = vmatpush1.msra.mxu0 %v3161
    %3756 = vmatprep.subr.mxu0 %v3166
    %3757 = vmatpush1.msra.mxu0 %v3165
    %3758 = vmatprep.subr.mxu0 %v3170
    %3759 = vmatpush1.msra.mxu0 %v3169
    %3760 = vmatprep.subr.mxu0 %v3174
    %3761 = vmatpush1.msra.mxu0 %v3173
    %3762 = vmatprep.subr.mxu0 %v3178
    %3763 = vmatpush1.msra.mxu0 %v3177
    %3764 = vmatprep.subr.mxu0 %v3182
    %3765 = vmatpush1.msra.mxu0 %v3181
    %3766 = vmatprep.subr.mxu0 %v3186
    %3767 = vmatpush1.msra.mxu0 %v3185
    %3768 = vmatprep.subr.mxu0 %v3190
    %3769 = vmatpush1.msra.mxu0 %v3189
    %3770 = vmatprep.subr.mxu0 %v3194
    %3771 = vmatpush1.msra.mxu0 %v3193
    %3772 = vmatprep.subr.mxu0 %v3198
    %3773 = vmatpush1.msra.mxu0 %v3197
    %3774 = vmatprep.subr.mxu0 %v3202
    %3775 = vmatpush1.msra.mxu0 %v3201
    %3776 = vmatprep.subr.mxu0 %v3206
    %3777 = vmatpush1.msra.mxu0 %v3205
    %3778 = vmatprep.subr.mxu0 %v3210
    %3779 = vmatpush1.msra.mxu0 %v3209
    %3780 = vmatprep.subr.mxu0 %v3214
    %3781 = vmatpush1.msra.mxu0 %v3213
    %3782 = vmatprep.subr.mxu0 %v3218
    %3783 = vmatpush1.msra.mxu0 %v3217
    %3784 = vmatprep.subr.mxu0 %v3222
    %3785 = vmatpush1.msra.mxu0 %v3221
    %3786 = vmatprep.subr.mxu0 %v3226
    %3787 = vmatpush1.msra.mxu0 %v3225
    %3788 = vmatprep.subr.mxu0 %v3230
    %3789 = vmatpush1.msra.mxu0 %v3229
    %3790 = vmatprep.subr.mxu0 %v3234
    %3791 = vmatpush1.msra.mxu0 %v3233
    %3792 = vmatprep.subr.mxu0 %v3238
    %3793 = vmatpush1.msra.mxu0 %v3237
    %3794 = vmatprep.subr.mxu0 %v3242
    %3795 = vmatpush1.msra.mxu0 %v3241
    %3796 = vmatprep.subr.mxu0 %v3246
    %3797 = vmatpush1.msra.mxu0 %v3245
    %3798 = vmatprep.subr.mxu0 %v3250
    %3799 = vmatpush1.msra.mxu0 %v3249
    %3800 = vmatprep.subr.mxu0 %v3254
    %3801 = vmatpush1.msra.mxu0 %v3253
    %3802 = vmatprep.subr.mxu0 %v3258
    %3803 = vmatpush1.msra.mxu0 %v3257
    %3804 = vmatprep.mubr.f32.mxu0 %v3551
    %3805 = vmatmul.mubr.f32.gmra.mrb[0].mxu0 %v3544
    %v3806 = vpop.f32.mrb[0].mxu0
    %v3807 = vadd.f32 0.0, %v3806
    %v3808 = vpop.f32.mrb[0].mxu0
    %v3809 = vadd.f32 0.0, %v3808
    %3810 = vmatprep.mubr.f32.mxu0 %v3572
    %3811 = vmatmul.mubr.f32.gmra.mrb[0].mxu0 %v3565
    %v3812 = vpop.f32.mrb[0].mxu0
    %v3813 = vadd.f32 0.0, %v3812
    %v3814 = vpop.f32.mrb[0].mxu0
    %v3815 = vadd.f32 0.0, %v3814
    %3816 = vdwg.mxu0
    %3817 = vmatprep.subr.mxu0 %v3262
    %3818 = vmatpush1.msra.mxu0 %v3261
    %3819 = vmatprep.subr.mxu0 %v3266
    %3820 = vmatpush1.msra.mxu0 %v3265
    %3821 = vmatprep.subr.mxu0 %v3270
    %3822 = vmatpush1.msra.mxu0 %v3269
    %3823 = vmatprep.subr.mxu0 %v3274
    %3824 = vmatpush1.msra.mxu0 %v3273
    %3825 = vmatprep.subr.mxu0 %v3278
    %3826 = vmatpush1.msra.mxu0 %v3277
    %3827 = vmatprep.subr.mxu0 %v3282
    %3828 = vmatpush1.msra.mxu0 %v3281
    %3829 = vmatprep.subr.mxu0 %v3286
    %3830 = vmatpush1.msra.mxu0 %v3285
    %3831 = vmatprep.subr.mxu0 %v3290
    %3832 = vmatpush1.msra.mxu0 %v3289
    %3833 = vmatprep.subr.mxu0 %v3294
    %3834 = vmatpush1.msra.mxu0 %v3293
    %3835 = vmatprep.subr.mxu0 %v3298
    %3836 = vmatpush1.msra.mxu0 %v3297
    %3837 = vmatprep.subr.mxu0 %v3302
    %3838 = vmatpush1.msra.mxu0 %v3301
    %3839 = vmatprep.subr.mxu0 %v3306
    %3840 = vmatpush1.msra.mxu0 %v3305
    %3841 = vmatprep.subr.mxu0 %v3310
    %3842 = vmatpush1.msra.mxu0 %v3309
    %3843 = vmatprep.subr.mxu0 %v3314
    %3844 = vmatpush1.msra.mxu0 %v3313
    %3845 = vmatprep.subr.mxu0 %v3318
    %3846 = vmatpush1.msra.mxu0 %v3317
    %3847 = vmatprep.subr.mxu0 %v3322
    %3848 = vmatpush1.msra.mxu0 %v3321
    %3849 = vmatprep.subr.mxu0 0.0
    %3850 = vmatpush1.msra.mxu0 0.0
    %3851 = vmatprep.subr.mxu0 0.0
    %3852 = vmatpush1.msra.mxu0 0.0
    %3853 = vmatprep.subr.mxu0 0.0
    %3854 = vmatpush1.msra.mxu0 0.0
    %3855 = vmatprep.subr.mxu0 0.0
    %3856 = vmatpush1.msra.mxu0 0.0
    %3857 = vmatprep.subr.mxu0 0.0
    %3858 = vmatpush1.msra.mxu0 0.0
    %3859 = vmatprep.subr.mxu0 0.0
    %3860 = vmatpush1.msra.mxu0 0.0
    %3861 = vmatprep.subr.mxu0 0.0
    %3862 = vmatpush1.msra.mxu0 0.0
    %3863 = vmatprep.subr.mxu0 0.0
    %3864 = vmatpush1.msra.mxu0 0.0
    %3865 = vmatprep.subr.mxu0 0.0
    %3866 = vmatpush1.msra.mxu0 0.0
    %3867 = vmatprep.subr.mxu0 0.0
    %3868 = vmatpush1.msra.mxu0 0.0
    %3869 = vmatprep.subr.mxu0 0.0
    %3870 = vmatpush1.msra.mxu0 0.0
    %3871 = vmatprep.subr.mxu0 0.0
    %3872 = vmatpush1.msra.mxu0 0.0
    %3873 = vmatprep.subr.mxu0 0.0
    %3874 = vmatpush1.msra.mxu0 0.0
    %3875 = vmatprep.subr.mxu0 0.0
    %3876 = vmatpush1.msra.mxu0 0.0
    %3877 = vmatprep.subr.mxu0 0.0
    %3878 = vmatpush1.msra.mxu0 0.0
    %3879 = vmatprep.subr.mxu0 0.0
    %3880 = vmatpush1.msra.mxu0 0.0
    %3881 = vmatprep.mubr.f32.mxu0 0.0
    %3882 = vmatmul.mubr.f32.gmra.mrb[0].mxu0 %v3558
    %v3883 = vpop.f32.mrb[0].mxu0
    %v3884 = vadd.f32 %v3807, %v3883
    %v3885 = vpop.f32.mrb[0].mxu0
    %v3886 = vadd.f32 %v3809, %v3885
    %3887 = vmatprep.mubr.f32.mxu0 0.0
    %3888 = vmatmul.mubr.f32.gmra.mrb[0].mxu0 %v3579
    %v3889 = vpop.f32.mrb[0].mxu0
    %v3890 = vadd.f32 %v3813, %v3889
    %v3891 = vpop.f32.mrb[0].mxu0
    %v3892 = vadd.f32 %v3815, %v3891
    %3893 = vdwg.mxu0
    %v3896 = vlaneseq
    %v3897 = vshrl.u32 %v3896, 7
    %v3898 = vsub.s32 0, %v3897
    %v3899 = vrot.slane %v2914, %v3898
    %v3900 = vlaneseq
    %v3901 = vshrl.u32 %v3900, 7
    %v3902 = vsub.s32 2, %v3901
    %v3903 = vrot.slane %v2914, %v3902
    %v3904 = vlaneseq
    %v3905 = vshrl.u32 %v3904, 7
    %v3906 = vsub.s32 4, %v3905
    %v3907 = vrot.slane %v2914, %v3906
    %v3908 = vlaneseq
    %v3909 = vshrl.u32 %v3908, 7
    %v3910 = vsub.s32 0, %v3909
    %v3911 = vrot.slane %v2926, %v3910
    %v3912 = vlaneseq
    %v3913 = vshrl.u32 %v3912, 7
    %v3914 = vsub.s32 2, %v3913
    %v3915 = vrot.slane %v2926, %v3914
    %v3916 = vlaneseq
    %v3917 = vshrl.u32 %v3916, 7
    %v3918 = vsub.s32 4, %v3917
    %v3919 = vrot.slane %v2926, %v3918
    %v3920 = vsel %vm3531, %v3342, %v3899
    %v3921 = vsel %vm3533, %v3354, %v3920
    %v3922 = vsel %vm3535, %v3366, %v3921
    %v3923 = vsel %vm3537, %v3378, %v3922
    %v3924 = vsel %vm3539, %v3390, %v3923
    %v3925 = vsel %vm3541, %v3402, %v3924
    %v3926 = vsel %vm3543, %v3414, %v3925
    %v3927 = vsel %vm3531, %v3346, %v3903
    %v3928 = vsel %vm3533, %v3358, %v3927
    %v3929 = vsel %vm3535, %v3370, %v3928
    %v3930 = vsel %vm3537, %v3382, %v3929
    %v3931 = vsel %vm3539, %v3394, %v3930
    %v3932 = vsel %vm3541, %v3406, %v3931
    %v3933 = vsel %vm3543, %v3418, %v3932
    %v3934 = vsel %vm3531, %v3350, %v3907
    %v3935 = vsel %vm3533, %v3362, %v3934
    %v3936 = vsel %vm3535, %v3374, %v3935
    %v3937 = vsel %vm3537, %v3386, %v3936
    %v3938 = vsel %vm3539, %v3398, %v3937
    %v3939 = vsel %vm3541, %v3410, %v3938
    %v3940 = vsel %vm3543, %v3422, %v3939
    %v3941 = vsel %vm3531, %v3438, %v3911
    %v3942 = vsel %vm3533, %v3450, %v3941
    %v3943 = vsel %vm3535, %v3462, %v3942
    %v3944 = vsel %vm3537, %v3474, %v3943
    %v3945 = vsel %vm3539, %v3486, %v3944
    %v3946 = vsel %vm3541, %v3498, %v3945
    %v3947 = vsel %vm3543, %v3510, %v3946
    %v3948 = vsel %vm3531, %v3442, %v3915
    %v3949 = vsel %vm3533, %v3454, %v3948
    %v3950 = vsel %vm3535, %v3466, %v3949
    %v3951 = vsel %vm3537, %v3478, %v3950
    %v3952 = vsel %vm3539, %v3490, %v3951
    %v3953 = vsel %vm3541, %v3502, %v3952
    %v3954 = vsel %vm3543, %v3514, %v3953
    %v3955 = vsel %vm3531, %v3446, %v3919
    %v3956 = vsel %vm3533, %v3458, %v3955
    %v3957 = vsel %vm3535, %v3470, %v3956
    %v3958 = vsel %vm3537, %v3482, %v3957
    %v3959 = vsel %vm3539, %v3494, %v3958
    %v3960 = vsel %vm3541, %v3506, %v3959
    %v3961 = vsel %vm3543, %v3518, %v3960
    %3968 = vmatprep.subr.mxu0 %v2939
    %3969 = vmatpush1.msra.mxu0 %v2938
    %3970 = vmatprep.subr.mxu0 %v2943
    %3971 = vmatpush1.msra.mxu0 %v2942
    %3972 = vmatprep.subr.mxu0 %v2947
    %3973 = vmatpush1.msra.mxu0 %v2946
    %3974 = vmatprep.subr.mxu0 %v2951
    %3975 = vmatpush1.msra.mxu0 %v2950
    %3976 = vmatprep.subr.mxu0 %v2955
    %3977 = vmatpush1.msra.mxu0 %v2954
    %3978 = vmatprep.subr.mxu0 %v2959
    %3979 = vmatpush1.msra.mxu0 %v2958
    %3980 = vmatprep.subr.mxu0 %v2963
    %3981 = vmatpush1.msra.mxu0 %v2962
    %3982 = vmatprep.subr.mxu0 %v2967
    %3983 = vmatpush1.msra.mxu0 %v2966
    %3984 = vmatprep.subr.mxu0 %v2971
    %3985 = vmatpush1.msra.mxu0 %v2970
    %3986 = vmatprep.subr.mxu0 %v2975
    %3987 = vmatpush1.msra.mxu0 %v2974
    %3988 = vmatprep.subr.mxu0 %v2979
    %3989 = vmatpush1.msra.mxu0 %v2978
    %3990 = vmatprep.subr.mxu0 %v2983
    %3991 = vmatpush1.msra.mxu0 %v2982
    %3992 = vmatprep.subr.mxu0 %v2987
    %3993 = vmatpush1.msra.mxu0 %v2986
    %3994 = vmatprep.subr.mxu0 %v2991
    %3995 = vmatpush1.msra.mxu0 %v2990
    %3996 = vmatprep.subr.mxu0 %v2995
    %3997 = vmatpush1.msra.mxu0 %v2994
    %3998 = vmatprep.subr.mxu0 %v2999
    %3999 = vmatpush1.msra.mxu0 %v2998
    %4000 = vmatprep.subr.mxu0 %v3003
    %4001 = vmatpush1.msra.mxu0 %v3002
    %4002 = vmatprep.subr.mxu0 %v3007
    %4003 = vmatpush1.msra.mxu0 %v3006
    %4004 = vmatprep.subr.mxu0 %v3011
    %4005 = vmatpush1.msra.mxu0 %v3010
    %4006 = vmatprep.subr.mxu0 %v3015
    %4007 = vmatpush1.msra.mxu0 %v3014
    %4008 = vmatprep.subr.mxu0 %v3019
    %4009 = vmatpush1.msra.mxu0 %v3018
    %4010 = vmatprep.subr.mxu0 %v3023
    %4011 = vmatpush1.msra.mxu0 %v3022
    %4012 = vmatprep.subr.mxu0 %v3027
    %4013 = vmatpush1.msra.mxu0 %v3026
    %4014 = vmatprep.subr.mxu0 %v3031
    %4015 = vmatpush1.msra.mxu0 %v3030
    %4016 = vmatprep.subr.mxu0 %v3035
    %4017 = vmatpush1.msra.mxu0 %v3034
    %4018 = vmatprep.subr.mxu0 %v3039
    %4019 = vmatpush1.msra.mxu0 %v3038
    %4020 = vmatprep.subr.mxu0 %v3043
    %4021 = vmatpush1.msra.mxu0 %v3042
    %4022 = vmatprep.subr.mxu0 %v3047
    %4023 = vmatpush1.msra.mxu0 %v3046
    %4024 = vmatprep.subr.mxu0 %v3051
    %4025 = vmatpush1.msra.mxu0 %v3050
    %4026 = vmatprep.subr.mxu0 %v3055
    %4027 = vmatpush1.msra.mxu0 %v3054
    %4028 = vmatprep.subr.mxu0 %v3059
    %4029 = vmatpush1.msra.mxu0 %v3058
    %4030 = vmatprep.subr.mxu0 %v3063
    %4031 = vmatpush1.msra.mxu0 %v3062
    %4032 = vmatprep.mubr.f32.mxu0 %v3933
    %4033 = vmatmul.mubr.f32.gmra.mrb[0].mxu0 %v3926
    %v4034 = vpop.f32.mrb[0].mxu0
    %v4035 = vadd.f32 %v3730, %v4034
    %v4036 = vpop.f32.mrb[0].mxu0
    %v4037 = vadd.f32 %v3732, %v4036
    %4038 = vmatprep.mubr.f32.mxu0 %v3954
    %4039 = vmatmul.mubr.f32.gmra.mrb[0].mxu0 %v3947
    %v4040 = vpop.f32.mrb[0].mxu0
    %v4041 = vadd.f32 %v3736, %v4040
    %v4042 = vpop.f32.mrb[0].mxu0
    %v4043 = vadd.f32 %v3738, %v4042
    %4044 = vdwg.mxu0
    %4045 = vmatprep.subr.mxu0 %v3067
    %4046 = vmatpush1.msra.mxu0 %v3066
    %4047 = vmatprep.subr.mxu0 %v3071
    %4048 = vmatpush1.msra.mxu0 %v3070
    %4049 = vmatprep.subr.mxu0 %v3075
    %4050 = vmatpush1.msra.mxu0 %v3074
    %4051 = vmatprep.subr.mxu0 %v3079
    %4052 = vmatpush1.msra.mxu0 %v3078
    %4053 = vmatprep.subr.mxu0 %v3083
    %4054 = vmatpush1.msra.mxu0 %v3082
    %4055 = vmatprep.subr.mxu0 %v3087
    %4056 = vmatpush1.msra.mxu0 %v3086
    %4057 = vmatprep.subr.mxu0 %v3091
    %4058 = vmatpush1.msra.mxu0 %v3090
    %4059 = vmatprep.subr.mxu0 %v3095
    %4060 = vmatpush1.msra.mxu0 %v3094
    %4061 = vmatprep.subr.mxu0 %v3099
    %4062 = vmatpush1.msra.mxu0 %v3098
    %4063 = vmatprep.subr.mxu0 %v3103
    %4064 = vmatpush1.msra.mxu0 %v3102
    %4065 = vmatprep.subr.mxu0 %v3107
    %4066 = vmatpush1.msra.mxu0 %v3106
    %4067 = vmatprep.subr.mxu0 %v3111
    %4068 = vmatpush1.msra.mxu0 %v3110
    %4069 = vmatprep.subr.mxu0 %v3115
    %4070 = vmatpush1.msra.mxu0 %v3114
    %4071 = vmatprep.subr.mxu0 %v3119
    %4072 = vmatpush1.msra.mxu0 %v3118
    %4073 = vmatprep.subr.mxu0 %v3123
    %4074 = vmatpush1.msra.mxu0 %v3122
    %4075 = vmatprep.subr.mxu0 %v3127
    %4076 = vmatpush1.msra.mxu0 %v3126
    %4077 = vmatprep.subr.mxu0 0.0
    %4078 = vmatpush1.msra.mxu0 0.0
    %4079 = vmatprep.subr.mxu0 0.0
    %4080 = vmatpush1.msra.mxu0 0.0
    %4081 = vmatprep.subr.mxu0 0.0
    %4082 = vmatpush1.msra.mxu0 0.0
    %4083 = vmatprep.subr.mxu0 0.0
    %4084 = vmatpush1.msra.mxu0 0.0
    %4085 = vmatprep.subr.mxu0 0.0
    %4086 = vmatpush1.msra.mxu0 0.0
    %4087 = vmatprep.subr.mxu0 0.0
    %4088 = vmatpush1.msra.mxu0 0.0
    %4089 = vmatprep.subr.mxu0 0.0
    %4090 = vmatpush1.msra.mxu0 0.0
    %4091 = vmatprep.subr.mxu0 0.0
    %4092 = vmatpush1.msra.mxu0 0.0
    %4093 = vmatprep.subr.mxu0 0.0
    %4094 = vmatpush1.msra.mxu0 0.0
    %4095 = vmatprep.subr.mxu0 0.0
    %4096 = vmatpush1.msra.mxu0 0.0
    %4097 = vmatprep.subr.mxu0 0.0
    %4098 = vmatpush1.msra.mxu0 0.0
    %4099 = vmatprep.subr.mxu0 0.0
    %4100 = vmatpush1.msra.mxu0 0.0
    %4101 = vmatprep.subr.mxu0 0.0
    %4102 = vmatpush1.msra.mxu0 0.0
    %4103 = vmatprep.subr.mxu0 0.0
    %4104 = vmatpush1.msra.mxu0 0.0
    %4105 = vmatprep.subr.mxu0 0.0
    %4106 = vmatpush1.msra.mxu0 0.0
    %4107 = vmatprep.subr.mxu0 0.0
    %4108 = vmatpush1.msra.mxu0 0.0
    %4109 = vmatprep.mubr.f32.mxu0 0.0
    %4110 = vmatmul.mubr.f32.gmra.mrb[0].mxu0 %v3940
    %v4111 = vpop.f32.mrb[0].mxu0
    %v4112 = vadd.f32 %v4035, %v4111
    %v4113 = vpop.f32.mrb[0].mxu0
    %v4114 = vadd.f32 %v4037, %v4113
    %4115 = vmatprep.mubr.f32.mxu0 0.0
    %4116 = vmatmul.mubr.f32.gmra.mrb[0].mxu0 %v3961
    %v4117 = vpop.f32.mrb[0].mxu0
    %v4118 = vadd.f32 %v4041, %v4117
    %v4119 = vpop.f32.mrb[0].mxu0
    %v4120 = vadd.f32 %v4043, %v4119
    %4121 = vdwg.mxu0
    %4122 = vmatprep.subr.mxu0 %v2941
    %4123 = vmatpush1.msra.mxu0 %v2940
    %4124 = vmatprep.subr.mxu0 %v2945
    %4125 = vmatpush1.msra.mxu0 %v2944
    %4126 = vmatprep.subr.mxu0 %v2949
    %4127 = vmatpush1.msra.mxu0 %v2948
    %4128 = vmatprep.subr.mxu0 %v2953
    %4129 = vmatpush1.msra.mxu0 %v2952
    %4130 = vmatprep.subr.mxu0 %v2957
    %4131 = vmatpush1.msra.mxu0 %v2956
    %4132 = vmatprep.subr.mxu0 %v2961
    %4133 = vmatpush1.msra.mxu0 %v2960
    %4134 = vmatprep.subr.mxu0 %v2965
    %4135 = vmatpush1.msra.mxu0 %v2964
    %4136 = vmatprep.subr.mxu0 %v2969
    %4137 = vmatpush1.msra.mxu0 %v2968
    %4138 = vmatprep.subr.mxu0 %v2973
    %4139 = vmatpush1.msra.mxu0 %v2972
    %4140 = vmatprep.subr.mxu0 %v2977
    %4141 = vmatpush1.msra.mxu0 %v2976
    %4142 = vmatprep.subr.mxu0 %v2981
    %4143 = vmatpush1.msra.mxu0 %v2980
    %4144 = vmatprep.subr.mxu0 %v2985
    %4145 = vmatpush1.msra.mxu0 %v2984
    %4146 = vmatprep.subr.mxu0 %v2989
    %4147 = vmatpush1.msra.mxu0 %v2988
    %4148 = vmatprep.subr.mxu0 %v2993
    %4149 = vmatpush1.msra.mxu0 %v2992
    %4150 = vmatprep.subr.mxu0 %v2997
    %4151 = vmatpush1.msra.mxu0 %v2996
    %4152 = vmatprep.subr.mxu0 %v3001
    %4153 = vmatpush1.msra.mxu0 %v3000
    %4154 = vmatprep.subr.mxu0 %v3005
    %4155 = vmatpush1.msra.mxu0 %v3004
    %4156 = vmatprep.subr.mxu0 %v3009
    %4157 = vmatpush1.msra.mxu0 %v3008
    %4158 = vmatprep.subr.mxu0 %v3013
    %4159 = vmatpush1.msra.mxu0 %v3012
    %4160 = vmatprep.subr.mxu0 %v3017
    %4161 = vmatpush1.msra.mxu0 %v3016
    %4162 = vmatprep.subr.mxu0 %v3021
    %4163 = vmatpush1.msra.mxu0 %v3020
    %4164 = vmatprep.subr.mxu0 %v3025
    %4165 = vmatpush1.msra.mxu0 %v3024
    %4166 = vmatprep.subr.mxu0 %v3029
    %4167 = vmatpush1.msra.mxu0 %v3028
    %4168 = vmatprep.subr.mxu0 %v3033
    %4169 = vmatpush1.msra.mxu0 %v3032
    %4170 = vmatprep.subr.mxu0 %v3037
    %4171 = vmatpush1.msra.mxu0 %v3036
    %4172 = vmatprep.subr.mxu0 %v3041
    %4173 = vmatpush1.msra.mxu0 %v3040
    %4174 = vmatprep.subr.mxu0 %v3045
    %4175 = vmatpush1.msra.mxu0 %v3044
    %4176 = vmatprep.subr.mxu0 %v3049
    %4177 = vmatpush1.msra.mxu0 %v3048
    %4178 = vmatprep.subr.mxu0 %v3053
    %4179 = vmatpush1.msra.mxu0 %v3052
    %4180 = vmatprep.subr.mxu0 %v3057
    %4181 = vmatpush1.msra.mxu0 %v3056
    %4182 = vmatprep.subr.mxu0 %v3061
    %4183 = vmatpush1.msra.mxu0 %v3060
    %4184 = vmatprep.subr.mxu0 %v3065
    %4185 = vmatpush1.msra.mxu0 %v3064
    %4186 = vmatprep.mubr.f32.mxu0 %v3933
    %4187 = vmatmul.mubr.f32.gmra.mrb[0].mxu0 %v3926
    %v4188 = vpop.f32.mrb[0].mxu0
    %v4189 = vadd.f32 %v3884, %v4188
    %v4190 = vpop.f32.mrb[0].mxu0
    %v4191 = vadd.f32 %v3886, %v4190
    %4192 = vmatprep.mubr.f32.mxu0 %v3954
    %4193 = vmatmul.mubr.f32.gmra.mrb[0].mxu0 %v3947
    %v4194 = vpop.f32.mrb[0].mxu0
    %v4195 = vadd.f32 %v3890, %v4194
    %v4196 = vpop.f32.mrb[0].mxu0
    %v4197 = vadd.f32 %v3892, %v4196
    %4198 = vdwg.mxu0
    %4199 = vmatprep.subr.mxu0 %v3069
    %4200 = vmatpush1.msra.mxu0 %v3068
    %4201 = vmatprep.subr.mxu0 %v3073
    %4202 = vmatpush1.msra.mxu0 %v3072
    %4203 = vmatprep.subr.mxu0 %v3077
    %4204 = vmatpush1.msra.mxu0 %v3076
    %4205 = vmatprep.subr.mxu0 %v3081
    %4206 = vmatpush1.msra.mxu0 %v3080
    %4207 = vmatprep.subr.mxu0 %v3085
    %4208 = vmatpush1.msra.mxu0 %v3084
    %4209 = vmatprep.subr.mxu0 %v3089
    %4210 = vmatpush1.msra.mxu0 %v3088
    %4211 = vmatprep.subr.mxu0 %v3093
    %4212 = vmatpush1.msra.mxu0 %v3092
    %4213 = vmatprep.subr.mxu0 %v3097
    %4214 = vmatpush1.msra.mxu0 %v3096
    %4215 = vmatprep.subr.mxu0 %v3101
    %4216 = vmatpush1.msra.mxu0 %v3100
    %4217 = vmatprep.subr.mxu0 %v3105
    %4218 = vmatpush1.msra.mxu0 %v3104
    %4219 = vmatprep.subr.mxu0 %v3109
    %4220 = vmatpush1.msra.mxu0 %v3108
    %4221 = vmatprep.subr.mxu0 %v3113
    %4222 = vmatpush1.msra.mxu0 %v3112
    %4223 = vmatprep.subr.mxu0 %v3117
    %4224 = vmatpush1.msra.mxu0 %v3116
    %4225 = vmatprep.subr.mxu0 %v3121
    %4226 = vmatpush1.msra.mxu0 %v3120
    %4227 = vmatprep.subr.mxu0 %v3125
    %4228 = vmatpush1.msra.mxu0 %v3124
    %4229 = vmatprep.subr.mxu0 %v3129
    %4230 = vmatpush1.msra.mxu0 %v3128
    %4231 = vmatprep.subr.mxu0 0.0
    %4232 = vmatpush1.msra.mxu0 0.0
    %4233 = vmatprep.subr.mxu0 0.0
    %4234 = vmatpush1.msra.mxu0 0.0
    %4235 = vmatprep.subr.mxu0 0.0
    %4236 = vmatpush1.msra.mxu0 0.0
    %4237 = vmatprep.subr.mxu0 0.0
    %4238 = vmatpush1.msra.mxu0 0.0
    %4239 = vmatprep.subr.mxu0 0.0
    %4240 = vmatpush1.msra.mxu0 0.0
    %4241 = vmatprep.subr.mxu0 0.0
    %4242 = vmatpush1.msra.mxu0 0.0
    %4243 = vmatprep.subr.mxu0 0.0
    %4244 = vmatpush1.msra.mxu0 0.0
    %4245 = vmatprep.subr.mxu0 0.0
    %4246 = vmatpush1.msra.mxu0 0.0
    %4247 = vmatprep.subr.mxu0 0.0
    %4248 = vmatpush1.msra.mxu0 0.0
    %4249 = vmatprep.subr.mxu0 0.0
    %4250 = vmatpush1.msra.mxu0 0.0
    %4251 = vmatprep.subr.mxu0 0.0
    %4252 = vmatpush1.msra.mxu0 0.0
    %4253 = vmatprep.subr.mxu0 0.0
    %4254 = vmatpush1.msra.mxu0 0.0
    %4255 = vmatprep.subr.mxu0 0.0
    %4256 = vmatpush1.msra.mxu0 0.0
    %4257 = vmatprep.subr.mxu0 0.0
    %4258 = vmatpush1.msra.mxu0 0.0
    %4259 = vmatprep.subr.mxu0 0.0
    %4260 = vmatpush1.msra.mxu0 0.0
    %4261 = vmatprep.subr.mxu0 0.0
    %4262 = vmatpush1.msra.mxu0 0.0
    %4263 = vmatprep.mubr.f32.mxu0 0.0
    %4264 = vmatmul.mubr.f32.gmra.mrb[0].mxu0 %v3940
    %v4265 = vpop.f32.mrb[0].mxu0
    %v4266 = vadd.f32 %v4189, %v4265
    %v4267 = vpop.f32.mrb[0].mxu0
    %v4268 = vadd.f32 %v4191, %v4267
    %4269 = vmatprep.mubr.f32.mxu0 0.0
    %4270 = vmatmul.mubr.f32.gmra.mrb[0].mxu0 %v3961
    %v4271 = vpop.f32.mrb[0].mxu0
    %v4272 = vadd.f32 %v4195, %v4271
    %v4273 = vpop.f32.mrb[0].mxu0
    %v4274 = vadd.f32 %v4197, %v4273
    %4275 = vdwg.mxu0
    %s4276 = scalar_lea.vmem [#allocation7], 3072
    %v4277 = vld [vmem:[%s4276] sm:$0xff]
    %v4278 = vld [vmem:[%s4276 + $0x8] sm:$0xff]
    %v4279 = vld [vmem:[%s4276 + $0x10] sm:$0xff]
    %v4280 = vld [vmem:[%s4276 + $0x18] sm:$0xff]
    %v4281 = vld [vmem:[%s4276 + $0x20] sm:$0xff]
    %v4282 = vld [vmem:[%s4276 + $0x28] sm:$0xff]
    %v4283 = vld [vmem:[%s4276 + $0x30] sm:$0xff]
    %v4284 = vld [vmem:[%s4276 + $0x38] sm:$0xff]
    %v4285 = vld [vmem:[%s4276 + $0x40] sm:$0xff]
    %v4286 = vld [vmem:[%s4276 + $0x48] sm:$0xff]
    %v4287 = vld [vmem:[%s4276 + $0x50] sm:$0xff]
    %v4288 = vld [vmem:[%s4276 + $0x58] sm:$0xff]
    %v4289 = vld [vmem:[%s4276 + $0x60] sm:$0xff]
    %v4290 = vld [vmem:[%s4276 + $0x68] sm:$0xff]
    %v4291 = vld [vmem:[%s4276 + $0x70] sm:$0xff]
    %v4292 = vld [vmem:[%s4276 + $0x78] sm:$0xff]
    %v4293 = vld [vmem:[%s4276 + $0x80] sm:$0xff]
    %v4294 = vld [vmem:[%s4276 + $0x88] sm:$0xff]
    %v4295 = vld [vmem:[%s4276 + $0x90] sm:$0xff]
    %v4296 = vld [vmem:[%s4276 + $0x98] sm:$0xff]
    %v4297 = vld [vmem:[%s4276 + $0xa0] sm:$0xff]
    %v4298 = vld [vmem:[%s4276 + $0xa8] sm:$0xff]
    %v4299 = vld [vmem:[%s4276 + $0xb0] sm:$0xff]
    %v4300 = vld [vmem:[%s4276 + $0xb8] sm:$0xff]
    %v4301 = vld [vmem:[%s4276 + $0xc0] sm:$0xff]
    %v4302 = vld [vmem:[%s4276 + $0xc8] sm:$0xff]
    %v4303 = vld [vmem:[%s4276 + $0xd0] sm:$0xff]
    %v4304 = vld [vmem:[%s4276 + $0xd8] sm:$0xff]
    %v4305 = vld [vmem:[%s4276 + $0xe0] sm:$0xff]
    %v4306 = vld [vmem:[%s4276 + $0xe8] sm:$0xff]
    %v4307 = vld [vmem:[%s4276 + $0xf0] sm:$0xff]
    %v4308 = vld [vmem:[%s4276 + $0xf8] sm:$0xff]
    %v4309 = vld [vmem:[%s4276 + $0x100] sm:$0xff]
    %v4310 = vld [vmem:[%s4276 + $0x108] sm:$0xff]
    %v4311 = vld [vmem:[%s4276 + $0x110] sm:$0xff]
    %v4312 = vld [vmem:[%s4276 + $0x118] sm:$0xff]
    %v4313 = vld [vmem:[%s4276 + $0x120] sm:$0xff]
    %v4314 = vld [vmem:[%s4276 + $0x128] sm:$0xff]
    %v4315 = vld [vmem:[%s4276 + $0x130] sm:$0xff]
    %v4316 = vld [vmem:[%s4276 + $0x138] sm:$0xff]
    %v4317 = vld [vmem:[%s4276 + $0x140] sm:$0xff]
    %v4318 = vld [vmem:[%s4276 + $0x148] sm:$0xff]
    %v4319 = vld [vmem:[%s4276 + $0x150] sm:$0xff]
    %v4320 = vld [vmem:[%s4276 + $0x158] sm:$0xff]
    %v4321 = vld [vmem:[%s4276 + $0x160] sm:$0xff]
    %v4322 = vld [vmem:[%s4276 + $0x168] sm:$0xff]
    %v4323 = vld [vmem:[%s4276 + $0x170] sm:$0xff]
    %v4324 = vld [vmem:[%s4276 + $0x178] sm:$0xff]
    %v4325 = vld [vmem:[%s4276 + $0x180] sm:$0xff]
    %v4326 = vld [vmem:[%s4276 + $0x188] sm:$0xff]
    %v4327 = vld [vmem:[%s4276 + $0x190] sm:$0xff]
    %v4328 = vld [vmem:[%s4276 + $0x198] sm:$0xff]
    %v4329 = vld [vmem:[%s4276 + $0x1a0] sm:$0xff]
    %v4330 = vld [vmem:[%s4276 + $0x1a8] sm:$0xff]
    %v4331 = vld [vmem:[%s4276 + $0x1b0] sm:$0xff]
    %v4332 = vld [vmem:[%s4276 + $0x1b8] sm:$0xff]
    %v4333 = vld [vmem:[%s4276 + $0x1c0] sm:$0xff]
    %v4334 = vld [vmem:[%s4276 + $0x1c8] sm:$0xff]
    %v4335 = vld [vmem:[%s4276 + $0x1d0] sm:$0xff]
    %v4336 = vld [vmem:[%s4276 + $0x1d8] sm:$0xff]
    %v4337 = vld [vmem:[%s4276 + $0x1e0] sm:$0xff]
    %v4338 = vld [vmem:[%s4276 + $0x1e8] sm:$0xff]
    %v4339 = vld [vmem:[%s4276 + $0x1f0] sm:$0xff]
    %v4340 = vld [vmem:[%s4276 + $0x1f8] sm:$0xff]
    %v4341 = vld [vmem:[%s4276 + $0x200] sm:$0xff]
    %v4342 = vld [vmem:[%s4276 + $0x208] sm:$0xff]
    %v4343 = vld [vmem:[%s4276 + $0x210] sm:$0xff]
    %v4344 = vld [vmem:[%s4276 + $0x218] sm:$0xff]
    %v4345 = vld [vmem:[%s4276 + $0x220] sm:$0xff]
    %v4346 = vld [vmem:[%s4276 + $0x228] sm:$0xff]
    %v4347 = vld [vmem:[%s4276 + $0x230] sm:$0xff]
    %v4348 = vld [vmem:[%s4276 + $0x238] sm:$0xff]
    %v4349 = vld [vmem:[%s4276 + $0x240] sm:$0xff]
    %v4350 = vld [vmem:[%s4276 + $0x248] sm:$0xff]
    %v4351 = vld [vmem:[%s4276 + $0x250] sm:$0xff]
    %v4352 = vld [vmem:[%s4276 + $0x258] sm:$0xff]
    %v4353 = vld [vmem:[%s4276 + $0x260] sm:$0xff]
    %v4354 = vld [vmem:[%s4276 + $0x268] sm:$0xff]
    %v4355 = vld [vmem:[%s4276 + $0x270] sm:$0xff]
    %v4356 = vld [vmem:[%s4276 + $0x278] sm:$0xff]
    %v4357 = vld [vmem:[%s4276 + $0x280] sm:$0xff]
    %v4358 = vld [vmem:[%s4276 + $0x288] sm:$0xff]
    %v4359 = vld [vmem:[%s4276 + $0x290] sm:$0xff]
    %v4360 = vld [vmem:[%s4276 + $0x298] sm:$0xff]
    %v4361 = vld [vmem:[%s4276 + $0x2a0] sm:$0xff]
    %v4362 = vld [vmem:[%s4276 + $0x2a8] sm:$0xff]
    %v4363 = vld [vmem:[%s4276 + $0x2b0] sm:$0xff]
    %v4364 = vld [vmem:[%s4276 + $0x2b8] sm:$0xff]
    %v4365 = vld [vmem:[%s4276 + $0x2c0] sm:$0xff]
    %v4366 = vld [vmem:[%s4276 + $0x2c8] sm:$0xff]
    %v4367 = vld [vmem:[%s4276 + $0x2d0] sm:$0xff]
    %v4368 = vld [vmem:[%s4276 + $0x2d8] sm:$0xff]
    %v4369 = vld [vmem:[%s4276 + $0x2e0] sm:$0xff]
    %v4370 = vld [vmem:[%s4276 + $0x2e8] sm:$0xff]
    %v4371 = vld [vmem:[%s4276 + $0x2f0] sm:$0xff]
    %v4372 = vld [vmem:[%s4276 + $0x2f8] sm:$0xff]
    %v4373 = vld [vmem:[%s4276 + $0x300] sm:$0xff]
    %v4374 = vld [vmem:[%s4276 + $0x308] sm:$0xff]
    %v4375 = vld [vmem:[%s4276 + $0x310] sm:$0xff]
    %v4376 = vld [vmem:[%s4276 + $0x318] sm:$0xff]
    %v4377 = vld [vmem:[%s4276 + $0x320] sm:$0xff]
    %v4378 = vld [vmem:[%s4276 + $0x328] sm:$0xff]
    %v4379 = vld [vmem:[%s4276 + $0x330] sm:$0xff]
    %v4380 = vld [vmem:[%s4276 + $0x338] sm:$0xff]
    %v4381 = vld [vmem:[%s4276 + $0x340] sm:$0xff]
    %v4382 = vld [vmem:[%s4276 + $0x348] sm:$0xff]
    %v4383 = vld [vmem:[%s4276 + $0x350] sm:$0xff]
    %v4384 = vld [vmem:[%s4276 + $0x358] sm:$0xff]
    %v4385 = vld [vmem:[%s4276 + $0x360] sm:$0xff]
    %v4386 = vld [vmem:[%s4276 + $0x368] sm:$0xff]
    %v4387 = vld [vmem:[%s4276 + $0x370] sm:$0xff]
    %v4388 = vld [vmem:[%s4276 + $0x378] sm:$0xff]
    %v4389 = vld [vmem:[%s4276 + $0x380] sm:$0xff]
    %v4390 = vld [vmem:[%s4276 + $0x388] sm:$0xff]
    %v4391 = vld [vmem:[%s4276 + $0x390] sm:$0xff]
    %v4392 = vld [vmem:[%s4276 + $0x398] sm:$0xff]
    %v4393 = vld [vmem:[%s4276 + $0x3a0] sm:$0xff]
    %v4394 = vld [vmem:[%s4276 + $0x3a8] sm:$0xff]
    %v4395 = vld [vmem:[%s4276 + $0x3b0] sm:$0xff]
    %v4396 = vld [vmem:[%s4276 + $0x3b8] sm:$0xff]
    %v4397 = vld [vmem:[%s4276 + $0x3c0] sm:$0xff]
    %v4398 = vld [vmem:[%s4276 + $0x3c8] sm:$0xff]
    %v4399 = vld [vmem:[%s4276 + $0x3d0] sm:$0xff]
    %v4400 = vld [vmem:[%s4276 + $0x3d8] sm:$0xff]
    %v4401 = vld [vmem:[%s4276 + $0x3e0] sm:$0xff]
    %v4402 = vld [vmem:[%s4276 + $0x3e8] sm:$0xff]
    %v4403 = vld [vmem:[%s4276 + $0x3f0] sm:$0xff]
    %v4404 = vld [vmem:[%s4276 + $0x3f8] sm:$0xff]
    %v4405 = vld [vmem:[%s4276 + $0x400] sm:$0xff]
    %v4406 = vld [vmem:[%s4276 + $0x408] sm:$0xff]
    %v4407 = vld [vmem:[%s4276 + $0x410] sm:$0xff]
    %v4408 = vld [vmem:[%s4276 + $0x418] sm:$0xff]
    %v4409 = vld [vmem:[%s4276 + $0x420] sm:$0xff]
    %v4410 = vld [vmem:[%s4276 + $0x428] sm:$0xff]
    %v4411 = vld [vmem:[%s4276 + $0x430] sm:$0xff]
    %v4412 = vld [vmem:[%s4276 + $0x438] sm:$0xff]
    %v4413 = vld [vmem:[%s4276 + $0x440] sm:$0xff]
    %v4414 = vld [vmem:[%s4276 + $0x448] sm:$0xff]
    %v4415 = vld [vmem:[%s4276 + $0x450] sm:$0xff]
    %v4416 = vld [vmem:[%s4276 + $0x458] sm:$0xff]
    %v4417 = vld [vmem:[%s4276 + $0x460] sm:$0xff]
    %v4418 = vld [vmem:[%s4276 + $0x468] sm:$0xff]
    %v4419 = vld [vmem:[%s4276 + $0x470] sm:$0xff]
    %v4420 = vld [vmem:[%s4276 + $0x478] sm:$0xff]
    %v4421 = vld [vmem:[%s4276 + $0x480] sm:$0xff]
    %v4422 = vld [vmem:[%s4276 + $0x488] sm:$0xff]
    %v4423 = vld [vmem:[%s4276 + $0x490] sm:$0xff]
    %v4424 = vld [vmem:[%s4276 + $0x498] sm:$0xff]
    %v4425 = vld [vmem:[%s4276 + $0x4a0] sm:$0xff]
    %v4426 = vld [vmem:[%s4276 + $0x4a8] sm:$0xff]
    %v4427 = vld [vmem:[%s4276 + $0x4b0] sm:$0xff]
    %v4428 = vld [vmem:[%s4276 + $0x4b8] sm:$0xff]
    %v4429 = vld [vmem:[%s4276 + $0x4c0] sm:$0xff]
    %v4430 = vld [vmem:[%s4276 + $0x4c8] sm:$0xff]
    %v4431 = vld [vmem:[%s4276 + $0x4d0] sm:$0xff]
    %v4432 = vld [vmem:[%s4276 + $0x4d8] sm:$0xff]
    %v4433 = vld [vmem:[%s4276 + $0x4e0] sm:$0xff]
    %v4434 = vld [vmem:[%s4276 + $0x4e8] sm:$0xff]
    %v4435 = vld [vmem:[%s4276 + $0x4f0] sm:$0xff]
    %v4436 = vld [vmem:[%s4276 + $0x4f8] sm:$0xff]
    %v4437 = vld [vmem:[%s4276 + $0x500] sm:$0xff]
    %v4438 = vld [vmem:[%s4276 + $0x508] sm:$0xff]
    %v4439 = vld [vmem:[%s4276 + $0x510] sm:$0xff]
    %v4440 = vld [vmem:[%s4276 + $0x518] sm:$0xff]
    %v4441 = vld [vmem:[%s4276 + $0x520] sm:$0xff]
    %v4442 = vld [vmem:[%s4276 + $0x528] sm:$0xff]
    %v4443 = vld [vmem:[%s4276 + $0x530] sm:$0xff]
    %v4444 = vld [vmem:[%s4276 + $0x538] sm:$0xff]
    %v4445 = vld [vmem:[%s4276 + $0x540] sm:$0xff]
    %v4446 = vld [vmem:[%s4276 + $0x548] sm:$0xff]
    %v4447 = vld [vmem:[%s4276 + $0x550] sm:$0xff]
    %v4448 = vld [vmem:[%s4276 + $0x558] sm:$0xff]
    %v4449 = vld [vmem:[%s4276 + $0x560] sm:$0xff]
    %v4450 = vld [vmem:[%s4276 + $0x568] sm:$0xff]
    %v4451 = vld [vmem:[%s4276 + $0x570] sm:$0xff]
    %v4452 = vld [vmem:[%s4276 + $0x578] sm:$0xff]
    %v4453 = vld [vmem:[%s4276 + $0x580] sm:$0xff]
    %v4454 = vld [vmem:[%s4276 + $0x588] sm:$0xff]
    %v4455 = vld [vmem:[%s4276 + $0x590] sm:$0xff]
    %v4456 = vld [vmem:[%s4276 + $0x598] sm:$0xff]
    %v4457 = vld [vmem:[%s4276 + $0x5a0] sm:$0xff]
    %v4458 = vld [vmem:[%s4276 + $0x5a8] sm:$0xff]
    %v4459 = vld [vmem:[%s4276 + $0x5b0] sm:$0xff]
    %v4460 = vld [vmem:[%s4276 + $0x5b8] sm:$0xff]
    %v4461 = vld [vmem:[%s4276 + $0x5c0] sm:$0xff]
    %v4462 = vld [vmem:[%s4276 + $0x5c8] sm:$0xff]
    %v4463 = vld [vmem:[%s4276 + $0x5d0] sm:$0xff]
    %v4464 = vld [vmem:[%s4276 + $0x5d8] sm:$0xff]
    %v4465 = vld [vmem:[%s4276 + $0x5e0] sm:$0xff]
    %v4466 = vld [vmem:[%s4276 + $0x5e8] sm:$0xff]
    %v4467 = vld [vmem:[%s4276 + $0x5f0] sm:$0xff]
    %v4468 = vld [vmem:[%s4276 + $0x5f8] sm:$0xff]
    %v4471 = vlaneseq
    %v4472 = vshrl.u32 %v4471, 7
    %v4473 = vsub.s32 0, %v4472
    %v4474 = vrot.slane %v2923, %v4473
    %v4475 = vlaneseq
    %v4476 = vshrl.u32 %v4475, 7
    %v4477 = vsub.s32 2, %v4476
    %v4478 = vrot.slane %v2923, %v4477
    %v4479 = vlaneseq
    %v4480 = vshrl.u32 %v4479, 7
    %v4481 = vsub.s32 4, %v4480
    %v4482 = vrot.slane %v2923, %v4481
    %v4483 = vlaneseq
    %v4484 = vshrl.u32 %v4483, 7
    %v4485 = vsub.s32 0, %v4484
    %v4486 = vrot.slane %v2935, %v4485
    %v4487 = vlaneseq
    %v4488 = vshrl.u32 %v4487, 7
    %v4489 = vsub.s32 2, %v4488
    %v4490 = vrot.slane %v2935, %v4489
    %v4491 = vlaneseq
    %v4492 = vshrl.u32 %v4491, 7
    %v4493 = vsub.s32 4, %v4492
    %v4494 = vrot.slane %v2935, %v4493
    %v4495 = vsel %vm3531, %v3366, %v3354
    %v4496 = vsel %vm3533, %v3378, %v4495
    %v4497 = vsel %vm3535, %v3390, %v4496
    %v4498 = vsel %vm3537, %v3402, %v4497
    %v4499 = vsel %vm3539, %v3414, %v4498
    %v4500 = vsel %vm3541, %v3426, %v4499
    %v4501 = vsel %vm3543, %v4474, %v4500
    %v4502 = vsel %vm3531, %v3370, %v3358
    %v4503 = vsel %vm3533, %v3382, %v4502
    %v4504 = vsel %vm3535, %v3394, %v4503
    %v4505 = vsel %vm3537, %v3406, %v4504
    %v4506 = vsel %vm3539, %v3418, %v4505
    %v4507 = vsel %vm3541, %v3430, %v4506
    %v4508 = vsel %vm3543, %v4478, %v4507
    %v4509 = vsel %vm3531, %v3374, %v3362
    %v4510 = vsel %vm3533, %v3386, %v4509
    %v4511 = vsel %vm3535, %v3398, %v4510
    %v4512 = vsel %vm3537, %v3410, %v4511
    %v4513 = vsel %vm3539, %v3422, %v4512
    %v4514 = vsel %vm3541, %v3434, %v4513
    %v4515 = vsel %vm3543, %v4482, %v4514
    %v4516 = vsel %vm3531, %v3462, %v3450
    %v4517 = vsel %vm3533, %v3474, %v4516
    %v4518 = vsel %vm3535, %v3486, %v4517
    %v4519 = vsel %vm3537, %v3498, %v4518
    %v4520 = vsel %vm3539, %v3510, %v4519
    %v4521 = vsel %vm3541, %v3522, %v4520
    %v4522 = vsel %vm3543, %v4486, %v4521
    %v4523 = vsel %vm3531, %v3466, %v3454
    %v4524 = vsel %vm3533, %v3478, %v4523
    %v4525 = vsel %vm3535, %v3490, %v4524
    %v4526 = vsel %vm3537, %v3502, %v4525
    %v4527 = vsel %vm3539, %v3514, %v4526
    %v4528 = vsel %vm3541, %v3526, %v4527
    %v4529 = vsel %vm3543, %v4490, %v4528
    %v4530 = vsel %vm3531, %v3470, %v3458
    %v4531 = vsel %vm3533, %v3482, %v4530
    %v4532 = vsel %vm3535, %v3494, %v4531
    %v4533 = vsel %vm3537, %v3506, %v4532
    %v4534 = vsel %vm3539, %v3518, %v4533
    %v4535 = vsel %vm3541, %v3530, %v4534
    %v4536 = vsel %vm3543, %v4494, %v4535
    %4543 = vmatprep.subr.mxu0 %v4278
    %4544 = vmatpush1.msra.mxu0 %v4277
    %4545 = vmatprep.subr.mxu0 %v4282
    %4546 = vmatpush1.msra.mxu0 %v4281
    %4547 = vmatprep.subr.mxu0 %v4286
    %4548 = vmatpush1.msra.mxu0 %v4285
    %4549 = vmatprep.subr.mxu0 %v4290
    %4550 = vmatpush1.msra.mxu0 %v4289
    %4551 = vmatprep.subr.mxu0 %v4294
    %4552 = vmatpush1.msra.mxu0 %v4293
    %4553 = vmatprep.subr.mxu0 %v4298
    %4554 = vmatpush1.msra.mxu0 %v4297
    %4555 = vmatprep.subr.mxu0 %v4302
    %4556 = vmatpush1.msra.mxu0 %v4301
    %4557 = vmatprep.subr.mxu0 %v4306
    %4558 = vmatpush1.msra.mxu0 %v4305
    %4559 = vmatprep.subr.mxu0 %v4310
    %4560 = vmatpush1.msra.mxu0 %v4309
    %4561 = vmatprep.subr.mxu0 %v4314
    %4562 = vmatpush1.msra.mxu0 %v4313
    %4563 = vmatprep.subr.mxu0 %v4318
    %4564 = vmatpush1.msra.mxu0 %v4317
    %4565 = vmatprep.subr.mxu0 %v4322
    %4566 = vmatpush1.msra.mxu0 %v4321
    %4567 = vmatprep.subr.mxu0 %v4326
    %4568 = vmatpush1.msra.mxu0 %v4325
    %4569 = vmatprep.subr.mxu0 %v4330
    %4570 = vmatpush1.msra.mxu0 %v4329
    %4571 = vmatprep.subr.mxu0 %v4334
    %4572 = vmatpush1.msra.mxu0 %v4333
    %4573 = vmatprep.subr.mxu0 %v4338
    %4574 = vmatpush1.msra.mxu0 %v4337
    %4575 = vmatprep.subr.mxu0 %v4342
    %4576 = vmatpush1.msra.mxu0 %v4341
    %4577 = vmatprep.subr.mxu0 %v4346
    %4578 = vmatpush1.msra.mxu0 %v4345
    %4579 = vmatprep.subr.mxu0 %v4350
    %4580 = vmatpush1.msra.mxu0 %v4349
    %4581 = vmatprep.subr.mxu0 %v4354
    %4582 = vmatpush1.msra.mxu0 %v4353
    %4583 = vmatprep.subr.mxu0 %v4358
    %4584 = vmatpush1.msra.mxu0 %v4357
    %4585 = vmatprep.subr.mxu0 %v4362
    %4586 = vmatpush1.msra.mxu0 %v4361
    %4587 = vmatprep.subr.mxu0 %v4366
    %4588 = vmatpush1.msra.mxu0 %v4365
    %4589 = vmatprep.subr.mxu0 %v4370
    %4590 = vmatpush1.msra.mxu0 %v4369
    %4591 = vmatprep.subr.mxu0 %v4374
    %4592 = vmatpush1.msra.mxu0 %v4373
    %4593 = vmatprep.subr.mxu0 %v4378
    %4594 = vmatpush1.msra.mxu0 %v4377
    %4595 = vmatprep.subr.mxu0 %v4382
    %4596 = vmatpush1.msra.mxu0 %v4381
    %4597 = vmatprep.subr.mxu0 %v4386
    %4598 = vmatpush1.msra.mxu0 %v4385
    %4599 = vmatprep.subr.mxu0 %v4390
    %4600 = vmatpush1.msra.mxu0 %v4389
    %4601 = vmatprep.subr.mxu0 %v4394
    %4602 = vmatpush1.msra.mxu0 %v4393
    %4603 = vmatprep.subr.mxu0 %v4398
    %4604 = vmatpush1.msra.mxu0 %v4397
    %4605 = vmatprep.subr.mxu0 %v4402
    %4606 = vmatpush1.msra.mxu0 %v4401
    %4607 = vmatprep.mubr.f32.mxu0 %v4508
    %4608 = vmatmul.mubr.f32.gmra.mrb[0].mxu0 %v4501
    %v4609 = vpop.f32.mrb[0].mxu0
    %v4610 = vadd.f32 0.0, %v4609
    %v4611 = vpop.f32.mrb[0].mxu0
    %v4612 = vadd.f32 0.0, %v4611
    %4613 = vmatprep.mubr.f32.mxu0 %v4529
    %4614 = vmatmul.mubr.f32.gmra.mrb[0].mxu0 %v4522
    %v4615 = vpop.f32.mrb[0].mxu0
    %v4616 = vadd.f32 0.0, %v4615
    %v4617 = vpop.f32.mrb[0].mxu0
    %v4618 = vadd.f32 0.0, %v4617
    %4619 = vdwg.mxu0
    %4620 = vmatprep.subr.mxu0 %v4406
    %4621 = vmatpush1.msra.mxu0 %v4405
    %4622 = vmatprep.subr.mxu0 %v4410
    %4623 = vmatpush1.msra.mxu0 %v4409
    %4624 = vmatprep.subr.mxu0 %v4414
    %4625 = vmatpush1.msra.mxu0 %v4413
    %4626 = vmatprep.subr.mxu0 %v4418
    %4627 = vmatpush1.msra.mxu0 %v4417
    %4628 = vmatprep.subr.mxu0 %v4422
    %4629 = vmatpush1.msra.mxu0 %v4421
    %4630 = vmatprep.subr.mxu0 %v4426
    %4631 = vmatpush1.msra.mxu0 %v4425
    %4632 = vmatprep.subr.mxu0 %v4430
    %4633 = vmatpush1.msra.mxu0 %v4429
    %4634 = vmatprep.subr.mxu0 %v4434
    %4635 = vmatpush1.msra.mxu0 %v4433
    %4636 = vmatprep.subr.mxu0 %v4438
    %4637 = vmatpush1.msra.mxu0 %v4437
    %4638 = vmatprep.subr.mxu0 %v4442
    %4639 = vmatpush1.msra.mxu0 %v4441
    %4640 = vmatprep.subr.mxu0 %v4446
    %4641 = vmatpush1.msra.mxu0 %v4445
    %4642 = vmatprep.subr.mxu0 %v4450
    %4643 = vmatpush1.msra.mxu0 %v4449
    %4644 = vmatprep.subr.mxu0 %v4454
    %4645 = vmatpush1.msra.mxu0 %v4453
    %4646 = vmatprep.subr.mxu0 %v4458
    %4647 = vmatpush1.msra.mxu0 %v4457
    %4648 = vmatprep.subr.mxu0 %v4462
    %4649 = vmatpush1.msra.mxu0 %v4461
    %4650 = vmatprep.subr.mxu0 %v4466
    %4651 = vmatpush1.msra.mxu0 %v4465
    %4652 = vmatprep.subr.mxu0 0.0
    %4653 = vmatpush1.msra.mxu0 0.0
    %4654 = vmatprep.subr.mxu0 0.0
    %4655 = vmatpush1.msra.mxu0 0.0
    %4656 = vmatprep.subr.mxu0 0.0
    %4657 = vmatpush1.msra.mxu0 0.0
    %4658 = vmatprep.subr.mxu0 0.0
    %4659 = vmatpush1.msra.mxu0 0.0
    %4660 = vmatprep.subr.mxu0 0.0
    %4661 = vmatpush1.msra.mxu0 0.0
    %4662 = vmatprep.subr.mxu0 0.0
    %4663 = vmatpush1.msra.mxu0 0.0
    %4664 = vmatprep.subr.mxu0 0.0
    %4665 = vmatpush1.msra.mxu0 0.0
    %4666 = vmatprep.subr.mxu0 0.0
    %4667 = vmatpush1.msra.mxu0 0.0
    %4668 = vmatprep.subr.mxu0 0.0
    %4669 = vmatpush1.msra.mxu0 0.0
    %4670 = vmatprep.subr.mxu0 0.0
    %4671 = vmatpush1.msra.mxu0 0.0
    %4672 = vmatprep.subr.mxu0 0.0
    %4673 = vmatpush1.msra.mxu0 0.0
    %4674 = vmatprep.subr.mxu0 0.0
    %4675 = vmatpush1.msra.mxu0 0.0
    %4676 = vmatprep.subr.mxu0 0.0
    %4677 = vmatpush1.msra.mxu0 0.0
    %4678 = vmatprep.subr.mxu0 0.0
    %4679 = vmatpush1.msra.mxu0 0.0
    %4680 = vmatprep.subr.mxu0 0.0
    %4681 = vmatpush1.msra.mxu0 0.0
    %4682 = vmatprep.subr.mxu0 0.0
    %4683 = vmatpush1.msra.mxu0 0.0
    %4684 = vmatprep.mubr.f32.mxu0 0.0
    %4685 = vmatmul.mubr.f32.gmra.mrb[0].mxu0 %v4515
    %v4686 = vpop.f32.mrb[0].mxu0
    %v4687 = vadd.f32 %v4610, %v4686
    %v4688 = vpop.f32.mrb[0].mxu0
    %v4689 = vadd.f32 %v4612, %v4688
    %4690 = vmatprep.mubr.f32.mxu0 0.0
    %4691 = vmatmul.mubr.f32.gmra.mrb[0].mxu0 %v4536
    %v4692 = vpop.f32.mrb[0].mxu0
    %v4693 = vadd.f32 %v4616, %v4692
    %v4694 = vpop.f32.mrb[0].mxu0
    %v4695 = vadd.f32 %v4618, %v4694
    %4696 = vdwg.mxu0
    %4697 = vmatprep.subr.mxu0 %v4280
    %4698 = vmatpush1.msra.mxu0 %v4279
    %4699 = vmatprep.subr.mxu0 %v4284
    %4700 = vmatpush1.msra.mxu0 %v4283
    %4701 = vmatprep.subr.mxu0 %v4288
    %4702 = vmatpush1.msra.mxu0 %v4287
    %4703 = vmatprep.subr.mxu0 %v4292
    %4704 = vmatpush1.msra.mxu0 %v4291
    %4705 = vmatprep.subr.mxu0 %v4296
    %4706 = vmatpush1.msra.mxu0 %v4295
    %4707 = vmatprep.subr.mxu0 %v4300
    %4708 = vmatpush1.msra.mxu0 %v4299
    %4709 = vmatprep.subr.mxu0 %v4304
    %4710 = vmatpush1.msra.mxu0 %v4303
    %4711 = vmatprep.subr.mxu0 %v4308
    %4712 = vmatpush1.msra.mxu0 %v4307
    %4713 = vmatprep.subr.mxu0 %v4312
    %4714 = vmatpush1.msra.mxu0 %v4311
    %4715 = vmatprep.subr.mxu0 %v4316
    %4716 = vmatpush1.msra.mxu0 %v4315
    %4717 = vmatprep.subr.mxu0 %v4320
    %4718 = vmatpush1.msra.mxu0 %v4319
    %4719 = vmatprep.subr.mxu0 %v4324
    %4720 = vmatpush1.msra.mxu0 %v4323
    %4721 = vmatprep.subr.mxu0 %v4328
    %4722 = vmatpush1.msra.mxu0 %v4327
    %4723 = vmatprep.subr.mxu0 %v4332
    %4724 = vmatpush1.msra.mxu0 %v4331
    %4725 = vmatprep.subr.mxu0 %v4336
    %4726 = vmatpush1.msra.mxu0 %v4335
    %4727 = vmatprep.subr.mxu0 %v4340
    %4728 = vmatpush1.msra.mxu0 %v4339
    %4729 = vmatprep.subr.mxu0 %v4344
    %4730 = vmatpush1.msra.mxu0 %v4343
    %4731 = vmatprep.subr.mxu0 %v4348
    %4732 = vmatpush1.msra.mxu0 %v4347
    %4733 = vmatprep.subr.mxu0 %v4352
    %4734 = vmatpush1.msra.mxu0 %v4351
    %4735 = vmatprep.subr.mxu0 %v4356
    %4736 = vmatpush1.msra.mxu0 %v4355
    %4737 = vmatprep.subr.mxu0 %v4360
    %4738 = vmatpush1.msra.mxu0 %v4359
    %4739 = vmatprep.subr.mxu0 %v4364
    %4740 = vmatpush1.msra.mxu0 %v4363
    %4741 = vmatprep.subr.mxu0 %v4368
    %4742 = vmatpush1.msra.mxu0 %v4367
    %4743 = vmatprep.subr.mxu0 %v4372
    %4744 = vmatpush1.msra.mxu0 %v4371
    %4745 = vmatprep.subr.mxu0 %v4376
    %4746 = vmatpush1.msra.mxu0 %v4375
    %4747 = vmatprep.subr.mxu0 %v4380
    %4748 = vmatpush1.msra.mxu0 %v4379
    %4749 = vmatprep.subr.mxu0 %v4384
    %4750 = vmatpush1.msra.mxu0 %v4383
    %4751 = vmatprep.subr.mxu0 %v4388
    %4752 = vmatpush1.msra.mxu0 %v4387
    %4753 = vmatprep.subr.mxu0 %v4392
    %4754 = vmatpush1.msra.mxu0 %v4391
    %4755 = vmatprep.subr.mxu0 %v4396
    %4756 = vmatpush1.msra.mxu0 %v4395
    %4757 = vmatprep.subr.mxu0 %v4400
    %4758 = vmatpush1.msra.mxu0 %v4399
    %4759 = vmatprep.subr.mxu0 %v4404
    %4760 = vmatpush1.msra.mxu0 %v4403
    %4761 = vmatprep.mubr.f32.mxu0 %v4508
    %4762 = vmatmul.mubr.f32.gmra.mrb[0].mxu0 %v4501
    %v4763 = vpop.f32.mrb[0].mxu0
    %v4764 = vadd.f32 0.0, %v4763
    %v4765 = vpop.f32.mrb[0].mxu0
    %v4766 = vadd.f32 0.0, %v4765
    %4767 = vmatprep.mubr.f32.mxu0 %v4529
    %4768 = vmatmul.mubr.f32.gmra.mrb[0].mxu0 %v4522
    %v4769 = vpop.f32.mrb[0].mxu0
    %v4770 = vadd.f32 0.0, %v4769
    %v4771 = vpop.f32.mrb[0].mxu0
    %v4772 = vadd.f32 0.0, %v4771
    %4773 = vdwg.mxu0
    %4774 = vmatprep.subr.mxu0 %v4408
    %4775 = vmatpush1.msra.mxu0 %v4407
    %4776 = vmatprep.subr.mxu0 %v4412
    %4777 = vmatpush1.msra.mxu0 %v4411
    %4778 = vmatprep.subr.mxu0 %v4416
    %4779 = vmatpush1.msra.mxu0 %v4415
    %4780 = vmatprep.subr.mxu0 %v4420
    %4781 = vmatpush1.msra.mxu0 %v4419
    %4782 = vmatprep.subr.mxu0 %v4424
    %4783 = vmatpush1.msra.mxu0 %v4423
    %4784 = vmatprep.subr.mxu0 %v4428
    %4785 = vmatpush1.msra.mxu0 %v4427
    %4786 = vmatprep.subr.mxu0 %v4432
    %4787 = vmatpush1.msra.mxu0 %v4431
    %4788 = vmatprep.subr.mxu0 %v4436
    %4789 = vmatpush1.msra.mxu0 %v4435
    %4790 = vmatprep.subr.mxu0 %v4440
    %4791 = vmatpush1.msra.mxu0 %v4439
    %4792 = vmatprep.subr.mxu0 %v4444
    %4793 = vmatpush1.msra.mxu0 %v4443
    %4794 = vmatprep.subr.mxu0 %v4448
    %4795 = vmatpush1.msra.mxu0 %v4447
    %4796 = vmatprep.subr.mxu0 %v4452
    %4797 = vmatpush1.msra.mxu0 %v4451
    %4798 = vmatprep.subr.mxu0 %v4456
    %4799 = vmatpush1.msra.mxu0 %v4455
    %4800 = vmatprep.subr.mxu0 %v4460
    %4801 = vmatpush1.msra.mxu0 %v4459
    %4802 = vmatprep.subr.mxu0 %v4464
    %4803 = vmatpush1.msra.mxu0 %v4463
    %4804 = vmatprep.subr.mxu0 %v4468
    %4805 = vmatpush1.msra.mxu0 %v4467
    %4806 = vmatprep.subr.mxu0 0.0
    %4807 = vmatpush1.msra.mxu0 0.0
    %4808 = vmatprep.subr.mxu0 0.0
    %4809 = vmatpush1.msra.mxu0 0.0
    %4810 = vmatprep.subr.mxu0 0.0
    %4811 = vmatpush1.msra.mxu0 0.0
    %4812 = vmatprep.subr.mxu0 0.0
    %4813 = vmatpush1.msra.mxu0 0.0
    %4814 = vmatprep.subr.mxu0 0.0
    %4815 = vmatpush1.msra.mxu0 0.0
    %4816 = vmatprep.subr.mxu0 0.0
    %4817 = vmatpush1.msra.mxu0 0.0
    %4818 = vmatprep.subr.mxu0 0.0
    %4819 = vmatpush1.msra.mxu0 0.0
    %4820 = vmatprep.subr.mxu0 0.0
    %4821 = vmatpush1.msra.mxu0 0.0
    %4822 = vmatprep.subr.mxu0 0.0
    %4823 = vmatpush1.msra.mxu0 0.0
    %4824 = vmatprep.subr.mxu0 0.0
    %4825 = vmatpush1.msra.mxu0 0.0
    %4826 = vmatprep.subr.mxu0 0.0
    %4827 = vmatpush1.msra.mxu0 0.0
    %4828 = vmatprep.subr.mxu0 0.0
    %4829 = vmatpush1.msra.mxu0 0.0
    %4830 = vmatprep.subr.mxu0 0.0
    %4831 = vmatpush1.msra.mxu0 0.0
    %4832 = vmatprep.subr.mxu0 0.0
    %4833 = vmatpush1.msra.mxu0 0.0
    %4834 = vmatprep.subr.mxu0 0.0
    %4835 = vmatpush1.msra.mxu0 0.0
    %4836 = vmatprep.subr.mxu0 0.0
    %4837 = vmatpush1.msra.mxu0 0.0
    %4838 = vmatprep.mubr.f32.mxu0 0.0
    %4839 = vmatmul.mubr.f32.gmra.mrb[0].mxu0 %v4515
    %v4840 = vpop.f32.mrb[0].mxu0
    %v4841 = vadd.f32 %v4764, %v4840
    %v4842 = vpop.f32.mrb[0].mxu0
    %v4843 = vadd.f32 %v4766, %v4842
    %4844 = vmatprep.mubr.f32.mxu0 0.0
    %4845 = vmatmul.mubr.f32.gmra.mrb[0].mxu0 %v4536
    %v4846 = vpop.f32.mrb[0].mxu0
    %v4847 = vadd.f32 %v4770, %v4846
    %v4848 = vpop.f32.mrb[0].mxu0
    %v4849 = vadd.f32 %v4772, %v4848
    %4850 = vdwg.mxu0
    %v4851 = vadd.f32 %v4112, %v4687
    %v4852 = vadd.f32 %v4114, %v4689
    %v4853 = vadd.f32 %v4266, %v4841
    %v4854 = vadd.f32 %v4268, %v4843
    %v4855 = vadd.f32 %v4118, %v4693
    %v4856 = vadd.f32 %v4120, %v4695
    %v4857 = vadd.f32 %v4272, %v4847
    %v4858 = vadd.f32 %v4274, %v4849
    %s4859 = scalar_lea.vmem [#allocation7], 4608
    %v4860 = vld [vmem:[%s4859] sm:$0xff]
    %v4861 = vld [vmem:[%s4859 + $0x8] sm:$0xff]
    %v4862 = vld [vmem:[%s4859 + $0x10] sm:$0xff]
    %v4863 = vld [vmem:[%s4859 + $0x18] sm:$0xff]
    %v4864 = vld [vmem:[%s4859 + $0x20] sm:$0xff]
    %v4865 = vld [vmem:[%s4859 + $0x28] sm:$0xff]
    %v4866 = vld [vmem:[%s4859 + $0x30] sm:$0xff]
    %v4867 = vld [vmem:[%s4859 + $0x38] sm:$0xff]
    %v4868 = vld [vmem:[%s4859 + $0x40] sm:$0xff]
    %v4869 = vld [vmem:[%s4859 + $0x48] sm:$0xff]
    %v4870 = vld [vmem:[%s4859 + $0x50] sm:$0xff]
    %v4871 = vld [vmem:[%s4859 + $0x58] sm:$0xff]
    %v4872 = vld [vmem:[%s4859 + $0x60] sm:$0xff]
    %v4873 = vld [vmem:[%s4859 + $0x68] sm:$0xff]
    %v4874 = vld [vmem:[%s4859 + $0x70] sm:$0xff]
    %v4875 = vld [vmem:[%s4859 + $0x78] sm:$0xff]
    %v4876 = vld [vmem:[%s4859 + $0x80] sm:$0xff]
    %v4877 = vld [vmem:[%s4859 + $0x88] sm:$0xff]
    %v4878 = vld [vmem:[%s4859 + $0x90] sm:$0xff]
    %v4879 = vld [vmem:[%s4859 + $0x98] sm:$0xff]
    %v4880 = vld [vmem:[%s4859 + $0xa0] sm:$0xff]
    %v4881 = vld [vmem:[%s4859 + $0xa8] sm:$0xff]
    %v4882 = vld [vmem:[%s4859 + $0xb0] sm:$0xff]
    %v4883 = vld [vmem:[%s4859 + $0xb8] sm:$0xff]
    %v4884 = vld [vmem:[%s4859 + $0xc0] sm:$0xff]
    %v4885 = vld [vmem:[%s4859 + $0xc8] sm:$0xff]
    %v4886 = vld [vmem:[%s4859 + $0xd0] sm:$0xff]
    %v4887 = vld [vmem:[%s4859 + $0xd8] sm:$0xff]
    %v4888 = vld [vmem:[%s4859 + $0xe0] sm:$0xff]
    %v4889 = vld [vmem:[%s4859 + $0xe8] sm:$0xff]
    %v4890 = vld [vmem:[%s4859 + $0xf0] sm:$0xff]
    %v4891 = vld [vmem:[%s4859 + $0xf8] sm:$0xff]
    %v4892 = vld [vmem:[%s4859 + $0x100] sm:$0xff]
    %v4893 = vld [vmem:[%s4859 + $0x108] sm:$0xff]
    %v4894 = vld [vmem:[%s4859 + $0x110] sm:$0xff]
    %v4895 = vld [vmem:[%s4859 + $0x118] sm:$0xff]
    %v4896 = vld [vmem:[%s4859 + $0x120] sm:$0xff]
    %v4897 = vld [vmem:[%s4859 + $0x128] sm:$0xff]
    %v4898 = vld [vmem:[%s4859 + $0x130] sm:$0xff]
    %v4899 = vld [vmem:[%s4859 + $0x138] sm:$0xff]
    %v4900 = vld [vmem:[%s4859 + $0x140] sm:$0xff]
    %v4901 = vld [vmem:[%s4859 + $0x148] sm:$0xff]
    %v4902 = vld [vmem:[%s4859 + $0x150] sm:$0xff]
    %v4903 = vld [vmem:[%s4859 + $0x158] sm:$0xff]
    %v4904 = vld [vmem:[%s4859 + $0x160] sm:$0xff]
    %v4905 = vld [vmem:[%s4859 + $0x168] sm:$0xff]
    %v4906 = vld [vmem:[%s4859 + $0x170] sm:$0xff]
    %v4907 = vld [vmem:[%s4859 + $0x178] sm:$0xff]
    %v4908 = vld [vmem:[%s4859 + $0x180] sm:$0xff]
    %v4909 = vld [vmem:[%s4859 + $0x188] sm:$0xff]
    %v4910 = vld [vmem:[%s4859 + $0x190] sm:$0xff]
    %v4911 = vld [vmem:[%s4859 + $0x198] sm:$0xff]
    %v4912 = vld [vmem:[%s4859 + $0x1a0] sm:$0xff]
    %v4913 = vld [vmem:[%s4859 + $0x1a8] sm:$0xff]
    %v4914 = vld [vmem:[%s4859 + $0x1b0] sm:$0xff]
    %v4915 = vld [vmem:[%s4859 + $0x1b8] sm:$0xff]
    %v4916 = vld [vmem:[%s4859 + $0x1c0] sm:$0xff]
    %v4917 = vld [vmem:[%s4859 + $0x1c8] sm:$0xff]
    %v4918 = vld [vmem:[%s4859 + $0x1d0] sm:$0xff]
    %v4919 = vld [vmem:[%s4859 + $0x1d8] sm:$0xff]
    %v4920 = vld [vmem:[%s4859 + $0x1e0] sm:$0xff]
    %v4921 = vld [vmem:[%s4859 + $0x1e8] sm:$0xff]
    %v4922 = vld [vmem:[%s4859 + $0x1f0] sm:$0xff]
    %v4923 = vld [vmem:[%s4859 + $0x1f8] sm:$0xff]
    %v4924 = vld [vmem:[%s4859 + $0x200] sm:$0xff]
    %v4925 = vld [vmem:[%s4859 + $0x208] sm:$0xff]
    %v4926 = vld [vmem:[%s4859 + $0x210] sm:$0xff]
    %v4927 = vld [vmem:[%s4859 + $0x218] sm:$0xff]
    %v4928 = vld [vmem:[%s4859 + $0x220] sm:$0xff]
    %v4929 = vld [vmem:[%s4859 + $0x228] sm:$0xff]
    %v4930 = vld [vmem:[%s4859 + $0x230] sm:$0xff]
    %v4931 = vld [vmem:[%s4859 + $0x238] sm:$0xff]
    %v4932 = vld [vmem:[%s4859 + $0x240] sm:$0xff]
    %v4933 = vld [vmem:[%s4859 + $0x248] sm:$0xff]
    %v4934 = vld [vmem:[%s4859 + $0x250] sm:$0xff]
    %v4935 = vld [vmem:[%s4859 + $0x258] sm:$0xff]
    %v4936 = vld [vmem:[%s4859 + $0x260] sm:$0xff]
    %v4937 = vld [vmem:[%s4859 + $0x268] sm:$0xff]
    %v4938 = vld [vmem:[%s4859 + $0x270] sm:$0xff]
    %v4939 = vld [vmem:[%s4859 + $0x278] sm:$0xff]
    %v4940 = vld [vmem:[%s4859 + $0x280] sm:$0xff]
    %v4941 = vld [vmem:[%s4859 + $0x288] sm:$0xff]
    %v4942 = vld [vmem:[%s4859 + $0x290] sm:$0xff]
    %v4943 = vld [vmem:[%s4859 + $0x298] sm:$0xff]
    %v4944 = vld [vmem:[%s4859 + $0x2a0] sm:$0xff]
    %v4945 = vld [vmem:[%s4859 + $0x2a8] sm:$0xff]
    %v4946 = vld [vmem:[%s4859 + $0x2b0] sm:$0xff]
    %v4947 = vld [vmem:[%s4859 + $0x2b8] sm:$0xff]
    %v4948 = vld [vmem:[%s4859 + $0x2c0] sm:$0xff]
    %v4949 = vld [vmem:[%s4859 + $0x2c8] sm:$0xff]
    %v4950 = vld [vmem:[%s4859 + $0x2d0] sm:$0xff]
    %v4951 = vld [vmem:[%s4859 + $0x2d8] sm:$0xff]
    %v4952 = vld [vmem:[%s4859 + $0x2e0] sm:$0xff]
    %v4953 = vld [vmem:[%s4859 + $0x2e8] sm:$0xff]
    %v4954 = vld [vmem:[%s4859 + $0x2f0] sm:$0xff]
    %v4955 = vld [vmem:[%s4859 + $0x2f8] sm:$0xff]
    %v4956 = vld [vmem:[%s4859 + $0x300] sm:$0xff]
    %v4957 = vld [vmem:[%s4859 + $0x308] sm:$0xff]
    %v4958 = vld [vmem:[%s4859 + $0x310] sm:$0xff]
    %v4959 = vld [vmem:[%s4859 + $0x318] sm:$0xff]
    %v4960 = vld [vmem:[%s4859 + $0x320] sm:$0xff]
    %v4961 = vld [vmem:[%s4859 + $0x328] sm:$0xff]
    %v4962 = vld [vmem:[%s4859 + $0x330] sm:$0xff]
    %v4963 = vld [vmem:[%s4859 + $0x338] sm:$0xff]
    %v4964 = vld [vmem:[%s4859 + $0x340] sm:$0xff]
    %v4965 = vld [vmem:[%s4859 + $0x348] sm:$0xff]
    %v4966 = vld [vmem:[%s4859 + $0x350] sm:$0xff]
    %v4967 = vld [vmem:[%s4859 + $0x358] sm:$0xff]
    %v4968 = vld [vmem:[%s4859 + $0x360] sm:$0xff]
    %v4969 = vld [vmem:[%s4859 + $0x368] sm:$0xff]
    %v4970 = vld [vmem:[%s4859 + $0x370] sm:$0xff]
    %v4971 = vld [vmem:[%s4859 + $0x378] sm:$0xff]
    %v4972 = vld [vmem:[%s4859 + $0x380] sm:$0xff]
    %v4973 = vld [vmem:[%s4859 + $0x388] sm:$0xff]
    %v4974 = vld [vmem:[%s4859 + $0x390] sm:$0xff]
    %v4975 = vld [vmem:[%s4859 + $0x398] sm:$0xff]
    %v4976 = vld [vmem:[%s4859 + $0x3a0] sm:$0xff]
    %v4977 = vld [vmem:[%s4859 + $0x3a8] sm:$0xff]
    %v4978 = vld [vmem:[%s4859 + $0x3b0] sm:$0xff]
    %v4979 = vld [vmem:[%s4859 + $0x3b8] sm:$0xff]
    %v4980 = vld [vmem:[%s4859 + $0x3c0] sm:$0xff]
    %v4981 = vld [vmem:[%s4859 + $0x3c8] sm:$0xff]
    %v4982 = vld [vmem:[%s4859 + $0x3d0] sm:$0xff]
    %v4983 = vld [vmem:[%s4859 + $0x3d8] sm:$0xff]
    %v4984 = vld [vmem:[%s4859 + $0x3e0] sm:$0xff]
    %v4985 = vld [vmem:[%s4859 + $0x3e8] sm:$0xff]
    %v4986 = vld [vmem:[%s4859 + $0x3f0] sm:$0xff]
    %v4987 = vld [vmem:[%s4859 + $0x3f8] sm:$0xff]
    %v4988 = vld [vmem:[%s4859 + $0x400] sm:$0xff]
    %v4989 = vld [vmem:[%s4859 + $0x408] sm:$0xff]
    %v4990 = vld [vmem:[%s4859 + $0x410] sm:$0xff]
    %v4991 = vld [vmem:[%s4859 + $0x418] sm:$0xff]
    %v4992 = vld [vmem:[%s4859 + $0x420] sm:$0xff]
    %v4993 = vld [vmem:[%s4859 + $0x428] sm:$0xff]
    %v4994 = vld [vmem:[%s4859 + $0x430] sm:$0xff]
    %v4995 = vld [vmem:[%s4859 + $0x438] sm:$0xff]
    %v4996 = vld [vmem:[%s4859 + $0x440] sm:$0xff]
    %v4997 = vld [vmem:[%s4859 + $0x448] sm:$0xff]
    %v4998 = vld [vmem:[%s4859 + $0x450] sm:$0xff]
    %v4999 = vld [vmem:[%s4859 + $0x458] sm:$0xff]
    %v5000 = vld [vmem:[%s4859 + $0x460] sm:$0xff]
    %v5001 = vld [vmem:[%s4859 + $0x468] sm:$0xff]
    %v5002 = vld [vmem:[%s4859 + $0x470] sm:$0xff]
    %v5003 = vld [vmem:[%s4859 + $0x478] sm:$0xff]
    %v5004 = vld [vmem:[%s4859 + $0x480] sm:$0xff]
    %v5005 = vld [vmem:[%s4859 + $0x488] sm:$0xff]
    %v5006 = vld [vmem:[%s4859 + $0x490] sm:$0xff]
    %v5007 = vld [vmem:[%s4859 + $0x498] sm:$0xff]
    %v5008 = vld [vmem:[%s4859 + $0x4a0] sm:$0xff]
    %v5009 = vld [vmem:[%s4859 + $0x4a8] sm:$0xff]
    %v5010 = vld [vmem:[%s4859 + $0x4b0] sm:$0xff]
    %v5011 = vld [vmem:[%s4859 + $0x4b8] sm:$0xff]
    %v5012 = vld [vmem:[%s4859 + $0x4c0] sm:$0xff]
    %v5013 = vld [vmem:[%s4859 + $0x4c8] sm:$0xff]
    %v5014 = vld [vmem:[%s4859 + $0x4d0] sm:$0xff]
    %v5015 = vld [vmem:[%s4859 + $0x4d8] sm:$0xff]
    %v5016 = vld [vmem:[%s4859 + $0x4e0] sm:$0xff]
    %v5017 = vld [vmem:[%s4859 + $0x4e8] sm:$0xff]
    %v5018 = vld [vmem:[%s4859 + $0x4f0] sm:$0xff]
    %v5019 = vld [vmem:[%s4859 + $0x4f8] sm:$0xff]
    %v5020 = vld [vmem:[%s4859 + $0x500] sm:$0xff]
    %v5021 = vld [vmem:[%s4859 + $0x508] sm:$0xff]
    %v5022 = vld [vmem:[%s4859 + $0x510] sm:$0xff]
    %v5023 = vld [vmem:[%s4859 + $0x518] sm:$0xff]
    %v5024 = vld [vmem:[%s4859 + $0x520] sm:$0xff]
    %v5025 = vld [vmem:[%s4859 + $0x528] sm:$0xff]
    %v5026 = vld [vmem:[%s4859 + $0x530] sm:$0xff]
    %v5027 = vld [vmem:[%s4859 + $0x538] sm:$0xff]
    %v5028 = vld [vmem:[%s4859 + $0x540] sm:$0xff]
    %v5029 = vld [vmem:[%s4859 + $0x548] sm:$0xff]
    %v5030 = vld [vmem:[%s4859 + $0x550] sm:$0xff]
    %v5031 = vld [vmem:[%s4859 + $0x558] sm:$0xff]
    %v5032 = vld [vmem:[%s4859 + $0x560] sm:$0xff]
    %v5033 = vld [vmem:[%s4859 + $0x568] sm:$0xff]
    %v5034 = vld [vmem:[%s4859 + $0x570] sm:$0xff]
    %v5035 = vld [vmem:[%s4859 + $0x578] sm:$0xff]
    %v5036 = vld [vmem:[%s4859 + $0x580] sm:$0xff]
    %v5037 = vld [vmem:[%s4859 + $0x588] sm:$0xff]
    %v5038 = vld [vmem:[%s4859 + $0x590] sm:$0xff]
    %v5039 = vld [vmem:[%s4859 + $0x598] sm:$0xff]
    %v5040 = vld [vmem:[%s4859 + $0x5a0] sm:$0xff]
    %v5041 = vld [vmem:[%s4859 + $0x5a8] sm:$0xff]
    %v5042 = vld [vmem:[%s4859 + $0x5b0] sm:$0xff]
    %v5043 = vld [vmem:[%s4859 + $0x5b8] sm:$0xff]
    %v5044 = vld [vmem:[%s4859 + $0x5c0] sm:$0xff]
    %v5045 = vld [vmem:[%s4859 + $0x5c8] sm:$0xff]
    %v5046 = vld [vmem:[%s4859 + $0x5d0] sm:$0xff]
    %v5047 = vld [vmem:[%s4859 + $0x5d8] sm:$0xff]
    %v5048 = vld [vmem:[%s4859 + $0x5e0] sm:$0xff]
    %v5049 = vld [vmem:[%s4859 + $0x5e8] sm:$0xff]
    %v5050 = vld [vmem:[%s4859 + $0x5f0] sm:$0xff]
    %v5051 = vld [vmem:[%s4859 + $0x5f8] sm:$0xff]
    %v5054 = vlaneseq
    %v5055 = vshrl.u32 %v5054, 7
    %v5056 = vsub.s32 0, %v5055
    %v5057 = vrot.slane %v2924, %v5056
    %v5058 = vlaneseq
    %v5059 = vshrl.u32 %v5058, 7
    %v5060 = vsub.s32 2, %v5059
    %v5061 = vrot.slane %v2924, %v5060
    %v5062 = vlaneseq
    %v5063 = vshrl.u32 %v5062, 7
    %v5064 = vsub.s32 4, %v5063
    %v5065 = vrot.slane %v2924, %v5064
    %v5066 = vlaneseq
    %v5067 = vshrl.u32 %v5066, 7
    %v5068 = vsub.s32 0, %v5067
    %v5069 = vrot.slane %v2936, %v5068
    %v5070 = vlaneseq
    %v5071 = vshrl.u32 %v5070, 7
    %v5072 = vsub.s32 2, %v5071
    %v5073 = vrot.slane %v2936, %v5072
    %v5074 = vlaneseq
    %v5075 = vshrl.u32 %v5074, 7
    %v5076 = vsub.s32 4, %v5075
    %v5077 = vrot.slane %v2936, %v5076
    %v5078 = vsel %vm3531, %v3378, %v3366
    %v5079 = vsel %vm3533, %v3390, %v5078
    %v5080 = vsel %vm3535, %v3402, %v5079
    %v5081 = vsel %vm3537, %v3414, %v5080
    %v5082 = vsel %vm3539, %v3426, %v5081
    %v5083 = vsel %vm3541, %v4474, %v5082
    %v5084 = vsel %vm3543, %v5057, %v5083
    %v5085 = vsel %vm3531, %v3382, %v3370
    %v5086 = vsel %vm3533, %v3394, %v5085
    %v5087 = vsel %vm3535, %v3406, %v5086
    %v5088 = vsel %vm3537, %v3418, %v5087
    %v5089 = vsel %vm3539, %v3430, %v5088
    %v5090 = vsel %vm3541, %v4478, %v5089
    %v5091 = vsel %vm3543, %v5061, %v5090
    %v5092 = vsel %vm3531, %v3386, %v3374
    %v5093 = vsel %vm3533, %v3398, %v5092
    %v5094 = vsel %vm3535, %v3410, %v5093
    %v5095 = vsel %vm3537, %v3422, %v5094
    %v5096 = vsel %vm3539, %v3434, %v5095
    %v5097 = vsel %vm3541, %v4482, %v5096
    %v5098 = vsel %vm3543, %v5065, %v5097
    %v5099 = vsel %vm3531, %v3474, %v3462
    %v5100 = vsel %vm3533, %v3486, %v5099
    %v5101 = vsel %vm3535, %v3498, %v5100
    %v5102 = vsel %vm3537, %v3510, %v5101
    %v5103 = vsel %vm3539, %v3522, %v5102
    %v5104 = vsel %vm3541, %v4486, %v5103
    %v5105 = vsel %vm3543, %v5069, %v5104
    %v5106 = vsel %vm3531, %v3478, %v3466
    %v5107 = vsel %vm3533, %v3490, %v5106
    %v5108 = vsel %vm3535, %v3502, %v5107
    %v5109 = vsel %vm3537, %v3514, %v5108
    %v5110 = vsel %vm3539, %v3526, %v5109
    %v5111 = vsel %vm3541, %v4490, %v5110
    %v5112 = vsel %vm3543, %v5073, %v5111
    %v5113 = vsel %vm3531, %v3482, %v3470
    %v5114 = vsel %vm3533, %v3494, %v5113
    %v5115 = vsel %vm3535, %v3506, %v5114
    %v5116 = vsel %vm3537, %v3518, %v5115
    %v5117 = vsel %vm3539, %v3530, %v5116
    %v5118 = vsel %vm3541, %v4494, %v5117
    %v5119 = vsel %vm3543, %v5077, %v5118
    %5126 = vmatprep.subr.mxu0 %v4861
    %5127 = vmatpush1.msra.mxu0 %v4860
    %5128 = vmatprep.subr.mxu0 %v4865
    %5129 = vmatpush1.msra.mxu0 %v4864
    %5130 = vmatprep.subr.mxu0 %v4869
    %5131 = vmatpush1.msra.mxu0 %v4868
    %5132 = vmatprep.subr.mxu0 %v4873
    %5133 = vmatpush1.msra.mxu0 %v4872
    %5134 = vmatprep.subr.mxu0 %v4877
    %5135 = vmatpush1.msra.mxu0 %v4876
    %5136 = vmatprep.subr.mxu0 %v4881
    %5137 = vmatpush1.msra.mxu0 %v4880
    %5138 = vmatprep.subr.mxu0 %v4885
    %5139 = vmatpush1.msra.mxu0 %v4884
    %5140 = vmatprep.subr.mxu0 %v4889
    %5141 = vmatpush1.msra.mxu0 %v4888
    %5142 = vmatprep.subr.mxu0 %v4893
    %5143 = vmatpush1.msra.mxu0 %v4892
    %5144 = vmatprep.subr.mxu0 %v4897
    %5145 = vmatpush1.msra.mxu0 %v4896
    %5146 = vmatprep.subr.mxu0 %v4901
    %5147 = vmatpush1.msra.mxu0 %v4900
    %5148 = vmatprep.subr.mxu0 %v4905
    %5149 = vmatpush1.msra.mxu0 %v4904
    %5150 = vmatprep.subr.mxu0 %v4909
    %5151 = vmatpush1.msra.mxu0 %v4908
    %5152 = vmatprep.subr.mxu0 %v4913
    %5153 = vmatpush1.msra.mxu0 %v4912
    %5154 = vmatprep.subr.mxu0 %v4917
    %5155 = vmatpush1.msra.mxu0 %v4916
    %5156 = vmatprep.subr.mxu0 %v4921
    %5157 = vmatpush1.msra.mxu0 %v4920
    %5158 = vmatprep.subr.mxu0 %v4925
    %5159 = vmatpush1.msra.mxu0 %v4924
    %5160 = vmatprep.subr.mxu0 %v4929
    %5161 = vmatpush1.msra.mxu0 %v4928
    %5162 = vmatprep.subr.mxu0 %v4933
    %5163 = vmatpush1.msra.mxu0 %v4932
    %5164 = vmatprep.subr.mxu0 %v4937
    %5165 = vmatpush1.msra.mxu0 %v4936
    %5166 = vmatprep.subr.mxu0 %v4941
    %5167 = vmatpush1.msra.mxu0 %v4940
    %5168 = vmatprep.subr.mxu0 %v4945
    %5169 = vmatpush1.msra.mxu0 %v4944
    %5170 = vmatprep.subr.mxu0 %v4949
    %5171 = vmatpush1.msra.mxu0 %v4948
    %5172 = vmatprep.subr.mxu0 %v4953
    %5173 = vmatpush1.msra.mxu0 %v4952
    %5174 = vmatprep.subr.mxu0 %v4957
    %5175 = vmatpush1.msra.mxu0 %v4956
    %5176 = vmatprep.subr.mxu0 %v4961
    %5177 = vmatpush1.msra.mxu0 %v4960
    %5178 = vmatprep.subr.mxu0 %v4965
    %5179 = vmatpush1.msra.mxu0 %v4964
    %5180 = vmatprep.subr.mxu0 %v4969
    %5181 = vmatpush1.msra.mxu0 %v4968
    %5182 = vmatprep.subr.mxu0 %v4973
    %5183 = vmatpush1.msra.mxu0 %v4972
    %5184 = vmatprep.subr.mxu0 %v4977
    %5185 = vmatpush1.msra.mxu0 %v4976
    %5186 = vmatprep.subr.mxu0 %v4981
    %5187 = vmatpush1.msra.mxu0 %v4980
    %5188 = vmatprep.subr.mxu0 %v4985
    %5189 = vmatpush1.msra.mxu0 %v4984
    %5190 = vmatprep.mubr.f32.mxu0 %v5091
    %5191 = vmatmul.mubr.f32.gmra.mrb[0].mxu0 %v5084
    %v5192 = vpop.f32.mrb[0].mxu0
    %v5193 = vadd.f32 0.0, %v5192
    %v5194 = vpop.f32.mrb[0].mxu0
    %v5195 = vadd.f32 0.0, %v5194
    %5196 = vmatprep.mubr.f32.mxu0 %v5112
    %5197 = vmatmul.mubr.f32.gmra.mrb[0].mxu0 %v5105
    %v5198 = vpop.f32.mrb[0].mxu0
    %v5199 = vadd.f32 0.0, %v5198
    %v5200 = vpop.f32.mrb[0].mxu0
    %v5201 = vadd.f32 0.0, %v5200
    %5202 = vdwg.mxu0
    %5203 = vmatprep.subr.mxu0 %v4989
    %5204 = vmatpush1.msra.mxu0 %v4988
    %5205 = vmatprep.subr.mxu0 %v4993
    %5206 = vmatpush1.msra.mxu0 %v4992
    %5207 = vmatprep.subr.mxu0 %v4997
    %5208 = vmatpush1.msra.mxu0 %v4996
    %5209 = vmatprep.subr.mxu0 %v5001
    %5210 = vmatpush1.msra.mxu0 %v5000
    %5211 = vmatprep.subr.mxu0 %v5005
    %5212 = vmatpush1.msra.mxu0 %v5004
    %5213 = vmatprep.subr.mxu0 %v5009
    %5214 = vmatpush1.msra.mxu0 %v5008
    %5215 = vmatprep.subr.mxu0 %v5013
    %5216 = vmatpush1.msra.mxu0 %v5012
    %5217 = vmatprep.subr.mxu0 %v5017
    %5218 = vmatpush1.msra.mxu0 %v5016
    %5219 = vmatprep.subr.mxu0 %v5021
    %5220 = vmatpush1.msra.mxu0 %v5020
    %5221 = vmatprep.subr.mxu0 %v5025
    %5222 = vmatpush1.msra.mxu0 %v5024
    %5223 = vmatprep.subr.mxu0 %v5029
    %5224 = vmatpush1.msra.mxu0 %v5028
    %5225 = vmatprep.subr.mxu0 %v5033
    %5226 = vmatpush1.msra.mxu0 %v5032
    %5227 = vmatprep.subr.mxu0 %v5037
    %5228 = vmatpush1.msra.mxu0 %v5036
    %5229 = vmatprep.subr.mxu0 %v5041
    %5230 = vmatpush1.msra.mxu0 %v5040
    %5231 = vmatprep.subr.mxu0 %v5045
    %5232 = vmatpush1.msra.mxu0 %v5044
    %5233 = vmatprep.subr.mxu0 %v5049
    %5234 = vmatpush1.msra.mxu0 %v5048
    %5235 = vmatprep.subr.mxu0 0.0
    %5236 = vmatpush1.msra.mxu0 0.0
    %5237 = vmatprep.subr.mxu0 0.0
    %5238 = vmatpush1.msra.mxu0 0.0
    %5239 = vmatprep.subr.mxu0 0.0
    %5240 = vmatpush1.msra.mxu0 0.0
    %5241 = vmatprep.subr.mxu0 0.0
    %5242 = vmatpush1.msra.mxu0 0.0
    %5243 = vmatprep.subr.mxu0 0.0
    %5244 = vmatpush1.msra.mxu0 0.0
    %5245 = vmatprep.subr.mxu0 0.0
    %5246 = vmatpush1.msra.mxu0 0.0
    %5247 = vmatprep.subr.mxu0 0.0
    %5248 = vmatpush1.msra.mxu0 0.0
    %5249 = vmatprep.subr.mxu0 0.0
    %5250 = vmatpush1.msra.mxu0 0.0
    %5251 = vmatprep.subr.mxu0 0.0
    %5252 = vmatpush1.msra.mxu0 0.0
    %5253 = vmatprep.subr.mxu0 0.0
    %5254 = vmatpush1.msra.mxu0 0.0
    %5255 = vmatprep.subr.mxu0 0.0
    %5256 = vmatpush1.msra.mxu0 0.0
    %5257 = vmatprep.subr.mxu0 0.0
    %5258 = vmatpush1.msra.mxu0 0.0
    %5259 = vmatprep.subr.mxu0 0.0
    %5260 = vmatpush1.msra.mxu0 0.0
    %5261 = vmatprep.subr.mxu0 0.0
    %5262 = vmatpush1.msra.mxu0 0.0
    %5263 = vmatprep.subr.mxu0 0.0
    %5264 = vmatpush1.msra.mxu0 0.0
    %5265 = vmatprep.subr.mxu0 0.0
    %5266 = vmatpush1.msra.mxu0 0.0
    %5267 = vmatprep.mubr.f32.mxu0 0.0
    %5268 = vmatmul.mubr.f32.gmra.mrb[0].mxu0 %v5098
    %v5269 = vpop.f32.mrb[0].mxu0
    %v5270 = vadd.f32 %v5193, %v5269
    %v5271 = vpop.f32.mrb[0].mxu0
    %v5272 = vadd.f32 %v5195, %v5271
    %5273 = vmatprep.mubr.f32.mxu0 0.0
    %5274 = vmatmul.mubr.f32.gmra.mrb[0].mxu0 %v5119
    %v5275 = vpop.f32.mrb[0].mxu0
    %v5276 = vadd.f32 %v5199, %v5275
    %v5277 = vpop.f32.mrb[0].mxu0
    %v5278 = vadd.f32 %v5201, %v5277
    %5279 = vdwg.mxu0
    %5280 = vmatprep.subr.mxu0 %v4863
    %5281 = vmatpush1.msra.mxu0 %v4862
    %5282 = vmatprep.subr.mxu0 %v4867
    %5283 = vmatpush1.msra.mxu0 %v4866
    %5284 = vmatprep.subr.mxu0 %v4871
    %5285 = vmatpush1.msra.mxu0 %v4870
    %5286 = vmatprep.subr.mxu0 %v4875
    %5287 = vmatpush1.msra.mxu0 %v4874
    %5288 = vmatprep.subr.mxu0 %v4879
    %5289 = vmatpush1.msra.mxu0 %v4878
    %5290 = vmatprep.subr.mxu0 %v4883
    %5291 = vmatpush1.msra.mxu0 %v4882
    %5292 = vmatprep.subr.mxu0 %v4887
    %5293 = vmatpush1.msra.mxu0 %v4886
    %5294 = vmatprep.subr.mxu0 %v4891
    %5295 = vmatpush1.msra.mxu0 %v4890
    %5296 = vmatprep.subr.mxu0 %v4895
    %5297 = vmatpush1.msra.mxu0 %v4894
    %5298 = vmatprep.subr.mxu0 %v4899
    %5299 = vmatpush1.msra.mxu0 %v4898
    %5300 = vmatprep.subr.mxu0 %v4903
    %5301 = vmatpush1.msra.mxu0 %v4902
    %5302 = vmatprep.subr.mxu0 %v4907
    %5303 = vmatpush1.msra.mxu0 %v4906
    %5304 = vmatprep.subr.mxu0 %v4911
    %5305 = vmatpush1.msra.mxu0 %v4910
    %5306 = vmatprep.subr.mxu0 %v4915
    %5307 = vmatpush1.msra.mxu0 %v4914
    %5308 = vmatprep.subr.mxu0 %v4919
    %5309 = vmatpush1.msra.mxu0 %v4918
    %5310 = vmatprep.subr.mxu0 %v4923
    %5311 = vmatpush1.msra.mxu0 %v4922
    %5312 = vmatprep.subr.mxu0 %v4927
    %5313 = vmatpush1.msra.mxu0 %v4926
    %5314 = vmatprep.subr.mxu0 %v4931
    %5315 = vmatpush1.msra.mxu0 %v4930
    %5316 = vmatprep.subr.mxu0 %v4935
    %5317 = vmatpush1.msra.mxu0 %v4934
    %5318 = vmatprep.subr.mxu0 %v4939
    %5319 = vmatpush1.msra.mxu0 %v4938
    %5320 = vmatprep.subr.mxu0 %v4943
    %5321 = vmatpush1.msra.mxu0 %v4942
    %5322 = vmatprep.subr.mxu0 %v4947
    %5323 = vmatpush1.msra.mxu0 %v4946
    %5324 = vmatprep.subr.mxu0 %v4951
    %5325 = vmatpush1.msra.mxu0 %v4950
    %5326 = vmatprep.subr.mxu0 %v4955
    %5327 = vmatpush1.msra.mxu0 %v4954
    %5328 = vmatprep.subr.mxu0 %v4959
    %5329 = vmatpush1.msra.mxu0 %v4958
    %5330 = vmatprep.subr.mxu0 %v4963
    %5331 = vmatpush1.msra.mxu0 %v4962
    %5332 = vmatprep.subr.mxu0 %v4967
    %5333 = vmatpush1.msra.mxu0 %v4966
    %5334 = vmatprep.subr.mxu0 %v4971
    %5335 = vmatpush1.msra.mxu0 %v4970
    %5336 = vmatprep.subr.mxu0 %v4975
    %5337 = vmatpush1.msra.mxu0 %v4974
    %5338 = vmatprep.subr.mxu0 %v4979
    %5339 = vmatpush1.msra.mxu0 %v4978
    %5340 = vmatprep.subr.mxu0 %v4983
    %5341 = vmatpush1.msra.mxu0 %v4982
    %5342 = vmatprep.subr.mxu0 %v4987
    %5343 = vmatpush1.msra.mxu0 %v4986
    %5344 = vmatprep.mubr.f32.mxu0 %v5091
    %5345 = vmatmul.mubr.f32.gmra.mrb[0].mxu0 %v5084
    %v5346 = vpop.f32.mrb[0].mxu0
    %v5347 = vadd.f32 0.0, %v5346
    %v5348 = vpop.f32.mrb[0].mxu0
    %v5349 = vadd.f32 0.0, %v5348
    %5350 = vmatprep.mubr.f32.mxu0 %v5112
    %5351 = vmatmul.mubr.f32.gmra.mrb[0].mxu0 %v5105
    %v5352 = vpop.f32.mrb[0].mxu0
    %v5353 = vadd.f32 0.0, %v5352
    %v5354 = vpop.f32.mrb[0].mxu0
    %v5355 = vadd.f32 0.0, %v5354
    %5356 = vdwg.mxu0
    %5357 = vmatprep.subr.mxu0 %v4991
    %5358 = vmatpush1.msra.mxu0 %v4990
    %5359 = vmatprep.subr.mxu0 %v4995
    %5360 = vmatpush1.msra.mxu0 %v4994
    %5361 = vmatprep.subr.mxu0 %v4999
    %5362 = vmatpush1.msra.mxu0 %v4998
    %5363 = vmatprep.subr.mxu0 %v5003
    %5364 = vmatpush1.msra.mxu0 %v5002
    %5365 = vmatprep.subr.mxu0 %v5007
    %5366 = vmatpush1.msra.mxu0 %v5006
    %5367 = vmatprep.subr.mxu0 %v5011
    %5368 = vmatpush1.msra.mxu0 %v5010
    %5369 = vmatprep.subr.mxu0 %v5015
    %5370 = vmatpush1.msra.mxu0 %v5014
    %5371 = vmatprep.subr.mxu0 %v5019
    %5372 = vmatpush1.msra.mxu0 %v5018
    %5373 = vmatprep.subr.mxu0 %v5023
    %5374 = vmatpush1.msra.mxu0 %v5022
    %5375 = vmatprep.subr.mxu0 %v5027
    %5376 = vmatpush1.msra.mxu0 %v5026
    %5377 = vmatprep.subr.mxu0 %v5031
    %5378 = vmatpush1.msra.mxu0 %v5030
    %5379 = vmatprep.subr.mxu0 %v5035
    %5380 = vmatpush1.msra.mxu0 %v5034
    %5381 = vmatprep.subr.mxu0 %v5039
    %5382 = vmatpush1.msra.mxu0 %v5038
    %5383 = vmatprep.subr.mxu0 %v5043
    %5384 = vmatpush1.msra.mxu0 %v5042
    %5385 = vmatprep.subr.mxu0 %v5047
    %5386 = vmatpush1.msra.mxu0 %v5046
    %5387 = vmatprep.subr.mxu0 %v5051
    %5388 = vmatpush1.msra.mxu0 %v5050
    %5389 = vmatprep.subr.mxu0 0.0
    %5390 = vmatpush1.msra.mxu0 0.0
    %5391 = vmatprep.subr.mxu0 0.0
    %5392 = vmatpush1.msra.mxu0 0.0
    %5393 = vmatprep.subr.mxu0 0.0
    %5394 = vmatpush1.msra.mxu0 0.0
    %5395 = vmatprep.subr.mxu0 0.0
    %5396 = vmatpush1.msra.mxu0 0.0
    %5397 = vmatprep.subr.mxu0 0.0
    %5398 = vmatpush1.msra.mxu0 0.0
    %5399 = vmatprep.subr.mxu0 0.0
    %5400 = vmatpush1.msra.mxu0 0.0
    %5401 = vmatprep.subr.mxu0 0.0
    %5402 = vmatpush1.msra.mxu0 0.0
    %5403 = vmatprep.subr.mxu0 0.0
    %5404 = vmatpush1.msra.mxu0 0.0
    %5405 = vmatprep.subr.mxu0 0.0
    %5406 = vmatpush1.msra.mxu0 0.0
    %5407 = vmatprep.subr.mxu0 0.0
    %5408 = vmatpush1.msra.mxu0 0.0
    %5409 = vmatprep.subr.mxu0 0.0
    %5410 = vmatpush1.msra.mxu0 0.0
    %5411 = vmatprep.subr.mxu0 0.0
    %5412 = vmatpush1.msra.mxu0 0.0
    %5413 = vmatprep.subr.mxu0 0.0
    %5414 = vmatpush1.msra.mxu0 0.0
    %5415 = vmatprep.subr.mxu0 0.0
    %5416 = vmatpush1.msra.mxu0 0.0
    %5417 = vmatprep.subr.mxu0 0.0
    %5418 = vmatpush1.msra.mxu0 0.0
    %5419 = vmatprep.subr.mxu0 0.0
    %5420 = vmatpush1.msra.mxu0 0.0
    %5421 = vmatprep.mubr.f32.mxu0 0.0
    %5422 = vmatmul.mubr.f32.gmra.mrb[0].mxu0 %v5098
    %v5423 = vpop.f32.mrb[0].mxu0
    %v5424 = vadd.f32 %v5347, %v5423
    %v5425 = vpop.f32.mrb[0].mxu0
    %v5426 = vadd.f32 %v5349, %v5425
    %5427 = vmatprep.mubr.f32.mxu0 0.0
    %5428 = vmatmul.mubr.f32.gmra.mrb[0].mxu0 %v5119
    %v5429 = vpop.f32.mrb[0].mxu0
    %v5430 = vadd.f32 %v5353, %v5429
    %v5431 = vpop.f32.mrb[0].mxu0
    %v5432 = vadd.f32 %v5355, %v5431
    %5433 = vdwg.mxu0
    %v5434 = vadd.f32 %v4851, %v5270
    %v5435 = vadd.f32 %v4852, %v5272
    %v5436 = vadd.f32 %v4853, %v5424
    %v5437 = vadd.f32 %v4854, %v5426
    %v5438 = vadd.f32 %v4855, %v5276
    %v5439 = vadd.f32 %v4856, %v5278
    %v5440 = vadd.f32 %v4857, %v5430
    %v5441 = vadd.f32 %v4858, %v5432
    %s5442 = scalar_lea.vmem [#allocation7], 6144
    %v5443 = vld [vmem:[%s5442] sm:$0xff]
    %v5444 = vld [vmem:[%s5442 + $0x8] sm:$0xff]
    %v5445 = vld [vmem:[%s5442 + $0x10] sm:$0xff]
    %v5446 = vld [vmem:[%s5442 + $0x18] sm:$0xff]
    %v5447 = vld [vmem:[%s5442 + $0x20] sm:$0xff]
    %v5448 = vld [vmem:[%s5442 + $0x28] sm:$0xff]
    %v5449 = vld [vmem:[%s5442 + $0x30] sm:$0xff]
    %v5450 = vld [vmem:[%s5442 + $0x38] sm:$0xff]
    %v5451 = vld [vmem:[%s5442 + $0x40] sm:$0xff]
    %v5452 = vld [vmem:[%s5442 + $0x48] sm:$0xff]
    %v5453 = vld [vmem:[%s5442 + $0x50] sm:$0xff]
    %v5454 = vld [vmem:[%s5442 + $0x58] sm:$0xff]
    %v5455 = vld [vmem:[%s5442 + $0x60] sm:$0xff]
    %v5456 = vld [vmem:[%s5442 + $0x68] sm:$0xff]
    %v5457 = vld [vmem:[%s5442 + $0x70] sm:$0xff]
    %v5458 = vld [vmem:[%s5442 + $0x78] sm:$0xff]
    %v5459 = vld [vmem:[%s5442 + $0x80] sm:$0xff]
    %v5460 = vld [vmem:[%s5442 + $0x88] sm:$0xff]
    %v5461 = vld [vmem:[%s5442 + $0x90] sm:$0xff]
    %v5462 = vld [vmem:[%s5442 + $0x98] sm:$0xff]
    %v5463 = vld [vmem:[%s5442 + $0xa0] sm:$0xff]
    %v5464 = vld [vmem:[%s5442 + $0xa8] sm:$0xff]
    %v5465 = vld [vmem:[%s5442 + $0xb0] sm:$0xff]
    %v5466 = vld [vmem:[%s5442 + $0xb8] sm:$0xff]
    %v5467 = vld [vmem:[%s5442 + $0xc0] sm:$0xff]
    %v5468 = vld [vmem:[%s5442 + $0xc8] sm:$0xff]
    %v5469 = vld [vmem:[%s5442 + $0xd0] sm:$0xff]
    %v5470 = vld [vmem:[%s5442 + $0xd8] sm:$0xff]
    %v5471 = vld [vmem:[%s5442 + $0xe0] sm:$0xff]
    %v5472 = vld [vmem:[%s5442 + $0xe8] sm:$0xff]
    %v5473 = vld [vmem:[%s5442 + $0xf0] sm:$0xff]
    %v5474 = vld [vmem:[%s5442 + $0xf8] sm:$0xff]
    %v5475 = vld [vmem:[%s5442 + $0x100] sm:$0xff]
    %v5476 = vld [vmem:[%s5442 + $0x108] sm:$0xff]
    %v5477 = vld [vmem:[%s5442 + $0x110] sm:$0xff]
    %v5478 = vld [vmem:[%s5442 + $0x118] sm:$0xff]
    %v5479 = vld [vmem:[%s5442 + $0x120] sm:$0xff]
    %v5480 = vld [vmem:[%s5442 + $0x128] sm:$0xff]
    %v5481 = vld [vmem:[%s5442 + $0x130] sm:$0xff]
    %v5482 = vld [vmem:[%s5442 + $0x138] sm:$0xff]
    %v5483 = vld [vmem:[%s5442 + $0x140] sm:$0xff]
    %v5484 = vld [vmem:[%s5442 + $0x148] sm:$0xff]
    %v5485 = vld [vmem:[%s5442 + $0x150] sm:$0xff]
    %v5486 = vld [vmem:[%s5442 + $0x158] sm:$0xff]
    %v5487 = vld [vmem:[%s5442 + $0x160] sm:$0xff]
    %v5488 = vld [vmem:[%s5442 + $0x168] sm:$0xff]
    %v5489 = vld [vmem:[%s5442 + $0x170] sm:$0xff]
    %v5490 = vld [vmem:[%s5442 + $0x178] sm:$0xff]
    %v5491 = vld [vmem:[%s5442 + $0x180] sm:$0xff]
    %v5492 = vld [vmem:[%s5442 + $0x188] sm:$0xff]
    %v5493 = vld [vmem:[%s5442 + $0x190] sm:$0xff]
    %v5494 = vld [vmem:[%s5442 + $0x198] sm:$0xff]
    %v5495 = vld [vmem:[%s5442 + $0x1a0] sm:$0xff]
    %v5496 = vld [vmem:[%s5442 + $0x1a8] sm:$0xff]
    %v5497 = vld [vmem:[%s5442 + $0x1b0] sm:$0xff]
    %v5498 = vld [vmem:[%s5442 + $0x1b8] sm:$0xff]
    %v5499 = vld [vmem:[%s5442 + $0x1c0] sm:$0xff]
    %v5500 = vld [vmem:[%s5442 + $0x1c8] sm:$0xff]
    %v5501 = vld [vmem:[%s5442 + $0x1d0] sm:$0xff]
    %v5502 = vld [vmem:[%s5442 + $0x1d8] sm:$0xff]
    %v5503 = vld [vmem:[%s5442 + $0x1e0] sm:$0xff]
    %v5504 = vld [vmem:[%s5442 + $0x1e8] sm:$0xff]
    %v5505 = vld [vmem:[%s5442 + $0x1f0] sm:$0xff]
    %v5506 = vld [vmem:[%s5442 + $0x1f8] sm:$0xff]
    %v5507 = vld [vmem:[%s5442 + $0x200] sm:$0xff]
    %v5508 = vld [vmem:[%s5442 + $0x208] sm:$0xff]
    %v5509 = vld [vmem:[%s5442 + $0x210] sm:$0xff]
    %v5510 = vld [vmem:[%s5442 + $0x218] sm:$0xff]
    %v5511 = vld [vmem:[%s5442 + $0x220] sm:$0xff]
    %v5512 = vld [vmem:[%s5442 + $0x228] sm:$0xff]
    %v5513 = vld [vmem:[%s5442 + $0x230] sm:$0xff]
    %v5514 = vld [vmem:[%s5442 + $0x238] sm:$0xff]
    %v5515 = vld [vmem:[%s5442 + $0x240] sm:$0xff]
    %v5516 = vld [vmem:[%s5442 + $0x248] sm:$0xff]
    %v5517 = vld [vmem:[%s5442 + $0x250] sm:$0xff]
    %v5518 = vld [vmem:[%s5442 + $0x258] sm:$0xff]
    %v5519 = vld [vmem:[%s5442 + $0x260] sm:$0xff]
    %v5520 = vld [vmem:[%s5442 + $0x268] sm:$0xff]
    %v5521 = vld [vmem:[%s5442 + $0x270] sm:$0xff]
    %v5522 = vld [vmem:[%s5442 + $0x278] sm:$0xff]
    %v5523 = vld [vmem:[%s5442 + $0x280] sm:$0xff]
    %v5524 = vld [vmem:[%s5442 + $0x288] sm:$0xff]
    %v5525 = vld [vmem:[%s5442 + $0x290] sm:$0xff]
    %v5526 = vld [vmem:[%s5442 + $0x298] sm:$0xff]
    %v5527 = vld [vmem:[%s5442 + $0x2a0] sm:$0xff]
    %v5528 = vld [vmem:[%s5442 + $0x2a8] sm:$0xff]
    %v5529 = vld [vmem:[%s5442 + $0x2b0] sm:$0xff]
    %v5530 = vld [vmem:[%s5442 + $0x2b8] sm:$0xff]
    %v5531 = vld [vmem:[%s5442 + $0x2c0] sm:$0xff]
    %v5532 = vld [vmem:[%s5442 + $0x2c8] sm:$0xff]
    %v5533 = vld [vmem:[%s5442 + $0x2d0] sm:$0xff]
    %v5534 = vld [vmem:[%s5442 + $0x2d8] sm:$0xff]
    %v5535 = vld [vmem:[%s5442 + $0x2e0] sm:$0xff]
    %v5536 = vld [vmem:[%s5442 + $0x2e8] sm:$0xff]
    %v5537 = vld [vmem:[%s5442 + $0x2f0] sm:$0xff]
    %v5538 = vld [vmem:[%s5442 + $0x2f8] sm:$0xff]
    %v5539 = vld [vmem:[%s5442 + $0x300] sm:$0xff]
    %v5540 = vld [vmem:[%s5442 + $0x308] sm:$0xff]
    %v5541 = vld [vmem:[%s5442 + $0x310] sm:$0xff]
    %v5542 = vld [vmem:[%s5442 + $0x318] sm:$0xff]
    %v5543 = vld [vmem:[%s5442 + $0x320] sm:$0xff]
    %v5544 = vld [vmem:[%s5442 + $0x328] sm:$0xff]
    %v5545 = vld [vmem:[%s5442 + $0x330] sm:$0xff]
    %v5546 = vld [vmem:[%s5442 + $0x338] sm:$0xff]
    %v5547 = vld [vmem:[%s5442 + $0x340] sm:$0xff]
    %v5548 = vld [vmem:[%s5442 + $0x348] sm:$0xff]
    %v5549 = vld [vmem:[%s5442 + $0x350] sm:$0xff]
    %v5550 = vld [vmem:[%s5442 + $0x358] sm:$0xff]
    %v5551 = vld [vmem:[%s5442 + $0x360] sm:$0xff]
    %v5552 = vld [vmem:[%s5442 + $0x368] sm:$0xff]
    %v5553 = vld [vmem:[%s5442 + $0x370] sm:$0xff]
    %v5554 = vld [vmem:[%s5442 + $0x378] sm:$0xff]
    %v5555 = vld [vmem:[%s5442 + $0x380] sm:$0xff]
    %v5556 = vld [vmem:[%s5442 + $0x388] sm:$0xff]
    %v5557 = vld [vmem:[%s5442 + $0x390] sm:$0xff]
    %v5558 = vld [vmem:[%s5442 + $0x398] sm:$0xff]
    %v5559 = vld [vmem:[%s5442 + $0x3a0] sm:$0xff]
    %v5560 = vld [vmem:[%s5442 + $0x3a8] sm:$0xff]
    %v5561 = vld [vmem:[%s5442 + $0x3b0] sm:$0xff]
    %v5562 = vld [vmem:[%s5442 + $0x3b8] sm:$0xff]
    %v5563 = vld [vmem:[%s5442 + $0x3c0] sm:$0xff]
    %v5564 = vld [vmem:[%s5442 + $0x3c8] sm:$0xff]
    %v5565 = vld [vmem:[%s5442 + $0x3d0] sm:$0xff]
    %v5566 = vld [vmem:[%s5442 + $0x3d8] sm:$0xff]
    %v5567 = vld [vmem:[%s5442 + $0x3e0] sm:$0xff]
    %v5568 = vld [vmem:[%s5442 + $0x3e8] sm:$0xff]
    %v5569 = vld [vmem:[%s5442 + $0x3f0] sm:$0xff]
    %v5570 = vld [vmem:[%s5442 + $0x3f8] sm:$0xff]
    %v5571 = vld [vmem:[%s5442 + $0x400] sm:$0xff]
    %v5572 = vld [vmem:[%s5442 + $0x408] sm:$0xff]
    %v5573 = vld [vmem:[%s5442 + $0x410] sm:$0xff]
    %v5574 = vld [vmem:[%s5442 + $0x418] sm:$0xff]
    %v5575 = vld [vmem:[%s5442 + $0x420] sm:$0xff]
    %v5576 = vld [vmem:[%s5442 + $0x428] sm:$0xff]
    %v5577 = vld [vmem:[%s5442 + $0x430] sm:$0xff]
    %v5578 = vld [vmem:[%s5442 + $0x438] sm:$0xff]
    %v5579 = vld [vmem:[%s5442 + $0x440] sm:$0xff]
    %v5580 = vld [vmem:[%s5442 + $0x448] sm:$0xff]
    %v5581 = vld [vmem:[%s5442 + $0x450] sm:$0xff]
    %v5582 = vld [vmem:[%s5442 + $0x458] sm:$0xff]
    %v5583 = vld [vmem:[%s5442 + $0x460] sm:$0xff]
    %v5584 = vld [vmem:[%s5442 + $0x468] sm:$0xff]
    %v5585 = vld [vmem:[%s5442 + $0x470] sm:$0xff]
    %v5586 = vld [vmem:[%s5442 + $0x478] sm:$0xff]
    %v5587 = vld [vmem:[%s5442 + $0x480] sm:$0xff]
    %v5588 = vld [vmem:[%s5442 + $0x488] sm:$0xff]
    %v5589 = vld [vmem:[%s5442 + $0x490] sm:$0xff]
    %v5590 = vld [vmem:[%s5442 + $0x498] sm:$0xff]
    %v5591 = vld [vmem:[%s5442 + $0x4a0] sm:$0xff]
    %v5592 = vld [vmem:[%s5442 + $0x4a8] sm:$0xff]
    %v5593 = vld [vmem:[%s5442 + $0x4b0] sm:$0xff]
    %v5594 = vld [vmem:[%s5442 + $0x4b8] sm:$0xff]
    %v5595 = vld [vmem:[%s5442 + $0x4c0] sm:$0xff]
    %v5596 = vld [vmem:[%s5442 + $0x4c8] sm:$0xff]
    %v5597 = vld [vmem:[%s5442 + $0x4d0] sm:$0xff]
    %v5598 = vld [vmem:[%s5442 + $0x4d8] sm:$0xff]
    %v5599 = vld [vmem:[%s5442 + $0x4e0] sm:$0xff]
    %v5600 = vld [vmem:[%s5442 + $0x4e8] sm:$0xff]
    %v5601 = vld [vmem:[%s5442 + $0x4f0] sm:$0xff]
    %v5602 = vld [vmem:[%s5442 + $0x4f8] sm:$0xff]
    %v5603 = vld [vmem:[%s5442 + $0x500] sm:$0xff]
    %v5604 = vld [vmem:[%s5442 + $0x508] sm:$0xff]
    %v5605 = vld [vmem:[%s5442 + $0x510] sm:$0xff]
    %v5606 = vld [vmem:[%s5442 + $0x518] sm:$0xff]
    %v5607 = vld [vmem:[%s5442 + $0x520] sm:$0xff]
    %v5608 = vld [vmem:[%s5442 + $0x528] sm:$0xff]
    %v5609 = vld [vmem:[%s5442 + $0x530] sm:$0xff]
    %v5610 = vld [vmem:[%s5442 + $0x538] sm:$0xff]
    %v5611 = vld [vmem:[%s5442 + $0x540] sm:$0xff]
    %v5612 = vld [vmem:[%s5442 + $0x548] sm:$0xff]
    %v5613 = vld [vmem:[%s5442 + $0x550] sm:$0xff]
    %v5614 = vld [vmem:[%s5442 + $0x558] sm:$0xff]
    %v5615 = vld [vmem:[%s5442 + $0x560] sm:$0xff]
    %v5616 = vld [vmem:[%s5442 + $0x568] sm:$0xff]
    %v5617 = vld [vmem:[%s5442 + $0x570] sm:$0xff]
    %v5618 = vld [vmem:[%s5442 + $0x578] sm:$0xff]
    %v5619 = vld [vmem:[%s5442 + $0x580] sm:$0xff]
    %v5620 = vld [vmem:[%s5442 + $0x588] sm:$0xff]
    %v5621 = vld [vmem:[%s5442 + $0x590] sm:$0xff]
    %v5622 = vld [vmem:[%s5442 + $0x598] sm:$0xff]
    %v5623 = vld [vmem:[%s5442 + $0x5a0] sm:$0xff]
    %v5624 = vld [vmem:[%s5442 + $0x5a8] sm:$0xff]
    %v5625 = vld [vmem:[%s5442 + $0x5b0] sm:$0xff]
    %v5626 = vld [vmem:[%s5442 + $0x5b8] sm:$0xff]
    %v5627 = vld [vmem:[%s5442 + $0x5c0] sm:$0xff]
    %v5628 = vld [vmem:[%s5442 + $0x5c8] sm:$0xff]
    %v5629 = vld [vmem:[%s5442 + $0x5d0] sm:$0xff]
    %v5630 = vld [vmem:[%s5442 + $0x5d8] sm:$0xff]
    %v5631 = vld [vmem:[%s5442 + $0x5e0] sm:$0xff]
    %v5632 = vld [vmem:[%s5442 + $0x5e8] sm:$0xff]
    %v5633 = vld [vmem:[%s5442 + $0x5f0] sm:$0xff]
    %v5634 = vld [vmem:[%s5442 + $0x5f8] sm:$0xff]
    %v5637 = vlaneseq
    %v5638 = vshrl.u32 %v5637, 7
    %v5639 = vsub.s32 0, %v5638
    %v5640 = vrot.slane %v2925, %v5639
    %v5641 = vlaneseq
    %v5642 = vshrl.u32 %v5641, 7
    %v5643 = vsub.s32 2, %v5642
    %v5644 = vrot.slane %v2925, %v5643
    %v5645 = vlaneseq
    %v5646 = vshrl.u32 %v5645, 7
    %v5647 = vsub.s32 4, %v5646
    %v5648 = vrot.slane %v2925, %v5647
    %v5649 = vlaneseq
    %v5650 = vshrl.u32 %v5649, 7
    %v5651 = vsub.s32 0, %v5650
    %v5652 = vrot.slane %v2937, %v5651
    %v5653 = vlaneseq
    %v5654 = vshrl.u32 %v5653, 7
    %v5655 = vsub.s32 2, %v5654
    %v5656 = vrot.slane %v2937, %v5655
    %v5657 = vlaneseq
    %v5658 = vshrl.u32 %v5657, 7
    %v5659 = vsub.s32 4, %v5658
    %v5660 = vrot.slane %v2937, %v5659
    %v5661 = vsel %vm3531, %v3390, %v3378
    %v5662 = vsel %vm3533, %v3402, %v5661
    %v5663 = vsel %vm3535, %v3414, %v5662
    %v5664 = vsel %vm3537, %v3426, %v5663
    %v5665 = vsel %vm3539, %v4474, %v5664
    %v5666 = vsel %vm3541, %v5057, %v5665
    %v5667 = vsel %vm3543, %v5640, %v5666
    %v5668 = vsel %vm3531, %v3394, %v3382
    %v5669 = vsel %vm3533, %v3406, %v5668
    %v5670 = vsel %vm3535, %v3418, %v5669
    %v5671 = vsel %vm3537, %v3430, %v5670
    %v5672 = vsel %vm3539, %v4478, %v5671
    %v5673 = vsel %vm3541, %v5061, %v5672
    %v5674 = vsel %vm3543, %v5644, %v5673
    %v5675 = vsel %vm3531, %v3398, %v3386
    %v5676 = vsel %vm3533, %v3410, %v5675
    %v5677 = vsel %vm3535, %v3422, %v5676
    %v5678 = vsel %vm3537, %v3434, %v5677
    %v5679 = vsel %vm3539, %v4482, %v5678
    %v5680 = vsel %vm3541, %v5065, %v5679
    %v5681 = vsel %vm3543, %v5648, %v5680
    %v5682 = vsel %vm3531, %v3486, %v3474
    %v5683 = vsel %vm3533, %v3498, %v5682
    %v5684 = vsel %vm3535, %v3510, %v5683
    %v5685 = vsel %vm3537, %v3522, %v5684
    %v5686 = vsel %vm3539, %v4486, %v5685
    %v5687 = vsel %vm3541, %v5069, %v5686
    %v5688 = vsel %vm3543, %v5652, %v5687
    %v5689 = vsel %vm3531, %v3490, %v3478
    %v5690 = vsel %vm3533, %v3502, %v5689
    %v5691 = vsel %vm3535, %v3514, %v5690
    %v5692 = vsel %vm3537, %v3526, %v5691
    %v5693 = vsel %vm3539, %v4490, %v5692
    %v5694 = vsel %vm3541, %v5073, %v5693
    %v5695 = vsel %vm3543, %v5656, %v5694
    %v5696 = vsel %vm3531, %v3494, %v3482
    %v5697 = vsel %vm3533, %v3506, %v5696
    %v5698 = vsel %vm3535, %v3518, %v5697
    %v5699 = vsel %vm3537, %v3530, %v5698
    %v5700 = vsel %vm3539, %v4494, %v5699
    %v5701 = vsel %vm3541, %v5077, %v5700
    %v5702 = vsel %vm3543, %v5660, %v5701
    %5709 = vmatprep.subr.mxu0 %v5444
    %5710 = vmatpush1.msra.mxu0 %v5443
    %5711 = vmatprep.subr.mxu0 %v5448
    %5712 = vmatpush1.msra.mxu0 %v5447
    %5713 = vmatprep.subr.mxu0 %v5452
    %5714 = vmatpush1.msra.mxu0 %v5451
    %5715 = vmatprep.subr.mxu0 %v5456
    %5716 = vmatpush1.msra.mxu0 %v5455
    %5717 = vmatprep.subr.mxu0 %v5460
    %5718 = vmatpush1.msra.mxu0 %v5459
    %5719 = vmatprep.subr.mxu0 %v5464
    %5720 = vmatpush1.msra.mxu0 %v5463
    %5721 = vmatprep.subr.mxu0 %v5468
    %5722 = vmatpush1.msra.mxu0 %v5467
    %5723 = vmatprep.subr.mxu0 %v5472
    %5724 = vmatpush1.msra.mxu0 %v5471
    %5725 = vmatprep.subr.mxu0 %v5476
    %5726 = vmatpush1.msra.mxu0 %v5475
    %5727 = vmatprep.subr.mxu0 %v5480
    %5728 = vmatpush1.msra.mxu0 %v5479
    %5729 = vmatprep.subr.mxu0 %v5484
    %5730 = vmatpush1.msra.mxu0 %v5483
    %5731 = vmatprep.subr.mxu0 %v5488
    %5732 = vmatpush1.msra.mxu0 %v5487
    %5733 = vmatprep.subr.mxu0 %v5492
    %5734 = vmatpush1.msra.mxu0 %v5491
    %5735 = vmatprep.subr.mxu0 %v5496
    %5736 = vmatpush1.msra.mxu0 %v5495
    %5737 = vmatprep.subr.mxu0 %v5500
    %5738 = vmatpush1.msra.mxu0 %v5499
    %5739 = vmatprep.subr.mxu0 %v5504
    %5740 = vmatpush1.msra.mxu0 %v5503
    %5741 = vmatprep.subr.mxu0 %v5508
    %5742 = vmatpush1.msra.mxu0 %v5507
    %5743 = vmatprep.subr.mxu0 %v5512
    %5744 = vmatpush1.msra.mxu0 %v5511
    %5745 = vmatprep.subr.mxu0 %v5516
    %5746 = vmatpush1.msra.mxu0 %v5515
    %5747 = vmatprep.subr.mxu0 %v5520
    %5748 = vmatpush1.msra.mxu0 %v5519
    %5749 = vmatprep.subr.mxu0 %v5524
    %5750 = vmatpush1.msra.mxu0 %v5523
    %5751 = vmatprep.subr.mxu0 %v5528
    %5752 = vmatpush1.msra.mxu0 %v5527
    %5753 = vmatprep.subr.mxu0 %v5532
    %5754 = vmatpush1.msra.mxu0 %v5531
    %5755 = vmatprep.subr.mxu0 %v5536
    %5756 = vmatpush1.msra.mxu0 %v5535
    %5757 = vmatprep.subr.mxu0 %v5540
    %5758 = vmatpush1.msra.mxu0 %v5539
    %5759 = vmatprep.subr.mxu0 %v5544
    %5760 = vmatpush1.msra.mxu0 %v5543
    %5761 = vmatprep.subr.mxu0 %v5548
    %5762 = vmatpush1.msra.mxu0 %v5547
    %5763 = vmatprep.subr.mxu0 %v5552
    %5764 = vmatpush1.msra.mxu0 %v5551
    %5765 = vmatprep.subr.mxu0 %v5556
    %5766 = vmatpush1.msra.mxu0 %v5555
    %5767 = vmatprep.subr.mxu0 %v5560
    %5768 = vmatpush1.msra.mxu0 %v5559
    %5769 = vmatprep.subr.mxu0 %v5564
    %5770 = vmatpush1.msra.mxu0 %v5563
    %5771 = vmatprep.subr.mxu0 %v5568
    %5772 = vmatpush1.msra.mxu0 %v5567
    %5773 = vmatprep.mubr.f32.mxu0 %v5674
    %5774 = vmatmul.mubr.f32.gmra.mrb[0].mxu0 %v5667
    %v5775 = vpop.f32.mrb[0].mxu0
    %v5776 = vadd.f32 0.0, %v5775
    %v5777 = vpop.f32.mrb[0].mxu0
    %v5778 = vadd.f32 0.0, %v5777
    %5779 = vmatprep.mubr.f32.mxu0 %v5695
    %5780 = vmatmul.mubr.f32.gmra.mrb[0].mxu0 %v5688
    %v5781 = vpop.f32.mrb[0].mxu0
    %v5782 = vadd.f32 0.0, %v5781
    %v5783 = vpop.f32.mrb[0].mxu0
    %v5784 = vadd.f32 0.0, %v5783
    %5785 = vdwg.mxu0
    %5786 = vmatprep.subr.mxu0 %v5572
    %5787 = vmatpush1.msra.mxu0 %v5571
    %5788 = vmatprep.subr.mxu0 %v5576
    %5789 = vmatpush1.msra.mxu0 %v5575
    %5790 = vmatprep.subr.mxu0 %v5580
    %5791 = vmatpush1.msra.mxu0 %v5579
    %5792 = vmatprep.subr.mxu0 %v5584
    %5793 = vmatpush1.msra.mxu0 %v5583
    %5794 = vmatprep.subr.mxu0 %v5588
    %5795 = vmatpush1.msra.mxu0 %v5587
    %5796 = vmatprep.subr.mxu0 %v5592
    %5797 = vmatpush1.msra.mxu0 %v5591
    %5798 = vmatprep.subr.mxu0 %v5596
    %5799 = vmatpush1.msra.mxu0 %v5595
    %5800 = vmatprep.subr.mxu0 %v5600
    %5801 = vmatpush1.msra.mxu0 %v5599
    %5802 = vmatprep.subr.mxu0 %v5604
    %5803 = vmatpush1.msra.mxu0 %v5603
    %5804 = vmatprep.subr.mxu0 %v5608
    %5805 = vmatpush1.msra.mxu0 %v5607
    %5806 = vmatprep.subr.mxu0 %v5612
    %5807 = vmatpush1.msra.mxu0 %v5611
    %5808 = vmatprep.subr.mxu0 %v5616
    %5809 = vmatpush1.msra.mxu0 %v5615
    %5810 = vmatprep.subr.mxu0 %v5620
    %5811 = vmatpush1.msra.mxu0 %v5619
    %5812 = vmatprep.subr.mxu0 %v5624
    %5813 = vmatpush1.msra.mxu0 %v5623
    %5814 = vmatprep.subr.mxu0 %v5628
    %5815 = vmatpush1.msra.mxu0 %v5627
    %5816 = vmatprep.subr.mxu0 %v5632
    %5817 = vmatpush1.msra.mxu0 %v5631
    %5818 = vmatprep.subr.mxu0 0.0
    %5819 = vmatpush1.msra.mxu0 0.0
    %5820 = vmatprep.subr.mxu0 0.0
    %5821 = vmatpush1.msra.mxu0 0.0
    %5822 = vmatprep.subr.mxu0 0.0
    %5823 = vmatpush1.msra.mxu0 0.0
    %5824 = vmatprep.subr.mxu0 0.0
    %5825 = vmatpush1.msra.mxu0 0.0
    %5826 = vmatprep.subr.mxu0 0.0
    %5827 = vmatpush1.msra.mxu0 0.0
    %5828 = vmatprep.subr.mxu0 0.0
    %5829 = vmatpush1.msra.mxu0 0.0
    %5830 = vmatprep.subr.mxu0 0.0
    %5831 = vmatpush1.msra.mxu0 0.0
    %5832 = vmatprep.subr.mxu0 0.0
    %5833 = vmatpush1.msra.mxu0 0.0
    %5834 = vmatprep.subr.mxu0 0.0
    %5835 = vmatpush1.msra.mxu0 0.0
    %5836 = vmatprep.subr.mxu0 0.0
    %5837 = vmatpush1.msra.mxu0 0.0
    %5838 = vmatprep.subr.mxu0 0.0
    %5839 = vmatpush1.msra.mxu0 0.0
    %5840 = vmatprep.subr.mxu0 0.0
    %5841 = vmatpush1.msra.mxu0 0.0
    %5842 = vmatprep.subr.mxu0 0.0
    %5843 = vmatpush1.msra.mxu0 0.0
    %5844 = vmatprep.subr.mxu0 0.0
    %5845 = vmatpush1.msra.mxu0 0.0
    %5846 = vmatprep.subr.mxu0 0.0
    %5847 = vmatpush1.msra.mxu0 0.0
    %5848 = vmatprep.subr.mxu0 0.0
    %5849 = vmatpush1.msra.mxu0 0.0
    %5850 = vmatprep.mubr.f32.mxu0 0.0
    %5851 = vmatmul.mubr.f32.gmra.mrb[0].mxu0 %v5681
    %v5852 = vpop.f32.mrb[0].mxu0
    %v5853 = vadd.f32 %v5776, %v5852
    %v5854 = vpop.f32.mrb[0].mxu0
    %v5855 = vadd.f32 %v5778, %v5854
    %5856 = vmatprep.mubr.f32.mxu0 0.0
    %5857 = vmatmul.mubr.f32.gmra.mrb[0].mxu0 %v5702
    %v5858 = vpop.f32.mrb[0].mxu0
    %v5859 = vadd.f32 %v5782, %v5858
    %v5860 = vpop.f32.mrb[0].mxu0
    %v5861 = vadd.f32 %v5784, %v5860
    %5862 = vdwg.mxu0
    %5863 = vmatprep.subr.mxu0 %v5446
    %5864 = vmatpush1.msra.mxu0 %v5445
    %5865 = vmatprep.subr.mxu0 %v5450
    %5866 = vmatpush1.msra.mxu0 %v5449
    %5867 = vmatprep.subr.mxu0 %v5454
    %5868 = vmatpush1.msra.mxu0 %v5453
    %5869 = vmatprep.subr.mxu0 %v5458
    %5870 = vmatpush1.msra.mxu0 %v5457
    %5871 = vmatprep.subr.mxu0 %v5462
    %5872 = vmatpush1.msra.mxu0 %v5461
    %5873 = vmatprep.subr.mxu0 %v5466
    %5874 = vmatpush1.msra.mxu0 %v5465
    %5875 = vmatprep.subr.mxu0 %v5470
    %5876 = vmatpush1.msra.mxu0 %v5469
    %5877 = vmatprep.subr.mxu0 %v5474
    %5878 = vmatpush1.msra.mxu0 %v5473
    %5879 = vmatprep.subr.mxu0 %v5478
    %5880 = vmatpush1.msra.mxu0 %v5477
    %5881 = vmatprep.subr.mxu0 %v5482
    %5882 = vmatpush1.msra.mxu0 %v5481
    %5883 = vmatprep.subr.mxu0 %v5486
    %5884 = vmatpush1.msra.mxu0 %v5485
    %5885 = vmatprep.subr.mxu0 %v5490
    %5886 = vmatpush1.msra.mxu0 %v5489
    %5887 = vmatprep.subr.mxu0 %v5494
    %5888 = vmatpush1.msra.mxu0 %v5493
    %5889 = vmatprep.subr.mxu0 %v5498
    %5890 = vmatpush1.msra.mxu0 %v5497
    %5891 = vmatprep.subr.mxu0 %v5502
    %5892 = vmatpush1.msra.mxu0 %v5501
    %5893 = vmatprep.subr.mxu0 %v5506
    %5894 = vmatpush1.msra.mxu0 %v5505
    %5895 = vmatprep.subr.mxu0 %v5510
    %5896 = vmatpush1.msra.mxu0 %v5509
    %5897 = vmatprep.subr.mxu0 %v5514
    %5898 = vmatpush1.msra.mxu0 %v5513
    %5899 = vmatprep.subr.mxu0 %v5518
    %5900 = vmatpush1.msra.mxu0 %v5517
    %5901 = vmatprep.subr.mxu0 %v5522
    %5902 = vmatpush1.msra.mxu0 %v5521
    %5903 = vmatprep.subr.mxu0 %v5526
    %5904 = vmatpush1.msra.mxu0 %v5525
    %5905 = vmatprep.subr.mxu0 %v5530
    %5906 = vmatpush1.msra.mxu0 %v5529
    %5907 = vmatprep.subr.mxu0 %v5534
    %5908 = vmatpush1.msra.mxu0 %v5533
    %5909 = vmatprep.subr.mxu0 %v5538
    %5910 = vmatpush1.msra.mxu0 %v5537
    %5911 = vmatprep.subr.mxu0 %v5542
    %5912 = vmatpush1.msra.mxu0 %v5541
    %5913 = vmatprep.subr.mxu0 %v5546
    %5914 = vmatpush1.msra.mxu0 %v5545
    %5915 = vmatprep.subr.mxu0 %v5550
    %5916 = vmatpush1.msra.mxu0 %v5549
    %5917 = vmatprep.subr.mxu0 %v5554
    %5918 = vmatpush1.msra.mxu0 %v5553
    %5919 = vmatprep.subr.mxu0 %v5558
    %5920 = vmatpush1.msra.mxu0 %v5557
    %5921 = vmatprep.subr.mxu0 %v5562
    %5922 = vmatpush1.msra.mxu0 %v5561
    %5923 = vmatprep.subr.mxu0 %v5566
    %5924 = vmatpush1.msra.mxu0 %v5565
    %5925 = vmatprep.subr.mxu0 %v5570
    %5926 = vmatpush1.msra.mxu0 %v5569
    %5927 = vmatprep.mubr.f32.mxu0 %v5674
    %5928 = vmatmul.mubr.f32.gmra.mrb[0].mxu0 %v5667
    %v5929 = vpop.f32.mrb[0].mxu0
    %v5930 = vadd.f32 0.0, %v5929
    %v5931 = vpop.f32.mrb[0].mxu0
    %v5932 = vadd.f32 0.0, %v5931
    %5933 = vmatprep.mubr.f32.mxu0 %v5695
    %5934 = vmatmul.mubr.f32.gmra.mrb[0].mxu0 %v5688
    %v5935 = vpop.f32.mrb[0].mxu0
    %v5936 = vadd.f32 0.0, %v5935
    %v5937 = vpop.f32.mrb[0].mxu0
    %v5938 = vadd.f32 0.0, %v5937
    %5939 = vdwg.mxu0
    %5940 = vmatprep.subr.mxu0 %v5574
    %5941 = vmatpush1.msra.mxu0 %v5573
    %5942 = vmatprep.subr.mxu0 %v5578
    %5943 = vmatpush1.msra.mxu0 %v5577
    %5944 = vmatprep.subr.mxu0 %v5582
    %5945 = vmatpush1.msra.mxu0 %v5581
    %5946 = vmatprep.subr.mxu0 %v5586
    %5947 = vmatpush1.msra.mxu0 %v5585
    %5948 = vmatprep.subr.mxu0 %v5590
    %5949 = vmatpush1.msra.mxu0 %v5589
    %5950 = vmatprep.subr.mxu0 %v5594
    %5951 = vmatpush1.msra.mxu0 %v5593
    %5952 = vmatprep.subr.mxu0 %v5598
    %5953 = vmatpush1.msra.mxu0 %v5597
    %5954 = vmatprep.subr.mxu0 %v5602
    %5955 = vmatpush1.msra.mxu0 %v5601
    %5956 = vmatprep.subr.mxu0 %v5606
    %5957 = vmatpush1.msra.mxu0 %v5605
    %5958 = vmatprep.subr.mxu0 %v5610
    %5959 = vmatpush1.msra.mxu0 %v5609
    %5960 = vmatprep.subr.mxu0 %v5614
    %5961 = vmatpush1.msra.mxu0 %v5613
    %5962 = vmatprep.subr.mxu0 %v5618
    %5963 = vmatpush1.msra.mxu0 %v5617
    %5964 = vmatprep.subr.mxu0 %v5622
    %5965 = vmatpush1.msra.mxu0 %v5621
    %5966 = vmatprep.subr.mxu0 %v5626
    %5967 = vmatpush1.msra.mxu0 %v5625
    %5968 = vmatprep.subr.mxu0 %v5630
    %5969 = vmatpush1.msra.mxu0 %v5629
    %5970 = vmatprep.subr.mxu0 %v5634
    %5971 = vmatpush1.msra.mxu0 %v5633
    %5972 = vmatprep.subr.mxu0 0.0
    %5973 = vmatpush1.msra.mxu0 0.0
    %5974 = vmatprep.subr.mxu0 0.0
    %5975 = vmatpush1.msra.mxu0 0.0
    %5976 = vmatprep.subr.mxu0 0.0
    %5977 = vmatpush1.msra.mxu0 0.0
    %5978 = vmatprep.subr.mxu0 0.0
    %5979 = vmatpush1.msra.mxu0 0.0
    %5980 = vmatprep.subr.mxu0 0.0
    %5981 = vmatpush1.msra.mxu0 0.0
    %5982 = vmatprep.subr.mxu0 0.0
    %5983 = vmatpush1.msra.mxu0 0.0
    %5984 = vmatprep.subr.mxu0 0.0
    %5985 = vmatpush1.msra.mxu0 0.0
    %5986 = vmatprep.subr.mxu0 0.0
    %5987 = vmatpush1.msra.mxu0 0.0
    %5988 = vmatprep.subr.mxu0 0.0
    %5989 = vmatpush1.msra.mxu0 0.0
    %5990 = vmatprep.subr.mxu0 0.0
    %5991 = vmatpush1.msra.mxu0 0.0
    %5992 = vmatprep.subr.mxu0 0.0
    %5993 = vmatpush1.msra.mxu0 0.0
    %5994 = vmatprep.subr.mxu0 0.0
    %5995 = vmatpush1.msra.mxu0 0.0
    %5996 = vmatprep.subr.mxu0 0.0
    %5997 = vmatpush1.msra.mxu0 0.0
    %5998 = vmatprep.subr.mxu0 0.0
    %5999 = vmatpush1.msra.mxu0 0.0
    %6000 = vmatprep.subr.mxu0 0.0
    %6001 = vmatpush1.msra.mxu0 0.0
    %6002 = vmatprep.subr.mxu0 0.0
    %6003 = vmatpush1.msra.mxu0 0.0
    %6004 = vmatprep.mubr.f32.mxu0 0.0
    %6005 = vmatmul.mubr.f32.gmra.mrb[0].mxu0 %v5681
    %v6006 = vpop.f32.mrb[0].mxu0
    %v6007 = vadd.f32 %v5930, %v6006
    %v6008 = vpop.f32.mrb[0].mxu0
    %v6009 = vadd.f32 %v5932, %v6008
    %6010 = vmatprep.mubr.f32.mxu0 0.0
    %6011 = vmatmul.mubr.f32.gmra.mrb[0].mxu0 %v5702
    %v6012 = vpop.f32.mrb[0].mxu0
    %v6013 = vadd.f32 %v5936, %v6012
    %v6014 = vpop.f32.mrb[0].mxu0
    %v6015 = vadd.f32 %v5938, %v6014
    %6016 = vdwg.mxu0
    %v6017 = vadd.f32 %v5434, %v5853
    %v6018 = vadd.f32 %v5435, %v5855
    %v6019 = vadd.f32 %v5436, %v6007
    %v6020 = vadd.f32 %v5437, %v6009
    %v6021 = vadd.f32 %v5438, %v5859
    %v6022 = vadd.f32 %v5439, %v5861
    %v6023 = vadd.f32 %v5440, %v6013
    %v6024 = vadd.f32 %v5441, %v6015
    %v6025 = vld [vmem:[#allocation8] sm:$0xf]
    %v6027 = vlaneseq
    %v6028 = vshrl.u32 %v6027, 7
    %v6029 = vsub.s32 0, %v6028
    %v6030 = vrot.slane %v6025, %v6029
    %v6031 = vlaneseq
    %v6032 = vshrl.u32 %v6031, 7
    %v6033 = vsub.s32 1, %v6032
    %v6034 = vrot.slane %v6025, %v6033
    %v6035 = vlaneseq
    %v6036 = vshrl.u32 %v6035, 7
    %v6037 = vsub.s32 2, %v6036
    %v6038 = vrot.slane %v6025, %v6037
    %v6039 = vlaneseq
    %v6040 = vshrl.u32 %v6039, 7
    %v6041 = vsub.s32 3, %v6040
    %v6042 = vrot.slane %v6025, %v6041
    %v6047 = vadd.f32 %v6017, %v6030
    %v6048 = vadd.f32 %v6018, %v6034
    %v6049 = vadd.f32 %v6019, %v6038
    %v6050 = vadd.f32 %v6020, %v6042
    %v6051 = vadd.f32 %v6021, %v6030
    %v6052 = vadd.f32 %v6022, %v6034
    %v6053 = vadd.f32 %v6023, %v6038
    %v6054 = vadd.f32 %v6024, %v6042
    %v6063 = vcombine.low %v6047, %v6048
    %v6064 = vcombine.high %v6047, %v6048
    %v6065 = vcombine.low %v6049, %v6050
    %v6066 = vcombine.high %v6049, %v6050
    %v6068 = vunpack.c.l.s4 1983009808
    %v6069 = vunpack.c.0.s8 %v6068
    %v6070 = vlaneseq
    %v6071 = vshrl.u32 %v6070, 7
    %v6072 = vsub.s32 %v6069, %v6071
    %v6073 = vrot.slane %v6063, %v6072
    %v6075 = vunpack.c.l.s4 1983009808
    %v6076 = vunpack.c.0.s8 %v6075
    %v6077 = vlaneseq
    %v6078 = vshrl.u32 %v6077, 7
    %v6079 = vsub.s32 %v6076, %v6078
    %v6080 = vrot.slane %v6064, %v6079
    %v6082 = vunpack.c.l.s4 1983009808
    %v6083 = vunpack.c.0.s8 %v6082
    %v6084 = vlaneseq
    %v6085 = vshrl.u32 %v6084, 7
    %v6086 = vsub.s32 %v6083, %v6085
    %v6087 = vrot.slane %v6065, %v6086
    %v6089 = vunpack.c.l.s4 1983009808
    %v6090 = vunpack.c.0.s8 %v6089
    %v6091 = vlaneseq
    %v6092 = vshrl.u32 %v6091, 7
    %v6093 = vsub.s32 %v6090, %v6092
    %v6094 = vrot.slane %v6066, %v6093
    %v6095 = vcombine.low %v6073, %v6087
    %v6096 = vcombine.high %v6073, %v6087
    %v6097 = vcombine.low %v6080, %v6094
    %v6098 = vcombine.high %v6080, %v6094
    %v6099 = vcombine.low %v6051, %v6052
    %v6100 = vcombine.high %v6051, %v6052
    %v6101 = vcombine.low %v6053, %v6054
    %v6102 = vcombine.high %v6053, %v6054
    %v6104 = vunpack.c.l.s4 1983009808
    %v6105 = vunpack.c.0.s8 %v6104
    %v6106 = vlaneseq
    %v6107 = vshrl.u32 %v6106, 7
    %v6108 = vsub.s32 %v6105, %v6107
    %v6109 = vrot.slane %v6099, %v6108
    %v6111 = vunpack.c.l.s4 1983009808
    %v6112 = vunpack.c.0.s8 %v6111
    %v6113 = vlaneseq
    %v6114 = vshrl.u32 %v6113, 7
    %v6115 = vsub.s32 %v6112, %v6114
    %v6116 = vrot.slane %v6100, %v6115
    %v6118 = vunpack.c.l.s4 1983009808
    %v6119 = vunpack.c.0.s8 %v6118
    %v6120 = vlaneseq
    %v6121 = vshrl.u32 %v6120, 7
    %v6122 = vsub.s32 %v6119, %v6121
    %v6123 = vrot.slane %v6101, %v6122
    %v6125 = vunpack.c.l.s4 1983009808
    %v6126 = vunpack.c.0.s8 %v6125
    %v6127 = vlaneseq
    %v6128 = vshrl.u32 %v6127, 7
    %v6129 = vsub.s32 %v6126, %v6128
    %v6130 = vrot.slane %v6102, %v6129
    %v6131 = vcombine.low %v6109, %v6123
    %v6132 = vcombine.high %v6109, %v6123
    %v6133 = vcombine.low %v6116, %v6130
    %v6134 = vcombine.high %v6116, %v6130
    %v6143 = vrot.slane %v6095, 7
    %v6144 = vrot.slane %v6143, 2
    %v6145 = vrot.slane %v6096, 7
    %v6146 = vrot.slane %v6145, 2
    %v6147 = vrot.slane %v6097, 7
    %v6148 = vrot.slane %v6147, 2
    %v6149 = vrot.slane %v6098, 7
    %v6150 = vrot.slane %v6149, 2
    %v6151 = vrot.slane %v6131, 7
    %v6152 = vrot.slane %v6151, 2
    %v6153 = vrot.slane %v6132, 7
    %v6154 = vrot.slane %v6153, 2
    %v6155 = vrot.slane %v6133, 7
    %v6156 = vrot.slane %v6155, 2
    %v6157 = vrot.slane %v6134, 7
    %v6158 = vrot.slane %v6157, 2
    %v6167 = vmax.f32 %v6095, %v6144
    %v6168 = vmax.f32 %v6096, %v6146
    %v6169 = vmax.f32 %v6097, %v6148
    %v6170 = vmax.f32 %v6098, %v6150
    %v6171 = vmax.f32 %v6131, %v6152
    %v6172 = vmax.f32 %v6132, %v6154
    %v6173 = vmax.f32 %v6133, %v6156
    %v6174 = vmax.f32 %v6134, %v6158
    %v6183 = vrot.slane %v6167, 4
    %v6184 = vrot.slane %v6168, 4
    %v6185 = vrot.slane %v6169, 4
    %v6186 = vrot.slane %v6170, 4
    %v6187 = vrot.slane %v6171, 4
    %v6188 = vrot.slane %v6172, 4
    %v6189 = vrot.slane %v6173, 4
    %v6190 = vrot.slane %v6174, 4
    %v6199 = vmax.f32 %v6167, %v6183
    %v6200 = vmax.f32 %v6168, %v6184
    %v6201 = vmax.f32 %v6169, %v6185
    %v6202 = vmax.f32 %v6170, %v6186
    %v6203 = vmax.f32 %v6171, %v6187
    %v6204 = vmax.f32 %v6172, %v6188
    %v6205 = vmax.f32 %v6173, %v6189
    %v6206 = vmax.f32 %v6174, %v6190
    %v6207 = vmax.f32 %v6199, 0.0
    %v6208 = vmax.f32 %v6200, 0.0
    %v6209 = vmax.f32 %v6201, 0.0
    %v6210 = vmax.f32 %v6202, 0.0
    %v6211 = vmax.f32 %v6203, 0.0
    %v6212 = vmax.f32 %v6204, 0.0
    %v6213 = vmax.f32 %v6205, 0.0
    %v6214 = vmax.f32 %v6206, 0.0
    %v6217 = vlaneseq
    %v6218 = vshrl.u32 %v6217, 7
    %v6219 = vsub.s32 0, %v6218
    %v6220 = vrot.slane %v6207, %v6219
    %v6221 = vlaneseq
    %v6222 = vshrl.u32 %v6221, 7
    %v6223 = vsub.s32 2, %v6222
    %v6224 = vrot.slane %v6207, %v6223
    %v6225 = vlaneseq
    %v6226 = vshrl.u32 %v6225, 7
    %v6227 = vsub.s32 0, %v6226
    %v6228 = vrot.slane %v6211, %v6227
    %v6229 = vlaneseq
    %v6230 = vshrl.u32 %v6229, 7
    %v6231 = vsub.s32 2, %v6230
    %v6232 = vrot.slane %v6211, %v6231
    %v6233 = vsel %vm3531, %v6228, %v6220
    %v6234 = vsel %vm3531, %v6232, %v6224
    %v6239 = vlaneseq
    %v6240 = vshrl.u32 %v6239, 7
    %v6241 = vsub.s32 0, %v6240
    %v6242 = vrot.slane %v6208, %v6241
    %v6243 = vlaneseq
    %v6244 = vshrl.u32 %v6243, 7
    %v6245 = vsub.s32 2, %v6244
    %v6246 = vrot.slane %v6208, %v6245
    %v6247 = vlaneseq
    %v6248 = vshrl.u32 %v6247, 7
    %v6249 = vsub.s32 0, %v6248
    %v6250 = vrot.slane %v6212, %v6249
    %v6251 = vlaneseq
    %v6252 = vshrl.u32 %v6251, 7
    %v6253 = vsub.s32 2, %v6252
    %v6254 = vrot.slane %v6212, %v6253
    %v6255 = vsel %vm3531, %v6250, %v6242
    %v6256 = vsel %vm3531, %v6254, %v6246
    %v6261 = vlaneseq
    %v6262 = vshrl.u32 %v6261, 7
    %v6263 = vsub.s32 0, %v6262
    %v6264 = vrot.slane %v6209, %v6263
    %v6265 = vlaneseq
    %v6266 = vshrl.u32 %v6265, 7
    %v6267 = vsub.s32 2, %v6266
    %v6268 = vrot.slane %v6209, %v6267
    %v6269 = vlaneseq
    %v6270 = vshrl.u32 %v6269, 7
    %v6271 = vsub.s32 0, %v6270
    %v6272 = vrot.slane %v6213, %v6271
    %v6273 = vlaneseq
    %v6274 = vshrl.u32 %v6273, 7
    %v6275 = vsub.s32 2, %v6274
    %v6276 = vrot.slane %v6213, %v6275
    %v6277 = vsel %vm3531, %v6272, %v6264
    %v6278 = vsel %vm3531, %v6276, %v6268
    %v6283 = vlaneseq
    %v6284 = vshrl.u32 %v6283, 7
    %v6285 = vsub.s32 0, %v6284
    %v6286 = vrot.slane %v6210, %v6285
    %v6287 = vlaneseq
    %v6288 = vshrl.u32 %v6287, 7
    %v6289 = vsub.s32 2, %v6288
    %v6290 = vrot.slane %v6210, %v6289
    %v6291 = vlaneseq
    %v6292 = vshrl.u32 %v6291, 7
    %v6293 = vsub.s32 0, %v6292
    %v6294 = vrot.slane %v6214, %v6293
    %v6295 = vlaneseq
    %v6296 = vshrl.u32 %v6295, 7
    %v6297 = vsub.s32 2, %v6296
    %v6298 = vrot.slane %v6214, %v6297
    %v6299 = vsel %vm3531, %v6294, %v6286
    %v6300 = vsel %vm3531, %v6298, %v6290
    %v6303 = vld [vmem:[#allocation10] sm:$0xff]
    %v6304 = vld [vmem:[#allocation10 + $0x8] sm:$0xff]
    %v6305 = vld [vmem:[#allocation10 + $0x10] sm:$0xff]
    %v6306 = vld [vmem:[#allocation10 + $0x18] sm:$0xff]
    %v6307 = vld [vmem:[#allocation10 + $0x20] sm:$0xff]
    %v6308 = vld [vmem:[#allocation10 + $0x28] sm:$0xff]
    %v6309 = vld [vmem:[#allocation10 + $0x30] sm:$0xff]
    %v6310 = vld [vmem:[#allocation10 + $0x38] sm:$0xff]
    %v6311 = vld [vmem:[#allocation10 + $0x40] sm:$0xff]
    %v6312 = vld [vmem:[#allocation10 + $0x48] sm:$0xff]
    %v6313 = vld [vmem:[#allocation10 + $0x50] sm:$0xff]
    %v6314 = vld [vmem:[#allocation10 + $0x58] sm:$0xff]
    %v6315 = vld [vmem:[#allocation10 + $0x60] sm:$0xff]
    %v6316 = vld [vmem:[#allocation10 + $0x68] sm:$0xff]
    %v6317 = vld [vmem:[#allocation10 + $0x70] sm:$0xff]
    %v6318 = vld [vmem:[#allocation10 + $0x78] sm:$0xff]
    %v6319 = vld [vmem:[#allocation10 + $0x80] sm:$0xff]
    %v6320 = vld [vmem:[#allocation10 + $0x88] sm:$0xff]
    %v6321 = vld [vmem:[#allocation10 + $0x90] sm:$0xff]
    %v6322 = vld [vmem:[#allocation10 + $0x98] sm:$0xff]
    %v6323 = vld [vmem:[#allocation10 + $0xa0] sm:$0xff]
    %v6324 = vld [vmem:[#allocation10 + $0xa8] sm:$0xff]
    %v6325 = vld [vmem:[#allocation10 + $0xb0] sm:$0xff]
    %v6326 = vld [vmem:[#allocation10 + $0xb8] sm:$0xff]
    %v6327 = vld [vmem:[#allocation10 + $0xc0] sm:$0xff]
    %v6328 = vld [vmem:[#allocation10 + $0xc8] sm:$0xff]
    %v6329 = vld [vmem:[#allocation10 + $0xd0] sm:$0xff]
    %v6330 = vld [vmem:[#allocation10 + $0xd8] sm:$0xff]
    %v6331 = vld [vmem:[#allocation10 + $0xe0] sm:$0xff]
    %v6332 = vld [vmem:[#allocation10 + $0xe8] sm:$0xff]
    %v6333 = vld [vmem:[#allocation10 + $0xf0] sm:$0xff]
    %v6334 = vld [vmem:[#allocation10 + $0xf8] sm:$0xff]
    %v6335 = vld [vmem:[#allocation10 + $0x100] sm:$0xff]
    %v6336 = vld [vmem:[#allocation10 + $0x108] sm:$0xff]
    %v6337 = vld [vmem:[#allocation10 + $0x110] sm:$0xff]
    %v6338 = vld [vmem:[#allocation10 + $0x118] sm:$0xff]
    %v6339 = vld [vmem:[#allocation10 + $0x120] sm:$0xff]
    %v6340 = vld [vmem:[#allocation10 + $0x128] sm:$0xff]
    %v6341 = vld [vmem:[#allocation10 + $0x130] sm:$0xff]
    %v6342 = vld [vmem:[#allocation10 + $0x138] sm:$0xff]
    %v6343 = vld [vmem:[#allocation10 + $0x140] sm:$0xff]
    %v6344 = vld [vmem:[#allocation10 + $0x148] sm:$0xff]
    %v6345 = vld [vmem:[#allocation10 + $0x150] sm:$0xff]
    %v6346 = vld [vmem:[#allocation10 + $0x158] sm:$0xff]
    %v6347 = vld [vmem:[#allocation10 + $0x160] sm:$0xff]
    %v6348 = vld [vmem:[#allocation10 + $0x168] sm:$0xff]
    %v6349 = vld [vmem:[#allocation10 + $0x170] sm:$0xff]
    %v6350 = vld [vmem:[#allocation10 + $0x178] sm:$0xff]
    %v6351 = vld [vmem:[#allocation10 + $0x180] sm:$0xff]
    %v6352 = vld [vmem:[#allocation10 + $0x188] sm:$0xff]
    %v6353 = vld [vmem:[#allocation10 + $0x190] sm:$0xff]
    %v6354 = vld [vmem:[#allocation10 + $0x198] sm:$0xff]
    %v6355 = vld [vmem:[#allocation10 + $0x1a0] sm:$0xff]
    %v6356 = vld [vmem:[#allocation10 + $0x1a8] sm:$0xff]
    %v6357 = vld [vmem:[#allocation10 + $0x1b0] sm:$0xff]
    %v6358 = vld [vmem:[#allocation10 + $0x1b8] sm:$0xff]
    %v6359 = vld [vmem:[#allocation10 + $0x1c0] sm:$0xff]
    %v6360 = vld [vmem:[#allocation10 + $0x1c8] sm:$0xff]
    %v6361 = vld [vmem:[#allocation10 + $0x1d0] sm:$0xff]
    %v6362 = vld [vmem:[#allocation10 + $0x1d8] sm:$0xff]
    %v6363 = vld [vmem:[#allocation10 + $0x1e0] sm:$0xff]
    %v6364 = vld [vmem:[#allocation10 + $0x1e8] sm:$0xff]
    %v6365 = vld [vmem:[#allocation10 + $0x1f0] sm:$0xff]
    %v6366 = vld [vmem:[#allocation10 + $0x1f8] sm:$0xff]
    %v6367 = vld [vmem:[#allocation10 + $0x200] sm:$0xff]
    %v6368 = vld [vmem:[#allocation10 + $0x208] sm:$0xff]
    %v6369 = vld [vmem:[#allocation10 + $0x210] sm:$0xff]
    %v6370 = vld [vmem:[#allocation10 + $0x218] sm:$0xff]
    %v6371 = vld [vmem:[#allocation10 + $0x220] sm:$0xff]
    %v6372 = vld [vmem:[#allocation10 + $0x228] sm:$0xff]
    %v6373 = vld [vmem:[#allocation10 + $0x230] sm:$0xff]
    %v6374 = vld [vmem:[#allocation10 + $0x238] sm:$0xff]
    %v6375 = vld [vmem:[#allocation10 + $0x240] sm:$0xff]
    %v6376 = vld [vmem:[#allocation10 + $0x248] sm:$0xff]
    %v6377 = vld [vmem:[#allocation10 + $0x250] sm:$0xff]
    %v6378 = vld [vmem:[#allocation10 + $0x258] sm:$0xff]
    %v6379 = vld [vmem:[#allocation10 + $0x260] sm:$0xff]
    %v6380 = vld [vmem:[#allocation10 + $0x268] sm:$0xff]
    %v6381 = vld [vmem:[#allocation10 + $0x270] sm:$0xff]
    %v6382 = vld [vmem:[#allocation10 + $0x278] sm:$0xff]
    %v6383 = vld [vmem:[#allocation10 + $0x280] sm:$0xff]
    %v6384 = vld [vmem:[#allocation10 + $0x288] sm:$0xff]
    %v6385 = vld [vmem:[#allocation10 + $0x290] sm:$0xff]
    %v6386 = vld [vmem:[#allocation10 + $0x298] sm:$0xff]
    %v6387 = vld [vmem:[#allocation10 + $0x2a0] sm:$0xff]
    %v6388 = vld [vmem:[#allocation10 + $0x2a8] sm:$0xff]
    %v6389 = vld [vmem:[#allocation10 + $0x2b0] sm:$0xff]
    %v6390 = vld [vmem:[#allocation10 + $0x2b8] sm:$0xff]
    %v6391 = vld [vmem:[#allocation10 + $0x2c0] sm:$0xff]
    %v6392 = vld [vmem:[#allocation10 + $0x2c8] sm:$0xff]
    %v6393 = vld [vmem:[#allocation10 + $0x2d0] sm:$0xff]
    %v6394 = vld [vmem:[#allocation10 + $0x2d8] sm:$0xff]
    %v6395 = vld [vmem:[#allocation10 + $0x2e0] sm:$0xff]
    %v6396 = vld [vmem:[#allocation10 + $0x2e8] sm:$0xff]
    %v6397 = vld [vmem:[#allocation10 + $0x2f0] sm:$0xff]
    %v6398 = vld [vmem:[#allocation10 + $0x2f8] sm:$0xff]
    %v6399 = vld [vmem:[#allocation10 + $0x300] sm:$0xff]
    %v6400 = vld [vmem:[#allocation10 + $0x308] sm:$0xff]
    %v6401 = vld [vmem:[#allocation10 + $0x310] sm:$0xff]
    %v6402 = vld [vmem:[#allocation10 + $0x318] sm:$0xff]
    %v6403 = vld [vmem:[#allocation10 + $0x320] sm:$0xff]
    %v6404 = vld [vmem:[#allocation10 + $0x328] sm:$0xff]
    %v6405 = vld [vmem:[#allocation10 + $0x330] sm:$0xff]
    %v6406 = vld [vmem:[#allocation10 + $0x338] sm:$0xff]
    %v6407 = vld [vmem:[#allocation10 + $0x340] sm:$0xff]
    %v6408 = vld [vmem:[#allocation10 + $0x348] sm:$0xff]
    %v6409 = vld [vmem:[#allocation10 + $0x350] sm:$0xff]
    %v6410 = vld [vmem:[#allocation10 + $0x358] sm:$0xff]
    %v6411 = vld [vmem:[#allocation10 + $0x360] sm:$0xff]
    %v6412 = vld [vmem:[#allocation10 + $0x368] sm:$0xff]
    %v6413 = vld [vmem:[#allocation10 + $0x370] sm:$0xff]
    %v6414 = vld [vmem:[#allocation10 + $0x378] sm:$0xff]
    %v6415 = vld [vmem:[#allocation10 + $0x380] sm:$0xff]
    %v6416 = vld [vmem:[#allocation10 + $0x388] sm:$0xff]
    %v6417 = vld [vmem:[#allocation10 + $0x390] sm:$0xff]
    %v6418 = vld [vmem:[#allocation10 + $0x398] sm:$0xff]
    %v6419 = vld [vmem:[#allocation10 + $0x3a0] sm:$0xff]
    %v6420 = vld [vmem:[#allocation10 + $0x3a8] sm:$0xff]
    %v6421 = vld [vmem:[#allocation10 + $0x3b0] sm:$0xff]
    %v6422 = vld [vmem:[#allocation10 + $0x3b8] sm:$0xff]
    %v6423 = vld [vmem:[#allocation10 + $0x3c0] sm:$0xff]
    %v6424 = vld [vmem:[#allocation10 + $0x3c8] sm:$0xff]
    %v6425 = vld [vmem:[#allocation10 + $0x3d0] sm:$0xff]
    %v6426 = vld [vmem:[#allocation10 + $0x3d8] sm:$0xff]
    %v6427 = vld [vmem:[#allocation10 + $0x3e0] sm:$0xff]
    %v6428 = vld [vmem:[#allocation10 + $0x3e8] sm:$0xff]
    %v6429 = vld [vmem:[#allocation10 + $0x3f0] sm:$0xff]
    %v6430 = vld [vmem:[#allocation10 + $0x3f8] sm:$0xff]
    %v6431 = vld [vmem:[#allocation10 + $0x400] sm:$0xff]
    %v6432 = vld [vmem:[#allocation10 + $0x408] sm:$0xff]
    %v6433 = vld [vmem:[#allocation10 + $0x410] sm:$0xff]
    %v6434 = vld [vmem:[#allocation10 + $0x418] sm:$0xff]
    %v6435 = vld [vmem:[#allocation10 + $0x420] sm:$0xff]
    %v6436 = vld [vmem:[#allocation10 + $0x428] sm:$0xff]
    %v6437 = vld [vmem:[#allocation10 + $0x430] sm:$0xff]
    %v6438 = vld [vmem:[#allocation10 + $0x438] sm:$0xff]
    %v6439 = vld [vmem:[#allocation10 + $0x440] sm:$0xff]
    %v6440 = vld [vmem:[#allocation10 + $0x448] sm:$0xff]
    %v6441 = vld [vmem:[#allocation10 + $0x450] sm:$0xff]
    %v6442 = vld [vmem:[#allocation10 + $0x458] sm:$0xff]
    %v6443 = vld [vmem:[#allocation10 + $0x460] sm:$0xff]
    %v6444 = vld [vmem:[#allocation10 + $0x468] sm:$0xff]
    %v6445 = vld [vmem:[#allocation10 + $0x470] sm:$0xff]
    %v6446 = vld [vmem:[#allocation10 + $0x478] sm:$0xff]
    %v6447 = vld [vmem:[#allocation10 + $0x480] sm:$0xff]
    %v6448 = vld [vmem:[#allocation10 + $0x488] sm:$0xff]
    %v6449 = vld [vmem:[#allocation10 + $0x490] sm:$0xff]
    %v6450 = vld [vmem:[#allocation10 + $0x498] sm:$0xff]
    %v6451 = vld [vmem:[#allocation10 + $0x4a0] sm:$0xff]
    %v6452 = vld [vmem:[#allocation10 + $0x4a8] sm:$0xff]
    %v6453 = vld [vmem:[#allocation10 + $0x4b0] sm:$0xff]
    %v6454 = vld [vmem:[#allocation10 + $0x4b8] sm:$0xff]
    %v6455 = vld [vmem:[#allocation10 + $0x4c0] sm:$0xff]
    %v6456 = vld [vmem:[#allocation10 + $0x4c8] sm:$0xff]
    %v6457 = vld [vmem:[#allocation10 + $0x4d0] sm:$0xff]
    %v6458 = vld [vmem:[#allocation10 + $0x4d8] sm:$0xff]
    %v6459 = vld [vmem:[#allocation10 + $0x4e0] sm:$0xff]
    %v6460 = vld [vmem:[#allocation10 + $0x4e8] sm:$0xff]
    %v6461 = vld [vmem:[#allocation10 + $0x4f0] sm:$0xff]
    %v6462 = vld [vmem:[#allocation10 + $0x4f8] sm:$0xff]
    %v6463 = vld [vmem:[#allocation10 + $0x500] sm:$0xff]
    %v6464 = vld [vmem:[#allocation10 + $0x508] sm:$0xff]
    %v6465 = vld [vmem:[#allocation10 + $0x510] sm:$0xff]
    %v6466 = vld [vmem:[#allocation10 + $0x518] sm:$0xff]
    %v6467 = vld [vmem:[#allocation10 + $0x520] sm:$0xff]
    %v6468 = vld [vmem:[#allocation10 + $0x528] sm:$0xff]
    %v6469 = vld [vmem:[#allocation10 + $0x530] sm:$0xff]
    %v6470 = vld [vmem:[#allocation10 + $0x538] sm:$0xff]
    %v6471 = vld [vmem:[#allocation10 + $0x540] sm:$0xff]
    %v6472 = vld [vmem:[#allocation10 + $0x548] sm:$0xff]
    %v6473 = vld [vmem:[#allocation10 + $0x550] sm:$0xff]
    %v6474 = vld [vmem:[#allocation10 + $0x558] sm:$0xff]
    %v6475 = vld [vmem:[#allocation10 + $0x560] sm:$0xff]
    %v6476 = vld [vmem:[#allocation10 + $0x568] sm:$0xff]
    %v6477 = vld [vmem:[#allocation10 + $0x570] sm:$0xff]
    %v6478 = vld [vmem:[#allocation10 + $0x578] sm:$0xff]
    %v6479 = vld [vmem:[#allocation10 + $0x580] sm:$0xff]
    %v6480 = vld [vmem:[#allocation10 + $0x588] sm:$0xff]
    %v6481 = vld [vmem:[#allocation10 + $0x590] sm:$0xff]
    %v6482 = vld [vmem:[#allocation10 + $0x598] sm:$0xff]
    %v6483 = vld [vmem:[#allocation10 + $0x5a0] sm:$0xff]
    %v6484 = vld [vmem:[#allocation10 + $0x5a8] sm:$0xff]
    %v6485 = vld [vmem:[#allocation10 + $0x5b0] sm:$0xff]
    %v6486 = vld [vmem:[#allocation10 + $0x5b8] sm:$0xff]
    %v6487 = vld [vmem:[#allocation10 + $0x5c0] sm:$0xff]
    %v6488 = vld [vmem:[#allocation10 + $0x5c8] sm:$0xff]
    %v6489 = vld [vmem:[#allocation10 + $0x5d0] sm:$0xff]
    %v6490 = vld [vmem:[#allocation10 + $0x5d8] sm:$0xff]
    %v6491 = vld [vmem:[#allocation10 + $0x5e0] sm:$0xff]
    %v6492 = vld [vmem:[#allocation10 + $0x5e8] sm:$0xff]
    %v6493 = vld [vmem:[#allocation10 + $0x5f0] sm:$0xff]
    %v6494 = vld [vmem:[#allocation10 + $0x5f8] sm:$0xff]
    %v6495 = vld [vmem:[#allocation10 + $0x600] sm:$0xff]
    %v6496 = vld [vmem:[#allocation10 + $0x608] sm:$0xff]
    %v6497 = vld [vmem:[#allocation10 + $0x610] sm:$0xff]
    %v6498 = vld [vmem:[#allocation10 + $0x618] sm:$0xff]
    %v6499 = vld [vmem:[#allocation10 + $0x620] sm:$0xff]
    %v6500 = vld [vmem:[#allocation10 + $0x628] sm:$0xff]
    %v6501 = vld [vmem:[#allocation10 + $0x630] sm:$0xff]
    %v6502 = vld [vmem:[#allocation10 + $0x638] sm:$0xff]
    %v6503 = vld [vmem:[#allocation10 + $0x640] sm:$0xff]
    %v6504 = vld [vmem:[#allocation10 + $0x648] sm:$0xff]
    %v6505 = vld [vmem:[#allocation10 + $0x650] sm:$0xff]
    %v6506 = vld [vmem:[#allocation10 + $0x658] sm:$0xff]
    %v6507 = vld [vmem:[#allocation10 + $0x660] sm:$0xff]
    %v6508 = vld [vmem:[#allocation10 + $0x668] sm:$0xff]
    %v6509 = vld [vmem:[#allocation10 + $0x670] sm:$0xff]
    %v6510 = vld [vmem:[#allocation10 + $0x678] sm:$0xff]
    %v6511 = vld [vmem:[#allocation10 + $0x680] sm:$0xff]
    %v6512 = vld [vmem:[#allocation10 + $0x688] sm:$0xff]
    %v6513 = vld [vmem:[#allocation10 + $0x690] sm:$0xff]
    %v6514 = vld [vmem:[#allocation10 + $0x698] sm:$0xff]
    %v6515 = vld [vmem:[#allocation10 + $0x6a0] sm:$0xff]
    %v6516 = vld [vmem:[#allocation10 + $0x6a8] sm:$0xff]
    %v6517 = vld [vmem:[#allocation10 + $0x6b0] sm:$0xff]
    %v6518 = vld [vmem:[#allocation10 + $0x6b8] sm:$0xff]
    %v6519 = vld [vmem:[#allocation10 + $0x6c0] sm:$0xff]
    %v6520 = vld [vmem:[#allocation10 + $0x6c8] sm:$0xff]
    %v6521 = vld [vmem:[#allocation10 + $0x6d0] sm:$0xff]
    %v6522 = vld [vmem:[#allocation10 + $0x6d8] sm:$0xff]
    %v6523 = vld [vmem:[#allocation10 + $0x6e0] sm:$0xff]
    %v6524 = vld [vmem:[#allocation10 + $0x6e8] sm:$0xff]
    %v6525 = vld [vmem:[#allocation10 + $0x6f0] sm:$0xff]
    %v6526 = vld [vmem:[#allocation10 + $0x6f8] sm:$0xff]
    %v6527 = vld [vmem:[#allocation10 + $0x700] sm:$0xff]
    %v6528 = vld [vmem:[#allocation10 + $0x708] sm:$0xff]
    %v6529 = vld [vmem:[#allocation10 + $0x710] sm:$0xff]
    %v6530 = vld [vmem:[#allocation10 + $0x718] sm:$0xff]
    %v6531 = vld [vmem:[#allocation10 + $0x720] sm:$0xff]
    %v6532 = vld [vmem:[#allocation10 + $0x728] sm:$0xff]
    %v6533 = vld [vmem:[#allocation10 + $0x730] sm:$0xff]
    %v6534 = vld [vmem:[#allocation10 + $0x738] sm:$0xff]
    %v6535 = vld [vmem:[#allocation10 + $0x740] sm:$0xff]
    %v6536 = vld [vmem:[#allocation10 + $0x748] sm:$0xff]
    %v6537 = vld [vmem:[#allocation10 + $0x750] sm:$0xff]
    %v6538 = vld [vmem:[#allocation10 + $0x758] sm:$0xff]
    %v6539 = vld [vmem:[#allocation10 + $0x760] sm:$0xff]
    %v6540 = vld [vmem:[#allocation10 + $0x768] sm:$0xff]
    %v6541 = vld [vmem:[#allocation10 + $0x770] sm:$0xff]
    %v6542 = vld [vmem:[#allocation10 + $0x778] sm:$0xff]
    %v6543 = vld [vmem:[#allocation10 + $0x780] sm:$0xff]
    %v6544 = vld [vmem:[#allocation10 + $0x788] sm:$0xff]
    %v6545 = vld [vmem:[#allocation10 + $0x790] sm:$0xff]
    %v6546 = vld [vmem:[#allocation10 + $0x798] sm:$0xff]
    %v6547 = vld [vmem:[#allocation10 + $0x7a0] sm:$0xff]
    %v6548 = vld [vmem:[#allocation10 + $0x7a8] sm:$0xff]
    %v6549 = vld [vmem:[#allocation10 + $0x7b0] sm:$0xff]
    %v6550 = vld [vmem:[#allocation10 + $0x7b8] sm:$0xff]
    %v6551 = vld [vmem:[#allocation10 + $0x7c0] sm:$0xff]
    %v6552 = vld [vmem:[#allocation10 + $0x7c8] sm:$0xff]
    %v6553 = vld [vmem:[#allocation10 + $0x7d0] sm:$0xff]
    %v6554 = vld [vmem:[#allocation10 + $0x7d8] sm:$0xff]
    %v6555 = vld [vmem:[#allocation10 + $0x7e0] sm:$0xff]
    %v6556 = vld [vmem:[#allocation10 + $0x7e8] sm:$0xff]
    %v6557 = vld [vmem:[#allocation10 + $0x7f0] sm:$0xff]
    %v6558 = vld [vmem:[#allocation10 + $0x7f8] sm:$0xff]
    %v6559 = vld [vmem:[#allocation10 + $0x800] sm:$0xff]
    %v6560 = vld [vmem:[#allocation10 + $0x808] sm:$0xff]
    %v6561 = vld [vmem:[#allocation10 + $0x810] sm:$0xff]
    %v6562 = vld [vmem:[#allocation10 + $0x818] sm:$0xff]
    %v6563 = vld [vmem:[#allocation10 + $0x820] sm:$0xff]
    %v6564 = vld [vmem:[#allocation10 + $0x828] sm:$0xff]
    %v6565 = vld [vmem:[#allocation10 + $0x830] sm:$0xff]
    %v6566 = vld [vmem:[#allocation10 + $0x838] sm:$0xff]
    %v6567 = vld [vmem:[#allocation10 + $0x840] sm:$0xff]
    %v6568 = vld [vmem:[#allocation10 + $0x848] sm:$0xff]
    %v6569 = vld [vmem:[#allocation10 + $0x850] sm:$0xff]
    %v6570 = vld [vmem:[#allocation10 + $0x858] sm:$0xff]
    %v6571 = vld [vmem:[#allocation10 + $0x860] sm:$0xff]
    %v6572 = vld [vmem:[#allocation10 + $0x868] sm:$0xff]
    %v6573 = vld [vmem:[#allocation10 + $0x870] sm:$0xff]
    %v6574 = vld [vmem:[#allocation10 + $0x878] sm:$0xff]
    %v6575 = vld [vmem:[#allocation10 + $0x880] sm:$0xff]
    %v6576 = vld [vmem:[#allocation10 + $0x888] sm:$0xff]
    %v6577 = vld [vmem:[#allocation10 + $0x890] sm:$0xff]
    %v6578 = vld [vmem:[#allocation10 + $0x898] sm:$0xff]
    %v6579 = vld [vmem:[#allocation10 + $0x8a0] sm:$0xff]
    %v6580 = vld [vmem:[#allocation10 + $0x8a8] sm:$0xff]
    %v6581 = vld [vmem:[#allocation10 + $0x8b0] sm:$0xff]
    %v6582 = vld [vmem:[#allocation10 + $0x8b8] sm:$0xff]
    %v6583 = vld [vmem:[#allocation10 + $0x8c0] sm:$0xff]
    %v6584 = vld [vmem:[#allocation10 + $0x8c8] sm:$0xff]
    %v6585 = vld [vmem:[#allocation10 + $0x8d0] sm:$0xff]
    %v6586 = vld [vmem:[#allocation10 + $0x8d8] sm:$0xff]
    %v6587 = vld [vmem:[#allocation10 + $0x8e0] sm:$0xff]
    %v6588 = vld [vmem:[#allocation10 + $0x8e8] sm:$0xff]
    %v6589 = vld [vmem:[#allocation10 + $0x8f0] sm:$0xff]
    %v6590 = vld [vmem:[#allocation10 + $0x8f8] sm:$0xff]
    %v6591 = vld [vmem:[#allocation10 + $0x900] sm:$0xff]
    %v6592 = vld [vmem:[#allocation10 + $0x908] sm:$0xff]
    %v6593 = vld [vmem:[#allocation10 + $0x910] sm:$0xff]
    %v6594 = vld [vmem:[#allocation10 + $0x918] sm:$0xff]
    %v6595 = vld [vmem:[#allocation10 + $0x920] sm:$0xff]
    %v6596 = vld [vmem:[#allocation10 + $0x928] sm:$0xff]
    %v6597 = vld [vmem:[#allocation10 + $0x930] sm:$0xff]
    %v6598 = vld [vmem:[#allocation10 + $0x938] sm:$0xff]
    %v6599 = vld [vmem:[#allocation10 + $0x940] sm:$0xff]
    %v6600 = vld [vmem:[#allocation10 + $0x948] sm:$0xff]
    %v6601 = vld [vmem:[#allocation10 + $0x950] sm:$0xff]
    %v6602 = vld [vmem:[#allocation10 + $0x958] sm:$0xff]
    %v6603 = vld [vmem:[#allocation10 + $0x960] sm:$0xff]
    %v6604 = vld [vmem:[#allocation10 + $0x968] sm:$0xff]
    %v6605 = vld [vmem:[#allocation10 + $0x970] sm:$0xff]
    %v6606 = vld [vmem:[#allocation10 + $0x978] sm:$0xff]
    %v6607 = vld [vmem:[#allocation10 + $0x980] sm:$0xff]
    %v6608 = vld [vmem:[#allocation10 + $0x988] sm:$0xff]
    %v6609 = vld [vmem:[#allocation10 + $0x990] sm:$0xff]
    %v6610 = vld [vmem:[#allocation10 + $0x998] sm:$0xff]
    %v6611 = vld [vmem:[#allocation10 + $0x9a0] sm:$0xff]
    %v6612 = vld [vmem:[#allocation10 + $0x9a8] sm:$0xff]
    %v6613 = vld [vmem:[#allocation10 + $0x9b0] sm:$0xff]
    %v6614 = vld [vmem:[#allocation10 + $0x9b8] sm:$0xff]
    %v6615 = vld [vmem:[#allocation10 + $0x9c0] sm:$0xff]
    %v6616 = vld [vmem:[#allocation10 + $0x9c8] sm:$0xff]
    %v6617 = vld [vmem:[#allocation10 + $0x9d0] sm:$0xff]
    %v6618 = vld [vmem:[#allocation10 + $0x9d8] sm:$0xff]
    %v6619 = vld [vmem:[#allocation10 + $0x9e0] sm:$0xff]
    %v6620 = vld [vmem:[#allocation10 + $0x9e8] sm:$0xff]
    %v6621 = vld [vmem:[#allocation10 + $0x9f0] sm:$0xff]
    %v6622 = vld [vmem:[#allocation10 + $0x9f8] sm:$0xff]
    %v6623 = vld [vmem:[#allocation10 + $0xa00] sm:$0xff]
    %v6624 = vld [vmem:[#allocation10 + $0xa08] sm:$0xff]
    %v6625 = vld [vmem:[#allocation10 + $0xa10] sm:$0xff]
    %v6626 = vld [vmem:[#allocation10 + $0xa18] sm:$0xff]
    %v6627 = vld [vmem:[#allocation10 + $0xa20] sm:$0xff]
    %v6628 = vld [vmem:[#allocation10 + $0xa28] sm:$0xff]
    %v6629 = vld [vmem:[#allocation10 + $0xa30] sm:$0xff]
    %v6630 = vld [vmem:[#allocation10 + $0xa38] sm:$0xff]
    %v6631 = vld [vmem:[#allocation10 + $0xa40] sm:$0xff]
    %v6632 = vld [vmem:[#allocation10 + $0xa48] sm:$0xff]
    %v6633 = vld [vmem:[#allocation10 + $0xa50] sm:$0xff]
    %v6634 = vld [vmem:[#allocation10 + $0xa58] sm:$0xff]
    %v6635 = vld [vmem:[#allocation10 + $0xa60] sm:$0xff]
    %v6636 = vld [vmem:[#allocation10 + $0xa68] sm:$0xff]
    %v6637 = vld [vmem:[#allocation10 + $0xa70] sm:$0xff]
    %v6638 = vld [vmem:[#allocation10 + $0xa78] sm:$0xff]
    %v6639 = vld [vmem:[#allocation10 + $0xa80] sm:$0xff]
    %v6640 = vld [vmem:[#allocation10 + $0xa88] sm:$0xff]
    %v6641 = vld [vmem:[#allocation10 + $0xa90] sm:$0xff]
    %v6642 = vld [vmem:[#allocation10 + $0xa98] sm:$0xff]
    %v6643 = vld [vmem:[#allocation10 + $0xaa0] sm:$0xff]
    %v6644 = vld [vmem:[#allocation10 + $0xaa8] sm:$0xff]
    %v6645 = vld [vmem:[#allocation10 + $0xab0] sm:$0xff]
    %v6646 = vld [vmem:[#allocation10 + $0xab8] sm:$0xff]
    %v6647 = vld [vmem:[#allocation10 + $0xac0] sm:$0xff]
    %v6648 = vld [vmem:[#allocation10 + $0xac8] sm:$0xff]
    %v6649 = vld [vmem:[#allocation10 + $0xad0] sm:$0xff]
    %v6650 = vld [vmem:[#allocation10 + $0xad8] sm:$0xff]
    %v6651 = vld [vmem:[#allocation10 + $0xae0] sm:$0xff]
    %v6652 = vld [vmem:[#allocation10 + $0xae8] sm:$0xff]
    %v6653 = vld [vmem:[#allocation10 + $0xaf0] sm:$0xff]
    %v6654 = vld [vmem:[#allocation10 + $0xaf8] sm:$0xff]
    %v6655 = vld [vmem:[#allocation10 + $0xb00] sm:$0xff]
    %v6656 = vld [vmem:[#allocation10 + $0xb08] sm:$0xff]
    %v6657 = vld [vmem:[#allocation10 + $0xb10] sm:$0xff]
    %v6658 = vld [vmem:[#allocation10 + $0xb18] sm:$0xff]
    %v6659 = vld [vmem:[#allocation10 + $0xb20] sm:$0xff]
    %v6660 = vld [vmem:[#allocation10 + $0xb28] sm:$0xff]
    %v6661 = vld [vmem:[#allocation10 + $0xb30] sm:$0xff]
    %v6662 = vld [vmem:[#allocation10 + $0xb38] sm:$0xff]
    %v6663 = vld [vmem:[#allocation10 + $0xb40] sm:$0xff]
    %v6664 = vld [vmem:[#allocation10 + $0xb48] sm:$0xff]
    %v6665 = vld [vmem:[#allocation10 + $0xb50] sm:$0xff]
    %v6666 = vld [vmem:[#allocation10 + $0xb58] sm:$0xff]
    %v6667 = vld [vmem:[#allocation10 + $0xb60] sm:$0xff]
    %v6668 = vld [vmem:[#allocation10 + $0xb68] sm:$0xff]
    %v6669 = vld [vmem:[#allocation10 + $0xb70] sm:$0xff]
    %v6670 = vld [vmem:[#allocation10 + $0xb78] sm:$0xff]
    %v6671 = vld [vmem:[#allocation10 + $0xb80] sm:$0xff]
    %v6672 = vld [vmem:[#allocation10 + $0xb88] sm:$0xff]
    %v6673 = vld [vmem:[#allocation10 + $0xb90] sm:$0xff]
    %v6674 = vld [vmem:[#allocation10 + $0xb98] sm:$0xff]
    %v6675 = vld [vmem:[#allocation10 + $0xba0] sm:$0xff]
    %v6676 = vld [vmem:[#allocation10 + $0xba8] sm:$0xff]
    %v6677 = vld [vmem:[#allocation10 + $0xbb0] sm:$0xff]
    %v6678 = vld [vmem:[#allocation10 + $0xbb8] sm:$0xff]
    %v6679 = vld [vmem:[#allocation10 + $0xbc0] sm:$0xff]
    %v6680 = vld [vmem:[#allocation10 + $0xbc8] sm:$0xff]
    %v6681 = vld [vmem:[#allocation10 + $0xbd0] sm:$0xff]
    %v6682 = vld [vmem:[#allocation10 + $0xbd8] sm:$0xff]
    %v6683 = vld [vmem:[#allocation10 + $0xbe0] sm:$0xff]
    %v6684 = vld [vmem:[#allocation10 + $0xbe8] sm:$0xff]
    %v6685 = vld [vmem:[#allocation10 + $0xbf0] sm:$0xff]
    %v6686 = vld [vmem:[#allocation10 + $0xbf8] sm:$0xff]
    %v6687 = vld [vmem:[#allocation10 + $0xc00] sm:$0xff]
    %v6688 = vld [vmem:[#allocation10 + $0xc08] sm:$0xff]
    %v6689 = vld [vmem:[#allocation10 + $0xc10] sm:$0xff]
    %v6690 = vld [vmem:[#allocation10 + $0xc18] sm:$0xff]
    %v6691 = vld [vmem:[#allocation10 + $0xc20] sm:$0xff]
    %v6692 = vld [vmem:[#allocation10 + $0xc28] sm:$0xff]
    %v6693 = vld [vmem:[#allocation10 + $0xc30] sm:$0xff]
    %v6694 = vld [vmem:[#allocation10 + $0xc38] sm:$0xff]
    %v6695 = vld [vmem:[#allocation10 + $0xc40] sm:$0xff]
    %v6696 = vld [vmem:[#allocation10 + $0xc48] sm:$0xff]
    %v6697 = vld [vmem:[#allocation10 + $0xc50] sm:$0xff]
    %v6698 = vld [vmem:[#allocation10 + $0xc58] sm:$0xff]
    %v6699 = vld [vmem:[#allocation10 + $0xc60] sm:$0xff]
    %v6700 = vld [vmem:[#allocation10 + $0xc68] sm:$0xff]
    %v6701 = vld [vmem:[#allocation10 + $0xc70] sm:$0xff]
    %v6702 = vld [vmem:[#allocation10 + $0xc78] sm:$0xff]
    %v6703 = vld [vmem:[#allocation10 + $0xc80] sm:$0xff]
    %v6704 = vld [vmem:[#allocation10 + $0xc88] sm:$0xff]
    %v6705 = vld [vmem:[#allocation10 + $0xc90] sm:$0xff]
    %v6706 = vld [vmem:[#allocation10 + $0xc98] sm:$0xff]
    %v6707 = vld [vmem:[#allocation10 + $0xca0] sm:$0xff]
    %v6708 = vld [vmem:[#allocation10 + $0xca8] sm:$0xff]
    %v6709 = vld [vmem:[#allocation10 + $0xcb0] sm:$0xff]
    %v6710 = vld [vmem:[#allocation10 + $0xcb8] sm:$0xff]
    %v6711 = vld [vmem:[#allocation10 + $0xcc0] sm:$0xff]
    %v6712 = vld [vmem:[#allocation10 + $0xcc8] sm:$0xff]
    %v6713 = vld [vmem:[#allocation10 + $0xcd0] sm:$0xff]
    %v6714 = vld [vmem:[#allocation10 + $0xcd8] sm:$0xff]
    %v6715 = vld [vmem:[#allocation10 + $0xce0] sm:$0xff]
    %v6716 = vld [vmem:[#allocation10 + $0xce8] sm:$0xff]
    %v6717 = vld [vmem:[#allocation10 + $0xcf0] sm:$0xff]
    %v6718 = vld [vmem:[#allocation10 + $0xcf8] sm:$0xff]
    %v6719 = vld [vmem:[#allocation10 + $0xd00] sm:$0xff]
    %v6720 = vld [vmem:[#allocation10 + $0xd08] sm:$0xff]
    %v6721 = vld [vmem:[#allocation10 + $0xd10] sm:$0xff]
    %v6722 = vld [vmem:[#allocation10 + $0xd18] sm:$0xff]
    %v6723 = vld [vmem:[#allocation10 + $0xd20] sm:$0xff]
    %v6724 = vld [vmem:[#allocation10 + $0xd28] sm:$0xff]
    %v6725 = vld [vmem:[#allocation10 + $0xd30] sm:$0xff]
    %v6726 = vld [vmem:[#allocation10 + $0xd38] sm:$0xff]
    %v6727 = vld [vmem:[#allocation10 + $0xd40] sm:$0xff]
    %v6728 = vld [vmem:[#allocation10 + $0xd48] sm:$0xff]
    %v6729 = vld [vmem:[#allocation10 + $0xd50] sm:$0xff]
    %v6730 = vld [vmem:[#allocation10 + $0xd58] sm:$0xff]
    %v6731 = vld [vmem:[#allocation10 + $0xd60] sm:$0xff]
    %v6732 = vld [vmem:[#allocation10 + $0xd68] sm:$0xff]
    %v6733 = vld [vmem:[#allocation10 + $0xd70] sm:$0xff]
    %v6734 = vld [vmem:[#allocation10 + $0xd78] sm:$0xff]
    %v6735 = vld [vmem:[#allocation10 + $0xd80] sm:$0xff]
    %v6736 = vld [vmem:[#allocation10 + $0xd88] sm:$0xff]
    %v6737 = vld [vmem:[#allocation10 + $0xd90] sm:$0xff]
    %v6738 = vld [vmem:[#allocation10 + $0xd98] sm:$0xff]
    %v6739 = vld [vmem:[#allocation10 + $0xda0] sm:$0xff]
    %v6740 = vld [vmem:[#allocation10 + $0xda8] sm:$0xff]
    %v6741 = vld [vmem:[#allocation10 + $0xdb0] sm:$0xff]
    %v6742 = vld [vmem:[#allocation10 + $0xdb8] sm:$0xff]
    %v6743 = vld [vmem:[#allocation10 + $0xdc0] sm:$0xff]
    %v6744 = vld [vmem:[#allocation10 + $0xdc8] sm:$0xff]
    %v6745 = vld [vmem:[#allocation10 + $0xdd0] sm:$0xff]
    %v6746 = vld [vmem:[#allocation10 + $0xdd8] sm:$0xff]
    %v6747 = vld [vmem:[#allocation10 + $0xde0] sm:$0xff]
    %v6748 = vld [vmem:[#allocation10 + $0xde8] sm:$0xff]
    %v6749 = vld [vmem:[#allocation10 + $0xdf0] sm:$0xff]
    %v6750 = vld [vmem:[#allocation10 + $0xdf8] sm:$0xff]
    %v6751 = vld [vmem:[#allocation10 + $0xe00] sm:$0xff]
    %v6752 = vld [vmem:[#allocation10 + $0xe08] sm:$0xff]
    %v6753 = vld [vmem:[#allocation10 + $0xe10] sm:$0xff]
    %v6754 = vld [vmem:[#allocation10 + $0xe18] sm:$0xff]
    %v6755 = vld [vmem:[#allocation10 + $0xe20] sm:$0xff]
    %v6756 = vld [vmem:[#allocation10 + $0xe28] sm:$0xff]
    %v6757 = vld [vmem:[#allocation10 + $0xe30] sm:$0xff]
    %v6758 = vld [vmem:[#allocation10 + $0xe38] sm:$0xff]
    %v6759 = vld [vmem:[#allocation10 + $0xe40] sm:$0xff]
    %v6760 = vld [vmem:[#allocation10 + $0xe48] sm:$0xff]
    %v6761 = vld [vmem:[#allocation10 + $0xe50] sm:$0xff]
    %v6762 = vld [vmem:[#allocation10 + $0xe58] sm:$0xff]
    %v6763 = vld [vmem:[#allocation10 + $0xe60] sm:$0xff]
    %v6764 = vld [vmem:[#allocation10 + $0xe68] sm:$0xff]
    %v6765 = vld [vmem:[#allocation10 + $0xe70] sm:$0xff]
    %v6766 = vld [vmem:[#allocation10 + $0xe78] sm:$0xff]
    %v6767 = vld [vmem:[#allocation10 + $0xe80] sm:$0xff]
    %v6768 = vld [vmem:[#allocation10 + $0xe88] sm:$0xff]
    %v6769 = vld [vmem:[#allocation10 + $0xe90] sm:$0xff]
    %v6770 = vld [vmem:[#allocation10 + $0xe98] sm:$0xff]
    %v6771 = vld [vmem:[#allocation10 + $0xea0] sm:$0xff]
    %v6772 = vld [vmem:[#allocation10 + $0xea8] sm:$0xff]
    %v6773 = vld [vmem:[#allocation10 + $0xeb0] sm:$0xff]
    %v6774 = vld [vmem:[#allocation10 + $0xeb8] sm:$0xff]
    %v6775 = vld [vmem:[#allocation10 + $0xec0] sm:$0xff]
    %v6776 = vld [vmem:[#allocation10 + $0xec8] sm:$0xff]
    %v6777 = vld [vmem:[#allocation10 + $0xed0] sm:$0xff]
    %v6778 = vld [vmem:[#allocation10 + $0xed8] sm:$0xff]
    %v6779 = vld [vmem:[#allocation10 + $0xee0] sm:$0xff]
    %v6780 = vld [vmem:[#allocation10 + $0xee8] sm:$0xff]
    %v6781 = vld [vmem:[#allocation10 + $0xef0] sm:$0xff]
    %v6782 = vld [vmem:[#allocation10 + $0xef8] sm:$0xff]
    %v6783 = vld [vmem:[#allocation10 + $0xf00] sm:$0xff]
    %v6784 = vld [vmem:[#allocation10 + $0xf08] sm:$0xff]
    %v6785 = vld [vmem:[#allocation10 + $0xf10] sm:$0xff]
    %v6786 = vld [vmem:[#allocation10 + $0xf18] sm:$0xff]
    %v6787 = vld [vmem:[#allocation10 + $0xf20] sm:$0xff]
    %v6788 = vld [vmem:[#allocation10 + $0xf28] sm:$0xff]
    %v6789 = vld [vmem:[#allocation10 + $0xf30] sm:$0xff]
    %v6790 = vld [vmem:[#allocation10 + $0xf38] sm:$0xff]
    %v6791 = vld [vmem:[#allocation10 + $0xf40] sm:$0xff]
    %v6792 = vld [vmem:[#allocation10 + $0xf48] sm:$0xff]
    %v6793 = vld [vmem:[#allocation10 + $0xf50] sm:$0xff]
    %v6794 = vld [vmem:[#allocation10 + $0xf58] sm:$0xff]
    %v6795 = vld [vmem:[#allocation10 + $0xf60] sm:$0xff]
    %v6796 = vld [vmem:[#allocation10 + $0xf68] sm:$0xff]
    %v6797 = vld [vmem:[#allocation10 + $0xf70] sm:$0xff]
    %v6798 = vld [vmem:[#allocation10 + $0xf78] sm:$0xff]
    %v6799 = vld [vmem:[#allocation10 + $0xf80] sm:$0xff]
    %v6800 = vld [vmem:[#allocation10 + $0xf88] sm:$0xff]
    %v6801 = vld [vmem:[#allocation10 + $0xf90] sm:$0xff]
    %v6802 = vld [vmem:[#allocation10 + $0xf98] sm:$0xff]
    %v6803 = vld [vmem:[#allocation10 + $0xfa0] sm:$0xff]
    %v6804 = vld [vmem:[#allocation10 + $0xfa8] sm:$0xff]
    %v6805 = vld [vmem:[#allocation10 + $0xfb0] sm:$0xff]
    %v6806 = vld [vmem:[#allocation10 + $0xfb8] sm:$0xff]
    %v6807 = vld [vmem:[#allocation10 + $0xfc0] sm:$0xff]
    %v6808 = vld [vmem:[#allocation10 + $0xfc8] sm:$0xff]
    %v6809 = vld [vmem:[#allocation10 + $0xfd0] sm:$0xff]
    %v6810 = vld [vmem:[#allocation10 + $0xfd8] sm:$0xff]
    %v6811 = vld [vmem:[#allocation10 + $0xfe0] sm:$0xff]
    %v6812 = vld [vmem:[#allocation10 + $0xfe8] sm:$0xff]
    %v6813 = vld [vmem:[#allocation10 + $0xff0] sm:$0xff]
    %v6814 = vld [vmem:[#allocation10 + $0xff8] sm:$0xff]
    %v6815 = vld [vmem:[#allocation11] sm:$0xf]
    %v6817 = vlaneseq
    %v6818 = vshrl.u32 %v6817, 7
    %v6819 = vsub.s32 0, %v6818
    %v6820 = vrot.slane %v6815, %v6819
    %v6821 = vlaneseq
    %v6822 = vshrl.u32 %v6821, 7
    %v6823 = vsub.s32 1, %v6822
    %v6824 = vrot.slane %v6815, %v6823
    %v6825 = vlaneseq
    %v6826 = vshrl.u32 %v6825, 7
    %v6827 = vsub.s32 2, %v6826
    %v6828 = vrot.slane %v6815, %v6827
    %v6829 = vlaneseq
    %v6830 = vshrl.u32 %v6829, 7
    %v6831 = vsub.s32 3, %v6830
    %v6832 = vrot.slane %v6815, %v6831
    %6837 = vmatprep.subr.mxu0 %v6304
    %6838 = vmatpush1.msra.mxu0 %v6303
    %6839 = vmatprep.subr.mxu0 %v6308
    %6840 = vmatpush1.msra.mxu0 %v6307
    %6841 = vmatprep.subr.mxu0 %v6312
    %6842 = vmatpush1.msra.mxu0 %v6311
    %6843 = vmatprep.subr.mxu0 %v6316
    %6844 = vmatpush1.msra.mxu0 %v6315
    %6845 = vmatprep.subr.mxu0 %v6320
    %6846 = vmatpush1.msra.mxu0 %v6319
    %6847 = vmatprep.subr.mxu0 %v6324
    %6848 = vmatpush1.msra.mxu0 %v6323
    %6849 = vmatprep.subr.mxu0 %v6328
    %6850 = vmatpush1.msra.mxu0 %v6327
    %6851 = vmatprep.subr.mxu0 %v6332
    %6852 = vmatpush1.msra.mxu0 %v6331
    %6853 = vmatprep.subr.mxu0 %v6336
    %6854 = vmatpush1.msra.mxu0 %v6335
    %6855 = vmatprep.subr.mxu0 %v6340
    %6856 = vmatpush1.msra.mxu0 %v6339
    %6857 = vmatprep.subr.mxu0 %v6344
    %6858 = vmatpush1.msra.mxu0 %v6343
    %6859 = vmatprep.subr.mxu0 %v6348
    %6860 = vmatpush1.msra.mxu0 %v6347
    %6861 = vmatprep.subr.mxu0 %v6352
    %6862 = vmatpush1.msra.mxu0 %v6351
    %6863 = vmatprep.subr.mxu0 %v6356
    %6864 = vmatpush1.msra.mxu0 %v6355
    %6865 = vmatprep.subr.mxu0 %v6360
    %6866 = vmatpush1.msra.mxu0 %v6359
    %6867 = vmatprep.subr.mxu0 %v6364
    %6868 = vmatpush1.msra.mxu0 %v6363
    %6869 = vmatprep.subr.mxu0 %v6368
    %6870 = vmatpush1.msra.mxu0 %v6367
    %6871 = vmatprep.subr.mxu0 %v6372
    %6872 = vmatpush1.msra.mxu0 %v6371
    %6873 = vmatprep.subr.mxu0 %v6376
    %6874 = vmatpush1.msra.mxu0 %v6375
    %6875 = vmatprep.subr.mxu0 %v6380
    %6876 = vmatpush1.msra.mxu0 %v6379
    %6877 = vmatprep.subr.mxu0 %v6384
    %6878 = vmatpush1.msra.mxu0 %v6383
    %6879 = vmatprep.subr.mxu0 %v6388
    %6880 = vmatpush1.msra.mxu0 %v6387
    %6881 = vmatprep.subr.mxu0 %v6392
    %6882 = vmatpush1.msra.mxu0 %v6391
    %6883 = vmatprep.subr.mxu0 %v6396
    %6884 = vmatpush1.msra.mxu0 %v6395
    %6885 = vmatprep.subr.mxu0 %v6400
    %6886 = vmatpush1.msra.mxu0 %v6399
    %6887 = vmatprep.subr.mxu0 %v6404
    %6888 = vmatpush1.msra.mxu0 %v6403
    %6889 = vmatprep.subr.mxu0 %v6408
    %6890 = vmatpush1.msra.mxu0 %v6407
    %6891 = vmatprep.subr.mxu0 %v6412
    %6892 = vmatpush1.msra.mxu0 %v6411
    %6893 = vmatprep.subr.mxu0 %v6416
    %6894 = vmatpush1.msra.mxu0 %v6415
    %6895 = vmatprep.subr.mxu0 %v6420
    %6896 = vmatpush1.msra.mxu0 %v6419
    %6897 = vmatprep.subr.mxu0 %v6424
    %6898 = vmatpush1.msra.mxu0 %v6423
    %6899 = vmatprep.subr.mxu0 %v6428
    %6900 = vmatpush1.msra.mxu0 %v6427
    %6901 = vmatprep.mubr.f32.mxu0 %v6234
    %6902 = vmatmul.mubr.f32.gmra.mrb[0].mxu0 %v6233
    %v6903 = vpop.f32.mrb[0].mxu0
    %v6904 = vadd.f32 %v6820, %v6903
    %v6905 = vpop.f32.mrb[0].mxu0
    %v6906 = vadd.f32 %v6824, %v6905
    %6907 = vdwg.mxu0
    %6908 = vmatprep.subr.mxu0 %v6432
    %6909 = vmatpush1.msra.mxu0 %v6431
    %6910 = vmatprep.subr.mxu0 %v6436
    %6911 = vmatpush1.msra.mxu0 %v6435
    %6912 = vmatprep.subr.mxu0 %v6440
    %6913 = vmatpush1.msra.mxu0 %v6439
    %6914 = vmatprep.subr.mxu0 %v6444
    %6915 = vmatpush1.msra.mxu0 %v6443
    %6916 = vmatprep.subr.mxu0 %v6448
    %6917 = vmatpush1.msra.mxu0 %v6447
    %6918 = vmatprep.subr.mxu0 %v6452
    %6919 = vmatpush1.msra.mxu0 %v6451
    %6920 = vmatprep.subr.mxu0 %v6456
    %6921 = vmatpush1.msra.mxu0 %v6455
    %6922 = vmatprep.subr.mxu0 %v6460
    %6923 = vmatpush1.msra.mxu0 %v6459
    %6924 = vmatprep.subr.mxu0 %v6464
    %6925 = vmatpush1.msra.mxu0 %v6463
    %6926 = vmatprep.subr.mxu0 %v6468
    %6927 = vmatpush1.msra.mxu0 %v6467
    %6928 = vmatprep.subr.mxu0 %v6472
    %6929 = vmatpush1.msra.mxu0 %v6471
    %6930 = vmatprep.subr.mxu0 %v6476
    %6931 = vmatpush1.msra.mxu0 %v6475
    %6932 = vmatprep.subr.mxu0 %v6480
    %6933 = vmatpush1.msra.mxu0 %v6479
    %6934 = vmatprep.subr.mxu0 %v6484
    %6935 = vmatpush1.msra.mxu0 %v6483
    %6936 = vmatprep.subr.mxu0 %v6488
    %6937 = vmatpush1.msra.mxu0 %v6487
    %6938 = vmatprep.subr.mxu0 %v6492
    %6939 = vmatpush1.msra.mxu0 %v6491
    %6940 = vmatprep.subr.mxu0 %v6496
    %6941 = vmatpush1.msra.mxu0 %v6495
    %6942 = vmatprep.subr.mxu0 %v6500
    %6943 = vmatpush1.msra.mxu0 %v6499
    %6944 = vmatprep.subr.mxu0 %v6504
    %6945 = vmatpush1.msra.mxu0 %v6503
    %6946 = vmatprep.subr.mxu0 %v6508
    %6947 = vmatpush1.msra.mxu0 %v6507
    %6948 = vmatprep.subr.mxu0 %v6512
    %6949 = vmatpush1.msra.mxu0 %v6511
    %6950 = vmatprep.subr.mxu0 %v6516
    %6951 = vmatpush1.msra.mxu0 %v6515
    %6952 = vmatprep.subr.mxu0 %v6520
    %6953 = vmatpush1.msra.mxu0 %v6519
    %6954 = vmatprep.subr.mxu0 %v6524
    %6955 = vmatpush1.msra.mxu0 %v6523
    %6956 = vmatprep.subr.mxu0 %v6528
    %6957 = vmatpush1.msra.mxu0 %v6527
    %6958 = vmatprep.subr.mxu0 %v6532
    %6959 = vmatpush1.msra.mxu0 %v6531
    %6960 = vmatprep.subr.mxu0 %v6536
    %6961 = vmatpush1.msra.mxu0 %v6535
    %6962 = vmatprep.subr.mxu0 %v6540
    %6963 = vmatpush1.msra.mxu0 %v6539
    %6964 = vmatprep.subr.mxu0 %v6544
    %6965 = vmatpush1.msra.mxu0 %v6543
    %6966 = vmatprep.subr.mxu0 %v6548
    %6967 = vmatpush1.msra.mxu0 %v6547
    %6968 = vmatprep.subr.mxu0 %v6552
    %6969 = vmatpush1.msra.mxu0 %v6551
    %6970 = vmatprep.subr.mxu0 %v6556
    %6971 = vmatpush1.msra.mxu0 %v6555
    %6972 = vmatprep.mubr.f32.mxu0 %v6256
    %6973 = vmatmul.mubr.f32.gmra.mrb[0].mxu0 %v6255
    %v6974 = vpop.f32.mrb[0].mxu0
    %v6975 = vadd.f32 %v6904, %v6974
    %v6976 = vpop.f32.mrb[0].mxu0
    %v6977 = vadd.f32 %v6906, %v6976
    %6978 = vdwg.mxu0
    %6979 = vmatprep.subr.mxu0 %v6560
    %6980 = vmatpush1.msra.mxu0 %v6559
    %6981 = vmatprep.subr.mxu0 %v6564
    %6982 = vmatpush1.msra.mxu0 %v6563
    %6983 = vmatprep.subr.mxu0 %v6568
    %6984 = vmatpush1.msra.mxu0 %v6567
    %6985 = vmatprep.subr.mxu0 %v6572
    %6986 = vmatpush1.msra.mxu0 %v6571
    %6987 = vmatprep.subr.mxu0 %v6576
    %6988 = vmatpush1.msra.mxu0 %v6575
    %6989 = vmatprep.subr.mxu0 %v6580
    %6990 = vmatpush1.msra.mxu0 %v6579
    %6991 = vmatprep.subr.mxu0 %v6584
    %6992 = vmatpush1.msra.mxu0 %v6583
    %6993 = vmatprep.subr.mxu0 %v6588
    %6994 = vmatpush1.msra.mxu0 %v6587
    %6995 = vmatprep.subr.mxu0 %v6592
    %6996 = vmatpush1.msra.mxu0 %v6591
    %6997 = vmatprep.subr.mxu0 %v6596
    %6998 = vmatpush1.msra.mxu0 %v6595
    %6999 = vmatprep.subr.mxu0 %v6600
    %7000 = vmatpush1.msra.mxu0 %v6599
    %7001 = vmatprep.subr.mxu0 %v6604
    %7002 = vmatpush1.msra.mxu0 %v6603
    %7003 = vmatprep.subr.mxu0 %v6608
    %7004 = vmatpush1.msra.mxu0 %v6607
    %7005 = vmatprep.subr.mxu0 %v6612
    %7006 = vmatpush1.msra.mxu0 %v6611
    %7007 = vmatprep.subr.mxu0 %v6616
    %7008 = vmatpush1.msra.mxu0 %v6615
    %7009 = vmatprep.subr.mxu0 %v6620
    %7010 = vmatpush1.msra.mxu0 %v6619
    %7011 = vmatprep.subr.mxu0 %v6624
    %7012 = vmatpush1.msra.mxu0 %v6623
    %7013 = vmatprep.subr.mxu0 %v6628
    %7014 = vmatpush1.msra.mxu0 %v6627
    %7015 = vmatprep.subr.mxu0 %v6632
    %7016 = vmatpush1.msra.mxu0 %v6631
    %7017 = vmatprep.subr.mxu0 %v6636
    %7018 = vmatpush1.msra.mxu0 %v6635
    %7019 = vmatprep.subr.mxu0 %v6640
    %7020 = vmatpush1.msra.mxu0 %v6639
    %7021 = vmatprep.subr.mxu0 %v6644
    %7022 = vmatpush1.msra.mxu0 %v6643
    %7023 = vmatprep.subr.mxu0 %v6648
    %7024 = vmatpush1.msra.mxu0 %v6647
    %7025 = vmatprep.subr.mxu0 %v6652
    %7026 = vmatpush1.msra.mxu0 %v6651
    %7027 = vmatprep.subr.mxu0 %v6656
    %7028 = vmatpush1.msra.mxu0 %v6655
    %7029 = vmatprep.subr.mxu0 %v6660
    %7030 = vmatpush1.msra.mxu0 %v6659
    %7031 = vmatprep.subr.mxu0 %v6664
    %7032 = vmatpush1.msra.mxu0 %v6663
    %7033 = vmatprep.subr.mxu0 %v6668
    %7034 = vmatpush1.msra.mxu0 %v6667
    %7035 = vmatprep.subr.mxu0 %v6672
    %7036 = vmatpush1.msra.mxu0 %v6671
    %7037 = vmatprep.subr.mxu0 %v6676
    %7038 = vmatpush1.msra.mxu0 %v6675
    %7039 = vmatprep.subr.mxu0 %v6680
    %7040 = vmatpush1.msra.mxu0 %v6679
    %7041 = vmatprep.subr.mxu0 %v6684
    %7042 = vmatpush1.msra.mxu0 %v6683
    %7043 = vmatprep.mubr.f32.mxu0 %v6278
    %7044 = vmatmul.mubr.f32.gmra.mrb[0].mxu0 %v6277
    %v7045 = vpop.f32.mrb[0].mxu0
    %v7046 = vadd.f32 %v6975, %v7045
    %v7047 = vpop.f32.mrb[0].mxu0
    %v7048 = vadd.f32 %v6977, %v7047
    %7049 = vdwg.mxu0
    %7050 = vmatprep.subr.mxu0 %v6688
    %7051 = vmatpush1.msra.mxu0 %v6687
    %7052 = vmatprep.subr.mxu0 %v6692
    %7053 = vmatpush1.msra.mxu0 %v6691
    %7054 = vmatprep.subr.mxu0 %v6696
    %7055 = vmatpush1.msra.mxu0 %v6695
    %7056 = vmatprep.subr.mxu0 %v6700
    %7057 = vmatpush1.msra.mxu0 %v6699
    %7058 = vmatprep.subr.mxu0 %v6704
    %7059 = vmatpush1.msra.mxu0 %v6703
    %7060 = vmatprep.subr.mxu0 %v6708
    %7061 = vmatpush1.msra.mxu0 %v6707
    %7062 = vmatprep.subr.mxu0 %v6712
    %7063 = vmatpush1.msra.mxu0 %v6711
    %7064 = vmatprep.subr.mxu0 %v6716
    %7065 = vmatpush1.msra.mxu0 %v6715
    %7066 = vmatprep.subr.mxu0 %v6720
    %7067 = vmatpush1.msra.mxu0 %v6719
    %7068 = vmatprep.subr.mxu0 %v6724
    %7069 = vmatpush1.msra.mxu0 %v6723
    %7070 = vmatprep.subr.mxu0 %v6728
    %7071 = vmatpush1.msra.mxu0 %v6727
    %7072 = vmatprep.subr.mxu0 %v6732
    %7073 = vmatpush1.msra.mxu0 %v6731
    %7074 = vmatprep.subr.mxu0 %v6736
    %7075 = vmatpush1.msra.mxu0 %v6735
    %7076 = vmatprep.subr.mxu0 %v6740
    %7077 = vmatpush1.msra.mxu0 %v6739
    %7078 = vmatprep.subr.mxu0 %v6744
    %7079 = vmatpush1.msra.mxu0 %v6743
    %7080 = vmatprep.subr.mxu0 %v6748
    %7081 = vmatpush1.msra.mxu0 %v6747
    %7082 = vmatprep.subr.mxu0 %v6752
    %7083 = vmatpush1.msra.mxu0 %v6751
    %7084 = vmatprep.subr.mxu0 %v6756
    %7085 = vmatpush1.msra.mxu0 %v6755
    %7086 = vmatprep.subr.mxu0 %v6760
    %7087 = vmatpush1.msra.mxu0 %v6759
    %7088 = vmatprep.subr.mxu0 %v6764
    %7089 = vmatpush1.msra.mxu0 %v6763
    %7090 = vmatprep.subr.mxu0 %v6768
    %7091 = vmatpush1.msra.mxu0 %v6767
    %7092 = vmatprep.subr.mxu0 %v6772
    %7093 = vmatpush1.msra.mxu0 %v6771
    %7094 = vmatprep.subr.mxu0 %v6776
    %7095 = vmatpush1.msra.mxu0 %v6775
    %7096 = vmatprep.subr.mxu0 %v6780
    %7097 = vmatpush1.msra.mxu0 %v6779
    %7098 = vmatprep.subr.mxu0 %v6784
    %7099 = vmatpush1.msra.mxu0 %v6783
    %7100 = vmatprep.subr.mxu0 %v6788
    %7101 = vmatpush1.msra.mxu0 %v6787
    %7102 = vmatprep.subr.mxu0 %v6792
    %7103 = vmatpush1.msra.mxu0 %v6791
    %7104 = vmatprep.subr.mxu0 %v6796
    %7105 = vmatpush1.msra.mxu0 %v6795
    %7106 = vmatprep.subr.mxu0 %v6800
    %7107 = vmatpush1.msra.mxu0 %v6799
    %7108 = vmatprep.subr.mxu0 %v6804
    %7109 = vmatpush1.msra.mxu0 %v6803
    %7110 = vmatprep.subr.mxu0 %v6808
    %7111 = vmatpush1.msra.mxu0 %v6807
    %7112 = vmatprep.subr.mxu0 %v6812
    %7113 = vmatpush1.msra.mxu0 %v6811
    %7114 = vmatprep.mubr.f32.mxu0 %v6300
    %7115 = vmatmul.mubr.f32.gmra.mrb[0].mxu0 %v6299
    %v7116 = vpop.f32.mrb[0].mxu0
    %v7117 = vadd.f32 %v7046, %v7116
    %v7118 = vpop.f32.mrb[0].mxu0
    %v7119 = vadd.f32 %v7048, %v7118
    %7120 = vdwg.mxu0
    %7121 = vmatprep.subr.mxu0 %v6306
    %7122 = vmatpush1.msra.mxu0 %v6305
    %7123 = vmatprep.subr.mxu0 %v6310
    %7124 = vmatpush1.msra.mxu0 %v6309
    %7125 = vmatprep.subr.mxu0 %v6314
    %7126 = vmatpush1.msra.mxu0 %v6313
    %7127 = vmatprep.subr.mxu0 %v6318
    %7128 = vmatpush1.msra.mxu0 %v6317
    %7129 = vmatprep.subr.mxu0 %v6322
    %7130 = vmatpush1.msra.mxu0 %v6321
    %7131 = vmatprep.subr.mxu0 %v6326
    %7132 = vmatpush1.msra.mxu0 %v6325
    %7133 = vmatprep.subr.mxu0 %v6330
    %7134 = vmatpush1.msra.mxu0 %v6329
    %7135 = vmatprep.subr.mxu0 %v6334
    %7136 = vmatpush1.msra.mxu0 %v6333
    %7137 = vmatprep.subr.mxu0 %v6338
    %7138 = vmatpush1.msra.mxu0 %v6337
    %7139 = vmatprep.subr.mxu0 %v6342
    %7140 = vmatpush1.msra.mxu0 %v6341
    %7141 = vmatprep.subr.mxu0 %v6346
    %7142 = vmatpush1.msra.mxu0 %v6345
    %7143 = vmatprep.subr.mxu0 %v6350
    %7144 = vmatpush1.msra.mxu0 %v6349
    %7145 = vmatprep.subr.mxu0 %v6354
    %7146 = vmatpush1.msra.mxu0 %v6353
    %7147 = vmatprep.subr.mxu0 %v6358
    %7148 = vmatpush1.msra.mxu0 %v6357
    %7149 = vmatprep.subr.mxu0 %v6362
    %7150 = vmatpush1.msra.mxu0 %v6361
    %7151 = vmatprep.subr.mxu0 %v6366
    %7152 = vmatpush1.msra.mxu0 %v6365
    %7153 = vmatprep.subr.mxu0 %v6370
    %7154 = vmatpush1.msra.mxu0 %v6369
    %7155 = vmatprep.subr.mxu0 %v6374
    %7156 = vmatpush1.msra.mxu0 %v6373
    %7157 = vmatprep.subr.mxu0 %v6378
    %7158 = vmatpush1.msra.mxu0 %v6377
    %7159 = vmatprep.subr.mxu0 %v6382
    %7160 = vmatpush1.msra.mxu0 %v6381
    %7161 = vmatprep.subr.mxu0 %v6386
    %7162 = vmatpush1.msra.mxu0 %v6385
    %7163 = vmatprep.subr.mxu0 %v6390
    %7164 = vmatpush1.msra.mxu0 %v6389
    %7165 = vmatprep.subr.mxu0 %v6394
    %7166 = vmatpush1.msra.mxu0 %v6393
    %7167 = vmatprep.subr.mxu0 %v6398
    %7168 = vmatpush1.msra.mxu0 %v6397
    %7169 = vmatprep.subr.mxu0 %v6402
    %7170 = vmatpush1.msra.mxu0 %v6401
    %7171 = vmatprep.subr.mxu0 %v6406
    %7172 = vmatpush1.msra.mxu0 %v6405
    %7173 = vmatprep.subr.mxu0 %v6410
    %7174 = vmatpush1.msra.mxu0 %v6409
    %7175 = vmatprep.subr.mxu0 %v6414
    %7176 = vmatpush1.msra.mxu0 %v6413
    %7177 = vmatprep.subr.mxu0 %v6418
    %7178 = vmatpush1.msra.mxu0 %v6417
    %7179 = vmatprep.subr.mxu0 %v6422
    %7180 = vmatpush1.msra.mxu0 %v6421
    %7181 = vmatprep.subr.mxu0 %v6426
    %7182 = vmatpush1.msra.mxu0 %v6425
    %7183 = vmatprep.subr.mxu0 %v6430
    %7184 = vmatpush1.msra.mxu0 %v6429
    %7185 = vmatprep.mubr.f32.mxu0 %v6234
    %7186 = vmatmul.mubr.f32.gmra.mrb[0].mxu0 %v6233
    %v7187 = vpop.f32.mrb[0].mxu0
    %v7188 = vadd.f32 %v6828, %v7187
    %v7189 = vpop.f32.mrb[0].mxu0
    %v7190 = vadd.f32 %v6832, %v7189
    %7191 = vdwg.mxu0
    %7192 = vmatprep.subr.mxu0 %v6434
    %7193 = vmatpush1.msra.mxu0 %v6433
    %7194 = vmatprep.subr.mxu0 %v6438
    %7195 = vmatpush1.msra.mxu0 %v6437
    %7196 = vmatprep.subr.mxu0 %v6442
    %7197 = vmatpush1.msra.mxu0 %v6441
    %7198 = vmatprep.subr.mxu0 %v6446
    %7199 = vmatpush1.msra.mxu0 %v6445
    %7200 = vmatprep.subr.mxu0 %v6450
    %7201 = vmatpush1.msra.mxu0 %v6449
    %7202 = vmatprep.subr.mxu0 %v6454
    %7203 = vmatpush1.msra.mxu0 %v6453
    %7204 = vmatprep.subr.mxu0 %v6458
    %7205 = vmatpush1.msra.mxu0 %v6457
    %7206 = vmatprep.subr.mxu0 %v6462
    %7207 = vmatpush1.msra.mxu0 %v6461
    %7208 = vmatprep.subr.mxu0 %v6466
    %7209 = vmatpush1.msra.mxu0 %v6465
    %7210 = vmatprep.subr.mxu0 %v6470
    %7211 = vmatpush1.msra.mxu0 %v6469
    %7212 = vmatprep.subr.mxu0 %v6474
    %7213 = vmatpush1.msra.mxu0 %v6473
    %7214 = vmatprep.subr.mxu0 %v6478
    %7215 = vmatpush1.msra.mxu0 %v6477
    %7216 = vmatprep.subr.mxu0 %v6482
    %7217 = vmatpush1.msra.mxu0 %v6481
    %7218 = vmatprep.subr.mxu0 %v6486
    %7219 = vmatpush1.msra.mxu0 %v6485
    %7220 = vmatprep.subr.mxu0 %v6490
    %7221 = vmatpush1.msra.mxu0 %v6489
    %7222 = vmatprep.subr.mxu0 %v6494
    %7223 = vmatpush1.msra.mxu0 %v6493
    %7224 = vmatprep.subr.mxu0 %v6498
    %7225 = vmatpush1.msra.mxu0 %v6497
    %7226 = vmatprep.subr.mxu0 %v6502
    %7227 = vmatpush1.msra.mxu0 %v6501
    %7228 = vmatprep.subr.mxu0 %v6506
    %7229 = vmatpush1.msra.mxu0 %v6505
    %7230 = vmatprep.subr.mxu0 %v6510
    %7231 = vmatpush1.msra.mxu0 %v6509
    %7232 = vmatprep.subr.mxu0 %v6514
    %7233 = vmatpush1.msra.mxu0 %v6513
    %7234 = vmatprep.subr.mxu0 %v6518
    %7235 = vmatpush1.msra.mxu0 %v6517
    %7236 = vmatprep.subr.mxu0 %v6522
    %7237 = vmatpush1.msra.mxu0 %v6521
    %7238 = vmatprep.subr.mxu0 %v6526
    %7239 = vmatpush1.msra.mxu0 %v6525
    %7240 = vmatprep.subr.mxu0 %v6530
    %7241 = vmatpush1.msra.mxu0 %v6529
    %7242 = vmatprep.subr.mxu0 %v6534
    %7243 = vmatpush1.msra.mxu0 %v6533
    %7244 = vmatprep.subr.mxu0 %v6538
    %7245 = vmatpush1.msra.mxu0 %v6537
    %7246 = vmatprep.subr.mxu0 %v6542
    %7247 = vmatpush1.msra.mxu0 %v6541
    %7248 = vmatprep.subr.mxu0 %v6546
    %7249 = vmatpush1.msra.mxu0 %v6545
    %7250 = vmatprep.subr.mxu0 %v6550
    %7251 = vmatpush1.msra.mxu0 %v6549
    %7252 = vmatprep.subr.mxu0 %v6554
    %7253 = vmatpush1.msra.mxu0 %v6553
    %7254 = vmatprep.subr.mxu0 %v6558
    %7255 = vmatpush1.msra.mxu0 %v6557
    %7256 = vmatprep.mubr.f32.mxu0 %v6256
    %7257 = vmatmul.mubr.f32.gmra.mrb[0].mxu0 %v6255
    %v7258 = vpop.f32.mrb[0].mxu0
    %v7259 = vadd.f32 %v7188, %v7258
    %v7260 = vpop.f32.mrb[0].mxu0
    %v7261 = vadd.f32 %v7190, %v7260
    %7262 = vdwg.mxu0
    %7263 = vmatprep.subr.mxu0 %v6562
    %7264 = vmatpush1.msra.mxu0 %v6561
    %7265 = vmatprep.subr.mxu0 %v6566
    %7266 = vmatpush1.msra.mxu0 %v6565
    %7267 = vmatprep.subr.mxu0 %v6570
    %7268 = vmatpush1.msra.mxu0 %v6569
    %7269 = vmatprep.subr.mxu0 %v6574
    %7270 = vmatpush1.msra.mxu0 %v6573
    %7271 = vmatprep.subr.mxu0 %v6578
    %7272 = vmatpush1.msra.mxu0 %v6577
    %7273 = vmatprep.subr.mxu0 %v6582
    %7274 = vmatpush1.msra.mxu0 %v6581
    %7275 = vmatprep.subr.mxu0 %v6586
    %7276 = vmatpush1.msra.mxu0 %v6585
    %7277 = vmatprep.subr.mxu0 %v6590
    %7278 = vmatpush1.msra.mxu0 %v6589
    %7279 = vmatprep.subr.mxu0 %v6594
    %7280 = vmatpush1.msra.mxu0 %v6593
    %7281 = vmatprep.subr.mxu0 %v6598
    %7282 = vmatpush1.msra.mxu0 %v6597
    %7283 = vmatprep.subr.mxu0 %v6602
    %7284 = vmatpush1.msra.mxu0 %v6601
    %7285 = vmatprep.subr.mxu0 %v6606
    %7286 = vmatpush1.msra.mxu0 %v6605
    %7287 = vmatprep.subr.mxu0 %v6610
    %7288 = vmatpush1.msra.mxu0 %v6609
    %7289 = vmatprep.subr.mxu0 %v6614
    %7290 = vmatpush1.msra.mxu0 %v6613
    %7291 = vmatprep.subr.mxu0 %v6618
    %7292 = vmatpush1.msra.mxu0 %v6617
    %7293 = vmatprep.subr.mxu0 %v6622
    %7294 = vmatpush1.msra.mxu0 %v6621
    %7295 = vmatprep.subr.mxu0 %v6626
    %7296 = vmatpush1.msra.mxu0 %v6625
    %7297 = vmatprep.subr.mxu0 %v6630
    %7298 = vmatpush1.msra.mxu0 %v6629
    %7299 = vmatprep.subr.mxu0 %v6634
    %7300 = vmatpush1.msra.mxu0 %v6633
    %7301 = vmatprep.subr.mxu0 %v6638
    %7302 = vmatpush1.msra.mxu0 %v6637
    %7303 = vmatprep.subr.mxu0 %v6642
    %7304 = vmatpush1.msra.mxu0 %v6641
    %7305 = vmatprep.subr.mxu0 %v6646
    %7306 = vmatpush1.msra.mxu0 %v6645
    %7307 = vmatprep.subr.mxu0 %v6650
    %7308 = vmatpush1.msra.mxu0 %v6649
    %7309 = vmatprep.subr.mxu0 %v6654
    %7310 = vmatpush1.msra.mxu0 %v6653
    %7311 = vmatprep.subr.mxu0 %v6658
    %7312 = vmatpush1.msra.mxu0 %v6657
    %7313 = vmatprep.subr.mxu0 %v6662
    %7314 = vmatpush1.msra.mxu0 %v6661
    %7315 = vmatprep.subr.mxu0 %v6666
    %7316 = vmatpush1.msra.mxu0 %v6665
    %7317 = vmatprep.subr.mxu0 %v6670
    %7318 = vmatpush1.msra.mxu0 %v6669
    %7319 = vmatprep.subr.mxu0 %v6674
    %7320 = vmatpush1.msra.mxu0 %v6673
    %7321 = vmatprep.subr.mxu0 %v6678
    %7322 = vmatpush1.msra.mxu0 %v6677
    %7323 = vmatprep.subr.mxu0 %v6682
    %7324 = vmatpush1.msra.mxu0 %v6681
    %7325 = vmatprep.subr.mxu0 %v6686
    %7326 = vmatpush1.msra.mxu0 %v6685
    %7327 = vmatprep.mubr.f32.mxu0 %v6278
    %7328 = vmatmul.mubr.f32.gmra.mrb[0].mxu0 %v6277
    %v7329 = vpop.f32.mrb[0].mxu0
    %v7330 = vadd.f32 %v7259, %v7329
    %v7331 = vpop.f32.mrb[0].mxu0
    %v7332 = vadd.f32 %v7261, %v7331
    %7333 = vdwg.mxu0
    %7334 = vmatprep.subr.mxu0 %v6690
    %7335 = vmatpush1.msra.mxu0 %v6689
    %7336 = vmatprep.subr.mxu0 %v6694
    %7337 = vmatpush1.msra.mxu0 %v6693
    %7338 = vmatprep.subr.mxu0 %v6698
    %7339 = vmatpush1.msra.mxu0 %v6697
    %7340 = vmatprep.subr.mxu0 %v6702
    %7341 = vmatpush1.msra.mxu0 %v6701
    %7342 = vmatprep.subr.mxu0 %v6706
    %7343 = vmatpush1.msra.mxu0 %v6705
    %7344 = vmatprep.subr.mxu0 %v6710
    %7345 = vmatpush1.msra.mxu0 %v6709
    %7346 = vmatprep.subr.mxu0 %v6714
    %7347 = vmatpush1.msra.mxu0 %v6713
    %7348 = vmatprep.subr.mxu0 %v6718
    %7349 = vmatpush1.msra.mxu0 %v6717
    %7350 = vmatprep.subr.mxu0 %v6722
    %7351 = vmatpush1.msra.mxu0 %v6721
    %7352 = vmatprep.subr.mxu0 %v6726
    %7353 = vmatpush1.msra.mxu0 %v6725
    %7354 = vmatprep.subr.mxu0 %v6730
    %7355 = vmatpush1.msra.mxu0 %v6729
    %7356 = vmatprep.subr.mxu0 %v6734
    %7357 = vmatpush1.msra.mxu0 %v6733
    %7358 = vmatprep.subr.mxu0 %v6738
    %7359 = vmatpush1.msra.mxu0 %v6737
    %7360 = vmatprep.subr.mxu0 %v6742
    %7361 = vmatpush1.msra.mxu0 %v6741
    %7362 = vmatprep.subr.mxu0 %v6746
    %7363 = vmatpush1.msra.mxu0 %v6745
    %7364 = vmatprep.subr.mxu0 %v6750
    %7365 = vmatpush1.msra.mxu0 %v6749
    %7366 = vmatprep.subr.mxu0 %v6754
    %7367 = vmatpush1.msra.mxu0 %v6753
    %7368 = vmatprep.subr.mxu0 %v6758
    %7369 = vmatpush1.msra.mxu0 %v6757
    %7370 = vmatprep.subr.mxu0 %v6762
    %7371 = vmatpush1.msra.mxu0 %v6761
    %7372 = vmatprep.subr.mxu0 %v6766
    %7373 = vmatpush1.msra.mxu0 %v6765
    %7374 = vmatprep.subr.mxu0 %v6770
    %7375 = vmatpush1.msra.mxu0 %v6769
    %7376 = vmatprep.subr.mxu0 %v6774
    %7377 = vmatpush1.msra.mxu0 %v6773
    %7378 = vmatprep.subr.mxu0 %v6778
    %7379 = vmatpush1.msra.mxu0 %v6777
    %7380 = vmatprep.subr.mxu0 %v6782
    %7381 = vmatpush1.msra.mxu0 %v6781
    %7382 = vmatprep.subr.mxu0 %v6786
    %7383 = vmatpush1.msra.mxu0 %v6785
    %7384 = vmatprep.subr.mxu0 %v6790
    %7385 = vmatpush1.msra.mxu0 %v6789
    %7386 = vmatprep.subr.mxu0 %v6794
    %7387 = vmatpush1.msra.mxu0 %v6793
    %7388 = vmatprep.subr.mxu0 %v6798
    %7389 = vmatpush1.msra.mxu0 %v6797
    %7390 = vmatprep.subr.mxu0 %v6802
    %7391 = vmatpush1.msra.mxu0 %v6801
    %7392 = vmatprep.subr.mxu0 %v6806
    %7393 = vmatpush1.msra.mxu0 %v6805
    %7394 = vmatprep.subr.mxu0 %v6810
    %7395 = vmatpush1.msra.mxu0 %v6809
    %7396 = vmatprep.subr.mxu0 %v6814
    %7397 = vmatpush1.msra.mxu0 %v6813
    %7398 = vmatprep.mubr.f32.mxu0 %v6300
    %7399 = vmatmul.mubr.f32.gmra.mrb[0].mxu0 %v6299
    %v7400 = vpop.f32.mrb[0].mxu0
    %v7401 = vadd.f32 %v7330, %v7400
    %v7402 = vpop.f32.mrb[0].mxu0
    %v7403 = vadd.f32 %v7332, %v7402
    %7404 = vdwg.mxu0
    %v7409 = vcombine.low %v7117, %v7119
    %v7410 = vcombine.low %v7401, %v7403
    %v7412 = vunpack.c.l.s4 1983009808
    %v7413 = vunpack.c.0.s8 %v7412
    %v7414 = vlaneseq
    %v7415 = vshrl.u32 %v7414, 7
    %v7416 = vsub.s32 %v7413, %v7415
    %v7417 = vrot.slane %v7409, %v7416
    %v7419 = vunpack.c.l.s4 1983009808
    %v7420 = vunpack.c.0.s8 %v7419
    %v7421 = vlaneseq
    %v7422 = vshrl.u32 %v7421, 7
    %v7423 = vsub.s32 %v7420, %v7422
    %v7424 = vrot.slane %v7410, %v7423
    %v7425 = vcombine.low %v7417, %v7424
    %7427 = vst [vmem:[#allocation13] sm:$0xff] %v7425
    // Predicated region
    $region54: #{source_cnn_forward.1} parent=1 // pred_check
      _
    $region55: #{source_cnn_forward.1} parent=1 // pred_check_branch
      %7429 = sbr.rel (0) target = $region57
    $region56: #{source_cnn_forward.1} parent=1 // pred_region
      %s7431 = ssub.s32 128, 128
      %7432 = vsyncadd [#allocation4], %s7431
      %s7434 = sshll.u32 [#allocation13], 4
      %s7435 = int_to_ptr.vmem [resolvable:$true] %s7434
      %7437 = dma.vmem_to_hbm [thread:$0]  %s7435, 128, %s7, [#allocation4]
    $region57: #{source_cnn_forward.1} parent=1 // pred_fallthru
      _
    // Predicated region
    $region58: #{source_cnn_forward.1} parent=1 // pred_check
      _
    $region59: #{source_cnn_forward.1} parent=1 // pred_check_branch
      %7439 = sbr.rel (0) target = $region61
    $region60: #{source_cnn_forward.1} parent=1 // pred_region
      %7440 = dma.done [#allocation4], 128
    $region61: #{source_cnn_forward.1} parent=1 // pred_fallthru
      _
    %7441 = vsyncpa [#allocation3], 1
    %7442 = vsyncpa [#allocation6], 1
    %7443 = vsyncpa [#allocation9], 1
    %7444 = vsyncpa [#allocation12], 1
    %7445 = vsyncpa [#allocation4], 1

</llo_original>
